<compile_context>
chip_gen: v6e
topology: v6e:2x2x1
jax: 0.10.0
libtpu: 0.0.40
codegen_flags: <defaults>
</compile_context>

<pallas_src>
import jax
import jax.numpy as jnp
import numpy as np
from jax.experimental import pallas as pl
from jax.experimental.pallas import tpu as pltpu

BN_EPS = 1e-5
N_BATCH = 2
H_IN = 3             # conv2d kernel spans the full height, squeezed afterwards
W_IN = 193           # -> 96 conv2d cols -> 48 pooled -> 23 conv1d -> 11 pooled
CH1 = 256            # Conv2d out channels
CH2 = 128            # Conv1d out channels
L_POOL1D = 11        # MaxPool1d output length
FEAT = CH2 * L_POOL1D      # 1408
D_FC1 = 512
D_FC2 = 256
R_BLK = 12           # pool2d positions per (sample) row block: 48 / 4
N_RES = 8            # residue blocks kept per row (0..3 real taps + 4..7 halo)

# The r = R_BLK-1 rows of the conv1d/pool1d activations are junk (MaxPool1d only has
# 11 outputs) and are the ONLY rows that ever see halo positions > 47 / clamped input
# columns; the flatten below must therefore only gather m = 0..L_POOL1D-1.
assert L_POOL1D == R_BLK - 1


# ------------------------------------------------------------------
# The single fused kernel.
# h1 layout: row = 12*n + r, lane block q (256 ch) = pool2d output at position 4r+q.
# With the 8-residue halo, even conv1d (E), odd conv1d (O) and the "next even"
# term of MaxPool1d (En) are all plain aligned lane slices of h1 times the same
# tap-stacked weight -> no row shifts anywhere.
# ------------------------------------------------------------------
def fused_kernel(p_ref, w2d_ref, b2d_ref, sc2_ref, sh2_ref,
                 we_ref, b1d_ref, sc1_ref, sh1_ref,
                 wa_hbm, ba_ref, wb_hbm, bb_ref, wf2_ref, bf2_ref,
                 o_ref, wa_vmem, wb_vmem, dma_sems):
    # Kick off the big fc1 weight DMAs immediately; they overlap the whole conv path.
    wa_cp = pltpu.make_async_copy(wa_hbm, wa_vmem, dma_sems.at[0])
    wb_cp = pltpu.make_async_copy(wb_hbm, wb_vmem, dma_sems.at[1])
    wa_cp.start()
    wb_cp.start()

    leaky = lambda t: jnp.maximum(t, 0.01 * t)          # LeakyReLU(0.01)
    nb = o_ref.shape[0]
    two_n = 2 * nb
    B = two_n * R_BLK                                   # activation rows (48 for N=2)

    # ---- cnn1: Conv2d(1,256,(3,3),(1,2)) + LeakyReLU + BN2d (folded) + MaxPool2d((1,2),(1,2))
    # One matmul covers both siamese branches, both pool halves and all 8 residue blocks.
    hc = jnp.dot(p_ref[...], w2d_ref[...], preferred_element_type=jnp.float32) + b2d_ref[...]
    hc = leaky(hc) * sc2_ref[...] + sh2_ref[...]
    hp = jnp.maximum(hc[0:N_RES * B, :], hc[N_RES * B:2 * N_RES * B, :])   # width-pair max pool

    # Residue blocks move from rows to lanes (aligned (B,256) slabs, one lane concat):
    # h1[12n+r, 256q + c] = pool2d output of sample n, channel c, position 4r+q.
    h1 = jnp.concatenate([hp[q * B:(q + 1) * B, :] for q in range(N_RES)], axis=1)  # (B, 2048)

    # ---- cnn2: Conv1d(256,128,4,stride=2) + LeakyReLU + BN1d + MaxPool1d(3,2)
    # Three matmuls share the same tap-stacked weight (K = 4*256):
    #   E  : even conv1d position l=2r    <- residues 0..3
    #   O  : odd  conv1d position l=2r+1  <- residues 2..5
    #   En : even conv1d position l=2r+2  <- residues 4..7 (== E shifted one row, recomputed)
    b1d = b1d_ref[...]
    sc1 = sc1_ref[...]
    sh1 = sh1_ref[...]
    we = we_ref[...]
    act1 = lambda t: leaky(t) * sc1 + sh1

    E = act1(jnp.dot(h1[:, 0 * CH1:4 * CH1], we, preferred_element_type=jnp.float32) + b1d)
    O = act1(jnp.dot(h1[:, 2 * CH1:6 * CH1], we, preferred_element_type=jnp.float32) + b1d)
    En = act1(jnp.dot(h1[:, 4 * CH1:8 * CH1], we, preferred_element_type=jnp.float32) + b1d)
    pooled = jnp.maximum(jnp.maximum(E, O), En)         # (B, 128); r = 11 rows are junk, discarded

    # ---- flatten to (2N, 1408) in registers (no masked single-row stores, no scratch).
    # PyTorch's channel-major flatten order is absorbed into wa's row permutation.
    rows = []
    for s in range(two_n):
        base = R_BLK * s
        rows.append(jnp.concatenate(
            [pooled[base + m:base + m + 1, :] for m in range(L_POOL1D)], axis=1))
    feat = jnp.concatenate(rows, axis=0)                # (2N, 1408)

    # ---- fc1 MLP (both branches at once), L1 distance, fc2 + Sigmoid
    wa_cp.wait()                                        # fc1a weight has landed by now
    h = leaky(jnp.dot(feat, wa_vmem[...], preferred_element_type=jnp.float32) + ba_ref[...])
    wb_cp.wait()
    y = leaky(jnp.dot(h, wb_vmem[...], preferred_element_type=jnp.float32) + bb_ref[...])
    y1 = y[0:nb, :]
    y2 = y[nb:two_n, :]
    dist = jnp.sum(jnp.abs(y1 - y2), axis=-1, keepdims=True)     # (N, 1) L1 distance
    z = dist * wf2_ref[0, 0] + bf2_ref[0, 0]                     # Linear(1, 1), scalars from SMEM
    o_ref[...] = 1.0 / (1.0 + jnp.exp(-z))                       # Sigmoid


# ------------------------------------------------------------------
# Glue: trace-time im2col on the raw input (tiny), one-time weight repack.
# ------------------------------------------------------------------
def im2col_cnn1(x):
    """x: (2N, 1, 3, 193) NCHW -> (2*8*2N*12, 9) conv2d patches.

    Row order (half, q, n, r): half 0/1 = even/odd conv2d column of each MaxPool2d
    window, residue q = pool2d position 4r+q (q = 4..7 is the +1-row halo used for
    the odd conv1d taps and the MaxPool1d E[r+1] term).  Out-of-range halo columns
    are clamped; they only ever land in the discarded r = 11 rows."""
    two_n = x.shape[0]
    x2 = x[:, 0]                                        # (2N, 3, 193)
    r = np.arange(R_BLK)
    q = np.arange(N_RES)
    p = 4 * r[None, :] + q[:, None]                     # (8, 12) pool2d positions (may exceed 47)
    kw = np.arange(3)
    cols_a = (4 * p)[..., None] + kw                    # conv2d col 2p   -> input cols 4p+kw
    cols_b = cols_a + 2                                 # conv2d col 2p+1 -> input cols 4p+2+kw
    cols = np.stack([cols_a, cols_b], axis=0)           # (2, 8, 12, 3) = (half, q, r, kw)
    cols = np.minimum(cols, W_IN - 1)                   # clamp halo overruns (junk rows only)
    g = x2[:, :, cols]                                  # (2N, 3, 2, 8, 12, 3) = (n, kh, half, q, r, kw)
    g = jnp.transpose(g, (2, 3, 0, 4, 1, 5))            # (half, q, n, r, kh, kw)
    return g.reshape(2 * N_RES * two_n * R_BLK, 9)


def fold_bn(gamma, beta, mean, var):
    sc = gamma / jnp.sqrt(var + BN_EPS)
    sh = beta - mean * sc
    return sc.reshape(1, -1).astype(jnp.float32), sh.reshape(1, -1).astype(jnp.float32)


def prepare_params(p):
    """One-time repack of PyTorch-layout params into kernel matmul layouts."""
    sc2, sh2 = fold_bn(p["bn2d_gamma"], p["bn2d_beta"], p["bn2d_mean"], p["bn2d_var"])
    sc1, sh1 = fold_bn(p["bn1d_gamma"], p["bn1d_beta"], p["bn1d_mean"], p["bn1d_var"])
    # Conv1d taps stacked along K: rows 256k..256k+255 = tap k, so one (1024,128) weight
    # serves the E / O / En matmuls.
    w_even = jnp.concatenate([p["w_conv1d"][:, :, k].T for k in range(4)], axis=0)  # (1024, 128)
    # fc1 first layer: permute rows from PyTorch (c, m) flatten order to our (m, c) order.
    wa = jnp.transpose(p["w_fc1a"].reshape(D_FC1, CH2, L_POOL1D), (2, 1, 0)).reshape(FEAT, D_FC1)
    return {
        "w2d": p["w_conv2d"].reshape(CH1, 9).T,          # (9, 256), (kh,kw) minor
        "b2d": p["b_conv2d"].reshape(1, CH1),
        "sc2": sc2, "sh2": sh2,
        "we": w_even,
        "b1d": p["b_conv1d"].reshape(1, CH2),
        "sc1": sc1, "sh1": sh1,
        "wa": wa,
        "ba": p["b_fc1a"].reshape(1, D_FC1),
        "wb": p["w_fc1b"].T,                             # (512, 256)
        "bb": p["b_fc1b"].reshape(1, D_FC2),
        "wf2": p["w_fc2"].reshape(1, 1),
        "bf2": p["b_fc2"].reshape(1, 1),
    }


def _fs(shape):
    return pl.BlockSpec(shape, lambda i: (0,) * len(shape))


@jax.jit
def siamese_forward(x1, x2, kp):
    n = x1.shape[0]
    two_n = 2 * n
    B = two_n * R_BLK
    x = jnp.concatenate([x1, x2], axis=0)                # both branches stacked on batch
    patches = im2col_cnn1(x)                             # (2*8*B, 9)

    flops = 2 * (2 * N_RES * B * 9 * CH1 + 3 * B * 4 * CH1 * CH2
                 + two_n * FEAT * D_FC1 + two_n * D_FC1 * D_FC2)
    bytes_accessed = 4 * (2 * N_RES * B * 9 + 9 * CH1 + 4 * CH1 * CH2
                          + FEAT * D_FC1 + D_FC1 * D_FC2 + 3 * (CH1 + CH2)
                          + D_FC1 + D_FC2 + two_n * FEAT + n)

    return pl.pallas_call(
        fused_kernel,
        out_shape=jax.ShapeDtypeStruct((n, 1), jnp.float32),
        grid=(1,),
        in_specs=[
            _fs((2 * N_RES * B, 9)),                                 # conv2d patches
            _fs((9, CH1)), _fs((1, CH1)), _fs((1, CH1)), _fs((1, CH1)),
            _fs((4 * CH1, CH2)), _fs((1, CH2)), _fs((1, CH2)), _fs((1, CH2)),
            pl.BlockSpec(memory_space=pl.ANY),                       # wa: manual async DMA
            _fs((1, D_FC1)),
            pl.BlockSpec(memory_space=pl.ANY),                       # wb: manual async DMA
            _fs((1, D_FC2)),
            pl.BlockSpec(memory_space=pltpu.MemorySpace.SMEM),       # fc2 weight scalar
            pl.BlockSpec(memory_space=pltpu.MemorySpace.SMEM),       # fc2 bias scalar
        ],
        out_specs=_fs((n, 1)),
        scratch_shapes=[
            pltpu.VMEM((FEAT, D_FC1), jnp.float32),                  # wa landing buffer
            pltpu.VMEM((D_FC1, D_FC2), jnp.float32),                 # wb landing buffer
            pltpu.SemaphoreType.DMA((2,)),
        ],
        compiler_params=pltpu.CompilerParams(
            dimension_semantics=("arbitrary",),
            vmem_limit_bytes=32 * 1024 * 1024),
        cost_estimate=pl.CostEstimate(
            flops=flops, transcendentals=n, bytes_accessed=bytes_accessed),
    )(patches, kp["w2d"], kp["b2d"], kp["sc2"], kp["sh2"],
      kp["we"], kp["b1d"], kp["sc1"], kp["sh1"],
      kp["wa"], kp["ba"], kp["wb"], kp["bb"], kp["wf2"], kp["bf2"])


# ------------------------------------------------------------------
# Plain-XLA reference in PyTorch layout (for a correctness self-check).
# ------------------------------------------------------------------
@jax.jit
def reference_forward(x1, x2, p):
    def leaky(t):
        return jnp.where(t >= 0, t, 0.01 * t)

    def bn(h, g, b, m, v):
        shape = (1, -1) + (1,) * (h.ndim - 2)
        return (h - m.reshape(shape)) * (g.reshape(shape) / jnp.sqrt(v.reshape(shape) + BN_EPS)) \
            + b.reshape(shape)

    def features(x):
        h = jax.lax.conv_general_dilated(
            x, p["w_conv2d"], window_strides=(1, 2), padding="VALID",
            dimension_numbers=("NCHW", "OIHW", "NCHW"),
            precision=jax.lax.Precision.HIGHEST)
        h = h + p["b_conv2d"].reshape(1, -1, 1, 1)
        h = bn(leaky(h), p["bn2d_gamma"], p["bn2d_beta"], p["bn2d_mean"], p["bn2d_var"])
        h = jnp.maximum(h[..., 0::2], h[..., 1::2])      # MaxPool2d((1,2),(1,2))
        h = h[:, :, 0, :]                                # squeeze(2) -> (N, 256, 48)
        h = jax.lax.conv_general_dilated(
            h, p["w_conv1d"], window_strides=(2,), padding="VALID",
            dimension_numbers=("NCH", "OIH", "NCH"),
            precision=jax.lax.Precision.HIGHEST)
        h = h + p["b_conv1d"].reshape(1, -1, 1)
        h = bn(leaky(h), p["bn1d_gamma"], p["bn1d_beta"], p["bn1d_mean"], p["bn1d_var"])
        h = jnp.maximum(jnp.maximum(h[..., 0:21:2], h[..., 1:22:2]), h[..., 2:23:2])  # MaxPool1d(3,2)
        f = h.reshape(h.shape[0], -1)                    # PyTorch channel-major flatten
        f = leaky(jnp.dot(f, p["w_fc1a"].T, precision=jax.lax.Precision.HIGHEST) + p["b_fc1a"])
        f = leaky(jnp.dot(f, p["w_fc1b"].T, precision=jax.lax.Precision.HIGHEST) + p["b_fc1b"])
        return f

    y1 = features(x1)
    y2 = features(x2)
    dist = jnp.sum(jnp.abs(y1 - y2), axis=-1, keepdims=True)
    z = dist * p["w_fc2"][0, 0] + p["b_fc2"][0]
    return jax.nn.sigmoid(z)


def init_params(key):
    ks = jax.random.split(key, 16)

    def nrm(k, shape, scale=0.05):
        return (scale * jax.random.normal(k, shape)).astype(jnp.float32)

    return {
        "w_conv2d": nrm(ks[0], (CH1, 1, 3, 3)),
        "b_conv2d": nrm(ks[1], (CH1,)),
        "bn2d_gamma": (1.0 + 0.1 * jax.random.normal(ks[2], (CH1,))).astype(jnp.float32),
        "bn2d_beta": nrm(ks[3], (CH1,), 0.1),
        "bn2d_mean": nrm(ks[4], (CH1,), 0.1),
        "bn2d_var": (1.0 + 0.2 * jnp.abs(jax.random.normal(ks[5], (CH1,)))).astype(jnp.float32),
        "w_conv1d": nrm(ks[6], (CH2, CH1, 4)),
        "b_conv1d": nrm(ks[7], (CH2,)),
        "bn1d_gamma": (1.0 + 0.1 * jax.random.normal(ks[8], (CH2,))).astype(jnp.float32),
        "bn1d_beta": nrm(ks[9], (CH2,), 0.1),
        "bn1d_mean": nrm(ks[10], (CH2,), 0.1),
        "bn1d_var": (1.0 + 0.2 * jnp.abs(jax.random.normal(ks[11], (CH2,)))).astype(jnp.float32),
        "w_fc1a": nrm(ks[12], (D_FC1, FEAT)),
        "b_fc1a": nrm(ks[13], (D_FC1,)),
        "w_fc1b": nrm(ks[14], (D_FC2, D_FC1)),
        "b_fc1b": nrm(ks[15], (D_FC2,)),
        "w_fc2": jnp.array([[0.02]], jnp.float32),
        "b_fc2": jnp.array([0.05], jnp.float32),
    }


if __name__ == "__main__":
    key = jax.random.PRNGKey(0)
    k1, k2, kp_key = jax.random.split(key, 3)
    x1 = jax.random.normal(k1, (N_BATCH, 1, H_IN, W_IN), jnp.float32)
    x2 = jax.random.normal(k2, (N_BATCH, 1, H_IN, W_IN), jnp.float32)
    params = init_params(kp_key)
    kparams = prepare_params(params)                    # one-time weight repack

    out = jax.block_until_ready(siamese_forward(x1, x2, kparams))
    ref = jax.block_until_ready(reference_forward(x1, x2, params))

    assert out.shape == (N_BATCH, 1), out.shape
    assert bool(jnp.all(jnp.isfinite(out)))
    max_err = float(jnp.max(jnp.abs(out - ref)))
    assert max_err < 2e-3, f"mismatch vs XLA reference: {max_err}"
    print("KERNEL_OK")
</pallas_src>

<mosaic_0001>
module attributes {stable_mosaic.version = 11 : i64} {
  func.func @fused_kernel(%arg0: i32, %arg1: memref<768x9xf32, #tpu.memory_space<vmem>>, %arg2: memref<9x256xf32, #tpu.memory_space<vmem>>, %arg3: memref<1x256xf32, #tpu.memory_space<vmem>>, %arg4: memref<1x256xf32, #tpu.memory_space<vmem>>, %arg5: memref<1x256xf32, #tpu.memory_space<vmem>>, %arg6: memref<1024x128xf32, #tpu.memory_space<vmem>>, %arg7: memref<1x128xf32, #tpu.memory_space<vmem>>, %arg8: memref<1x128xf32, #tpu.memory_space<vmem>>, %arg9: memref<1x128xf32, #tpu.memory_space<vmem>>, %arg10: memref<1408x512xf32, #tpu.memory_space<any>>, %arg11: memref<1x512xf32, #tpu.memory_space<vmem>>, %arg12: memref<512x256xf32, #tpu.memory_space<any>>, %arg13: memref<1x256xf32, #tpu.memory_space<vmem>>, %arg14: memref<1x1xf32, #tpu.memory_space<smem>>, %arg15: memref<1x1xf32, #tpu.memory_space<smem>>, %arg16: memref<2x1xf32, #tpu.memory_space<vmem>>, %arg17: memref<1408x512xf32, #tpu.memory_space<vmem>>, %arg18: memref<512x256xf32, #tpu.memory_space<vmem>>, %arg19: memref<2x!tpu.dma_semaphore, #tpu.memory_space<semaphore_mem>>) attributes {dimension_semantics = [#tpu.dimension_semantics<arbitrary>], iteration_bounds = array<i64: 1>, scalar_prefetch = 0 : i64, scratch_operands = 3 : i64, tpu.core_type = #tpu.core_type<tc>, window_params = [{pipeline_mode = #tpu.pipeline_mode<synchronous>, transform_indices = @transform_0, window_bounds = array<i64: 768, 9>}, {pipeline_mode = #tpu.pipeline_mode<synchronous>, transform_indices = @transform_1, window_bounds = array<i64: 9, 256>}, {pipeline_mode = #tpu.pipeline_mode<synchronous>, transform_indices = @transform_2, window_bounds = array<i64: 1, 256>}, {pipeline_mode = #tpu.pipeline_mode<synchronous>, transform_indices = @transform_3, window_bounds = array<i64: 1, 256>}, {pipeline_mode = #tpu.pipeline_mode<synchronous>, transform_indices = @transform_4, window_bounds = array<i64: 1, 256>}, {pipeline_mode = #tpu.pipeline_mode<synchronous>, transform_indices = @transform_5, window_bounds = array<i64: 1024, 128>}, {pipeline_mode = #tpu.pipeline_mode<synchronous>, transform_indices = @transform_6, window_bounds = array<i64: 1, 128>}, {pipeline_mode = #tpu.pipeline_mode<synchronous>, transform_indices = @transform_7, window_bounds = array<i64: 1, 128>}, {pipeline_mode = #tpu.pipeline_mode<synchronous>, transform_indices = @transform_8, window_bounds = array<i64: 1, 128>}, {}, {pipeline_mode = #tpu.pipeline_mode<synchronous>, transform_indices = @transform_10, window_bounds = array<i64: 1, 512>}, {}, {pipeline_mode = #tpu.pipeline_mode<synchronous>, transform_indices = @transform_12, window_bounds = array<i64: 1, 256>}, {transform_indices = @transform_13, window_bounds = array<i64: 1, 1>}, {transform_indices = @transform_14, window_bounds = array<i64: 1, 1>}, {pipeline_mode = #tpu.pipeline_mode<synchronous>, transform_indices = @transform_15, window_bounds = array<i64: 2, 1>}]} {
    %c0_i32 = arith.constant 0 : i32
    %0 = tpu.memref_slice %arg19[%c0_i32] : memref<2x!tpu.dma_semaphore, #tpu.memory_space<semaphore_mem>> -> memref<1x!tpu.dma_semaphore, #tpu.memory_space<semaphore_mem>>
    %1 = tpu.memref_squeeze %0 : memref<1x!tpu.dma_semaphore, #tpu.memory_space<semaphore_mem>> -> memref<!tpu.dma_semaphore, #tpu.memory_space<semaphore_mem>>
    tpu.enqueue_dma source(%arg10 : memref<1408x512xf32, #tpu.memory_space<any>>) target(%arg17 : memref<1408x512xf32, #tpu.memory_space<vmem>>) target_semaphore(%1 : memref<!tpu.dma_semaphore, #tpu.memory_space<semaphore_mem>>)
    %c1_i32 = arith.constant 1 : i32
    %2 = tpu.memref_slice %arg19[%c1_i32] : memref<2x!tpu.dma_semaphore, #tpu.memory_space<semaphore_mem>> -> memref<1x!tpu.dma_semaphore, #tpu.memory_space<semaphore_mem>>
    %3 = tpu.memref_squeeze %2 : memref<1x!tpu.dma_semaphore, #tpu.memory_space<semaphore_mem>> -> memref<!tpu.dma_semaphore, #tpu.memory_space<semaphore_mem>>
    tpu.enqueue_dma source(%arg12 : memref<512x256xf32, #tpu.memory_space<any>>) target(%arg18 : memref<512x256xf32, #tpu.memory_space<vmem>>) target_semaphore(%3 : memref<!tpu.dma_semaphore, #tpu.memory_space<semaphore_mem>>)
    %c0 = arith.constant 0 : index
    %c0_0 = arith.constant 0 : index
    %4 = vector.load %arg1[%c0, %c0_0] : memref<768x9xf32, #tpu.memory_space<vmem>>, vector<768x9xf32>
    %c0_1 = arith.constant 0 : index
    %c0_2 = arith.constant 0 : index
    %5 = vector.load %arg2[%c0_1, %c0_2] : memref<9x256xf32, #tpu.memory_space<vmem>>, vector<9x256xf32>
    %cst = arith.constant dense<0.000000e+00> : vector<768x256xf32>
    %6 = tpu.matmul %4, %5, %cst {dimension_numbers = #tpu.dot_dimension_numbers<[1], [0], [0], [1], [0, 0, 1, 1], [], []>} : vector<768x9xf32>, vector<9x256xf32>, vector<768x256xf32> -> vector<768x256xf32>
    %c0_3 = arith.constant 0 : index
    %c0_4 = arith.constant 0 : index
    %7 = vector.load %arg3[%c0_3, %c0_4] : memref<1x256xf32, #tpu.memory_space<vmem>>, vector<1x256xf32>
    %8 = vector.broadcast %7 : vector<1x256xf32> to vector<768x256xf32>
    %9 = arith.addf %6, %8 : vector<768x256xf32>
    %cst_5 = arith.constant 0.00999999977 : f32
    %10 = vector.broadcast %cst_5 : f32 to vector<768x256xf32>
    %11 = arith.mulf %10, %9 : vector<768x256xf32>
    %12 = arith.maximumf %9, %11 : vector<768x256xf32>
    %c0_6 = arith.constant 0 : index
    %c0_7 = arith.constant 0 : index
    %13 = vector.load %arg4[%c0_6, %c0_7] : memref<1x256xf32, #tpu.memory_space<vmem>>, vector<1x256xf32>
    %14 = vector.broadcast %13 : vector<1x256xf32> to vector<768x256xf32>
    %15 = arith.mulf %12, %14 : vector<768x256xf32>
    %c0_8 = arith.constant 0 : index
    %c0_9 = arith.constant 0 : index
    %16 = vector.load %arg5[%c0_8, %c0_9] : memref<1x256xf32, #tpu.memory_space<vmem>>, vector<1x256xf32>
    %17 = vector.broadcast %16 : vector<1x256xf32> to vector<768x256xf32>
    %18 = arith.addf %15, %17 : vector<768x256xf32>
    %19 = vector.extract_strided_slice %18 {offsets = [0, 0], sizes = [384, 256], strides = [1, 1]} : vector<768x256xf32> to vector<384x256xf32>
    %20 = vector.extract_strided_slice %18 {offsets = [384, 0], sizes = [384, 256], strides = [1, 1]} : vector<768x256xf32> to vector<384x256xf32>
    %21 = arith.maximumf %19, %20 : vector<384x256xf32>
    %22 = vector.extract_strided_slice %21 {offsets = [0, 0], sizes = [48, 256], strides = [1, 1]} : vector<384x256xf32> to vector<48x256xf32>
    %23 = vector.extract_strided_slice %21 {offsets = [48, 0], sizes = [48, 256], strides = [1, 1]} : vector<384x256xf32> to vector<48x256xf32>
    %24 = vector.extract_strided_slice %21 {offsets = [96, 0], sizes = [48, 256], strides = [1, 1]} : vector<384x256xf32> to vector<48x256xf32>
    %25 = vector.extract_strided_slice %21 {offsets = [144, 0], sizes = [48, 256], strides = [1, 1]} : vector<384x256xf32> to vector<48x256xf32>
    %26 = vector.extract_strided_slice %21 {offsets = [192, 0], sizes = [48, 256], strides = [1, 1]} : vector<384x256xf32> to vector<48x256xf32>
    %27 = vector.extract_strided_slice %21 {offsets = [240, 0], sizes = [48, 256], strides = [1, 1]} : vector<384x256xf32> to vector<48x256xf32>
    %28 = vector.extract_strided_slice %21 {offsets = [288, 0], sizes = [48, 256], strides = [1, 1]} : vector<384x256xf32> to vector<48x256xf32>
    %29 = vector.extract_strided_slice %21 {offsets = [336, 0], sizes = [48, 256], strides = [1, 1]} : vector<384x256xf32> to vector<48x256xf32>
    %30 = tpu.concatenate %22, %23, %24, %25, %26, %27, %28, %29 in 1 : vector<48x256xf32>, vector<48x256xf32>, vector<48x256xf32>, vector<48x256xf32>, vector<48x256xf32>, vector<48x256xf32>, vector<48x256xf32>, vector<48x256xf32> -> vector<48x2048xf32>
    %c0_10 = arith.constant 0 : index
    %c0_11 = arith.constant 0 : index
    %31 = vector.load %arg7[%c0_10, %c0_11] : memref<1x128xf32, #tpu.memory_space<vmem>>, vector<1x128xf32>
    %c0_12 = arith.constant 0 : index
    %c0_13 = arith.constant 0 : index
    %32 = vector.load %arg8[%c0_12, %c0_13] : memref<1x128xf32, #tpu.memory_space<vmem>>, vector<1x128xf32>
    %c0_14 = arith.constant 0 : index
    %c0_15 = arith.constant 0 : index
    %33 = vector.load %arg9[%c0_14, %c0_15] : memref<1x128xf32, #tpu.memory_space<vmem>>, vector<1x128xf32>
    %c0_16 = arith.constant 0 : index
    %c0_17 = arith.constant 0 : index
    %34 = vector.load %arg6[%c0_16, %c0_17] : memref<1024x128xf32, #tpu.memory_space<vmem>>, vector<1024x128xf32>
    %35 = vector.extract_strided_slice %30 {offsets = [0, 0], sizes = [48, 1024], strides = [1, 1]} : vector<48x2048xf32> to vector<48x1024xf32>
    %cst_18 = arith.constant dense<0.000000e+00> : vector<48x128xf32>
    %36 = tpu.matmul %35, %34, %cst_18 {dimension_numbers = #tpu.dot_dimension_numbers<[1], [0], [0], [1], [0, 0, 1, 1], [], []>} : vector<48x1024xf32>, vector<1024x128xf32>, vector<48x128xf32> -> vector<48x128xf32>
    %37 = vector.broadcast %31 : vector<1x128xf32> to vector<48x128xf32>
    %38 = arith.addf %36, %37 : vector<48x128xf32>
    %cst_19 = arith.constant 0.00999999977 : f32
    %39 = vector.broadcast %cst_19 : f32 to vector<48x128xf32>
    %40 = arith.mulf %39, %38 : vector<48x128xf32>
    %41 = arith.maximumf %38, %40 : vector<48x128xf32>
    %42 = vector.broadcast %32 : vector<1x128xf32> to vector<48x128xf32>
    %43 = arith.mulf %41, %42 : vector<48x128xf32>
    %44 = vector.broadcast %33 : vector<1x128xf32> to vector<48x128xf32>
    %45 = arith.addf %43, %44 : vector<48x128xf32>
    %46 = vector.extract_strided_slice %30 {offsets = [0, 512], sizes = [48, 1024], strides = [1, 1]} : vector<48x2048xf32> to vector<48x1024xf32>
    %cst_20 = arith.constant dense<0.000000e+00> : vector<48x128xf32>
    %47 = tpu.matmul %46, %34, %cst_20 {dimension_numbers = #tpu.dot_dimension_numbers<[1], [0], [0], [1], [0, 0, 1, 1], [], []>} : vector<48x1024xf32>, vector<1024x128xf32>, vector<48x128xf32> -> vector<48x128xf32>
    %48 = vector.broadcast %31 : vector<1x128xf32> to vector<48x128xf32>
    %49 = arith.addf %47, %48 : vector<48x128xf32>
    %cst_21 = arith.constant 0.00999999977 : f32
    %50 = vector.broadcast %cst_21 : f32 to vector<48x128xf32>
    %51 = arith.mulf %50, %49 : vector<48x128xf32>
    %52 = arith.maximumf %49, %51 : vector<48x128xf32>
    %53 = vector.broadcast %32 : vector<1x128xf32> to vector<48x128xf32>
    %54 = arith.mulf %52, %53 : vector<48x128xf32>
    %55 = vector.broadcast %33 : vector<1x128xf32> to vector<48x128xf32>
    %56 = arith.addf %54, %55 : vector<48x128xf32>
    %57 = vector.extract_strided_slice %30 {offsets = [0, 1024], sizes = [48, 1024], strides = [1, 1]} : vector<48x2048xf32> to vector<48x1024xf32>
    %cst_22 = arith.constant dense<0.000000e+00> : vector<48x128xf32>
    %58 = tpu.matmul %57, %34, %cst_22 {dimension_numbers = #tpu.dot_dimension_numbers<[1], [0], [0], [1], [0, 0, 1, 1], [], []>} : vector<48x1024xf32>, vector<1024x128xf32>, vector<48x128xf32> -> vector<48x128xf32>
    %59 = vector.broadcast %31 : vector<1x128xf32> to vector<48x128xf32>
    %60 = arith.addf %58, %59 : vector<48x128xf32>
    %cst_23 = arith.constant 0.00999999977 : f32
    %61 = vector.broadcast %cst_23 : f32 to vector<48x128xf32>
    %62 = arith.mulf %61, %60 : vector<48x128xf32>
    %63 = arith.maximumf %60, %62 : vector<48x128xf32>
    %64 = vector.broadcast %32 : vector<1x128xf32> to vector<48x128xf32>
    %65 = arith.mulf %63, %64 : vector<48x128xf32>
    %66 = vector.broadcast %33 : vector<1x128xf32> to vector<48x128xf32>
    %67 = arith.addf %65, %66 : vector<48x128xf32>
    %68 = arith.maximumf %45, %56 : vector<48x128xf32>
    %69 = arith.maximumf %68, %67 : vector<48x128xf32>
    %70 = vector.extract_strided_slice %69 {offsets = [0, 0], sizes = [1, 128], strides = [1, 1]} : vector<48x128xf32> to vector<1x128xf32>
    %71 = vector.extract_strided_slice %69 {offsets = [1, 0], sizes = [1, 128], strides = [1, 1]} : vector<48x128xf32> to vector<1x128xf32>
    %72 = vector.extract_strided_slice %69 {offsets = [2, 0], sizes = [1, 128], strides = [1, 1]} : vector<48x128xf32> to vector<1x128xf32>
    %73 = vector.extract_strided_slice %69 {offsets = [3, 0], sizes = [1, 128], strides = [1, 1]} : vector<48x128xf32> to vector<1x128xf32>
    %74 = vector.extract_strided_slice %69 {offsets = [4, 0], sizes = [1, 128], strides = [1, 1]} : vector<48x128xf32> to vector<1x128xf32>
    %75 = vector.extract_strided_slice %69 {offsets = [5, 0], sizes = [1, 128], strides = [1, 1]} : vector<48x128xf32> to vector<1x128xf32>
    %76 = vector.extract_strided_slice %69 {offsets = [6, 0], sizes = [1, 128], strides = [1, 1]} : vector<48x128xf32> to vector<1x128xf32>
    %77 = vector.extract_strided_slice %69 {offsets = [7, 0], sizes = [1, 128], strides = [1, 1]} : vector<48x128xf32> to vector<1x128xf32>
    %78 = vector.extract_strided_slice %69 {offsets = [8, 0], sizes = [1, 128], strides = [1, 1]} : vector<48x128xf32> to vector<1x128xf32>
    %79 = vector.extract_strided_slice %69 {offsets = [9, 0], sizes = [1, 128], strides = [1, 1]} : vector<48x128xf32> to vector<1x128xf32>
    %80 = vector.extract_strided_slice %69 {offsets = [10, 0], sizes = [1, 128], strides = [1, 1]} : vector<48x128xf32> to vector<1x128xf32>
    %81 = tpu.concatenate %70, %71, %72, %73, %74, %75, %76, %77, %78, %79, %80 in 1 : vector<1x128xf32>, vector<1x128xf32>, vector<1x128xf32>, vector<1x128xf32>, vector<1x128xf32>, vector<1x128xf32>, vector<1x128xf32>, vector<1x128xf32>, vector<1x128xf32>, vector<1x128xf32>, vector<1x128xf32> -> vector<1x1408xf32>
    %82 = vector.extract_strided_slice %69 {offsets = [12, 0], sizes = [1, 128], strides = [1, 1]} : vector<48x128xf32> to vector<1x128xf32>
    %83 = vector.extract_strided_slice %69 {offsets = [13, 0], sizes = [1, 128], strides = [1, 1]} : vector<48x128xf32> to vector<1x128xf32>
    %84 = vector.extract_strided_slice %69 {offsets = [14, 0], sizes = [1, 128], strides = [1, 1]} : vector<48x128xf32> to vector<1x128xf32>
    %85 = vector.extract_strided_slice %69 {offsets = [15, 0], sizes = [1, 128], strides = [1, 1]} : vector<48x128xf32> to vector<1x128xf32>
    %86 = vector.extract_strided_slice %69 {offsets = [16, 0], sizes = [1, 128], strides = [1, 1]} : vector<48x128xf32> to vector<1x128xf32>
    %87 = vector.extract_strided_slice %69 {offsets = [17, 0], sizes = [1, 128], strides = [1, 1]} : vector<48x128xf32> to vector<1x128xf32>
    %88 = vector.extract_strided_slice %69 {offsets = [18, 0], sizes = [1, 128], strides = [1, 1]} : vector<48x128xf32> to vector<1x128xf32>
    %89 = vector.extract_strided_slice %69 {offsets = [19, 0], sizes = [1, 128], strides = [1, 1]} : vector<48x128xf32> to vector<1x128xf32>
    %90 = vector.extract_strided_slice %69 {offsets = [20, 0], sizes = [1, 128], strides = [1, 1]} : vector<48x128xf32> to vector<1x128xf32>
    %91 = vector.extract_strided_slice %69 {offsets = [21, 0], sizes = [1, 128], strides = [1, 1]} : vector<48x128xf32> to vector<1x128xf32>
    %92 = vector.extract_strided_slice %69 {offsets = [22, 0], sizes = [1, 128], strides = [1, 1]} : vector<48x128xf32> to vector<1x128xf32>
    %93 = tpu.concatenate %82, %83, %84, %85, %86, %87, %88, %89, %90, %91, %92 in 1 : vector<1x128xf32>, vector<1x128xf32>, vector<1x128xf32>, vector<1x128xf32>, vector<1x128xf32>, vector<1x128xf32>, vector<1x128xf32>, vector<1x128xf32>, vector<1x128xf32>, vector<1x128xf32>, vector<1x128xf32> -> vector<1x1408xf32>
    %94 = vector.extract_strided_slice %69 {offsets = [24, 0], sizes = [1, 128], strides = [1, 1]} : vector<48x128xf32> to vector<1x128xf32>
    %95 = vector.extract_strided_slice %69 {offsets = [25, 0], sizes = [1, 128], strides = [1, 1]} : vector<48x128xf32> to vector<1x128xf32>
    %96 = vector.extract_strided_slice %69 {offsets = [26, 0], sizes = [1, 128], strides = [1, 1]} : vector<48x128xf32> to vector<1x128xf32>
    %97 = vector.extract_strided_slice %69 {offsets = [27, 0], sizes = [1, 128], strides = [1, 1]} : vector<48x128xf32> to vector<1x128xf32>
    %98 = vector.extract_strided_slice %69 {offsets = [28, 0], sizes = [1, 128], strides = [1, 1]} : vector<48x128xf32> to vector<1x128xf32>
    %99 = vector.extract_strided_slice %69 {offsets = [29, 0], sizes = [1, 128], strides = [1, 1]} : vector<48x128xf32> to vector<1x128xf32>
    %100 = vector.extract_strided_slice %69 {offsets = [30, 0], sizes = [1, 128], strides = [1, 1]} : vector<48x128xf32> to vector<1x128xf32>
    %101 = vector.extract_strided_slice %69 {offsets = [31, 0], sizes = [1, 128], strides = [1, 1]} : vector<48x128xf32> to vector<1x128xf32>
    %102 = vector.extract_strided_slice %69 {offsets = [32, 0], sizes = [1, 128], strides = [1, 1]} : vector<48x128xf32> to vector<1x128xf32>
    %103 = vector.extract_strided_slice %69 {offsets = [33, 0], sizes = [1, 128], strides = [1, 1]} : vector<48x128xf32> to vector<1x128xf32>
    %104 = vector.extract_strided_slice %69 {offsets = [34, 0], sizes = [1, 128], strides = [1, 1]} : vector<48x128xf32> to vector<1x128xf32>
    %105 = tpu.concatenate %94, %95, %96, %97, %98, %99, %100, %101, %102, %103, %104 in 1 : vector<1x128xf32>, vector<1x128xf32>, vector<1x128xf32>, vector<1x128xf32>, vector<1x128xf32>, vector<1x128xf32>, vector<1x128xf32>, vector<1x128xf32>, vector<1x128xf32>, vector<1x128xf32>, vector<1x128xf32> -> vector<1x1408xf32>
    %106 = vector.extract_strided_slice %69 {offsets = [36, 0], sizes = [1, 128], strides = [1, 1]} : vector<48x128xf32> to vector<1x128xf32>
    %107 = vector.extract_strided_slice %69 {offsets = [37, 0], sizes = [1, 128], strides = [1, 1]} : vector<48x128xf32> to vector<1x128xf32>
    %108 = vector.extract_strided_slice %69 {offsets = [38, 0], sizes = [1, 128], strides = [1, 1]} : vector<48x128xf32> to vector<1x128xf32>
    %109 = vector.extract_strided_slice %69 {offsets = [39, 0], sizes = [1, 128], strides = [1, 1]} : vector<48x128xf32> to vector<1x128xf32>
    %110 = vector.extract_strided_slice %69 {offsets = [40, 0], sizes = [1, 128], strides = [1, 1]} : vector<48x128xf32> to vector<1x128xf32>
    %111 = vector.extract_strided_slice %69 {offsets = [41, 0], sizes = [1, 128], strides = [1, 1]} : vector<48x128xf32> to vector<1x128xf32>
    %112 = vector.extract_strided_slice %69 {offsets = [42, 0], sizes = [1, 128], strides = [1, 1]} : vector<48x128xf32> to vector<1x128xf32>
    %113 = vector.extract_strided_slice %69 {offsets = [43, 0], sizes = [1, 128], strides = [1, 1]} : vector<48x128xf32> to vector<1x128xf32>
    %114 = vector.extract_strided_slice %69 {offsets = [44, 0], sizes = [1, 128], strides = [1, 1]} : vector<48x128xf32> to vector<1x128xf32>
    %115 = vector.extract_strided_slice %69 {offsets = [45, 0], sizes = [1, 128], strides = [1, 1]} : vector<48x128xf32> to vector<1x128xf32>
    %116 = vector.extract_strided_slice %69 {offsets = [46, 0], sizes = [1, 128], strides = [1, 1]} : vector<48x128xf32> to vector<1x128xf32>
    %117 = tpu.concatenate %106, %107, %108, %109, %110, %111, %112, %113, %114, %115, %116 in 1 : vector<1x128xf32>, vector<1x128xf32>, vector<1x128xf32>, vector<1x128xf32>, vector<1x128xf32>, vector<1x128xf32>, vector<1x128xf32>, vector<1x128xf32>, vector<1x128xf32>, vector<1x128xf32>, vector<1x128xf32> -> vector<1x1408xf32>
    %118 = tpu.concatenate %81, %93, %105, %117 in 0 : vector<1x1408xf32>, vector<1x1408xf32>, vector<1x1408xf32>, vector<1x1408xf32> -> vector<4x1408xf32>
    %c0_i32_24 = arith.constant 0 : i32
    %119 = tpu.memref_slice %arg19[%c0_i32_24] : memref<2x!tpu.dma_semaphore, #tpu.memory_space<semaphore_mem>> -> memref<1x!tpu.dma_semaphore, #tpu.memory_space<semaphore_mem>>
    %120 = tpu.memref_squeeze %119 : memref<1x!tpu.dma_semaphore, #tpu.memory_space<semaphore_mem>> -> memref<!tpu.dma_semaphore, #tpu.memory_space<semaphore_mem>>
    tpu.wait_dma2 semaphore(%120 : memref<!tpu.dma_semaphore, #tpu.memory_space<semaphore_mem>>) src(%arg10 : memref<1408x512xf32, #tpu.memory_space<any>>) dst(%arg17 : memref<1408x512xf32, #tpu.memory_space<vmem>>)
    %c0_25 = arith.constant 0 : index
    %c0_26 = arith.constant 0 : index
    %121 = vector.load %arg17[%c0_25, %c0_26] : memref<1408x512xf32, #tpu.memory_space<vmem>>, vector<1408x512xf32>
    %cst_27 = arith.constant dense<0.000000e+00> : vector<4x512xf32>
    %122 = tpu.matmul %118, %121, %cst_27 {dimension_numbers = #tpu.dot_dimension_numbers<[1], [0], [0], [1], [0, 0, 1, 1], [], []>} : vector<4x1408xf32>, vector<1408x512xf32>, vector<4x512xf32> -> vector<4x512xf32>
    %c0_28 = arith.constant 0 : index
    %c0_29 = arith.constant 0 : index
    %123 = vector.load %arg11[%c0_28, %c0_29] : memref<1x512xf32, #tpu.memory_space<vmem>>, vector<1x512xf32>
    %124 = vector.broadcast %123 : vector<1x512xf32> to vector<4x512xf32>
    %125 = arith.addf %122, %124 : vector<4x512xf32>
    %cst_30 = arith.constant 0.00999999977 : f32
    %126 = vector.broadcast %cst_30 : f32 to vector<4x512xf32>
    %127 = arith.mulf %126, %125 : vector<4x512xf32>
    %128 = arith.maximumf %125, %127 : vector<4x512xf32>
    %c1_i32_31 = arith.constant 1 : i32
    %129 = tpu.memref_slice %arg19[%c1_i32_31] : memref<2x!tpu.dma_semaphore, #tpu.memory_space<semaphore_mem>> -> memref<1x!tpu.dma_semaphore, #tpu.memory_space<semaphore_mem>>
    %130 = tpu.memref_squeeze %129 : memref<1x!tpu.dma_semaphore, #tpu.memory_space<semaphore_mem>> -> memref<!tpu.dma_semaphore, #tpu.memory_space<semaphore_mem>>
    tpu.wait_dma2 semaphore(%130 : memref<!tpu.dma_semaphore, #tpu.memory_space<semaphore_mem>>) src(%arg12 : memref<512x256xf32, #tpu.memory_space<any>>) dst(%arg18 : memref<512x256xf32, #tpu.memory_space<vmem>>)
    %c0_32 = arith.constant 0 : index
    %c0_33 = arith.constant 0 : index
    %131 = vector.load %arg18[%c0_32, %c0_33] : memref<512x256xf32, #tpu.memory_space<vmem>>, vector<512x256xf32>
    %cst_34 = arith.constant dense<0.000000e+00> : vector<4x256xf32>
    %132 = tpu.matmul %128, %131, %cst_34 {dimension_numbers = #tpu.dot_dimension_numbers<[1], [0], [0], [1], [0, 0, 1, 1], [], []>} : vector<4x512xf32>, vector<512x256xf32>, vector<4x256xf32> -> vector<4x256xf32>
    %c0_35 = arith.constant 0 : index
    %c0_36 = arith.constant 0 : index
    %133 = vector.load %arg13[%c0_35, %c0_36] : memref<1x256xf32, #tpu.memory_space<vmem>>, vector<1x256xf32>
    %134 = vector.broadcast %133 : vector<1x256xf32> to vector<4x256xf32>
    %135 = arith.addf %132, %134 : vector<4x256xf32>
    %cst_37 = arith.constant 0.00999999977 : f32
    %136 = vector.broadcast %cst_37 : f32 to vector<4x256xf32>
    %137 = arith.mulf %136, %135 : vector<4x256xf32>
    %138 = arith.maximumf %135, %137 : vector<4x256xf32>
    %139 = vector.extract_strided_slice %138 {offsets = [0, 0], sizes = [2, 256], strides = [1, 1]} : vector<4x256xf32> to vector<2x256xf32>
    %140 = vector.extract_strided_slice %138 {offsets = [2, 0], sizes = [2, 256], strides = [1, 1]} : vector<4x256xf32> to vector<2x256xf32>
    %141 = arith.subf %139, %140 : vector<2x256xf32>
    %142 = math.absf %141 : vector<2x256xf32>
    %cst_38 = arith.constant dense<0.000000e+00> : vector<2xf32>
    %143 = vector.multi_reduction <add>, %142, %cst_38 [1] : vector<2x256xf32> to vector<2xf32>
    %144 = vector.shape_cast %143 : vector<2xf32> to vector<2x1xf32>
    %c0_39 = arith.constant 0 : index
    %c0_40 = arith.constant 0 : index
    %145 = memref.load %arg14[%c0_39, %c0_40] : memref<1x1xf32, #tpu.memory_space<smem>>
    %146 = vector.broadcast %145 : f32 to vector<2x1xf32>
    %147 = arith.mulf %144, %146 : vector<2x1xf32>
    %c0_41 = arith.constant 0 : index
    %c0_42 = arith.constant 0 : index
    %148 = memref.load %arg15[%c0_41, %c0_42] : memref<1x1xf32, #tpu.memory_space<smem>>
    %149 = vector.broadcast %148 : f32 to vector<2x1xf32>
    %150 = arith.addf %147, %149 : vector<2x1xf32>
    %cst_43 = arith.constant 0.000000e+00 : f32
    %151 = vector.broadcast %cst_43 : f32 to vector<2x1xf32>
    %152 = arith.subf %151, %150 : vector<2x1xf32>
    %153 = math.exp %152 : vector<2x1xf32>
    %cst_44 = arith.constant 1.000000e+00 : f32
    %154 = vector.broadcast %cst_44 : f32 to vector<2x1xf32>
    %155 = arith.addf %154, %153 : vector<2x1xf32>
    %cst_45 = arith.constant 1.000000e+00 : f32
    %156 = vector.broadcast %cst_45 : f32 to vector<2x1xf32>
    %157 = arith.divf %156, %155 : vector<2x1xf32>
    %c0_46 = arith.constant 0 : index
    %c0_47 = arith.constant 0 : index
    %158 = vector.load %arg16[%c0_46, %c0_47] : memref<2x1xf32, #tpu.memory_space<vmem>>, vector<2x1xf32>
    tpu.vector_store %arg16[%c0_46, %c0_47], %157 {strides = array<i32>} : memref<2x1xf32, #tpu.memory_space<vmem>>, vector<2x1xf32>,
    return
  }
  func.func @transform_0(%arg0: i32) -> (i32, i32) {
    %c0_i32 = arith.constant 0 : i32
    %c0_i32_0 = arith.constant 0 : i32
    %c0_i32_1 = arith.constant 0 : i32
    return %c0_i32, %c0_i32_0 : i32, i32
  }
  func.func @transform_1(%arg0: i32) -> (i32, i32) {
    %c0_i32 = arith.constant 0 : i32
    %c0_i32_0 = arith.constant 0 : i32
    %c0_i32_1 = arith.constant 0 : i32
    return %c0_i32, %c0_i32_0 : i32, i32
  }
  func.func @transform_2(%arg0: i32) -> (i32, i32) {
    %c0_i32 = arith.constant 0 : i32
    %c0_i32_0 = arith.constant 0 : i32
    %c0_i32_1 = arith.constant 0 : i32
    return %c0_i32, %c0_i32_0 : i32, i32
  }
  func.func @transform_3(%arg0: i32) -> (i32, i32) {
    %c0_i32 = arith.constant 0 : i32
    %c0_i32_0 = arith.constant 0 : i32
    %c0_i32_1 = arith.constant 0 : i32
    return %c0_i32, %c0_i32_0 : i32, i32
  }
  func.func @transform_4(%arg0: i32) -> (i32, i32) {
    %c0_i32 = arith.constant 0 : i32
    %c0_i32_0 = arith.constant 0 : i32
    %c0_i32_1 = arith.constant 0 : i32
    return %c0_i32, %c0_i32_0 : i32, i32
  }
  func.func @transform_5(%arg0: i32) -> (i32, i32) {
    %c0_i32 = arith.constant 0 : i32
    %c0_i32_0 = arith.constant 0 : i32
    %c0_i32_1 = arith.constant 0 : i32
    return %c0_i32, %c0_i32_0 : i32, i32
  }
  func.func @transform_6(%arg0: i32) -> (i32, i32) {
    %c0_i32 = arith.constant 0 : i32
    %c0_i32_0 = arith.constant 0 : i32
    %c0_i32_1 = arith.constant 0 : i32
    return %c0_i32, %c0_i32_0 : i32, i32
  }
  func.func @transform_7(%arg0: i32) -> (i32, i32) {
    %c0_i32 = arith.constant 0 : i32
    %c0_i32_0 = arith.constant 0 : i32
    %c0_i32_1 = arith.constant 0 : i32
    return %c0_i32, %c0_i32_0 : i32, i32
  }
  func.func @transform_8(%arg0: i32) -> (i32, i32) {
    %c0_i32 = arith.constant 0 : i32
    %c0_i32_0 = arith.constant 0 : i32
    %c0_i32_1 = arith.constant 0 : i32
    return %c0_i32, %c0_i32_0 : i32, i32
  }
  func.func @transform_10(%arg0: i32) -> (i32, i32) {
    %c0_i32 = arith.constant 0 : i32
    %c0_i32_0 = arith.constant 0 : i32
    %c0_i32_1 = arith.constant 0 : i32
    return %c0_i32, %c0_i32_0 : i32, i32
  }
  func.func @transform_12(%arg0: i32) -> (i32, i32) {
    %c0_i32 = arith.constant 0 : i32
    %c0_i32_0 = arith.constant 0 : i32
    %c0_i32_1 = arith.constant 0 : i32
    return %c0_i32, %c0_i32_0 : i32, i32
  }
  func.func @transform_13(%arg0: i32) -> (i32, i32) {
    %c0_i32 = arith.constant 0 : i32
    %c0_i32_0 = arith.constant 0 : i32
    %c0_i32_1 = arith.constant 0 : i32
    return %c0_i32, %c0_i32_0 : i32, i32
  }
  func.func @transform_14(%arg0: i32) -> (i32, i32) {
    %c0_i32 = arith.constant 0 : i32
    %c0_i32_0 = arith.constant 0 : i32
    %c0_i32_1 = arith.constant 0 : i32
    return %c0_i32, %c0_i32_0 : i32, i32
  }
  func.func @transform_15(%arg0: i32) -> (i32, i32) {
    %c0_i32 = arith.constant 0 : i32
    %c0_i32_0 = arith.constant 0 : i32
    %c0_i32_1 = arith.constant 0 : i32
    return %c0_i32, %c0_i32_0 : i32, i32
  }
}

</mosaic_0001>

<llo_original>
// kernel: siamese_forward.1
$region0: #{siamese_forward.1}
  #allocation0 [shape = 'u32[]', space=smem, size = 0x4, offset = 0x4, fixed_abs, tag = 'smem constant byte address 0x4 - core index']
  #allocation1 [shape = 'u32[144,128]{1,0:T(1,128)}', space=vmem, size = 0x12000, scoped, tag = 'internal scratch']
  #allocation2 [shape = 'f32[1408,512]{1,0:T(8,128)}', space=vmem, size = 0x2c0000, scoped, tag = 'scratch operand']
  #allocation3 [shape = 'f32[512,256]{1,0:T(8,128)}', space=vmem, size = 0x80000, scoped, tag = 'scratch operand']
  #allocation4 [shape = 's32[2]{0}', space=sflag, size = 0x8, scoped, tag = 'scratch operand']
  #allocation5 [shape = 'f32[1,1]{1,0:T(1,128)S(6)}', space=smem, size = 0x200, scoped, tag = 'scoped memory for siamese_forward.1']
  #allocation6 [shape = 'f32[1,1]{1,0:T(1,128)S(6)}', space=smem, size = 0x200, scoped, tag = 'scoped memory for siamese_forward.1']
  #allocation7 [shape = 's32[]', space=sflag, size = 0x4, offset = 0, fixed_abs, tag = 'sflag constant byte address 0x0 - dummy sync flag']
  #allocation8 [shape = 's32[]', space=sflag, size = 0x4, offset = 0, fixed_abs, tag = 'sflag constant byte address 0x0 - dummy sync flag']
  %s0 = inlined_call_operand.vmem [shape: f32[768,9], index: 0, kind: input, shape index: {}]
  %s1 = inlined_call_operand.vmem [shape: f32[9,256], index: 1, kind: input, shape index: {}]
  %s2 = inlined_call_operand.vmem [shape: f32[1,256], index: 2, kind: input, shape index: {}]
  %s3 = inlined_call_operand.vmem [shape: f32[1,256], index: 3, kind: input, shape index: {}]
  %s4 = inlined_call_operand.vmem [shape: f32[1,256], index: 4, kind: input, shape index: {}]
  %s5 = inlined_call_operand.vmem [shape: f32[1024,128], index: 5, kind: input, shape index: {}]
  %s6 = inlined_call_operand.vmem [shape: f32[1,128], index: 6, kind: input, shape index: {}]
  %s7 = inlined_call_operand.vmem [shape: f32[1,128], index: 7, kind: input, shape index: {}]
  %s8 = inlined_call_operand.vmem [shape: f32[1,128], index: 8, kind: input, shape index: {}]
  %s9 = inlined_call_operand.vmem [shape: f32[1408,512], index: 9, kind: input, shape index: {}]
  %s10 = inlined_call_operand.vmem [shape: f32[1,512], index: 10, kind: input, shape index: {}]
  %s11 = inlined_call_operand.vmem [shape: f32[512,256], index: 11, kind: input, shape index: {}]
  %s12 = inlined_call_operand.vmem [shape: f32[1,256], index: 12, kind: input, shape index: {}]
  %s13 = inlined_call_operand.<no memory space> [shape: f32[1,1], index: 13, kind: input, shape index: {}]
  %s14 = inlined_call_operand.<no memory space> [shape: f32[1,1], index: 14, kind: input, shape index: {}]
  %s15 = inlined_call_operand.vmem [shape: f32[2,1], index: 15, kind: output, shape index: {}]
  %s16 = sld [smem:[#allocation0]]
  $region130: #{siamese_forward.1} parent=0
    _
  %s18 = ssub.s32 1, %s16
  %s19 = scalar_select 0, %s18, %s16
  %20 = sst [smem:[#allocation5]] %s13
  %21 = sst [smem:[#allocation6]] %s14
  // Predicated region
  $region2: #{siamese_forward.1} parent=0 // pred_check
    _
  $region3: #{siamese_forward.1} parent=0 // pred_check_branch
    %23 = sbr.rel (0) target = $region5
  $region4: #{siamese_forward.1} parent=0 // pred_region
    _
  $region5: #{siamese_forward.1} parent=0 // pred_fallthru
    _
  // Predicated region
  $region6: #{siamese_forward.1} parent=0 // pred_check
    _
  $region7: #{siamese_forward.1} parent=0 // pred_check_branch
    %25 = sbr.rel (0) target = $region9
  $region8: #{siamese_forward.1} parent=0 // pred_region
    _
  $region9: #{siamese_forward.1} parent=0 // pred_fallthru
    _
  // Predicated region
  $region10: #{siamese_forward.1} parent=0 // pred_check
    _
  $region11: #{siamese_forward.1} parent=0 // pred_check_branch
    %27 = sbr.rel (0) target = $region13
  $region12: #{siamese_forward.1} parent=0 // pred_region
    _
  $region13: #{siamese_forward.1} parent=0 // pred_fallthru
    _
  // Predicated region
  $region14: #{siamese_forward.1} parent=0 // pred_check
    _
  $region15: #{siamese_forward.1} parent=0 // pred_check_branch
    %29 = sbr.rel (0) target = $region17
  $region16: #{siamese_forward.1} parent=0 // pred_region
    _
  $region17: #{siamese_forward.1} parent=0 // pred_fallthru
    _
  // Predicated region
  $region18: #{siamese_forward.1} parent=0 // pred_check
    _
  $region19: #{siamese_forward.1} parent=0 // pred_check_branch
    %31 = sbr.rel (0) target = $region21
  $region20: #{siamese_forward.1} parent=0 // pred_region
    _
  $region21: #{siamese_forward.1} parent=0 // pred_fallthru
    _
  // Predicated region
  $region22: #{siamese_forward.1} parent=0 // pred_check
    _
  $region23: #{siamese_forward.1} parent=0 // pred_check_branch
    %33 = sbr.rel (0) target = $region25
  $region24: #{siamese_forward.1} parent=0 // pred_region
    _
  $region25: #{siamese_forward.1} parent=0 // pred_fallthru
    _
  // Predicated region
  $region26: #{siamese_forward.1} parent=0 // pred_check
    _
  $region27: #{siamese_forward.1} parent=0 // pred_check_branch
    %35 = sbr.rel (0) target = $region29
  $region28: #{siamese_forward.1} parent=0 // pred_region
    _
  $region29: #{siamese_forward.1} parent=0 // pred_fallthru
    _
  // Predicated region
  $region30: #{siamese_forward.1} parent=0 // pred_check
    _
  $region31: #{siamese_forward.1} parent=0 // pred_check_branch
    %37 = sbr.rel (0) target = $region33
  $region32: #{siamese_forward.1} parent=0 // pred_region
    _
  $region33: #{siamese_forward.1} parent=0 // pred_fallthru
    _
  // Predicated region
  $region34: #{siamese_forward.1} parent=0 // pred_check
    _
  $region35: #{siamese_forward.1} parent=0 // pred_check_branch
    %39 = sbr.rel (0) target = $region37
  $region36: #{siamese_forward.1} parent=0 // pred_region
    _
  $region37: #{siamese_forward.1} parent=0 // pred_fallthru
    _
  // Predicated region
  $region38: #{siamese_forward.1} parent=0 // pred_check
    _
  $region39: #{siamese_forward.1} parent=0 // pred_check_branch
    %41 = sbr.rel (0) target = $region41
  $region40: #{siamese_forward.1} parent=0 // pred_region
    _
  $region41: #{siamese_forward.1} parent=0 // pred_fallthru
    _
  // Predicated region
  $region42: #{siamese_forward.1} parent=0 // pred_check
    _
  $region43: #{siamese_forward.1} parent=0 // pred_check_branch
    %43 = sbr.rel (0) target = $region45
  $region44: #{siamese_forward.1} parent=0 // pred_region
    _
  $region45: #{siamese_forward.1} parent=0 // pred_fallthru
    _
  // Predicated region
  $region46: #{siamese_forward.1} parent=0 // pred_check
    _
  $region47: #{siamese_forward.1} parent=0 // pred_check_branch
    %45 = sbr.rel (0) target = $region49
  $region48: #{siamese_forward.1} parent=0 // pred_region
    _
  $region49: #{siamese_forward.1} parent=0 // pred_fallthru
    _
  // Predicated region
  $region50: #{siamese_forward.1} parent=0 // pred_check
    _
  $region51: #{siamese_forward.1} parent=0 // pred_check_branch
    %47 = sbr.rel (0) target = $region53
  $region52: #{siamese_forward.1} parent=0 // pred_region
    _
  $region53: #{siamese_forward.1} parent=0 // pred_fallthru
    _
  %p49 = scmp.lt.u32.totalorder 5632, 8
  %p50 = pneg %p49
  // Predicated region
  $region54: #{siamese_forward.1} parent=0 // pred_check
    _
  $region55: #{siamese_forward.1} parent=0 // pred_check_branch
    %52 = sbr.rel (%p49) target = $region57
  $region56: #{siamese_forward.1} parent=0 // pred_region
    %s68 = sand.u32 5632, 7
    %p69 = scmp.eq.s32.totalorder %s68, 0
    // Predicated region
    $region69: #{siamese_forward.1} parent=56 // pred_check
      %p70 = pneg %p69
    $region70: #{siamese_forward.1} parent=56 // pred_check_branch
      %72 = sbr.rel (%p70) target = $region72
    $region71: #{siamese_forward.1} parent=56 // pred_region
      loop: start=0, step=1, limit=1
      $region73: #{siamese_forward.1} parent=71 // loop_pre_header
        _
      $region74: #{siamese_forward.1} parent=71 // loop_header
        %s74 = sphi 0, %s78
        %p75 = scmp.ge.s32.totalorder %s74, 1
        %s79 = sphi %s9, %s9
        %s80 = sphi [#allocation2], [#allocation2]
      $region75: #{siamese_forward.1} parent=71 // loop_header_branch
        %77 = sbr.rel (%p75) target = $region79
      $region76: #{siamese_forward.1} parent=71 // loop_body
        %v81 = vld [vmem:[%s79] sm:$0xff]
        %82 = vst [vmem:[%s80] sm:$0xff] %v81
        %v83 = vld [vmem:[%s79 + $0x8] sm:$0xff]
        %84 = vst [vmem:[%s80 + $0x8] sm:$0xff] %v83
        %v85 = vld [vmem:[%s79 + $0x10] sm:$0xff]
        %86 = vst [vmem:[%s80 + $0x10] sm:$0xff] %v85
        %v87 = vld [vmem:[%s79 + $0x18] sm:$0xff]
        %88 = vst [vmem:[%s80 + $0x18] sm:$0xff] %v87
        %v89 = vld [vmem:[%s79 + $0x20] sm:$0xff]
        %90 = vst [vmem:[%s80 + $0x20] sm:$0xff] %v89
        %v91 = vld [vmem:[%s79 + $0x28] sm:$0xff]
        %92 = vst [vmem:[%s80 + $0x28] sm:$0xff] %v91
        %v93 = vld [vmem:[%s79 + $0x30] sm:$0xff]
        %94 = vst [vmem:[%s80 + $0x30] sm:$0xff] %v93
        %v95 = vld [vmem:[%s79 + $0x38] sm:$0xff]
        %96 = vst [vmem:[%s80 + $0x38] sm:$0xff] %v95
        %v97 = vld [vmem:[%s79 + $0x40] sm:$0xff]
        %98 = vst [vmem:[%s80 + $0x40] sm:$0xff] %v97
        %v99 = vld [vmem:[%s79 + $0x48] sm:$0xff]
        %100 = vst [vmem:[%s80 + $0x48] sm:$0xff] %v99
        %v101 = vld [vmem:[%s79 + $0x50] sm:$0xff]
        %102 = vst [vmem:[%s80 + $0x50] sm:$0xff] %v101
        %v103 = vld [vmem:[%s79 + $0x58] sm:$0xff]
        %104 = vst [vmem:[%s80 + $0x58] sm:$0xff] %v103
        %v105 = vld [vmem:[%s79 + $0x60] sm:$0xff]
        %106 = vst [vmem:[%s80 + $0x60] sm:$0xff] %v105
        %v107 = vld [vmem:[%s79 + $0x68] sm:$0xff]
        %108 = vst [vmem:[%s80 + $0x68] sm:$0xff] %v107
        %v109 = vld [vmem:[%s79 + $0x70] sm:$0xff]
        %110 = vst [vmem:[%s80 + $0x70] sm:$0xff] %v109
        %v111 = vld [vmem:[%s79 + $0x78] sm:$0xff]
        %112 = vst [vmem:[%s80 + $0x78] sm:$0xff] %v111
        %v113 = vld [vmem:[%s79 + $0x80] sm:$0xff]
        %114 = vst [vmem:[%s80 + $0x80] sm:$0xff] %v113
        %v115 = vld [vmem:[%s79 + $0x88] sm:$0xff]
        %116 = vst [vmem:[%s80 + $0x88] sm:$0xff] %v115
        %v117 = vld [vmem:[%s79 + $0x90] sm:$0xff]
        %118 = vst [vmem:[%s80 + $0x90] sm:$0xff] %v117
        %v119 = vld [vmem:[%s79 + $0x98] sm:$0xff]
        %120 = vst [vmem:[%s80 + $0x98] sm:$0xff] %v119
        %v121 = vld [vmem:[%s79 + $0xa0] sm:$0xff]
        %122 = vst [vmem:[%s80 + $0xa0] sm:$0xff] %v121
        %v123 = vld [vmem:[%s79 + $0xa8] sm:$0xff]
        %124 = vst [vmem:[%s80 + $0xa8] sm:$0xff] %v123
        %v125 = vld [vmem:[%s79 + $0xb0] sm:$0xff]
        %126 = vst [vmem:[%s80 + $0xb0] sm:$0xff] %v125
        %v127 = vld [vmem:[%s79 + $0xb8] sm:$0xff]
        %128 = vst [vmem:[%s80 + $0xb8] sm:$0xff] %v127
        %v129 = vld [vmem:[%s79 + $0xc0] sm:$0xff]
        %130 = vst [vmem:[%s80 + $0xc0] sm:$0xff] %v129
        %v131 = vld [vmem:[%s79 + $0xc8] sm:$0xff]
        %132 = vst [vmem:[%s80 + $0xc8] sm:$0xff] %v131
        %v133 = vld [vmem:[%s79 + $0xd0] sm:$0xff]
        %134 = vst [vmem:[%s80 + $0xd0] sm:$0xff] %v133
        %v135 = vld [vmem:[%s79 + $0xd8] sm:$0xff]
        %136 = vst [vmem:[%s80 + $0xd8] sm:$0xff] %v135
        %v137 = vld [vmem:[%s79 + $0xe0] sm:$0xff]
        %138 = vst [vmem:[%s80 + $0xe0] sm:$0xff] %v137
        %v139 = vld [vmem:[%s79 + $0xe8] sm:$0xff]
        %140 = vst [vmem:[%s80 + $0xe8] sm:$0xff] %v139
        %v141 = vld [vmem:[%s79 + $0xf0] sm:$0xff]
        %142 = vst [vmem:[%s80 + $0xf0] sm:$0xff] %v141
        %v143 = vld [vmem:[%s79 + $0xf8] sm:$0xff]
        %144 = vst [vmem:[%s80 + $0xf8] sm:$0xff] %v143
        %v145 = vld [vmem:[%s79 + $0x100] sm:$0xff]
        %146 = vst [vmem:[%s80 + $0x100] sm:$0xff] %v145
        %v147 = vld [vmem:[%s79 + $0x108] sm:$0xff]
        %148 = vst [vmem:[%s80 + $0x108] sm:$0xff] %v147
        %v149 = vld [vmem:[%s79 + $0x110] sm:$0xff]
        %150 = vst [vmem:[%s80 + $0x110] sm:$0xff] %v149
        %v151 = vld [vmem:[%s79 + $0x118] sm:$0xff]
        %152 = vst [vmem:[%s80 + $0x118] sm:$0xff] %v151
        %v153 = vld [vmem:[%s79 + $0x120] sm:$0xff]
        %154 = vst [vmem:[%s80 + $0x120] sm:$0xff] %v153
        %v155 = vld [vmem:[%s79 + $0x128] sm:$0xff]
        %156 = vst [vmem:[%s80 + $0x128] sm:$0xff] %v155
        %v157 = vld [vmem:[%s79 + $0x130] sm:$0xff]
        %158 = vst [vmem:[%s80 + $0x130] sm:$0xff] %v157
        %v159 = vld [vmem:[%s79 + $0x138] sm:$0xff]
        %160 = vst [vmem:[%s80 + $0x138] sm:$0xff] %v159
        %v161 = vld [vmem:[%s79 + $0x140] sm:$0xff]
        %162 = vst [vmem:[%s80 + $0x140] sm:$0xff] %v161
        %v163 = vld [vmem:[%s79 + $0x148] sm:$0xff]
        %164 = vst [vmem:[%s80 + $0x148] sm:$0xff] %v163
        %v165 = vld [vmem:[%s79 + $0x150] sm:$0xff]
        %166 = vst [vmem:[%s80 + $0x150] sm:$0xff] %v165
        %v167 = vld [vmem:[%s79 + $0x158] sm:$0xff]
        %168 = vst [vmem:[%s80 + $0x158] sm:$0xff] %v167
        %v169 = vld [vmem:[%s79 + $0x160] sm:$0xff]
        %170 = vst [vmem:[%s80 + $0x160] sm:$0xff] %v169
        %v171 = vld [vmem:[%s79 + $0x168] sm:$0xff]
        %172 = vst [vmem:[%s80 + $0x168] sm:$0xff] %v171
        %v173 = vld [vmem:[%s79 + $0x170] sm:$0xff]
        %174 = vst [vmem:[%s80 + $0x170] sm:$0xff] %v173
        %v175 = vld [vmem:[%s79 + $0x178] sm:$0xff]
        %176 = vst [vmem:[%s80 + $0x178] sm:$0xff] %v175
        %v177 = vld [vmem:[%s79 + $0x180] sm:$0xff]
        %178 = vst [vmem:[%s80 + $0x180] sm:$0xff] %v177
        %v179 = vld [vmem:[%s79 + $0x188] sm:$0xff]
        %180 = vst [vmem:[%s80 + $0x188] sm:$0xff] %v179
        %v181 = vld [vmem:[%s79 + $0x190] sm:$0xff]
        %182 = vst [vmem:[%s80 + $0x190] sm:$0xff] %v181
        %v183 = vld [vmem:[%s79 + $0x198] sm:$0xff]
        %184 = vst [vmem:[%s80 + $0x198] sm:$0xff] %v183
        %v185 = vld [vmem:[%s79 + $0x1a0] sm:$0xff]
        %186 = vst [vmem:[%s80 + $0x1a0] sm:$0xff] %v185
        %v187 = vld [vmem:[%s79 + $0x1a8] sm:$0xff]
        %188 = vst [vmem:[%s80 + $0x1a8] sm:$0xff] %v187
        %v189 = vld [vmem:[%s79 + $0x1b0] sm:$0xff]
        %190 = vst [vmem:[%s80 + $0x1b0] sm:$0xff] %v189
        %v191 = vld [vmem:[%s79 + $0x1b8] sm:$0xff]
        %192 = vst [vmem:[%s80 + $0x1b8] sm:$0xff] %v191
        %v193 = vld [vmem:[%s79 + $0x1c0] sm:$0xff]
        %194 = vst [vmem:[%s80 + $0x1c0] sm:$0xff] %v193
        %v195 = vld [vmem:[%s79 + $0x1c8] sm:$0xff]
        %196 = vst [vmem:[%s80 + $0x1c8] sm:$0xff] %v195
        %v197 = vld [vmem:[%s79 + $0x1d0] sm:$0xff]
        %198 = vst [vmem:[%s80 + $0x1d0] sm:$0xff] %v197
        %v199 = vld [vmem:[%s79 + $0x1d8] sm:$0xff]
        %200 = vst [vmem:[%s80 + $0x1d8] sm:$0xff] %v199
        %v201 = vld [vmem:[%s79 + $0x1e0] sm:$0xff]
        %202 = vst [vmem:[%s80 + $0x1e0] sm:$0xff] %v201
        %v203 = vld [vmem:[%s79 + $0x1e8] sm:$0xff]
        %204 = vst [vmem:[%s80 + $0x1e8] sm:$0xff] %v203
        %v205 = vld [vmem:[%s79 + $0x1f0] sm:$0xff]
        %206 = vst [vmem:[%s80 + $0x1f0] sm:$0xff] %v205
        %v207 = vld [vmem:[%s79 + $0x1f8] sm:$0xff]
        %208 = vst [vmem:[%s80 + $0x1f8] sm:$0xff] %v207
        %v209 = vld [vmem:[%s79 + $0x200] sm:$0xff]
        %210 = vst [vmem:[%s80 + $0x200] sm:$0xff] %v209
        %v211 = vld [vmem:[%s79 + $0x208] sm:$0xff]
        %212 = vst [vmem:[%s80 + $0x208] sm:$0xff] %v211
        %v213 = vld [vmem:[%s79 + $0x210] sm:$0xff]
        %214 = vst [vmem:[%s80 + $0x210] sm:$0xff] %v213
        %v215 = vld [vmem:[%s79 + $0x218] sm:$0xff]
        %216 = vst [vmem:[%s80 + $0x218] sm:$0xff] %v215
        %v217 = vld [vmem:[%s79 + $0x220] sm:$0xff]
        %218 = vst [vmem:[%s80 + $0x220] sm:$0xff] %v217
        %v219 = vld [vmem:[%s79 + $0x228] sm:$0xff]
        %220 = vst [vmem:[%s80 + $0x228] sm:$0xff] %v219
        %v221 = vld [vmem:[%s79 + $0x230] sm:$0xff]
        %222 = vst [vmem:[%s80 + $0x230] sm:$0xff] %v221
        %v223 = vld [vmem:[%s79 + $0x238] sm:$0xff]
        %224 = vst [vmem:[%s80 + $0x238] sm:$0xff] %v223
        %v225 = vld [vmem:[%s79 + $0x240] sm:$0xff]
        %226 = vst [vmem:[%s80 + $0x240] sm:$0xff] %v225
        %v227 = vld [vmem:[%s79 + $0x248] sm:$0xff]
        %228 = vst [vmem:[%s80 + $0x248] sm:$0xff] %v227
        %v229 = vld [vmem:[%s79 + $0x250] sm:$0xff]
        %230 = vst [vmem:[%s80 + $0x250] sm:$0xff] %v229
        %v231 = vld [vmem:[%s79 + $0x258] sm:$0xff]
        %232 = vst [vmem:[%s80 + $0x258] sm:$0xff] %v231
        %v233 = vld [vmem:[%s79 + $0x260] sm:$0xff]
        %234 = vst [vmem:[%s80 + $0x260] sm:$0xff] %v233
        %v235 = vld [vmem:[%s79 + $0x268] sm:$0xff]
        %236 = vst [vmem:[%s80 + $0x268] sm:$0xff] %v235
        %v237 = vld [vmem:[%s79 + $0x270] sm:$0xff]
        %238 = vst [vmem:[%s80 + $0x270] sm:$0xff] %v237
        %v239 = vld [vmem:[%s79 + $0x278] sm:$0xff]
        %240 = vst [vmem:[%s80 + $0x278] sm:$0xff] %v239
        %v241 = vld [vmem:[%s79 + $0x280] sm:$0xff]
        %242 = vst [vmem:[%s80 + $0x280] sm:$0xff] %v241
        %v243 = vld [vmem:[%s79 + $0x288] sm:$0xff]
        %244 = vst [vmem:[%s80 + $0x288] sm:$0xff] %v243
        %v245 = vld [vmem:[%s79 + $0x290] sm:$0xff]
        %246 = vst [vmem:[%s80 + $0x290] sm:$0xff] %v245
        %v247 = vld [vmem:[%s79 + $0x298] sm:$0xff]
        %248 = vst [vmem:[%s80 + $0x298] sm:$0xff] %v247
        %v249 = vld [vmem:[%s79 + $0x2a0] sm:$0xff]
        %250 = vst [vmem:[%s80 + $0x2a0] sm:$0xff] %v249
        %v251 = vld [vmem:[%s79 + $0x2a8] sm:$0xff]
        %252 = vst [vmem:[%s80 + $0x2a8] sm:$0xff] %v251
        %v253 = vld [vmem:[%s79 + $0x2b0] sm:$0xff]
        %254 = vst [vmem:[%s80 + $0x2b0] sm:$0xff] %v253
        %v255 = vld [vmem:[%s79 + $0x2b8] sm:$0xff]
        %256 = vst [vmem:[%s80 + $0x2b8] sm:$0xff] %v255
        %v257 = vld [vmem:[%s79 + $0x2c0] sm:$0xff]
        %258 = vst [vmem:[%s80 + $0x2c0] sm:$0xff] %v257
        %v259 = vld [vmem:[%s79 + $0x2c8] sm:$0xff]
        %260 = vst [vmem:[%s80 + $0x2c8] sm:$0xff] %v259
        %v261 = vld [vmem:[%s79 + $0x2d0] sm:$0xff]
        %262 = vst [vmem:[%s80 + $0x2d0] sm:$0xff] %v261
        %v263 = vld [vmem:[%s79 + $0x2d8] sm:$0xff]
        %264 = vst [vmem:[%s80 + $0x2d8] sm:$0xff] %v263
        %v265 = vld [vmem:[%s79 + $0x2e0] sm:$0xff]
        %266 = vst [vmem:[%s80 + $0x2e0] sm:$0xff] %v265
        %v267 = vld [vmem:[%s79 + $0x2e8] sm:$0xff]
        %268 = vst [vmem:[%s80 + $0x2e8] sm:$0xff] %v267
        %v269 = vld [vmem:[%s79 + $0x2f0] sm:$0xff]
        %270 = vst [vmem:[%s80 + $0x2f0] sm:$0xff] %v269
        %v271 = vld [vmem:[%s79 + $0x2f8] sm:$0xff]
        %272 = vst [vmem:[%s80 + $0x2f8] sm:$0xff] %v271
        %v273 = vld [vmem:[%s79 + $0x300] sm:$0xff]
        %274 = vst [vmem:[%s80 + $0x300] sm:$0xff] %v273
        %v275 = vld [vmem:[%s79 + $0x308] sm:$0xff]
        %276 = vst [vmem:[%s80 + $0x308] sm:$0xff] %v275
        %v277 = vld [vmem:[%s79 + $0x310] sm:$0xff]
        %278 = vst [vmem:[%s80 + $0x310] sm:$0xff] %v277
        %v279 = vld [vmem:[%s79 + $0x318] sm:$0xff]
        %280 = vst [vmem:[%s80 + $0x318] sm:$0xff] %v279
        %v281 = vld [vmem:[%s79 + $0x320] sm:$0xff]
        %282 = vst [vmem:[%s80 + $0x320] sm:$0xff] %v281
        %v283 = vld [vmem:[%s79 + $0x328] sm:$0xff]
        %284 = vst [vmem:[%s80 + $0x328] sm:$0xff] %v283
        %v285 = vld [vmem:[%s79 + $0x330] sm:$0xff]
        %286 = vst [vmem:[%s80 + $0x330] sm:$0xff] %v285
        %v287 = vld [vmem:[%s79 + $0x338] sm:$0xff]
        %288 = vst [vmem:[%s80 + $0x338] sm:$0xff] %v287
        %v289 = vld [vmem:[%s79 + $0x340] sm:$0xff]
        %290 = vst [vmem:[%s80 + $0x340] sm:$0xff] %v289
        %v291 = vld [vmem:[%s79 + $0x348] sm:$0xff]
        %292 = vst [vmem:[%s80 + $0x348] sm:$0xff] %v291
        %v293 = vld [vmem:[%s79 + $0x350] sm:$0xff]
        %294 = vst [vmem:[%s80 + $0x350] sm:$0xff] %v293
        %v295 = vld [vmem:[%s79 + $0x358] sm:$0xff]
        %296 = vst [vmem:[%s80 + $0x358] sm:$0xff] %v295
        %v297 = vld [vmem:[%s79 + $0x360] sm:$0xff]
        %298 = vst [vmem:[%s80 + $0x360] sm:$0xff] %v297
        %v299 = vld [vmem:[%s79 + $0x368] sm:$0xff]
        %300 = vst [vmem:[%s80 + $0x368] sm:$0xff] %v299
        %v301 = vld [vmem:[%s79 + $0x370] sm:$0xff]
        %302 = vst [vmem:[%s80 + $0x370] sm:$0xff] %v301
        %v303 = vld [vmem:[%s79 + $0x378] sm:$0xff]
        %304 = vst [vmem:[%s80 + $0x378] sm:$0xff] %v303
        %v305 = vld [vmem:[%s79 + $0x380] sm:$0xff]
        %306 = vst [vmem:[%s80 + $0x380] sm:$0xff] %v305
        %v307 = vld [vmem:[%s79 + $0x388] sm:$0xff]
        %308 = vst [vmem:[%s80 + $0x388] sm:$0xff] %v307
        %v309 = vld [vmem:[%s79 + $0x390] sm:$0xff]
        %310 = vst [vmem:[%s80 + $0x390] sm:$0xff] %v309
        %v311 = vld [vmem:[%s79 + $0x398] sm:$0xff]
        %312 = vst [vmem:[%s80 + $0x398] sm:$0xff] %v311
        %v313 = vld [vmem:[%s79 + $0x3a0] sm:$0xff]
        %314 = vst [vmem:[%s80 + $0x3a0] sm:$0xff] %v313
        %v315 = vld [vmem:[%s79 + $0x3a8] sm:$0xff]
        %316 = vst [vmem:[%s80 + $0x3a8] sm:$0xff] %v315
        %v317 = vld [vmem:[%s79 + $0x3b0] sm:$0xff]
        %318 = vst [vmem:[%s80 + $0x3b0] sm:$0xff] %v317
        %v319 = vld [vmem:[%s79 + $0x3b8] sm:$0xff]
        %320 = vst [vmem:[%s80 + $0x3b8] sm:$0xff] %v319
        %v321 = vld [vmem:[%s79 + $0x3c0] sm:$0xff]
        %322 = vst [vmem:[%s80 + $0x3c0] sm:$0xff] %v321
        %v323 = vld [vmem:[%s79 + $0x3c8] sm:$0xff]
        %324 = vst [vmem:[%s80 + $0x3c8] sm:$0xff] %v323
        %v325 = vld [vmem:[%s79 + $0x3d0] sm:$0xff]
        %326 = vst [vmem:[%s80 + $0x3d0] sm:$0xff] %v325
        %v327 = vld [vmem:[%s79 + $0x3d8] sm:$0xff]
        %328 = vst [vmem:[%s80 + $0x3d8] sm:$0xff] %v327
        %v329 = vld [vmem:[%s79 + $0x3e0] sm:$0xff]
        %330 = vst [vmem:[%s80 + $0x3e0] sm:$0xff] %v329
        %v331 = vld [vmem:[%s79 + $0x3e8] sm:$0xff]
        %332 = vst [vmem:[%s80 + $0x3e8] sm:$0xff] %v331
        %v333 = vld [vmem:[%s79 + $0x3f0] sm:$0xff]
        %334 = vst [vmem:[%s80 + $0x3f0] sm:$0xff] %v333
        %v335 = vld [vmem:[%s79 + $0x3f8] sm:$0xff]
        %336 = vst [vmem:[%s80 + $0x3f8] sm:$0xff] %v335
        %v337 = vld [vmem:[%s79 + $0x400] sm:$0xff]
        %338 = vst [vmem:[%s80 + $0x400] sm:$0xff] %v337
        %v339 = vld [vmem:[%s79 + $0x408] sm:$0xff]
        %340 = vst [vmem:[%s80 + $0x408] sm:$0xff] %v339
        %v341 = vld [vmem:[%s79 + $0x410] sm:$0xff]
        %342 = vst [vmem:[%s80 + $0x410] sm:$0xff] %v341
        %v343 = vld [vmem:[%s79 + $0x418] sm:$0xff]
        %344 = vst [vmem:[%s80 + $0x418] sm:$0xff] %v343
        %v345 = vld [vmem:[%s79 + $0x420] sm:$0xff]
        %346 = vst [vmem:[%s80 + $0x420] sm:$0xff] %v345
        %v347 = vld [vmem:[%s79 + $0x428] sm:$0xff]
        %348 = vst [vmem:[%s80 + $0x428] sm:$0xff] %v347
        %v349 = vld [vmem:[%s79 + $0x430] sm:$0xff]
        %350 = vst [vmem:[%s80 + $0x430] sm:$0xff] %v349
        %v351 = vld [vmem:[%s79 + $0x438] sm:$0xff]
        %352 = vst [vmem:[%s80 + $0x438] sm:$0xff] %v351
        %v353 = vld [vmem:[%s79 + $0x440] sm:$0xff]
        %354 = vst [vmem:[%s80 + $0x440] sm:$0xff] %v353
        %v355 = vld [vmem:[%s79 + $0x448] sm:$0xff]
        %356 = vst [vmem:[%s80 + $0x448] sm:$0xff] %v355
        %v357 = vld [vmem:[%s79 + $0x450] sm:$0xff]
        %358 = vst [vmem:[%s80 + $0x450] sm:$0xff] %v357
        %v359 = vld [vmem:[%s79 + $0x458] sm:$0xff]
        %360 = vst [vmem:[%s80 + $0x458] sm:$0xff] %v359
        %v361 = vld [vmem:[%s79 + $0x460] sm:$0xff]
        %362 = vst [vmem:[%s80 + $0x460] sm:$0xff] %v361
        %v363 = vld [vmem:[%s79 + $0x468] sm:$0xff]
        %364 = vst [vmem:[%s80 + $0x468] sm:$0xff] %v363
        %v365 = vld [vmem:[%s79 + $0x470] sm:$0xff]
        %366 = vst [vmem:[%s80 + $0x470] sm:$0xff] %v365
        %v367 = vld [vmem:[%s79 + $0x478] sm:$0xff]
        %368 = vst [vmem:[%s80 + $0x478] sm:$0xff] %v367
        %v369 = vld [vmem:[%s79 + $0x480] sm:$0xff]
        %370 = vst [vmem:[%s80 + $0x480] sm:$0xff] %v369
        %v371 = vld [vmem:[%s79 + $0x488] sm:$0xff]
        %372 = vst [vmem:[%s80 + $0x488] sm:$0xff] %v371
        %v373 = vld [vmem:[%s79 + $0x490] sm:$0xff]
        %374 = vst [vmem:[%s80 + $0x490] sm:$0xff] %v373
        %v375 = vld [vmem:[%s79 + $0x498] sm:$0xff]
        %376 = vst [vmem:[%s80 + $0x498] sm:$0xff] %v375
        %v377 = vld [vmem:[%s79 + $0x4a0] sm:$0xff]
        %378 = vst [vmem:[%s80 + $0x4a0] sm:$0xff] %v377
        %v379 = vld [vmem:[%s79 + $0x4a8] sm:$0xff]
        %380 = vst [vmem:[%s80 + $0x4a8] sm:$0xff] %v379
        %v381 = vld [vmem:[%s79 + $0x4b0] sm:$0xff]
        %382 = vst [vmem:[%s80 + $0x4b0] sm:$0xff] %v381
        %v383 = vld [vmem:[%s79 + $0x4b8] sm:$0xff]
        %384 = vst [vmem:[%s80 + $0x4b8] sm:$0xff] %v383
        %v385 = vld [vmem:[%s79 + $0x4c0] sm:$0xff]
        %386 = vst [vmem:[%s80 + $0x4c0] sm:$0xff] %v385
        %v387 = vld [vmem:[%s79 + $0x4c8] sm:$0xff]
        %388 = vst [vmem:[%s80 + $0x4c8] sm:$0xff] %v387
        %v389 = vld [vmem:[%s79 + $0x4d0] sm:$0xff]
        %390 = vst [vmem:[%s80 + $0x4d0] sm:$0xff] %v389
        %v391 = vld [vmem:[%s79 + $0x4d8] sm:$0xff]
        %392 = vst [vmem:[%s80 + $0x4d8] sm:$0xff] %v391
        %v393 = vld [vmem:[%s79 + $0x4e0] sm:$0xff]
        %394 = vst [vmem:[%s80 + $0x4e0] sm:$0xff] %v393
        %v395 = vld [vmem:[%s79 + $0x4e8] sm:$0xff]
        %396 = vst [vmem:[%s80 + $0x4e8] sm:$0xff] %v395
        %v397 = vld [vmem:[%s79 + $0x4f0] sm:$0xff]
        %398 = vst [vmem:[%s80 + $0x4f0] sm:$0xff] %v397
        %v399 = vld [vmem:[%s79 + $0x4f8] sm:$0xff]
        %400 = vst [vmem:[%s80 + $0x4f8] sm:$0xff] %v399
        %v401 = vld [vmem:[%s79 + $0x500] sm:$0xff]
        %402 = vst [vmem:[%s80 + $0x500] sm:$0xff] %v401
        %v403 = vld [vmem:[%s79 + $0x508] sm:$0xff]
        %404 = vst [vmem:[%s80 + $0x508] sm:$0xff] %v403
        %v405 = vld [vmem:[%s79 + $0x510] sm:$0xff]
        %406 = vst [vmem:[%s80 + $0x510] sm:$0xff] %v405
        %v407 = vld [vmem:[%s79 + $0x518] sm:$0xff]
        %408 = vst [vmem:[%s80 + $0x518] sm:$0xff] %v407
        %v409 = vld [vmem:[%s79 + $0x520] sm:$0xff]
        %410 = vst [vmem:[%s80 + $0x520] sm:$0xff] %v409
        %v411 = vld [vmem:[%s79 + $0x528] sm:$0xff]
        %412 = vst [vmem:[%s80 + $0x528] sm:$0xff] %v411
        %v413 = vld [vmem:[%s79 + $0x530] sm:$0xff]
        %414 = vst [vmem:[%s80 + $0x530] sm:$0xff] %v413
        %v415 = vld [vmem:[%s79 + $0x538] sm:$0xff]
        %416 = vst [vmem:[%s80 + $0x538] sm:$0xff] %v415
        %v417 = vld [vmem:[%s79 + $0x540] sm:$0xff]
        %418 = vst [vmem:[%s80 + $0x540] sm:$0xff] %v417
        %v419 = vld [vmem:[%s79 + $0x548] sm:$0xff]
        %420 = vst [vmem:[%s80 + $0x548] sm:$0xff] %v419
        %v421 = vld [vmem:[%s79 + $0x550] sm:$0xff]
        %422 = vst [vmem:[%s80 + $0x550] sm:$0xff] %v421
        %v423 = vld [vmem:[%s79 + $0x558] sm:$0xff]
        %424 = vst [vmem:[%s80 + $0x558] sm:$0xff] %v423
        %v425 = vld [vmem:[%s79 + $0x560] sm:$0xff]
        %426 = vst [vmem:[%s80 + $0x560] sm:$0xff] %v425
        %v427 = vld [vmem:[%s79 + $0x568] sm:$0xff]
        %428 = vst [vmem:[%s80 + $0x568] sm:$0xff] %v427
        %v429 = vld [vmem:[%s79 + $0x570] sm:$0xff]
        %430 = vst [vmem:[%s80 + $0x570] sm:$0xff] %v429
        %v431 = vld [vmem:[%s79 + $0x578] sm:$0xff]
        %432 = vst [vmem:[%s80 + $0x578] sm:$0xff] %v431
        %v433 = vld [vmem:[%s79 + $0x580] sm:$0xff]
        %434 = vst [vmem:[%s80 + $0x580] sm:$0xff] %v433
        %v435 = vld [vmem:[%s79 + $0x588] sm:$0xff]
        %436 = vst [vmem:[%s80 + $0x588] sm:$0xff] %v435
        %v437 = vld [vmem:[%s79 + $0x590] sm:$0xff]
        %438 = vst [vmem:[%s80 + $0x590] sm:$0xff] %v437
        %v439 = vld [vmem:[%s79 + $0x598] sm:$0xff]
        %440 = vst [vmem:[%s80 + $0x598] sm:$0xff] %v439
        %v441 = vld [vmem:[%s79 + $0x5a0] sm:$0xff]
        %442 = vst [vmem:[%s80 + $0x5a0] sm:$0xff] %v441
        %v443 = vld [vmem:[%s79 + $0x5a8] sm:$0xff]
        %444 = vst [vmem:[%s80 + $0x5a8] sm:$0xff] %v443
        %v445 = vld [vmem:[%s79 + $0x5b0] sm:$0xff]
        %446 = vst [vmem:[%s80 + $0x5b0] sm:$0xff] %v445
        %v447 = vld [vmem:[%s79 + $0x5b8] sm:$0xff]
        %448 = vst [vmem:[%s80 + $0x5b8] sm:$0xff] %v447
        %v449 = vld [vmem:[%s79 + $0x5c0] sm:$0xff]
        %450 = vst [vmem:[%s80 + $0x5c0] sm:$0xff] %v449
        %v451 = vld [vmem:[%s79 + $0x5c8] sm:$0xff]
        %452 = vst [vmem:[%s80 + $0x5c8] sm:$0xff] %v451
        %v453 = vld [vmem:[%s79 + $0x5d0] sm:$0xff]
        %454 = vst [vmem:[%s80 + $0x5d0] sm:$0xff] %v453
        %v455 = vld [vmem:[%s79 + $0x5d8] sm:$0xff]
        %456 = vst [vmem:[%s80 + $0x5d8] sm:$0xff] %v455
        %v457 = vld [vmem:[%s79 + $0x5e0] sm:$0xff]
        %458 = vst [vmem:[%s80 + $0x5e0] sm:$0xff] %v457
        %v459 = vld [vmem:[%s79 + $0x5e8] sm:$0xff]
        %460 = vst [vmem:[%s80 + $0x5e8] sm:$0xff] %v459
        %v461 = vld [vmem:[%s79 + $0x5f0] sm:$0xff]
        %462 = vst [vmem:[%s80 + $0x5f0] sm:$0xff] %v461
        %v463 = vld [vmem:[%s79 + $0x5f8] sm:$0xff]
        %464 = vst [vmem:[%s80 + $0x5f8] sm:$0xff] %v463
        %v465 = vld [vmem:[%s79 + $0x600] sm:$0xff]
        %466 = vst [vmem:[%s80 + $0x600] sm:$0xff] %v465
        %v467 = vld [vmem:[%s79 + $0x608] sm:$0xff]
        %468 = vst [vmem:[%s80 + $0x608] sm:$0xff] %v467
        %v469 = vld [vmem:[%s79 + $0x610] sm:$0xff]
        %470 = vst [vmem:[%s80 + $0x610] sm:$0xff] %v469
        %v471 = vld [vmem:[%s79 + $0x618] sm:$0xff]
        %472 = vst [vmem:[%s80 + $0x618] sm:$0xff] %v471
        %v473 = vld [vmem:[%s79 + $0x620] sm:$0xff]
        %474 = vst [vmem:[%s80 + $0x620] sm:$0xff] %v473
        %v475 = vld [vmem:[%s79 + $0x628] sm:$0xff]
        %476 = vst [vmem:[%s80 + $0x628] sm:$0xff] %v475
        %v477 = vld [vmem:[%s79 + $0x630] sm:$0xff]
        %478 = vst [vmem:[%s80 + $0x630] sm:$0xff] %v477
        %v479 = vld [vmem:[%s79 + $0x638] sm:$0xff]
        %480 = vst [vmem:[%s80 + $0x638] sm:$0xff] %v479
        %v481 = vld [vmem:[%s79 + $0x640] sm:$0xff]
        %482 = vst [vmem:[%s80 + $0x640] sm:$0xff] %v481
        %v483 = vld [vmem:[%s79 + $0x648] sm:$0xff]
        %484 = vst [vmem:[%s80 + $0x648] sm:$0xff] %v483
        %v485 = vld [vmem:[%s79 + $0x650] sm:$0xff]
        %486 = vst [vmem:[%s80 + $0x650] sm:$0xff] %v485
        %v487 = vld [vmem:[%s79 + $0x658] sm:$0xff]
        %488 = vst [vmem:[%s80 + $0x658] sm:$0xff] %v487
        %v489 = vld [vmem:[%s79 + $0x660] sm:$0xff]
        %490 = vst [vmem:[%s80 + $0x660] sm:$0xff] %v489
        %v491 = vld [vmem:[%s79 + $0x668] sm:$0xff]
        %492 = vst [vmem:[%s80 + $0x668] sm:$0xff] %v491
        %v493 = vld [vmem:[%s79 + $0x670] sm:$0xff]
        %494 = vst [vmem:[%s80 + $0x670] sm:$0xff] %v493
        %v495 = vld [vmem:[%s79 + $0x678] sm:$0xff]
        %496 = vst [vmem:[%s80 + $0x678] sm:$0xff] %v495
        %v497 = vld [vmem:[%s79 + $0x680] sm:$0xff]
        %498 = vst [vmem:[%s80 + $0x680] sm:$0xff] %v497
        %v499 = vld [vmem:[%s79 + $0x688] sm:$0xff]
        %500 = vst [vmem:[%s80 + $0x688] sm:$0xff] %v499
        %v501 = vld [vmem:[%s79 + $0x690] sm:$0xff]
        %502 = vst [vmem:[%s80 + $0x690] sm:$0xff] %v501
        %v503 = vld [vmem:[%s79 + $0x698] sm:$0xff]
        %504 = vst [vmem:[%s80 + $0x698] sm:$0xff] %v503
        %v505 = vld [vmem:[%s79 + $0x6a0] sm:$0xff]
        %506 = vst [vmem:[%s80 + $0x6a0] sm:$0xff] %v505
        %v507 = vld [vmem:[%s79 + $0x6a8] sm:$0xff]
        %508 = vst [vmem:[%s80 + $0x6a8] sm:$0xff] %v507
        %v509 = vld [vmem:[%s79 + $0x6b0] sm:$0xff]
        %510 = vst [vmem:[%s80 + $0x6b0] sm:$0xff] %v509
        %v511 = vld [vmem:[%s79 + $0x6b8] sm:$0xff]
        %512 = vst [vmem:[%s80 + $0x6b8] sm:$0xff] %v511
        %v513 = vld [vmem:[%s79 + $0x6c0] sm:$0xff]
        %514 = vst [vmem:[%s80 + $0x6c0] sm:$0xff] %v513
        %v515 = vld [vmem:[%s79 + $0x6c8] sm:$0xff]
        %516 = vst [vmem:[%s80 + $0x6c8] sm:$0xff] %v515
        %v517 = vld [vmem:[%s79 + $0x6d0] sm:$0xff]
        %518 = vst [vmem:[%s80 + $0x6d0] sm:$0xff] %v517
        %v519 = vld [vmem:[%s79 + $0x6d8] sm:$0xff]
        %520 = vst [vmem:[%s80 + $0x6d8] sm:$0xff] %v519
        %v521 = vld [vmem:[%s79 + $0x6e0] sm:$0xff]
        %522 = vst [vmem:[%s80 + $0x6e0] sm:$0xff] %v521
        %v523 = vld [vmem:[%s79 + $0x6e8] sm:$0xff]
        %524 = vst [vmem:[%s80 + $0x6e8] sm:$0xff] %v523
        %v525 = vld [vmem:[%s79 + $0x6f0] sm:$0xff]
        %526 = vst [vmem:[%s80 + $0x6f0] sm:$0xff] %v525
        %v527 = vld [vmem:[%s79 + $0x6f8] sm:$0xff]
        %528 = vst [vmem:[%s80 + $0x6f8] sm:$0xff] %v527
        %v529 = vld [vmem:[%s79 + $0x700] sm:$0xff]
        %530 = vst [vmem:[%s80 + $0x700] sm:$0xff] %v529
        %v531 = vld [vmem:[%s79 + $0x708] sm:$0xff]
        %532 = vst [vmem:[%s80 + $0x708] sm:$0xff] %v531
        %v533 = vld [vmem:[%s79 + $0x710] sm:$0xff]
        %534 = vst [vmem:[%s80 + $0x710] sm:$0xff] %v533
        %v535 = vld [vmem:[%s79 + $0x718] sm:$0xff]
        %536 = vst [vmem:[%s80 + $0x718] sm:$0xff] %v535
        %v537 = vld [vmem:[%s79 + $0x720] sm:$0xff]
        %538 = vst [vmem:[%s80 + $0x720] sm:$0xff] %v537
        %v539 = vld [vmem:[%s79 + $0x728] sm:$0xff]
        %540 = vst [vmem:[%s80 + $0x728] sm:$0xff] %v539
        %v541 = vld [vmem:[%s79 + $0x730] sm:$0xff]
        %542 = vst [vmem:[%s80 + $0x730] sm:$0xff] %v541
        %v543 = vld [vmem:[%s79 + $0x738] sm:$0xff]
        %544 = vst [vmem:[%s80 + $0x738] sm:$0xff] %v543
        %v545 = vld [vmem:[%s79 + $0x740] sm:$0xff]
        %546 = vst [vmem:[%s80 + $0x740] sm:$0xff] %v545
        %v547 = vld [vmem:[%s79 + $0x748] sm:$0xff]
        %548 = vst [vmem:[%s80 + $0x748] sm:$0xff] %v547
        %v549 = vld [vmem:[%s79 + $0x750] sm:$0xff]
        %550 = vst [vmem:[%s80 + $0x750] sm:$0xff] %v549
        %v551 = vld [vmem:[%s79 + $0x758] sm:$0xff]
        %552 = vst [vmem:[%s80 + $0x758] sm:$0xff] %v551
        %v553 = vld [vmem:[%s79 + $0x760] sm:$0xff]
        %554 = vst [vmem:[%s80 + $0x760] sm:$0xff] %v553
        %v555 = vld [vmem:[%s79 + $0x768] sm:$0xff]
        %556 = vst [vmem:[%s80 + $0x768] sm:$0xff] %v555
        %v557 = vld [vmem:[%s79 + $0x770] sm:$0xff]
        %558 = vst [vmem:[%s80 + $0x770] sm:$0xff] %v557
        %v559 = vld [vmem:[%s79 + $0x778] sm:$0xff]
        %560 = vst [vmem:[%s80 + $0x778] sm:$0xff] %v559
        %v561 = vld [vmem:[%s79 + $0x780] sm:$0xff]
        %562 = vst [vmem:[%s80 + $0x780] sm:$0xff] %v561
        %v563 = vld [vmem:[%s79 + $0x788] sm:$0xff]
        %564 = vst [vmem:[%s80 + $0x788] sm:$0xff] %v563
        %v565 = vld [vmem:[%s79 + $0x790] sm:$0xff]
        %566 = vst [vmem:[%s80 + $0x790] sm:$0xff] %v565
        %v567 = vld [vmem:[%s79 + $0x798] sm:$0xff]
        %568 = vst [vmem:[%s80 + $0x798] sm:$0xff] %v567
        %v569 = vld [vmem:[%s79 + $0x7a0] sm:$0xff]
        %570 = vst [vmem:[%s80 + $0x7a0] sm:$0xff] %v569
        %v571 = vld [vmem:[%s79 + $0x7a8] sm:$0xff]
        %572 = vst [vmem:[%s80 + $0x7a8] sm:$0xff] %v571
        %v573 = vld [vmem:[%s79 + $0x7b0] sm:$0xff]
        %574 = vst [vmem:[%s80 + $0x7b0] sm:$0xff] %v573
        %v575 = vld [vmem:[%s79 + $0x7b8] sm:$0xff]
        %576 = vst [vmem:[%s80 + $0x7b8] sm:$0xff] %v575
        %v577 = vld [vmem:[%s79 + $0x7c0] sm:$0xff]
        %578 = vst [vmem:[%s80 + $0x7c0] sm:$0xff] %v577
        %v579 = vld [vmem:[%s79 + $0x7c8] sm:$0xff]
        %580 = vst [vmem:[%s80 + $0x7c8] sm:$0xff] %v579
        %v581 = vld [vmem:[%s79 + $0x7d0] sm:$0xff]
        %582 = vst [vmem:[%s80 + $0x7d0] sm:$0xff] %v581
        %v583 = vld [vmem:[%s79 + $0x7d8] sm:$0xff]
        %584 = vst [vmem:[%s80 + $0x7d8] sm:$0xff] %v583
        %v585 = vld [vmem:[%s79 + $0x7e0] sm:$0xff]
        %586 = vst [vmem:[%s80 + $0x7e0] sm:$0xff] %v585
        %v587 = vld [vmem:[%s79 + $0x7e8] sm:$0xff]
        %588 = vst [vmem:[%s80 + $0x7e8] sm:$0xff] %v587
        %v589 = vld [vmem:[%s79 + $0x7f0] sm:$0xff]
        %590 = vst [vmem:[%s80 + $0x7f0] sm:$0xff] %v589
        %v591 = vld [vmem:[%s79 + $0x7f8] sm:$0xff]
        %592 = vst [vmem:[%s80 + $0x7f8] sm:$0xff] %v591
        %v593 = vld [vmem:[%s79 + $0x800] sm:$0xff]
        %594 = vst [vmem:[%s80 + $0x800] sm:$0xff] %v593
        %v595 = vld [vmem:[%s79 + $0x808] sm:$0xff]
        %596 = vst [vmem:[%s80 + $0x808] sm:$0xff] %v595
        %v597 = vld [vmem:[%s79 + $0x810] sm:$0xff]
        %598 = vst [vmem:[%s80 + $0x810] sm:$0xff] %v597
        %v599 = vld [vmem:[%s79 + $0x818] sm:$0xff]
        %600 = vst [vmem:[%s80 + $0x818] sm:$0xff] %v599
        %v601 = vld [vmem:[%s79 + $0x820] sm:$0xff]
        %602 = vst [vmem:[%s80 + $0x820] sm:$0xff] %v601
        %v603 = vld [vmem:[%s79 + $0x828] sm:$0xff]
        %604 = vst [vmem:[%s80 + $0x828] sm:$0xff] %v603
        %v605 = vld [vmem:[%s79 + $0x830] sm:$0xff]
        %606 = vst [vmem:[%s80 + $0x830] sm:$0xff] %v605
        %v607 = vld [vmem:[%s79 + $0x838] sm:$0xff]
        %608 = vst [vmem:[%s80 + $0x838] sm:$0xff] %v607
        %v609 = vld [vmem:[%s79 + $0x840] sm:$0xff]
        %610 = vst [vmem:[%s80 + $0x840] sm:$0xff] %v609
        %v611 = vld [vmem:[%s79 + $0x848] sm:$0xff]
        %612 = vst [vmem:[%s80 + $0x848] sm:$0xff] %v611
        %v613 = vld [vmem:[%s79 + $0x850] sm:$0xff]
        %614 = vst [vmem:[%s80 + $0x850] sm:$0xff] %v613
        %v615 = vld [vmem:[%s79 + $0x858] sm:$0xff]
        %616 = vst [vmem:[%s80 + $0x858] sm:$0xff] %v615
        %v617 = vld [vmem:[%s79 + $0x860] sm:$0xff]
        %618 = vst [vmem:[%s80 + $0x860] sm:$0xff] %v617
        %v619 = vld [vmem:[%s79 + $0x868] sm:$0xff]
        %620 = vst [vmem:[%s80 + $0x868] sm:$0xff] %v619
        %v621 = vld [vmem:[%s79 + $0x870] sm:$0xff]
        %622 = vst [vmem:[%s80 + $0x870] sm:$0xff] %v621
        %v623 = vld [vmem:[%s79 + $0x878] sm:$0xff]
        %624 = vst [vmem:[%s80 + $0x878] sm:$0xff] %v623
        %v625 = vld [vmem:[%s79 + $0x880] sm:$0xff]
        %626 = vst [vmem:[%s80 + $0x880] sm:$0xff] %v625
        %v627 = vld [vmem:[%s79 + $0x888] sm:$0xff]
        %628 = vst [vmem:[%s80 + $0x888] sm:$0xff] %v627
        %v629 = vld [vmem:[%s79 + $0x890] sm:$0xff]
        %630 = vst [vmem:[%s80 + $0x890] sm:$0xff] %v629
        %v631 = vld [vmem:[%s79 + $0x898] sm:$0xff]
        %632 = vst [vmem:[%s80 + $0x898] sm:$0xff] %v631
        %v633 = vld [vmem:[%s79 + $0x8a0] sm:$0xff]
        %634 = vst [vmem:[%s80 + $0x8a0] sm:$0xff] %v633
        %v635 = vld [vmem:[%s79 + $0x8a8] sm:$0xff]
        %636 = vst [vmem:[%s80 + $0x8a8] sm:$0xff] %v635
        %v637 = vld [vmem:[%s79 + $0x8b0] sm:$0xff]
        %638 = vst [vmem:[%s80 + $0x8b0] sm:$0xff] %v637
        %v639 = vld [vmem:[%s79 + $0x8b8] sm:$0xff]
        %640 = vst [vmem:[%s80 + $0x8b8] sm:$0xff] %v639
        %v641 = vld [vmem:[%s79 + $0x8c0] sm:$0xff]
        %642 = vst [vmem:[%s80 + $0x8c0] sm:$0xff] %v641
        %v643 = vld [vmem:[%s79 + $0x8c8] sm:$0xff]
        %644 = vst [vmem:[%s80 + $0x8c8] sm:$0xff] %v643
        %v645 = vld [vmem:[%s79 + $0x8d0] sm:$0xff]
        %646 = vst [vmem:[%s80 + $0x8d0] sm:$0xff] %v645
        %v647 = vld [vmem:[%s79 + $0x8d8] sm:$0xff]
        %648 = vst [vmem:[%s80 + $0x8d8] sm:$0xff] %v647
        %v649 = vld [vmem:[%s79 + $0x8e0] sm:$0xff]
        %650 = vst [vmem:[%s80 + $0x8e0] sm:$0xff] %v649
        %v651 = vld [vmem:[%s79 + $0x8e8] sm:$0xff]
        %652 = vst [vmem:[%s80 + $0x8e8] sm:$0xff] %v651
        %v653 = vld [vmem:[%s79 + $0x8f0] sm:$0xff]
        %654 = vst [vmem:[%s80 + $0x8f0] sm:$0xff] %v653
        %v655 = vld [vmem:[%s79 + $0x8f8] sm:$0xff]
        %656 = vst [vmem:[%s80 + $0x8f8] sm:$0xff] %v655
        %v657 = vld [vmem:[%s79 + $0x900] sm:$0xff]
        %658 = vst [vmem:[%s80 + $0x900] sm:$0xff] %v657
        %v659 = vld [vmem:[%s79 + $0x908] sm:$0xff]
        %660 = vst [vmem:[%s80 + $0x908] sm:$0xff] %v659
        %v661 = vld [vmem:[%s79 + $0x910] sm:$0xff]
        %662 = vst [vmem:[%s80 + $0x910] sm:$0xff] %v661
        %v663 = vld [vmem:[%s79 + $0x918] sm:$0xff]
        %664 = vst [vmem:[%s80 + $0x918] sm:$0xff] %v663
        %v665 = vld [vmem:[%s79 + $0x920] sm:$0xff]
        %666 = vst [vmem:[%s80 + $0x920] sm:$0xff] %v665
        %v667 = vld [vmem:[%s79 + $0x928] sm:$0xff]
        %668 = vst [vmem:[%s80 + $0x928] sm:$0xff] %v667
        %v669 = vld [vmem:[%s79 + $0x930] sm:$0xff]
        %670 = vst [vmem:[%s80 + $0x930] sm:$0xff] %v669
        %v671 = vld [vmem:[%s79 + $0x938] sm:$0xff]
        %672 = vst [vmem:[%s80 + $0x938] sm:$0xff] %v671
        %v673 = vld [vmem:[%s79 + $0x940] sm:$0xff]
        %674 = vst [vmem:[%s80 + $0x940] sm:$0xff] %v673
        %v675 = vld [vmem:[%s79 + $0x948] sm:$0xff]
        %676 = vst [vmem:[%s80 + $0x948] sm:$0xff] %v675
        %v677 = vld [vmem:[%s79 + $0x950] sm:$0xff]
        %678 = vst [vmem:[%s80 + $0x950] sm:$0xff] %v677
        %v679 = vld [vmem:[%s79 + $0x958] sm:$0xff]
        %680 = vst [vmem:[%s80 + $0x958] sm:$0xff] %v679
        %v681 = vld [vmem:[%s79 + $0x960] sm:$0xff]
        %682 = vst [vmem:[%s80 + $0x960] sm:$0xff] %v681
        %v683 = vld [vmem:[%s79 + $0x968] sm:$0xff]
        %684 = vst [vmem:[%s80 + $0x968] sm:$0xff] %v683
        %v685 = vld [vmem:[%s79 + $0x970] sm:$0xff]
        %686 = vst [vmem:[%s80 + $0x970] sm:$0xff] %v685
        %v687 = vld [vmem:[%s79 + $0x978] sm:$0xff]
        %688 = vst [vmem:[%s80 + $0x978] sm:$0xff] %v687
        %v689 = vld [vmem:[%s79 + $0x980] sm:$0xff]
        %690 = vst [vmem:[%s80 + $0x980] sm:$0xff] %v689
        %v691 = vld [vmem:[%s79 + $0x988] sm:$0xff]
        %692 = vst [vmem:[%s80 + $0x988] sm:$0xff] %v691
        %v693 = vld [vmem:[%s79 + $0x990] sm:$0xff]
        %694 = vst [vmem:[%s80 + $0x990] sm:$0xff] %v693
        %v695 = vld [vmem:[%s79 + $0x998] sm:$0xff]
        %696 = vst [vmem:[%s80 + $0x998] sm:$0xff] %v695
        %v697 = vld [vmem:[%s79 + $0x9a0] sm:$0xff]
        %698 = vst [vmem:[%s80 + $0x9a0] sm:$0xff] %v697
        %v699 = vld [vmem:[%s79 + $0x9a8] sm:$0xff]
        %700 = vst [vmem:[%s80 + $0x9a8] sm:$0xff] %v699
        %v701 = vld [vmem:[%s79 + $0x9b0] sm:$0xff]
        %702 = vst [vmem:[%s80 + $0x9b0] sm:$0xff] %v701
        %v703 = vld [vmem:[%s79 + $0x9b8] sm:$0xff]
        %704 = vst [vmem:[%s80 + $0x9b8] sm:$0xff] %v703
        %v705 = vld [vmem:[%s79 + $0x9c0] sm:$0xff]
        %706 = vst [vmem:[%s80 + $0x9c0] sm:$0xff] %v705
        %v707 = vld [vmem:[%s79 + $0x9c8] sm:$0xff]
        %708 = vst [vmem:[%s80 + $0x9c8] sm:$0xff] %v707
        %v709 = vld [vmem:[%s79 + $0x9d0] sm:$0xff]
        %710 = vst [vmem:[%s80 + $0x9d0] sm:$0xff] %v709
        %v711 = vld [vmem:[%s79 + $0x9d8] sm:$0xff]
        %712 = vst [vmem:[%s80 + $0x9d8] sm:$0xff] %v711
        %v713 = vld [vmem:[%s79 + $0x9e0] sm:$0xff]
        %714 = vst [vmem:[%s80 + $0x9e0] sm:$0xff] %v713
        %v715 = vld [vmem:[%s79 + $0x9e8] sm:$0xff]
        %716 = vst [vmem:[%s80 + $0x9e8] sm:$0xff] %v715
        %v717 = vld [vmem:[%s79 + $0x9f0] sm:$0xff]
        %718 = vst [vmem:[%s80 + $0x9f0] sm:$0xff] %v717
        %v719 = vld [vmem:[%s79 + $0x9f8] sm:$0xff]
        %720 = vst [vmem:[%s80 + $0x9f8] sm:$0xff] %v719
        %v721 = vld [vmem:[%s79 + $0xa00] sm:$0xff]
        %722 = vst [vmem:[%s80 + $0xa00] sm:$0xff] %v721
        %v723 = vld [vmem:[%s79 + $0xa08] sm:$0xff]
        %724 = vst [vmem:[%s80 + $0xa08] sm:$0xff] %v723
        %v725 = vld [vmem:[%s79 + $0xa10] sm:$0xff]
        %726 = vst [vmem:[%s80 + $0xa10] sm:$0xff] %v725
        %v727 = vld [vmem:[%s79 + $0xa18] sm:$0xff]
        %728 = vst [vmem:[%s80 + $0xa18] sm:$0xff] %v727
        %v729 = vld [vmem:[%s79 + $0xa20] sm:$0xff]
        %730 = vst [vmem:[%s80 + $0xa20] sm:$0xff] %v729
        %v731 = vld [vmem:[%s79 + $0xa28] sm:$0xff]
        %732 = vst [vmem:[%s80 + $0xa28] sm:$0xff] %v731
        %v733 = vld [vmem:[%s79 + $0xa30] sm:$0xff]
        %734 = vst [vmem:[%s80 + $0xa30] sm:$0xff] %v733
        %v735 = vld [vmem:[%s79 + $0xa38] sm:$0xff]
        %736 = vst [vmem:[%s80 + $0xa38] sm:$0xff] %v735
        %v737 = vld [vmem:[%s79 + $0xa40] sm:$0xff]
        %738 = vst [vmem:[%s80 + $0xa40] sm:$0xff] %v737
        %v739 = vld [vmem:[%s79 + $0xa48] sm:$0xff]
        %740 = vst [vmem:[%s80 + $0xa48] sm:$0xff] %v739
        %v741 = vld [vmem:[%s79 + $0xa50] sm:$0xff]
        %742 = vst [vmem:[%s80 + $0xa50] sm:$0xff] %v741
        %v743 = vld [vmem:[%s79 + $0xa58] sm:$0xff]
        %744 = vst [vmem:[%s80 + $0xa58] sm:$0xff] %v743
        %v745 = vld [vmem:[%s79 + $0xa60] sm:$0xff]
        %746 = vst [vmem:[%s80 + $0xa60] sm:$0xff] %v745
        %v747 = vld [vmem:[%s79 + $0xa68] sm:$0xff]
        %748 = vst [vmem:[%s80 + $0xa68] sm:$0xff] %v747
        %v749 = vld [vmem:[%s79 + $0xa70] sm:$0xff]
        %750 = vst [vmem:[%s80 + $0xa70] sm:$0xff] %v749
        %v751 = vld [vmem:[%s79 + $0xa78] sm:$0xff]
        %752 = vst [vmem:[%s80 + $0xa78] sm:$0xff] %v751
        %v753 = vld [vmem:[%s79 + $0xa80] sm:$0xff]
        %754 = vst [vmem:[%s80 + $0xa80] sm:$0xff] %v753
        %v755 = vld [vmem:[%s79 + $0xa88] sm:$0xff]
        %756 = vst [vmem:[%s80 + $0xa88] sm:$0xff] %v755
        %v757 = vld [vmem:[%s79 + $0xa90] sm:$0xff]
        %758 = vst [vmem:[%s80 + $0xa90] sm:$0xff] %v757
        %v759 = vld [vmem:[%s79 + $0xa98] sm:$0xff]
        %760 = vst [vmem:[%s80 + $0xa98] sm:$0xff] %v759
        %v761 = vld [vmem:[%s79 + $0xaa0] sm:$0xff]
        %762 = vst [vmem:[%s80 + $0xaa0] sm:$0xff] %v761
        %v763 = vld [vmem:[%s79 + $0xaa8] sm:$0xff]
        %764 = vst [vmem:[%s80 + $0xaa8] sm:$0xff] %v763
        %v765 = vld [vmem:[%s79 + $0xab0] sm:$0xff]
        %766 = vst [vmem:[%s80 + $0xab0] sm:$0xff] %v765
        %v767 = vld [vmem:[%s79 + $0xab8] sm:$0xff]
        %768 = vst [vmem:[%s80 + $0xab8] sm:$0xff] %v767
        %v769 = vld [vmem:[%s79 + $0xac0] sm:$0xff]
        %770 = vst [vmem:[%s80 + $0xac0] sm:$0xff] %v769
        %v771 = vld [vmem:[%s79 + $0xac8] sm:$0xff]
        %772 = vst [vmem:[%s80 + $0xac8] sm:$0xff] %v771
        %v773 = vld [vmem:[%s79 + $0xad0] sm:$0xff]
        %774 = vst [vmem:[%s80 + $0xad0] sm:$0xff] %v773
        %v775 = vld [vmem:[%s79 + $0xad8] sm:$0xff]
        %776 = vst [vmem:[%s80 + $0xad8] sm:$0xff] %v775
        %v777 = vld [vmem:[%s79 + $0xae0] sm:$0xff]
        %778 = vst [vmem:[%s80 + $0xae0] sm:$0xff] %v777
        %v779 = vld [vmem:[%s79 + $0xae8] sm:$0xff]
        %780 = vst [vmem:[%s80 + $0xae8] sm:$0xff] %v779
        %v781 = vld [vmem:[%s79 + $0xaf0] sm:$0xff]
        %782 = vst [vmem:[%s80 + $0xaf0] sm:$0xff] %v781
        %v783 = vld [vmem:[%s79 + $0xaf8] sm:$0xff]
        %784 = vst [vmem:[%s80 + $0xaf8] sm:$0xff] %v783
        %v785 = vld [vmem:[%s79 + $0xb00] sm:$0xff]
        %786 = vst [vmem:[%s80 + $0xb00] sm:$0xff] %v785
        %v787 = vld [vmem:[%s79 + $0xb08] sm:$0xff]
        %788 = vst [vmem:[%s80 + $0xb08] sm:$0xff] %v787
        %v789 = vld [vmem:[%s79 + $0xb10] sm:$0xff]
        %790 = vst [vmem:[%s80 + $0xb10] sm:$0xff] %v789
        %v791 = vld [vmem:[%s79 + $0xb18] sm:$0xff]
        %792 = vst [vmem:[%s80 + $0xb18] sm:$0xff] %v791
        %v793 = vld [vmem:[%s79 + $0xb20] sm:$0xff]
        %794 = vst [vmem:[%s80 + $0xb20] sm:$0xff] %v793
        %v795 = vld [vmem:[%s79 + $0xb28] sm:$0xff]
        %796 = vst [vmem:[%s80 + $0xb28] sm:$0xff] %v795
        %v797 = vld [vmem:[%s79 + $0xb30] sm:$0xff]
        %798 = vst [vmem:[%s80 + $0xb30] sm:$0xff] %v797
        %v799 = vld [vmem:[%s79 + $0xb38] sm:$0xff]
        %800 = vst [vmem:[%s80 + $0xb38] sm:$0xff] %v799
        %v801 = vld [vmem:[%s79 + $0xb40] sm:$0xff]
        %802 = vst [vmem:[%s80 + $0xb40] sm:$0xff] %v801
        %v803 = vld [vmem:[%s79 + $0xb48] sm:$0xff]
        %804 = vst [vmem:[%s80 + $0xb48] sm:$0xff] %v803
        %v805 = vld [vmem:[%s79 + $0xb50] sm:$0xff]
        %806 = vst [vmem:[%s80 + $0xb50] sm:$0xff] %v805
        %v807 = vld [vmem:[%s79 + $0xb58] sm:$0xff]
        %808 = vst [vmem:[%s80 + $0xb58] sm:$0xff] %v807
        %v809 = vld [vmem:[%s79 + $0xb60] sm:$0xff]
        %810 = vst [vmem:[%s80 + $0xb60] sm:$0xff] %v809
        %v811 = vld [vmem:[%s79 + $0xb68] sm:$0xff]
        %812 = vst [vmem:[%s80 + $0xb68] sm:$0xff] %v811
        %v813 = vld [vmem:[%s79 + $0xb70] sm:$0xff]
        %814 = vst [vmem:[%s80 + $0xb70] sm:$0xff] %v813
        %v815 = vld [vmem:[%s79 + $0xb78] sm:$0xff]
        %816 = vst [vmem:[%s80 + $0xb78] sm:$0xff] %v815
        %v817 = vld [vmem:[%s79 + $0xb80] sm:$0xff]
        %818 = vst [vmem:[%s80 + $0xb80] sm:$0xff] %v817
        %v819 = vld [vmem:[%s79 + $0xb88] sm:$0xff]
        %820 = vst [vmem:[%s80 + $0xb88] sm:$0xff] %v819
        %v821 = vld [vmem:[%s79 + $0xb90] sm:$0xff]
        %822 = vst [vmem:[%s80 + $0xb90] sm:$0xff] %v821
        %v823 = vld [vmem:[%s79 + $0xb98] sm:$0xff]
        %824 = vst [vmem:[%s80 + $0xb98] sm:$0xff] %v823
        %v825 = vld [vmem:[%s79 + $0xba0] sm:$0xff]
        %826 = vst [vmem:[%s80 + $0xba0] sm:$0xff] %v825
        %v827 = vld [vmem:[%s79 + $0xba8] sm:$0xff]
        %828 = vst [vmem:[%s80 + $0xba8] sm:$0xff] %v827
        %v829 = vld [vmem:[%s79 + $0xbb0] sm:$0xff]
        %830 = vst [vmem:[%s80 + $0xbb0] sm:$0xff] %v829
        %v831 = vld [vmem:[%s79 + $0xbb8] sm:$0xff]
        %832 = vst [vmem:[%s80 + $0xbb8] sm:$0xff] %v831
        %v833 = vld [vmem:[%s79 + $0xbc0] sm:$0xff]
        %834 = vst [vmem:[%s80 + $0xbc0] sm:$0xff] %v833
        %v835 = vld [vmem:[%s79 + $0xbc8] sm:$0xff]
        %836 = vst [vmem:[%s80 + $0xbc8] sm:$0xff] %v835
        %v837 = vld [vmem:[%s79 + $0xbd0] sm:$0xff]
        %838 = vst [vmem:[%s80 + $0xbd0] sm:$0xff] %v837
        %v839 = vld [vmem:[%s79 + $0xbd8] sm:$0xff]
        %840 = vst [vmem:[%s80 + $0xbd8] sm:$0xff] %v839
        %v841 = vld [vmem:[%s79 + $0xbe0] sm:$0xff]
        %842 = vst [vmem:[%s80 + $0xbe0] sm:$0xff] %v841
        %v843 = vld [vmem:[%s79 + $0xbe8] sm:$0xff]
        %844 = vst [vmem:[%s80 + $0xbe8] sm:$0xff] %v843
        %v845 = vld [vmem:[%s79 + $0xbf0] sm:$0xff]
        %846 = vst [vmem:[%s80 + $0xbf0] sm:$0xff] %v845
        %v847 = vld [vmem:[%s79 + $0xbf8] sm:$0xff]
        %848 = vst [vmem:[%s80 + $0xbf8] sm:$0xff] %v847
        %v849 = vld [vmem:[%s79 + $0xc00] sm:$0xff]
        %850 = vst [vmem:[%s80 + $0xc00] sm:$0xff] %v849
        %v851 = vld [vmem:[%s79 + $0xc08] sm:$0xff]
        %852 = vst [vmem:[%s80 + $0xc08] sm:$0xff] %v851
        %v853 = vld [vmem:[%s79 + $0xc10] sm:$0xff]
        %854 = vst [vmem:[%s80 + $0xc10] sm:$0xff] %v853
        %v855 = vld [vmem:[%s79 + $0xc18] sm:$0xff]
        %856 = vst [vmem:[%s80 + $0xc18] sm:$0xff] %v855
        %v857 = vld [vmem:[%s79 + $0xc20] sm:$0xff]
        %858 = vst [vmem:[%s80 + $0xc20] sm:$0xff] %v857
        %v859 = vld [vmem:[%s79 + $0xc28] sm:$0xff]
        %860 = vst [vmem:[%s80 + $0xc28] sm:$0xff] %v859
        %v861 = vld [vmem:[%s79 + $0xc30] sm:$0xff]
        %862 = vst [vmem:[%s80 + $0xc30] sm:$0xff] %v861
        %v863 = vld [vmem:[%s79 + $0xc38] sm:$0xff]
        %864 = vst [vmem:[%s80 + $0xc38] sm:$0xff] %v863
        %v865 = vld [vmem:[%s79 + $0xc40] sm:$0xff]
        %866 = vst [vmem:[%s80 + $0xc40] sm:$0xff] %v865
        %v867 = vld [vmem:[%s79 + $0xc48] sm:$0xff]
        %868 = vst [vmem:[%s80 + $0xc48] sm:$0xff] %v867
        %v869 = vld [vmem:[%s79 + $0xc50] sm:$0xff]
        %870 = vst [vmem:[%s80 + $0xc50] sm:$0xff] %v869
        %v871 = vld [vmem:[%s79 + $0xc58] sm:$0xff]
        %872 = vst [vmem:[%s80 + $0xc58] sm:$0xff] %v871
        %v873 = vld [vmem:[%s79 + $0xc60] sm:$0xff]
        %874 = vst [vmem:[%s80 + $0xc60] sm:$0xff] %v873
        %v875 = vld [vmem:[%s79 + $0xc68] sm:$0xff]
        %876 = vst [vmem:[%s80 + $0xc68] sm:$0xff] %v875
        %v877 = vld [vmem:[%s79 + $0xc70] sm:$0xff]
        %878 = vst [vmem:[%s80 + $0xc70] sm:$0xff] %v877
        %v879 = vld [vmem:[%s79 + $0xc78] sm:$0xff]
        %880 = vst [vmem:[%s80 + $0xc78] sm:$0xff] %v879
        %v881 = vld [vmem:[%s79 + $0xc80] sm:$0xff]
        %882 = vst [vmem:[%s80 + $0xc80] sm:$0xff] %v881
        %v883 = vld [vmem:[%s79 + $0xc88] sm:$0xff]
        %884 = vst [vmem:[%s80 + $0xc88] sm:$0xff] %v883
        %v885 = vld [vmem:[%s79 + $0xc90] sm:$0xff]
        %886 = vst [vmem:[%s80 + $0xc90] sm:$0xff] %v885
        %v887 = vld [vmem:[%s79 + $0xc98] sm:$0xff]
        %888 = vst [vmem:[%s80 + $0xc98] sm:$0xff] %v887
        %v889 = vld [vmem:[%s79 + $0xca0] sm:$0xff]
        %890 = vst [vmem:[%s80 + $0xca0] sm:$0xff] %v889
        %v891 = vld [vmem:[%s79 + $0xca8] sm:$0xff]
        %892 = vst [vmem:[%s80 + $0xca8] sm:$0xff] %v891
        %v893 = vld [vmem:[%s79 + $0xcb0] sm:$0xff]
        %894 = vst [vmem:[%s80 + $0xcb0] sm:$0xff] %v893
        %v895 = vld [vmem:[%s79 + $0xcb8] sm:$0xff]
        %896 = vst [vmem:[%s80 + $0xcb8] sm:$0xff] %v895
        %v897 = vld [vmem:[%s79 + $0xcc0] sm:$0xff]
        %898 = vst [vmem:[%s80 + $0xcc0] sm:$0xff] %v897
        %v899 = vld [vmem:[%s79 + $0xcc8] sm:$0xff]
        %900 = vst [vmem:[%s80 + $0xcc8] sm:$0xff] %v899
        %v901 = vld [vmem:[%s79 + $0xcd0] sm:$0xff]
        %902 = vst [vmem:[%s80 + $0xcd0] sm:$0xff] %v901
        %v903 = vld [vmem:[%s79 + $0xcd8] sm:$0xff]
        %904 = vst [vmem:[%s80 + $0xcd8] sm:$0xff] %v903
        %v905 = vld [vmem:[%s79 + $0xce0] sm:$0xff]
        %906 = vst [vmem:[%s80 + $0xce0] sm:$0xff] %v905
        %v907 = vld [vmem:[%s79 + $0xce8] sm:$0xff]
        %908 = vst [vmem:[%s80 + $0xce8] sm:$0xff] %v907
        %v909 = vld [vmem:[%s79 + $0xcf0] sm:$0xff]
        %910 = vst [vmem:[%s80 + $0xcf0] sm:$0xff] %v909
        %v911 = vld [vmem:[%s79 + $0xcf8] sm:$0xff]
        %912 = vst [vmem:[%s80 + $0xcf8] sm:$0xff] %v911
        %v913 = vld [vmem:[%s79 + $0xd00] sm:$0xff]
        %914 = vst [vmem:[%s80 + $0xd00] sm:$0xff] %v913
        %v915 = vld [vmem:[%s79 + $0xd08] sm:$0xff]
        %916 = vst [vmem:[%s80 + $0xd08] sm:$0xff] %v915
        %v917 = vld [vmem:[%s79 + $0xd10] sm:$0xff]
        %918 = vst [vmem:[%s80 + $0xd10] sm:$0xff] %v917
        %v919 = vld [vmem:[%s79 + $0xd18] sm:$0xff]
        %920 = vst [vmem:[%s80 + $0xd18] sm:$0xff] %v919
        %v921 = vld [vmem:[%s79 + $0xd20] sm:$0xff]
        %922 = vst [vmem:[%s80 + $0xd20] sm:$0xff] %v921
        %v923 = vld [vmem:[%s79 + $0xd28] sm:$0xff]
        %924 = vst [vmem:[%s80 + $0xd28] sm:$0xff] %v923
        %v925 = vld [vmem:[%s79 + $0xd30] sm:$0xff]
        %926 = vst [vmem:[%s80 + $0xd30] sm:$0xff] %v925
        %v927 = vld [vmem:[%s79 + $0xd38] sm:$0xff]
        %928 = vst [vmem:[%s80 + $0xd38] sm:$0xff] %v927
        %v929 = vld [vmem:[%s79 + $0xd40] sm:$0xff]
        %930 = vst [vmem:[%s80 + $0xd40] sm:$0xff] %v929
        %v931 = vld [vmem:[%s79 + $0xd48] sm:$0xff]
        %932 = vst [vmem:[%s80 + $0xd48] sm:$0xff] %v931
        %v933 = vld [vmem:[%s79 + $0xd50] sm:$0xff]
        %934 = vst [vmem:[%s80 + $0xd50] sm:$0xff] %v933
        %v935 = vld [vmem:[%s79 + $0xd58] sm:$0xff]
        %936 = vst [vmem:[%s80 + $0xd58] sm:$0xff] %v935
        %v937 = vld [vmem:[%s79 + $0xd60] sm:$0xff]
        %938 = vst [vmem:[%s80 + $0xd60] sm:$0xff] %v937
        %v939 = vld [vmem:[%s79 + $0xd68] sm:$0xff]
        %940 = vst [vmem:[%s80 + $0xd68] sm:$0xff] %v939
        %v941 = vld [vmem:[%s79 + $0xd70] sm:$0xff]
        %942 = vst [vmem:[%s80 + $0xd70] sm:$0xff] %v941
        %v943 = vld [vmem:[%s79 + $0xd78] sm:$0xff]
        %944 = vst [vmem:[%s80 + $0xd78] sm:$0xff] %v943
        %v945 = vld [vmem:[%s79 + $0xd80] sm:$0xff]
        %946 = vst [vmem:[%s80 + $0xd80] sm:$0xff] %v945
        %v947 = vld [vmem:[%s79 + $0xd88] sm:$0xff]
        %948 = vst [vmem:[%s80 + $0xd88] sm:$0xff] %v947
        %v949 = vld [vmem:[%s79 + $0xd90] sm:$0xff]
        %950 = vst [vmem:[%s80 + $0xd90] sm:$0xff] %v949
        %v951 = vld [vmem:[%s79 + $0xd98] sm:$0xff]
        %952 = vst [vmem:[%s80 + $0xd98] sm:$0xff] %v951
        %v953 = vld [vmem:[%s79 + $0xda0] sm:$0xff]
        %954 = vst [vmem:[%s80 + $0xda0] sm:$0xff] %v953
        %v955 = vld [vmem:[%s79 + $0xda8] sm:$0xff]
        %956 = vst [vmem:[%s80 + $0xda8] sm:$0xff] %v955
        %v957 = vld [vmem:[%s79 + $0xdb0] sm:$0xff]
        %958 = vst [vmem:[%s80 + $0xdb0] sm:$0xff] %v957
        %v959 = vld [vmem:[%s79 + $0xdb8] sm:$0xff]
        %960 = vst [vmem:[%s80 + $0xdb8] sm:$0xff] %v959
        %v961 = vld [vmem:[%s79 + $0xdc0] sm:$0xff]
        %962 = vst [vmem:[%s80 + $0xdc0] sm:$0xff] %v961
        %v963 = vld [vmem:[%s79 + $0xdc8] sm:$0xff]
        %964 = vst [vmem:[%s80 + $0xdc8] sm:$0xff] %v963
        %v965 = vld [vmem:[%s79 + $0xdd0] sm:$0xff]
        %966 = vst [vmem:[%s80 + $0xdd0] sm:$0xff] %v965
        %v967 = vld [vmem:[%s79 + $0xdd8] sm:$0xff]
        %968 = vst [vmem:[%s80 + $0xdd8] sm:$0xff] %v967
        %v969 = vld [vmem:[%s79 + $0xde0] sm:$0xff]
        %970 = vst [vmem:[%s80 + $0xde0] sm:$0xff] %v969
        %v971 = vld [vmem:[%s79 + $0xde8] sm:$0xff]
        %972 = vst [vmem:[%s80 + $0xde8] sm:$0xff] %v971
        %v973 = vld [vmem:[%s79 + $0xdf0] sm:$0xff]
        %974 = vst [vmem:[%s80 + $0xdf0] sm:$0xff] %v973
        %v975 = vld [vmem:[%s79 + $0xdf8] sm:$0xff]
        %976 = vst [vmem:[%s80 + $0xdf8] sm:$0xff] %v975
        %v977 = vld [vmem:[%s79 + $0xe00] sm:$0xff]
        %978 = vst [vmem:[%s80 + $0xe00] sm:$0xff] %v977
        %v979 = vld [vmem:[%s79 + $0xe08] sm:$0xff]
        %980 = vst [vmem:[%s80 + $0xe08] sm:$0xff] %v979
        %v981 = vld [vmem:[%s79 + $0xe10] sm:$0xff]
        %982 = vst [vmem:[%s80 + $0xe10] sm:$0xff] %v981
        %v983 = vld [vmem:[%s79 + $0xe18] sm:$0xff]
        %984 = vst [vmem:[%s80 + $0xe18] sm:$0xff] %v983
        %v985 = vld [vmem:[%s79 + $0xe20] sm:$0xff]
        %986 = vst [vmem:[%s80 + $0xe20] sm:$0xff] %v985
        %v987 = vld [vmem:[%s79 + $0xe28] sm:$0xff]
        %988 = vst [vmem:[%s80 + $0xe28] sm:$0xff] %v987
        %v989 = vld [vmem:[%s79 + $0xe30] sm:$0xff]
        %990 = vst [vmem:[%s80 + $0xe30] sm:$0xff] %v989
        %v991 = vld [vmem:[%s79 + $0xe38] sm:$0xff]
        %992 = vst [vmem:[%s80 + $0xe38] sm:$0xff] %v991
        %v993 = vld [vmem:[%s79 + $0xe40] sm:$0xff]
        %994 = vst [vmem:[%s80 + $0xe40] sm:$0xff] %v993
        %v995 = vld [vmem:[%s79 + $0xe48] sm:$0xff]
        %996 = vst [vmem:[%s80 + $0xe48] sm:$0xff] %v995
        %v997 = vld [vmem:[%s79 + $0xe50] sm:$0xff]
        %998 = vst [vmem:[%s80 + $0xe50] sm:$0xff] %v997
        %v999 = vld [vmem:[%s79 + $0xe58] sm:$0xff]
        %1000 = vst [vmem:[%s80 + $0xe58] sm:$0xff] %v999
        %v1001 = vld [vmem:[%s79 + $0xe60] sm:$0xff]
        %1002 = vst [vmem:[%s80 + $0xe60] sm:$0xff] %v1001
        %v1003 = vld [vmem:[%s79 + $0xe68] sm:$0xff]
        %1004 = vst [vmem:[%s80 + $0xe68] sm:$0xff] %v1003
        %v1005 = vld [vmem:[%s79 + $0xe70] sm:$0xff]
        %1006 = vst [vmem:[%s80 + $0xe70] sm:$0xff] %v1005
        %v1007 = vld [vmem:[%s79 + $0xe78] sm:$0xff]
        %1008 = vst [vmem:[%s80 + $0xe78] sm:$0xff] %v1007
        %v1009 = vld [vmem:[%s79 + $0xe80] sm:$0xff]
        %1010 = vst [vmem:[%s80 + $0xe80] sm:$0xff] %v1009
        %v1011 = vld [vmem:[%s79 + $0xe88] sm:$0xff]
        %1012 = vst [vmem:[%s80 + $0xe88] sm:$0xff] %v1011
        %v1013 = vld [vmem:[%s79 + $0xe90] sm:$0xff]
        %1014 = vst [vmem:[%s80 + $0xe90] sm:$0xff] %v1013
        %v1015 = vld [vmem:[%s79 + $0xe98] sm:$0xff]
        %1016 = vst [vmem:[%s80 + $0xe98] sm:$0xff] %v1015
        %v1017 = vld [vmem:[%s79 + $0xea0] sm:$0xff]
        %1018 = vst [vmem:[%s80 + $0xea0] sm:$0xff] %v1017
        %v1019 = vld [vmem:[%s79 + $0xea8] sm:$0xff]
        %1020 = vst [vmem:[%s80 + $0xea8] sm:$0xff] %v1019
        %v1021 = vld [vmem:[%s79 + $0xeb0] sm:$0xff]
        %1022 = vst [vmem:[%s80 + $0xeb0] sm:$0xff] %v1021
        %v1023 = vld [vmem:[%s79 + $0xeb8] sm:$0xff]
        %1024 = vst [vmem:[%s80 + $0xeb8] sm:$0xff] %v1023
        %v1025 = vld [vmem:[%s79 + $0xec0] sm:$0xff]
        %1026 = vst [vmem:[%s80 + $0xec0] sm:$0xff] %v1025
        %v1027 = vld [vmem:[%s79 + $0xec8] sm:$0xff]
        %1028 = vst [vmem:[%s80 + $0xec8] sm:$0xff] %v1027
        %v1029 = vld [vmem:[%s79 + $0xed0] sm:$0xff]
        %1030 = vst [vmem:[%s80 + $0xed0] sm:$0xff] %v1029
        %v1031 = vld [vmem:[%s79 + $0xed8] sm:$0xff]
        %1032 = vst [vmem:[%s80 + $0xed8] sm:$0xff] %v1031
        %v1033 = vld [vmem:[%s79 + $0xee0] sm:$0xff]
        %1034 = vst [vmem:[%s80 + $0xee0] sm:$0xff] %v1033
        %v1035 = vld [vmem:[%s79 + $0xee8] sm:$0xff]
        %1036 = vst [vmem:[%s80 + $0xee8] sm:$0xff] %v1035
        %v1037 = vld [vmem:[%s79 + $0xef0] sm:$0xff]
        %1038 = vst [vmem:[%s80 + $0xef0] sm:$0xff] %v1037
        %v1039 = vld [vmem:[%s79 + $0xef8] sm:$0xff]
        %1040 = vst [vmem:[%s80 + $0xef8] sm:$0xff] %v1039
        %v1041 = vld [vmem:[%s79 + $0xf00] sm:$0xff]
        %1042 = vst [vmem:[%s80 + $0xf00] sm:$0xff] %v1041
        %v1043 = vld [vmem:[%s79 + $0xf08] sm:$0xff]
        %1044 = vst [vmem:[%s80 + $0xf08] sm:$0xff] %v1043
        %v1045 = vld [vmem:[%s79 + $0xf10] sm:$0xff]
        %1046 = vst [vmem:[%s80 + $0xf10] sm:$0xff] %v1045
        %v1047 = vld [vmem:[%s79 + $0xf18] sm:$0xff]
        %1048 = vst [vmem:[%s80 + $0xf18] sm:$0xff] %v1047
        %v1049 = vld [vmem:[%s79 + $0xf20] sm:$0xff]
        %1050 = vst [vmem:[%s80 + $0xf20] sm:$0xff] %v1049
        %v1051 = vld [vmem:[%s79 + $0xf28] sm:$0xff]
        %1052 = vst [vmem:[%s80 + $0xf28] sm:$0xff] %v1051
        %v1053 = vld [vmem:[%s79 + $0xf30] sm:$0xff]
        %1054 = vst [vmem:[%s80 + $0xf30] sm:$0xff] %v1053
        %v1055 = vld [vmem:[%s79 + $0xf38] sm:$0xff]
        %1056 = vst [vmem:[%s80 + $0xf38] sm:$0xff] %v1055
        %v1057 = vld [vmem:[%s79 + $0xf40] sm:$0xff]
        %1058 = vst [vmem:[%s80 + $0xf40] sm:$0xff] %v1057
        %v1059 = vld [vmem:[%s79 + $0xf48] sm:$0xff]
        %1060 = vst [vmem:[%s80 + $0xf48] sm:$0xff] %v1059
        %v1061 = vld [vmem:[%s79 + $0xf50] sm:$0xff]
        %1062 = vst [vmem:[%s80 + $0xf50] sm:$0xff] %v1061
        %v1063 = vld [vmem:[%s79 + $0xf58] sm:$0xff]
        %1064 = vst [vmem:[%s80 + $0xf58] sm:$0xff] %v1063
        %v1065 = vld [vmem:[%s79 + $0xf60] sm:$0xff]
        %1066 = vst [vmem:[%s80 + $0xf60] sm:$0xff] %v1065
        %v1067 = vld [vmem:[%s79 + $0xf68] sm:$0xff]
        %1068 = vst [vmem:[%s80 + $0xf68] sm:$0xff] %v1067
        %v1069 = vld [vmem:[%s79 + $0xf70] sm:$0xff]
        %1070 = vst [vmem:[%s80 + $0xf70] sm:$0xff] %v1069
        %v1071 = vld [vmem:[%s79 + $0xf78] sm:$0xff]
        %1072 = vst [vmem:[%s80 + $0xf78] sm:$0xff] %v1071
        %v1073 = vld [vmem:[%s79 + $0xf80] sm:$0xff]
        %1074 = vst [vmem:[%s80 + $0xf80] sm:$0xff] %v1073
        %v1075 = vld [vmem:[%s79 + $0xf88] sm:$0xff]
        %1076 = vst [vmem:[%s80 + $0xf88] sm:$0xff] %v1075
        %v1077 = vld [vmem:[%s79 + $0xf90] sm:$0xff]
        %1078 = vst [vmem:[%s80 + $0xf90] sm:$0xff] %v1077
        %v1079 = vld [vmem:[%s79 + $0xf98] sm:$0xff]
        %1080 = vst [vmem:[%s80 + $0xf98] sm:$0xff] %v1079
        %v1081 = vld [vmem:[%s79 + $0xfa0] sm:$0xff]
        %1082 = vst [vmem:[%s80 + $0xfa0] sm:$0xff] %v1081
        %v1083 = vld [vmem:[%s79 + $0xfa8] sm:$0xff]
        %1084 = vst [vmem:[%s80 + $0xfa8] sm:$0xff] %v1083
        %v1085 = vld [vmem:[%s79 + $0xfb0] sm:$0xff]
        %1086 = vst [vmem:[%s80 + $0xfb0] sm:$0xff] %v1085
        %v1087 = vld [vmem:[%s79 + $0xfb8] sm:$0xff]
        %1088 = vst [vmem:[%s80 + $0xfb8] sm:$0xff] %v1087
        %v1089 = vld [vmem:[%s79 + $0xfc0] sm:$0xff]
        %1090 = vst [vmem:[%s80 + $0xfc0] sm:$0xff] %v1089
        %v1091 = vld [vmem:[%s79 + $0xfc8] sm:$0xff]
        %1092 = vst [vmem:[%s80 + $0xfc8] sm:$0xff] %v1091
        %v1093 = vld [vmem:[%s79 + $0xfd0] sm:$0xff]
        %1094 = vst [vmem:[%s80 + $0xfd0] sm:$0xff] %v1093
        %v1095 = vld [vmem:[%s79 + $0xfd8] sm:$0xff]
        %1096 = vst [vmem:[%s80 + $0xfd8] sm:$0xff] %v1095
        %v1097 = vld [vmem:[%s79 + $0xfe0] sm:$0xff]
        %1098 = vst [vmem:[%s80 + $0xfe0] sm:$0xff] %v1097
        %v1099 = vld [vmem:[%s79 + $0xfe8] sm:$0xff]
        %1100 = vst [vmem:[%s80 + $0xfe8] sm:$0xff] %v1099
        %v1101 = vld [vmem:[%s79 + $0xff0] sm:$0xff]
        %1102 = vst [vmem:[%s80 + $0xff0] sm:$0xff] %v1101
        %v1103 = vld [vmem:[%s79 + $0xff8] sm:$0xff]
        %1104 = vst [vmem:[%s80 + $0xff8] sm:$0xff] %v1103
        %v1105 = vld [vmem:[%s79 + $0x1000] sm:$0xff]
        %1106 = vst [vmem:[%s80 + $0x1000] sm:$0xff] %v1105
        %v1107 = vld [vmem:[%s79 + $0x1008] sm:$0xff]
        %1108 = vst [vmem:[%s80 + $0x1008] sm:$0xff] %v1107
        %v1109 = vld [vmem:[%s79 + $0x1010] sm:$0xff]
        %1110 = vst [vmem:[%s80 + $0x1010] sm:$0xff] %v1109
        %v1111 = vld [vmem:[%s79 + $0x1018] sm:$0xff]
        %1112 = vst [vmem:[%s80 + $0x1018] sm:$0xff] %v1111
        %v1113 = vld [vmem:[%s79 + $0x1020] sm:$0xff]
        %1114 = vst [vmem:[%s80 + $0x1020] sm:$0xff] %v1113
        %v1115 = vld [vmem:[%s79 + $0x1028] sm:$0xff]
        %1116 = vst [vmem:[%s80 + $0x1028] sm:$0xff] %v1115
        %v1117 = vld [vmem:[%s79 + $0x1030] sm:$0xff]
        %1118 = vst [vmem:[%s80 + $0x1030] sm:$0xff] %v1117
        %v1119 = vld [vmem:[%s79 + $0x1038] sm:$0xff]
        %1120 = vst [vmem:[%s80 + $0x1038] sm:$0xff] %v1119
        %v1121 = vld [vmem:[%s79 + $0x1040] sm:$0xff]
        %1122 = vst [vmem:[%s80 + $0x1040] sm:$0xff] %v1121
        %v1123 = vld [vmem:[%s79 + $0x1048] sm:$0xff]
        %1124 = vst [vmem:[%s80 + $0x1048] sm:$0xff] %v1123
        %v1125 = vld [vmem:[%s79 + $0x1050] sm:$0xff]
        %1126 = vst [vmem:[%s80 + $0x1050] sm:$0xff] %v1125
        %v1127 = vld [vmem:[%s79 + $0x1058] sm:$0xff]
        %1128 = vst [vmem:[%s80 + $0x1058] sm:$0xff] %v1127
        %v1129 = vld [vmem:[%s79 + $0x1060] sm:$0xff]
        %1130 = vst [vmem:[%s80 + $0x1060] sm:$0xff] %v1129
        %v1131 = vld [vmem:[%s79 + $0x1068] sm:$0xff]
        %1132 = vst [vmem:[%s80 + $0x1068] sm:$0xff] %v1131
        %v1133 = vld [vmem:[%s79 + $0x1070] sm:$0xff]
        %1134 = vst [vmem:[%s80 + $0x1070] sm:$0xff] %v1133
        %v1135 = vld [vmem:[%s79 + $0x1078] sm:$0xff]
        %1136 = vst [vmem:[%s80 + $0x1078] sm:$0xff] %v1135
        %v1137 = vld [vmem:[%s79 + $0x1080] sm:$0xff]
        %1138 = vst [vmem:[%s80 + $0x1080] sm:$0xff] %v1137
        %v1139 = vld [vmem:[%s79 + $0x1088] sm:$0xff]
        %1140 = vst [vmem:[%s80 + $0x1088] sm:$0xff] %v1139
        %v1141 = vld [vmem:[%s79 + $0x1090] sm:$0xff]
        %1142 = vst [vmem:[%s80 + $0x1090] sm:$0xff] %v1141
        %v1143 = vld [vmem:[%s79 + $0x1098] sm:$0xff]
        %1144 = vst [vmem:[%s80 + $0x1098] sm:$0xff] %v1143
        %v1145 = vld [vmem:[%s79 + $0x10a0] sm:$0xff]
        %1146 = vst [vmem:[%s80 + $0x10a0] sm:$0xff] %v1145
        %v1147 = vld [vmem:[%s79 + $0x10a8] sm:$0xff]
        %1148 = vst [vmem:[%s80 + $0x10a8] sm:$0xff] %v1147
        %v1149 = vld [vmem:[%s79 + $0x10b0] sm:$0xff]
        %1150 = vst [vmem:[%s80 + $0x10b0] sm:$0xff] %v1149
        %v1151 = vld [vmem:[%s79 + $0x10b8] sm:$0xff]
        %1152 = vst [vmem:[%s80 + $0x10b8] sm:$0xff] %v1151
        %v1153 = vld [vmem:[%s79 + $0x10c0] sm:$0xff]
        %1154 = vst [vmem:[%s80 + $0x10c0] sm:$0xff] %v1153
        %v1155 = vld [vmem:[%s79 + $0x10c8] sm:$0xff]
        %1156 = vst [vmem:[%s80 + $0x10c8] sm:$0xff] %v1155
        %v1157 = vld [vmem:[%s79 + $0x10d0] sm:$0xff]
        %1158 = vst [vmem:[%s80 + $0x10d0] sm:$0xff] %v1157
        %v1159 = vld [vmem:[%s79 + $0x10d8] sm:$0xff]
        %1160 = vst [vmem:[%s80 + $0x10d8] sm:$0xff] %v1159
        %v1161 = vld [vmem:[%s79 + $0x10e0] sm:$0xff]
        %1162 = vst [vmem:[%s80 + $0x10e0] sm:$0xff] %v1161
        %v1163 = vld [vmem:[%s79 + $0x10e8] sm:$0xff]
        %1164 = vst [vmem:[%s80 + $0x10e8] sm:$0xff] %v1163
        %v1165 = vld [vmem:[%s79 + $0x10f0] sm:$0xff]
        %1166 = vst [vmem:[%s80 + $0x10f0] sm:$0xff] %v1165
        %v1167 = vld [vmem:[%s79 + $0x10f8] sm:$0xff]
        %1168 = vst [vmem:[%s80 + $0x10f8] sm:$0xff] %v1167
        %v1169 = vld [vmem:[%s79 + $0x1100] sm:$0xff]
        %1170 = vst [vmem:[%s80 + $0x1100] sm:$0xff] %v1169
        %v1171 = vld [vmem:[%s79 + $0x1108] sm:$0xff]
        %1172 = vst [vmem:[%s80 + $0x1108] sm:$0xff] %v1171
        %v1173 = vld [vmem:[%s79 + $0x1110] sm:$0xff]
        %1174 = vst [vmem:[%s80 + $0x1110] sm:$0xff] %v1173
        %v1175 = vld [vmem:[%s79 + $0x1118] sm:$0xff]
        %1176 = vst [vmem:[%s80 + $0x1118] sm:$0xff] %v1175
        %v1177 = vld [vmem:[%s79 + $0x1120] sm:$0xff]
        %1178 = vst [vmem:[%s80 + $0x1120] sm:$0xff] %v1177
        %v1179 = vld [vmem:[%s79 + $0x1128] sm:$0xff]
        %1180 = vst [vmem:[%s80 + $0x1128] sm:$0xff] %v1179
        %v1181 = vld [vmem:[%s79 + $0x1130] sm:$0xff]
        %1182 = vst [vmem:[%s80 + $0x1130] sm:$0xff] %v1181
        %v1183 = vld [vmem:[%s79 + $0x1138] sm:$0xff]
        %1184 = vst [vmem:[%s80 + $0x1138] sm:$0xff] %v1183
        %v1185 = vld [vmem:[%s79 + $0x1140] sm:$0xff]
        %1186 = vst [vmem:[%s80 + $0x1140] sm:$0xff] %v1185
        %v1187 = vld [vmem:[%s79 + $0x1148] sm:$0xff]
        %1188 = vst [vmem:[%s80 + $0x1148] sm:$0xff] %v1187
        %v1189 = vld [vmem:[%s79 + $0x1150] sm:$0xff]
        %1190 = vst [vmem:[%s80 + $0x1150] sm:$0xff] %v1189
        %v1191 = vld [vmem:[%s79 + $0x1158] sm:$0xff]
        %1192 = vst [vmem:[%s80 + $0x1158] sm:$0xff] %v1191
        %v1193 = vld [vmem:[%s79 + $0x1160] sm:$0xff]
        %1194 = vst [vmem:[%s80 + $0x1160] sm:$0xff] %v1193
        %v1195 = vld [vmem:[%s79 + $0x1168] sm:$0xff]
        %1196 = vst [vmem:[%s80 + $0x1168] sm:$0xff] %v1195
        %v1197 = vld [vmem:[%s79 + $0x1170] sm:$0xff]
        %1198 = vst [vmem:[%s80 + $0x1170] sm:$0xff] %v1197
        %v1199 = vld [vmem:[%s79 + $0x1178] sm:$0xff]
        %1200 = vst [vmem:[%s80 + $0x1178] sm:$0xff] %v1199
        %v1201 = vld [vmem:[%s79 + $0x1180] sm:$0xff]
        %1202 = vst [vmem:[%s80 + $0x1180] sm:$0xff] %v1201
        %v1203 = vld [vmem:[%s79 + $0x1188] sm:$0xff]
        %1204 = vst [vmem:[%s80 + $0x1188] sm:$0xff] %v1203
        %v1205 = vld [vmem:[%s79 + $0x1190] sm:$0xff]
        %1206 = vst [vmem:[%s80 + $0x1190] sm:$0xff] %v1205
        %v1207 = vld [vmem:[%s79 + $0x1198] sm:$0xff]
        %1208 = vst [vmem:[%s80 + $0x1198] sm:$0xff] %v1207
        %v1209 = vld [vmem:[%s79 + $0x11a0] sm:$0xff]
        %1210 = vst [vmem:[%s80 + $0x11a0] sm:$0xff] %v1209
        %v1211 = vld [vmem:[%s79 + $0x11a8] sm:$0xff]
        %1212 = vst [vmem:[%s80 + $0x11a8] sm:$0xff] %v1211
        %v1213 = vld [vmem:[%s79 + $0x11b0] sm:$0xff]
        %1214 = vst [vmem:[%s80 + $0x11b0] sm:$0xff] %v1213
        %v1215 = vld [vmem:[%s79 + $0x11b8] sm:$0xff]
        %1216 = vst [vmem:[%s80 + $0x11b8] sm:$0xff] %v1215
        %v1217 = vld [vmem:[%s79 + $0x11c0] sm:$0xff]
        %1218 = vst [vmem:[%s80 + $0x11c0] sm:$0xff] %v1217
        %v1219 = vld [vmem:[%s79 + $0x11c8] sm:$0xff]
        %1220 = vst [vmem:[%s80 + $0x11c8] sm:$0xff] %v1219
        %v1221 = vld [vmem:[%s79 + $0x11d0] sm:$0xff]
        %1222 = vst [vmem:[%s80 + $0x11d0] sm:$0xff] %v1221
        %v1223 = vld [vmem:[%s79 + $0x11d8] sm:$0xff]
        %1224 = vst [vmem:[%s80 + $0x11d8] sm:$0xff] %v1223
        %v1225 = vld [vmem:[%s79 + $0x11e0] sm:$0xff]
        %1226 = vst [vmem:[%s80 + $0x11e0] sm:$0xff] %v1225
        %v1227 = vld [vmem:[%s79 + $0x11e8] sm:$0xff]
        %1228 = vst [vmem:[%s80 + $0x11e8] sm:$0xff] %v1227
        %v1229 = vld [vmem:[%s79 + $0x11f0] sm:$0xff]
        %1230 = vst [vmem:[%s80 + $0x11f0] sm:$0xff] %v1229
        %v1231 = vld [vmem:[%s79 + $0x11f8] sm:$0xff]
        %1232 = vst [vmem:[%s80 + $0x11f8] sm:$0xff] %v1231
        %v1233 = vld [vmem:[%s79 + $0x1200] sm:$0xff]
        %1234 = vst [vmem:[%s80 + $0x1200] sm:$0xff] %v1233
        %v1235 = vld [vmem:[%s79 + $0x1208] sm:$0xff]
        %1236 = vst [vmem:[%s80 + $0x1208] sm:$0xff] %v1235
        %v1237 = vld [vmem:[%s79 + $0x1210] sm:$0xff]
        %1238 = vst [vmem:[%s80 + $0x1210] sm:$0xff] %v1237
        %v1239 = vld [vmem:[%s79 + $0x1218] sm:$0xff]
        %1240 = vst [vmem:[%s80 + $0x1218] sm:$0xff] %v1239
        %v1241 = vld [vmem:[%s79 + $0x1220] sm:$0xff]
        %1242 = vst [vmem:[%s80 + $0x1220] sm:$0xff] %v1241
        %v1243 = vld [vmem:[%s79 + $0x1228] sm:$0xff]
        %1244 = vst [vmem:[%s80 + $0x1228] sm:$0xff] %v1243
        %v1245 = vld [vmem:[%s79 + $0x1230] sm:$0xff]
        %1246 = vst [vmem:[%s80 + $0x1230] sm:$0xff] %v1245
        %v1247 = vld [vmem:[%s79 + $0x1238] sm:$0xff]
        %1248 = vst [vmem:[%s80 + $0x1238] sm:$0xff] %v1247
        %v1249 = vld [vmem:[%s79 + $0x1240] sm:$0xff]
        %1250 = vst [vmem:[%s80 + $0x1240] sm:$0xff] %v1249
        %v1251 = vld [vmem:[%s79 + $0x1248] sm:$0xff]
        %1252 = vst [vmem:[%s80 + $0x1248] sm:$0xff] %v1251
        %v1253 = vld [vmem:[%s79 + $0x1250] sm:$0xff]
        %1254 = vst [vmem:[%s80 + $0x1250] sm:$0xff] %v1253
        %v1255 = vld [vmem:[%s79 + $0x1258] sm:$0xff]
        %1256 = vst [vmem:[%s80 + $0x1258] sm:$0xff] %v1255
        %v1257 = vld [vmem:[%s79 + $0x1260] sm:$0xff]
        %1258 = vst [vmem:[%s80 + $0x1260] sm:$0xff] %v1257
        %v1259 = vld [vmem:[%s79 + $0x1268] sm:$0xff]
        %1260 = vst [vmem:[%s80 + $0x1268] sm:$0xff] %v1259
        %v1261 = vld [vmem:[%s79 + $0x1270] sm:$0xff]
        %1262 = vst [vmem:[%s80 + $0x1270] sm:$0xff] %v1261
        %v1263 = vld [vmem:[%s79 + $0x1278] sm:$0xff]
        %1264 = vst [vmem:[%s80 + $0x1278] sm:$0xff] %v1263
        %v1265 = vld [vmem:[%s79 + $0x1280] sm:$0xff]
        %1266 = vst [vmem:[%s80 + $0x1280] sm:$0xff] %v1265
        %v1267 = vld [vmem:[%s79 + $0x1288] sm:$0xff]
        %1268 = vst [vmem:[%s80 + $0x1288] sm:$0xff] %v1267
        %v1269 = vld [vmem:[%s79 + $0x1290] sm:$0xff]
        %1270 = vst [vmem:[%s80 + $0x1290] sm:$0xff] %v1269
        %v1271 = vld [vmem:[%s79 + $0x1298] sm:$0xff]
        %1272 = vst [vmem:[%s80 + $0x1298] sm:$0xff] %v1271
        %v1273 = vld [vmem:[%s79 + $0x12a0] sm:$0xff]
        %1274 = vst [vmem:[%s80 + $0x12a0] sm:$0xff] %v1273
        %v1275 = vld [vmem:[%s79 + $0x12a8] sm:$0xff]
        %1276 = vst [vmem:[%s80 + $0x12a8] sm:$0xff] %v1275
        %v1277 = vld [vmem:[%s79 + $0x12b0] sm:$0xff]
        %1278 = vst [vmem:[%s80 + $0x12b0] sm:$0xff] %v1277
        %v1279 = vld [vmem:[%s79 + $0x12b8] sm:$0xff]
        %1280 = vst [vmem:[%s80 + $0x12b8] sm:$0xff] %v1279
        %v1281 = vld [vmem:[%s79 + $0x12c0] sm:$0xff]
        %1282 = vst [vmem:[%s80 + $0x12c0] sm:$0xff] %v1281
        %v1283 = vld [vmem:[%s79 + $0x12c8] sm:$0xff]
        %1284 = vst [vmem:[%s80 + $0x12c8] sm:$0xff] %v1283
        %v1285 = vld [vmem:[%s79 + $0x12d0] sm:$0xff]
        %1286 = vst [vmem:[%s80 + $0x12d0] sm:$0xff] %v1285
        %v1287 = vld [vmem:[%s79 + $0x12d8] sm:$0xff]
        %1288 = vst [vmem:[%s80 + $0x12d8] sm:$0xff] %v1287
        %v1289 = vld [vmem:[%s79 + $0x12e0] sm:$0xff]
        %1290 = vst [vmem:[%s80 + $0x12e0] sm:$0xff] %v1289
        %v1291 = vld [vmem:[%s79 + $0x12e8] sm:$0xff]
        %1292 = vst [vmem:[%s80 + $0x12e8] sm:$0xff] %v1291
        %v1293 = vld [vmem:[%s79 + $0x12f0] sm:$0xff]
        %1294 = vst [vmem:[%s80 + $0x12f0] sm:$0xff] %v1293
        %v1295 = vld [vmem:[%s79 + $0x12f8] sm:$0xff]
        %1296 = vst [vmem:[%s80 + $0x12f8] sm:$0xff] %v1295
        %v1297 = vld [vmem:[%s79 + $0x1300] sm:$0xff]
        %1298 = vst [vmem:[%s80 + $0x1300] sm:$0xff] %v1297
        %v1299 = vld [vmem:[%s79 + $0x1308] sm:$0xff]
        %1300 = vst [vmem:[%s80 + $0x1308] sm:$0xff] %v1299
        %v1301 = vld [vmem:[%s79 + $0x1310] sm:$0xff]
        %1302 = vst [vmem:[%s80 + $0x1310] sm:$0xff] %v1301
        %v1303 = vld [vmem:[%s79 + $0x1318] sm:$0xff]
        %1304 = vst [vmem:[%s80 + $0x1318] sm:$0xff] %v1303
        %v1305 = vld [vmem:[%s79 + $0x1320] sm:$0xff]
        %1306 = vst [vmem:[%s80 + $0x1320] sm:$0xff] %v1305
        %v1307 = vld [vmem:[%s79 + $0x1328] sm:$0xff]
        %1308 = vst [vmem:[%s80 + $0x1328] sm:$0xff] %v1307
        %v1309 = vld [vmem:[%s79 + $0x1330] sm:$0xff]
        %1310 = vst [vmem:[%s80 + $0x1330] sm:$0xff] %v1309
        %v1311 = vld [vmem:[%s79 + $0x1338] sm:$0xff]
        %1312 = vst [vmem:[%s80 + $0x1338] sm:$0xff] %v1311
        %v1313 = vld [vmem:[%s79 + $0x1340] sm:$0xff]
        %1314 = vst [vmem:[%s80 + $0x1340] sm:$0xff] %v1313
        %v1315 = vld [vmem:[%s79 + $0x1348] sm:$0xff]
        %1316 = vst [vmem:[%s80 + $0x1348] sm:$0xff] %v1315
        %v1317 = vld [vmem:[%s79 + $0x1350] sm:$0xff]
        %1318 = vst [vmem:[%s80 + $0x1350] sm:$0xff] %v1317
        %v1319 = vld [vmem:[%s79 + $0x1358] sm:$0xff]
        %1320 = vst [vmem:[%s80 + $0x1358] sm:$0xff] %v1319
        %v1321 = vld [vmem:[%s79 + $0x1360] sm:$0xff]
        %1322 = vst [vmem:[%s80 + $0x1360] sm:$0xff] %v1321
        %v1323 = vld [vmem:[%s79 + $0x1368] sm:$0xff]
        %1324 = vst [vmem:[%s80 + $0x1368] sm:$0xff] %v1323
        %v1325 = vld [vmem:[%s79 + $0x1370] sm:$0xff]
        %1326 = vst [vmem:[%s80 + $0x1370] sm:$0xff] %v1325
        %v1327 = vld [vmem:[%s79 + $0x1378] sm:$0xff]
        %1328 = vst [vmem:[%s80 + $0x1378] sm:$0xff] %v1327
        %v1329 = vld [vmem:[%s79 + $0x1380] sm:$0xff]
        %1330 = vst [vmem:[%s80 + $0x1380] sm:$0xff] %v1329
        %v1331 = vld [vmem:[%s79 + $0x1388] sm:$0xff]
        %1332 = vst [vmem:[%s80 + $0x1388] sm:$0xff] %v1331
        %v1333 = vld [vmem:[%s79 + $0x1390] sm:$0xff]
        %1334 = vst [vmem:[%s80 + $0x1390] sm:$0xff] %v1333
        %v1335 = vld [vmem:[%s79 + $0x1398] sm:$0xff]
        %1336 = vst [vmem:[%s80 + $0x1398] sm:$0xff] %v1335
        %v1337 = vld [vmem:[%s79 + $0x13a0] sm:$0xff]
        %1338 = vst [vmem:[%s80 + $0x13a0] sm:$0xff] %v1337
        %v1339 = vld [vmem:[%s79 + $0x13a8] sm:$0xff]
        %1340 = vst [vmem:[%s80 + $0x13a8] sm:$0xff] %v1339
        %v1341 = vld [vmem:[%s79 + $0x13b0] sm:$0xff]
        %1342 = vst [vmem:[%s80 + $0x13b0] sm:$0xff] %v1341
        %v1343 = vld [vmem:[%s79 + $0x13b8] sm:$0xff]
        %1344 = vst [vmem:[%s80 + $0x13b8] sm:$0xff] %v1343
        %v1345 = vld [vmem:[%s79 + $0x13c0] sm:$0xff]
        %1346 = vst [vmem:[%s80 + $0x13c0] sm:$0xff] %v1345
        %v1347 = vld [vmem:[%s79 + $0x13c8] sm:$0xff]
        %1348 = vst [vmem:[%s80 + $0x13c8] sm:$0xff] %v1347
        %v1349 = vld [vmem:[%s79 + $0x13d0] sm:$0xff]
        %1350 = vst [vmem:[%s80 + $0x13d0] sm:$0xff] %v1349
        %v1351 = vld [vmem:[%s79 + $0x13d8] sm:$0xff]
        %1352 = vst [vmem:[%s80 + $0x13d8] sm:$0xff] %v1351
        %v1353 = vld [vmem:[%s79 + $0x13e0] sm:$0xff]
        %1354 = vst [vmem:[%s80 + $0x13e0] sm:$0xff] %v1353
        %v1355 = vld [vmem:[%s79 + $0x13e8] sm:$0xff]
        %1356 = vst [vmem:[%s80 + $0x13e8] sm:$0xff] %v1355
        %v1357 = vld [vmem:[%s79 + $0x13f0] sm:$0xff]
        %1358 = vst [vmem:[%s80 + $0x13f0] sm:$0xff] %v1357
        %v1359 = vld [vmem:[%s79 + $0x13f8] sm:$0xff]
        %1360 = vst [vmem:[%s80 + $0x13f8] sm:$0xff] %v1359
        %v1361 = vld [vmem:[%s79 + $0x1400] sm:$0xff]
        %1362 = vst [vmem:[%s80 + $0x1400] sm:$0xff] %v1361
        %v1363 = vld [vmem:[%s79 + $0x1408] sm:$0xff]
        %1364 = vst [vmem:[%s80 + $0x1408] sm:$0xff] %v1363
        %v1365 = vld [vmem:[%s79 + $0x1410] sm:$0xff]
        %1366 = vst [vmem:[%s80 + $0x1410] sm:$0xff] %v1365
        %v1367 = vld [vmem:[%s79 + $0x1418] sm:$0xff]
        %1368 = vst [vmem:[%s80 + $0x1418] sm:$0xff] %v1367
        %v1369 = vld [vmem:[%s79 + $0x1420] sm:$0xff]
        %1370 = vst [vmem:[%s80 + $0x1420] sm:$0xff] %v1369
        %v1371 = vld [vmem:[%s79 + $0x1428] sm:$0xff]
        %1372 = vst [vmem:[%s80 + $0x1428] sm:$0xff] %v1371
        %v1373 = vld [vmem:[%s79 + $0x1430] sm:$0xff]
        %1374 = vst [vmem:[%s80 + $0x1430] sm:$0xff] %v1373
        %v1375 = vld [vmem:[%s79 + $0x1438] sm:$0xff]
        %1376 = vst [vmem:[%s80 + $0x1438] sm:$0xff] %v1375
        %v1377 = vld [vmem:[%s79 + $0x1440] sm:$0xff]
        %1378 = vst [vmem:[%s80 + $0x1440] sm:$0xff] %v1377
        %v1379 = vld [vmem:[%s79 + $0x1448] sm:$0xff]
        %1380 = vst [vmem:[%s80 + $0x1448] sm:$0xff] %v1379
        %v1381 = vld [vmem:[%s79 + $0x1450] sm:$0xff]
        %1382 = vst [vmem:[%s80 + $0x1450] sm:$0xff] %v1381
        %v1383 = vld [vmem:[%s79 + $0x1458] sm:$0xff]
        %1384 = vst [vmem:[%s80 + $0x1458] sm:$0xff] %v1383
        %v1385 = vld [vmem:[%s79 + $0x1460] sm:$0xff]
        %1386 = vst [vmem:[%s80 + $0x1460] sm:$0xff] %v1385
        %v1387 = vld [vmem:[%s79 + $0x1468] sm:$0xff]
        %1388 = vst [vmem:[%s80 + $0x1468] sm:$0xff] %v1387
        %v1389 = vld [vmem:[%s79 + $0x1470] sm:$0xff]
        %1390 = vst [vmem:[%s80 + $0x1470] sm:$0xff] %v1389
        %v1391 = vld [vmem:[%s79 + $0x1478] sm:$0xff]
        %1392 = vst [vmem:[%s80 + $0x1478] sm:$0xff] %v1391
        %v1393 = vld [vmem:[%s79 + $0x1480] sm:$0xff]
        %1394 = vst [vmem:[%s80 + $0x1480] sm:$0xff] %v1393
        %v1395 = vld [vmem:[%s79 + $0x1488] sm:$0xff]
        %1396 = vst [vmem:[%s80 + $0x1488] sm:$0xff] %v1395
        %v1397 = vld [vmem:[%s79 + $0x1490] sm:$0xff]
        %1398 = vst [vmem:[%s80 + $0x1490] sm:$0xff] %v1397
        %v1399 = vld [vmem:[%s79 + $0x1498] sm:$0xff]
        %1400 = vst [vmem:[%s80 + $0x1498] sm:$0xff] %v1399
        %v1401 = vld [vmem:[%s79 + $0x14a0] sm:$0xff]
        %1402 = vst [vmem:[%s80 + $0x14a0] sm:$0xff] %v1401
        %v1403 = vld [vmem:[%s79 + $0x14a8] sm:$0xff]
        %1404 = vst [vmem:[%s80 + $0x14a8] sm:$0xff] %v1403
        %v1405 = vld [vmem:[%s79 + $0x14b0] sm:$0xff]
        %1406 = vst [vmem:[%s80 + $0x14b0] sm:$0xff] %v1405
        %v1407 = vld [vmem:[%s79 + $0x14b8] sm:$0xff]
        %1408 = vst [vmem:[%s80 + $0x14b8] sm:$0xff] %v1407
        %v1409 = vld [vmem:[%s79 + $0x14c0] sm:$0xff]
        %1410 = vst [vmem:[%s80 + $0x14c0] sm:$0xff] %v1409
        %v1411 = vld [vmem:[%s79 + $0x14c8] sm:$0xff]
        %1412 = vst [vmem:[%s80 + $0x14c8] sm:$0xff] %v1411
        %v1413 = vld [vmem:[%s79 + $0x14d0] sm:$0xff]
        %1414 = vst [vmem:[%s80 + $0x14d0] sm:$0xff] %v1413
        %v1415 = vld [vmem:[%s79 + $0x14d8] sm:$0xff]
        %1416 = vst [vmem:[%s80 + $0x14d8] sm:$0xff] %v1415
        %v1417 = vld [vmem:[%s79 + $0x14e0] sm:$0xff]
        %1418 = vst [vmem:[%s80 + $0x14e0] sm:$0xff] %v1417
        %v1419 = vld [vmem:[%s79 + $0x14e8] sm:$0xff]
        %1420 = vst [vmem:[%s80 + $0x14e8] sm:$0xff] %v1419
        %v1421 = vld [vmem:[%s79 + $0x14f0] sm:$0xff]
        %1422 = vst [vmem:[%s80 + $0x14f0] sm:$0xff] %v1421
        %v1423 = vld [vmem:[%s79 + $0x14f8] sm:$0xff]
        %1424 = vst [vmem:[%s80 + $0x14f8] sm:$0xff] %v1423
        %v1425 = vld [vmem:[%s79 + $0x1500] sm:$0xff]
        %1426 = vst [vmem:[%s80 + $0x1500] sm:$0xff] %v1425
        %v1427 = vld [vmem:[%s79 + $0x1508] sm:$0xff]
        %1428 = vst [vmem:[%s80 + $0x1508] sm:$0xff] %v1427
        %v1429 = vld [vmem:[%s79 + $0x1510] sm:$0xff]
        %1430 = vst [vmem:[%s80 + $0x1510] sm:$0xff] %v1429
        %v1431 = vld [vmem:[%s79 + $0x1518] sm:$0xff]
        %1432 = vst [vmem:[%s80 + $0x1518] sm:$0xff] %v1431
        %v1433 = vld [vmem:[%s79 + $0x1520] sm:$0xff]
        %1434 = vst [vmem:[%s80 + $0x1520] sm:$0xff] %v1433
        %v1435 = vld [vmem:[%s79 + $0x1528] sm:$0xff]
        %1436 = vst [vmem:[%s80 + $0x1528] sm:$0xff] %v1435
        %v1437 = vld [vmem:[%s79 + $0x1530] sm:$0xff]
        %1438 = vst [vmem:[%s80 + $0x1530] sm:$0xff] %v1437
        %v1439 = vld [vmem:[%s79 + $0x1538] sm:$0xff]
        %1440 = vst [vmem:[%s80 + $0x1538] sm:$0xff] %v1439
        %v1441 = vld [vmem:[%s79 + $0x1540] sm:$0xff]
        %1442 = vst [vmem:[%s80 + $0x1540] sm:$0xff] %v1441
        %v1443 = vld [vmem:[%s79 + $0x1548] sm:$0xff]
        %1444 = vst [vmem:[%s80 + $0x1548] sm:$0xff] %v1443
        %v1445 = vld [vmem:[%s79 + $0x1550] sm:$0xff]
        %1446 = vst [vmem:[%s80 + $0x1550] sm:$0xff] %v1445
        %v1447 = vld [vmem:[%s79 + $0x1558] sm:$0xff]
        %1448 = vst [vmem:[%s80 + $0x1558] sm:$0xff] %v1447
        %v1449 = vld [vmem:[%s79 + $0x1560] sm:$0xff]
        %1450 = vst [vmem:[%s80 + $0x1560] sm:$0xff] %v1449
        %v1451 = vld [vmem:[%s79 + $0x1568] sm:$0xff]
        %1452 = vst [vmem:[%s80 + $0x1568] sm:$0xff] %v1451
        %v1453 = vld [vmem:[%s79 + $0x1570] sm:$0xff]
        %1454 = vst [vmem:[%s80 + $0x1570] sm:$0xff] %v1453
        %v1455 = vld [vmem:[%s79 + $0x1578] sm:$0xff]
        %1456 = vst [vmem:[%s80 + $0x1578] sm:$0xff] %v1455
        %v1457 = vld [vmem:[%s79 + $0x1580] sm:$0xff]
        %1458 = vst [vmem:[%s80 + $0x1580] sm:$0xff] %v1457
        %v1459 = vld [vmem:[%s79 + $0x1588] sm:$0xff]
        %1460 = vst [vmem:[%s80 + $0x1588] sm:$0xff] %v1459
        %v1461 = vld [vmem:[%s79 + $0x1590] sm:$0xff]
        %1462 = vst [vmem:[%s80 + $0x1590] sm:$0xff] %v1461
        %v1463 = vld [vmem:[%s79 + $0x1598] sm:$0xff]
        %1464 = vst [vmem:[%s80 + $0x1598] sm:$0xff] %v1463
        %v1465 = vld [vmem:[%s79 + $0x15a0] sm:$0xff]
        %1466 = vst [vmem:[%s80 + $0x15a0] sm:$0xff] %v1465
        %v1467 = vld [vmem:[%s79 + $0x15a8] sm:$0xff]
        %1468 = vst [vmem:[%s80 + $0x15a8] sm:$0xff] %v1467
        %v1469 = vld [vmem:[%s79 + $0x15b0] sm:$0xff]
        %1470 = vst [vmem:[%s80 + $0x15b0] sm:$0xff] %v1469
        %v1471 = vld [vmem:[%s79 + $0x15b8] sm:$0xff]
        %1472 = vst [vmem:[%s80 + $0x15b8] sm:$0xff] %v1471
        %v1473 = vld [vmem:[%s79 + $0x15c0] sm:$0xff]
        %1474 = vst [vmem:[%s80 + $0x15c0] sm:$0xff] %v1473
        %v1475 = vld [vmem:[%s79 + $0x15c8] sm:$0xff]
        %1476 = vst [vmem:[%s80 + $0x15c8] sm:$0xff] %v1475
        %v1477 = vld [vmem:[%s79 + $0x15d0] sm:$0xff]
        %1478 = vst [vmem:[%s80 + $0x15d0] sm:$0xff] %v1477
        %v1479 = vld [vmem:[%s79 + $0x15d8] sm:$0xff]
        %1480 = vst [vmem:[%s80 + $0x15d8] sm:$0xff] %v1479
        %v1481 = vld [vmem:[%s79 + $0x15e0] sm:$0xff]
        %1482 = vst [vmem:[%s80 + $0x15e0] sm:$0xff] %v1481
        %v1483 = vld [vmem:[%s79 + $0x15e8] sm:$0xff]
        %1484 = vst [vmem:[%s80 + $0x15e8] sm:$0xff] %v1483
        %v1485 = vld [vmem:[%s79 + $0x15f0] sm:$0xff]
        %1486 = vst [vmem:[%s80 + $0x15f0] sm:$0xff] %v1485
        %v1487 = vld [vmem:[%s79 + $0x15f8] sm:$0xff]
        %1488 = vst [vmem:[%s80 + $0x15f8] sm:$0xff] %v1487
      $region77: #{siamese_forward.1} parent=71 // loop_footer
        %s78 = sadd.s32 1, %s74
      $region78: #{siamese_forward.1} parent=71 // loop_footer_branch
        %73 = sbr.rel target = $region74
      $region79: #{siamese_forward.1} parent=71 // loop_exit
        _
    $region72: #{siamese_forward.1} parent=56 // pred_fallthru
      _
    %p1489 = pneg %p69
    // Predicated region
    $region80: #{siamese_forward.1} parent=56 // pred_check
      _
    $region81: #{siamese_forward.1} parent=56 // pred_check_branch
      %1491 = sbr.rel (%p69) target = $region83
    $region82: #{siamese_forward.1} parent=56 // pred_region
      %s1492 = sand.u32 5632, 7
    $region83: #{siamese_forward.1} parent=56 // pred_fallthru
      _
  $region57: #{siamese_forward.1} parent=0 // pred_fallthru
    _
  // Predicated region
  $region58: #{siamese_forward.1} parent=0 // pred_check
    %p53 = pneg %p49
  $region59: #{siamese_forward.1} parent=0 // pred_check_branch
    %55 = sbr.rel (%p53) target = $region61
  $region60: #{siamese_forward.1} parent=0 // pred_region
    %s56 = sshll.u32 1, 5632
    %s57 = ssub.s32 %s56, 1
    loop: start=0, step=1, limit=1
    $region62: #{siamese_forward.1} parent=60 // loop_pre_header
      _
    $region63: #{siamese_forward.1} parent=60 // loop_header
      %s59 = sphi 0, %s63
      %p60 = scmp.ge.s32.totalorder %s59, 1
      %s64 = sphi %s9, %s9
      %s65 = sphi [#allocation2], [#allocation2]
    $region64: #{siamese_forward.1} parent=60 // loop_header_branch
      %62 = sbr.rel (%p60) target = $region68
    $region65: #{siamese_forward.1} parent=60 // loop_body
      %v66 = vld [vmem:[%s64] sm:%s57]
      %67 = vst [vmem:[%s65] sm:%s57] %v66
    $region66: #{siamese_forward.1} parent=60 // loop_footer
      %s63 = sadd.s32 1, %s59
    $region67: #{siamese_forward.1} parent=60 // loop_footer_branch
      %58 = sbr.rel target = $region63
    $region68: #{siamese_forward.1} parent=60 // loop_exit
      _
  $region61: #{siamese_forward.1} parent=0 // pred_fallthru
    _
  // Predicated region
  $region84: #{siamese_forward.1} parent=0 // pred_check
    _
  $region85: #{siamese_forward.1} parent=0 // pred_check_branch
    %1495 = sbr.rel (0) target = $region87
  $region86: #{siamese_forward.1} parent=0 // pred_region
    %1496 = vsyncadd [#allocation4], 90112
  $region87: #{siamese_forward.1} parent=0 // pred_fallthru
    _
  %s1497 = scalar_lea.sflag [#allocation4], 1
  %p1499 = scmp.lt.u32.totalorder 1024, 8
  %p1500 = pneg %p1499
  // Predicated region
  $region88: #{siamese_forward.1} parent=0 // pred_check
    _
  $region89: #{siamese_forward.1} parent=0 // pred_check_branch
    %1502 = sbr.rel (%p1499) target = $region91
  $region90: #{siamese_forward.1} parent=0 // pred_region
    %s1518 = sand.u32 1024, 7
    %p1519 = scmp.eq.s32.totalorder %s1518, 0
    // Predicated region
    $region103: #{siamese_forward.1} parent=90 // pred_check
      %p1520 = pneg %p1519
    $region104: #{siamese_forward.1} parent=90 // pred_check_branch
      %1522 = sbr.rel (%p1520) target = $region106
    $region105: #{siamese_forward.1} parent=90 // pred_region
      loop: start=0, step=1, limit=1
      $region107: #{siamese_forward.1} parent=105 // loop_pre_header
        _
      $region108: #{siamese_forward.1} parent=105 // loop_header
        %s1524 = sphi 0, %s1528
        %p1525 = scmp.ge.s32.totalorder %s1524, 1
        %s1529 = sphi %s11, %s11
        %s1530 = sphi [#allocation3], [#allocation3]
      $region109: #{siamese_forward.1} parent=105 // loop_header_branch
        %1527 = sbr.rel (%p1525) target = $region113
      $region110: #{siamese_forward.1} parent=105 // loop_body
        %v1531 = vld [vmem:[%s1529] sm:$0xff]
        %1532 = vst [vmem:[%s1530] sm:$0xff] %v1531
        %v1533 = vld [vmem:[%s1529 + $0x8] sm:$0xff]
        %1534 = vst [vmem:[%s1530 + $0x8] sm:$0xff] %v1533
        %v1535 = vld [vmem:[%s1529 + $0x10] sm:$0xff]
        %1536 = vst [vmem:[%s1530 + $0x10] sm:$0xff] %v1535
        %v1537 = vld [vmem:[%s1529 + $0x18] sm:$0xff]
        %1538 = vst [vmem:[%s1530 + $0x18] sm:$0xff] %v1537
        %v1539 = vld [vmem:[%s1529 + $0x20] sm:$0xff]
        %1540 = vst [vmem:[%s1530 + $0x20] sm:$0xff] %v1539
        %v1541 = vld [vmem:[%s1529 + $0x28] sm:$0xff]
        %1542 = vst [vmem:[%s1530 + $0x28] sm:$0xff] %v1541
        %v1543 = vld [vmem:[%s1529 + $0x30] sm:$0xff]
        %1544 = vst [vmem:[%s1530 + $0x30] sm:$0xff] %v1543
        %v1545 = vld [vmem:[%s1529 + $0x38] sm:$0xff]
        %1546 = vst [vmem:[%s1530 + $0x38] sm:$0xff] %v1545
        %v1547 = vld [vmem:[%s1529 + $0x40] sm:$0xff]
        %1548 = vst [vmem:[%s1530 + $0x40] sm:$0xff] %v1547
        %v1549 = vld [vmem:[%s1529 + $0x48] sm:$0xff]
        %1550 = vst [vmem:[%s1530 + $0x48] sm:$0xff] %v1549
        %v1551 = vld [vmem:[%s1529 + $0x50] sm:$0xff]
        %1552 = vst [vmem:[%s1530 + $0x50] sm:$0xff] %v1551
        %v1553 = vld [vmem:[%s1529 + $0x58] sm:$0xff]
        %1554 = vst [vmem:[%s1530 + $0x58] sm:$0xff] %v1553
        %v1555 = vld [vmem:[%s1529 + $0x60] sm:$0xff]
        %1556 = vst [vmem:[%s1530 + $0x60] sm:$0xff] %v1555
        %v1557 = vld [vmem:[%s1529 + $0x68] sm:$0xff]
        %1558 = vst [vmem:[%s1530 + $0x68] sm:$0xff] %v1557
        %v1559 = vld [vmem:[%s1529 + $0x70] sm:$0xff]
        %1560 = vst [vmem:[%s1530 + $0x70] sm:$0xff] %v1559
        %v1561 = vld [vmem:[%s1529 + $0x78] sm:$0xff]
        %1562 = vst [vmem:[%s1530 + $0x78] sm:$0xff] %v1561
        %v1563 = vld [vmem:[%s1529 + $0x80] sm:$0xff]
        %1564 = vst [vmem:[%s1530 + $0x80] sm:$0xff] %v1563
        %v1565 = vld [vmem:[%s1529 + $0x88] sm:$0xff]
        %1566 = vst [vmem:[%s1530 + $0x88] sm:$0xff] %v1565
        %v1567 = vld [vmem:[%s1529 + $0x90] sm:$0xff]
        %1568 = vst [vmem:[%s1530 + $0x90] sm:$0xff] %v1567
        %v1569 = vld [vmem:[%s1529 + $0x98] sm:$0xff]
        %1570 = vst [vmem:[%s1530 + $0x98] sm:$0xff] %v1569
        %v1571 = vld [vmem:[%s1529 + $0xa0] sm:$0xff]
        %1572 = vst [vmem:[%s1530 + $0xa0] sm:$0xff] %v1571
        %v1573 = vld [vmem:[%s1529 + $0xa8] sm:$0xff]
        %1574 = vst [vmem:[%s1530 + $0xa8] sm:$0xff] %v1573
        %v1575 = vld [vmem:[%s1529 + $0xb0] sm:$0xff]
        %1576 = vst [vmem:[%s1530 + $0xb0] sm:$0xff] %v1575
        %v1577 = vld [vmem:[%s1529 + $0xb8] sm:$0xff]
        %1578 = vst [vmem:[%s1530 + $0xb8] sm:$0xff] %v1577
        %v1579 = vld [vmem:[%s1529 + $0xc0] sm:$0xff]
        %1580 = vst [vmem:[%s1530 + $0xc0] sm:$0xff] %v1579
        %v1581 = vld [vmem:[%s1529 + $0xc8] sm:$0xff]
        %1582 = vst [vmem:[%s1530 + $0xc8] sm:$0xff] %v1581
        %v1583 = vld [vmem:[%s1529 + $0xd0] sm:$0xff]
        %1584 = vst [vmem:[%s1530 + $0xd0] sm:$0xff] %v1583
        %v1585 = vld [vmem:[%s1529 + $0xd8] sm:$0xff]
        %1586 = vst [vmem:[%s1530 + $0xd8] sm:$0xff] %v1585
        %v1587 = vld [vmem:[%s1529 + $0xe0] sm:$0xff]
        %1588 = vst [vmem:[%s1530 + $0xe0] sm:$0xff] %v1587
        %v1589 = vld [vmem:[%s1529 + $0xe8] sm:$0xff]
        %1590 = vst [vmem:[%s1530 + $0xe8] sm:$0xff] %v1589
        %v1591 = vld [vmem:[%s1529 + $0xf0] sm:$0xff]
        %1592 = vst [vmem:[%s1530 + $0xf0] sm:$0xff] %v1591
        %v1593 = vld [vmem:[%s1529 + $0xf8] sm:$0xff]
        %1594 = vst [vmem:[%s1530 + $0xf8] sm:$0xff] %v1593
        %v1595 = vld [vmem:[%s1529 + $0x100] sm:$0xff]
        %1596 = vst [vmem:[%s1530 + $0x100] sm:$0xff] %v1595
        %v1597 = vld [vmem:[%s1529 + $0x108] sm:$0xff]
        %1598 = vst [vmem:[%s1530 + $0x108] sm:$0xff] %v1597
        %v1599 = vld [vmem:[%s1529 + $0x110] sm:$0xff]
        %1600 = vst [vmem:[%s1530 + $0x110] sm:$0xff] %v1599
        %v1601 = vld [vmem:[%s1529 + $0x118] sm:$0xff]
        %1602 = vst [vmem:[%s1530 + $0x118] sm:$0xff] %v1601
        %v1603 = vld [vmem:[%s1529 + $0x120] sm:$0xff]
        %1604 = vst [vmem:[%s1530 + $0x120] sm:$0xff] %v1603
        %v1605 = vld [vmem:[%s1529 + $0x128] sm:$0xff]
        %1606 = vst [vmem:[%s1530 + $0x128] sm:$0xff] %v1605
        %v1607 = vld [vmem:[%s1529 + $0x130] sm:$0xff]
        %1608 = vst [vmem:[%s1530 + $0x130] sm:$0xff] %v1607
        %v1609 = vld [vmem:[%s1529 + $0x138] sm:$0xff]
        %1610 = vst [vmem:[%s1530 + $0x138] sm:$0xff] %v1609
        %v1611 = vld [vmem:[%s1529 + $0x140] sm:$0xff]
        %1612 = vst [vmem:[%s1530 + $0x140] sm:$0xff] %v1611
        %v1613 = vld [vmem:[%s1529 + $0x148] sm:$0xff]
        %1614 = vst [vmem:[%s1530 + $0x148] sm:$0xff] %v1613
        %v1615 = vld [vmem:[%s1529 + $0x150] sm:$0xff]
        %1616 = vst [vmem:[%s1530 + $0x150] sm:$0xff] %v1615
        %v1617 = vld [vmem:[%s1529 + $0x158] sm:$0xff]
        %1618 = vst [vmem:[%s1530 + $0x158] sm:$0xff] %v1617
        %v1619 = vld [vmem:[%s1529 + $0x160] sm:$0xff]
        %1620 = vst [vmem:[%s1530 + $0x160] sm:$0xff] %v1619
        %v1621 = vld [vmem:[%s1529 + $0x168] sm:$0xff]
        %1622 = vst [vmem:[%s1530 + $0x168] sm:$0xff] %v1621
        %v1623 = vld [vmem:[%s1529 + $0x170] sm:$0xff]
        %1624 = vst [vmem:[%s1530 + $0x170] sm:$0xff] %v1623
        %v1625 = vld [vmem:[%s1529 + $0x178] sm:$0xff]
        %1626 = vst [vmem:[%s1530 + $0x178] sm:$0xff] %v1625
        %v1627 = vld [vmem:[%s1529 + $0x180] sm:$0xff]
        %1628 = vst [vmem:[%s1530 + $0x180] sm:$0xff] %v1627
        %v1629 = vld [vmem:[%s1529 + $0x188] sm:$0xff]
        %1630 = vst [vmem:[%s1530 + $0x188] sm:$0xff] %v1629
        %v1631 = vld [vmem:[%s1529 + $0x190] sm:$0xff]
        %1632 = vst [vmem:[%s1530 + $0x190] sm:$0xff] %v1631
        %v1633 = vld [vmem:[%s1529 + $0x198] sm:$0xff]
        %1634 = vst [vmem:[%s1530 + $0x198] sm:$0xff] %v1633
        %v1635 = vld [vmem:[%s1529 + $0x1a0] sm:$0xff]
        %1636 = vst [vmem:[%s1530 + $0x1a0] sm:$0xff] %v1635
        %v1637 = vld [vmem:[%s1529 + $0x1a8] sm:$0xff]
        %1638 = vst [vmem:[%s1530 + $0x1a8] sm:$0xff] %v1637
        %v1639 = vld [vmem:[%s1529 + $0x1b0] sm:$0xff]
        %1640 = vst [vmem:[%s1530 + $0x1b0] sm:$0xff] %v1639
        %v1641 = vld [vmem:[%s1529 + $0x1b8] sm:$0xff]
        %1642 = vst [vmem:[%s1530 + $0x1b8] sm:$0xff] %v1641
        %v1643 = vld [vmem:[%s1529 + $0x1c0] sm:$0xff]
        %1644 = vst [vmem:[%s1530 + $0x1c0] sm:$0xff] %v1643
        %v1645 = vld [vmem:[%s1529 + $0x1c8] sm:$0xff]
        %1646 = vst [vmem:[%s1530 + $0x1c8] sm:$0xff] %v1645
        %v1647 = vld [vmem:[%s1529 + $0x1d0] sm:$0xff]
        %1648 = vst [vmem:[%s1530 + $0x1d0] sm:$0xff] %v1647
        %v1649 = vld [vmem:[%s1529 + $0x1d8] sm:$0xff]
        %1650 = vst [vmem:[%s1530 + $0x1d8] sm:$0xff] %v1649
        %v1651 = vld [vmem:[%s1529 + $0x1e0] sm:$0xff]
        %1652 = vst [vmem:[%s1530 + $0x1e0] sm:$0xff] %v1651
        %v1653 = vld [vmem:[%s1529 + $0x1e8] sm:$0xff]
        %1654 = vst [vmem:[%s1530 + $0x1e8] sm:$0xff] %v1653
        %v1655 = vld [vmem:[%s1529 + $0x1f0] sm:$0xff]
        %1656 = vst [vmem:[%s1530 + $0x1f0] sm:$0xff] %v1655
        %v1657 = vld [vmem:[%s1529 + $0x1f8] sm:$0xff]
        %1658 = vst [vmem:[%s1530 + $0x1f8] sm:$0xff] %v1657
        %v1659 = vld [vmem:[%s1529 + $0x200] sm:$0xff]
        %1660 = vst [vmem:[%s1530 + $0x200] sm:$0xff] %v1659
        %v1661 = vld [vmem:[%s1529 + $0x208] sm:$0xff]
        %1662 = vst [vmem:[%s1530 + $0x208] sm:$0xff] %v1661
        %v1663 = vld [vmem:[%s1529 + $0x210] sm:$0xff]
        %1664 = vst [vmem:[%s1530 + $0x210] sm:$0xff] %v1663
        %v1665 = vld [vmem:[%s1529 + $0x218] sm:$0xff]
        %1666 = vst [vmem:[%s1530 + $0x218] sm:$0xff] %v1665
        %v1667 = vld [vmem:[%s1529 + $0x220] sm:$0xff]
        %1668 = vst [vmem:[%s1530 + $0x220] sm:$0xff] %v1667
        %v1669 = vld [vmem:[%s1529 + $0x228] sm:$0xff]
        %1670 = vst [vmem:[%s1530 + $0x228] sm:$0xff] %v1669
        %v1671 = vld [vmem:[%s1529 + $0x230] sm:$0xff]
        %1672 = vst [vmem:[%s1530 + $0x230] sm:$0xff] %v1671
        %v1673 = vld [vmem:[%s1529 + $0x238] sm:$0xff]
        %1674 = vst [vmem:[%s1530 + $0x238] sm:$0xff] %v1673
        %v1675 = vld [vmem:[%s1529 + $0x240] sm:$0xff]
        %1676 = vst [vmem:[%s1530 + $0x240] sm:$0xff] %v1675
        %v1677 = vld [vmem:[%s1529 + $0x248] sm:$0xff]
        %1678 = vst [vmem:[%s1530 + $0x248] sm:$0xff] %v1677
        %v1679 = vld [vmem:[%s1529 + $0x250] sm:$0xff]
        %1680 = vst [vmem:[%s1530 + $0x250] sm:$0xff] %v1679
        %v1681 = vld [vmem:[%s1529 + $0x258] sm:$0xff]
        %1682 = vst [vmem:[%s1530 + $0x258] sm:$0xff] %v1681
        %v1683 = vld [vmem:[%s1529 + $0x260] sm:$0xff]
        %1684 = vst [vmem:[%s1530 + $0x260] sm:$0xff] %v1683
        %v1685 = vld [vmem:[%s1529 + $0x268] sm:$0xff]
        %1686 = vst [vmem:[%s1530 + $0x268] sm:$0xff] %v1685
        %v1687 = vld [vmem:[%s1529 + $0x270] sm:$0xff]
        %1688 = vst [vmem:[%s1530 + $0x270] sm:$0xff] %v1687
        %v1689 = vld [vmem:[%s1529 + $0x278] sm:$0xff]
        %1690 = vst [vmem:[%s1530 + $0x278] sm:$0xff] %v1689
        %v1691 = vld [vmem:[%s1529 + $0x280] sm:$0xff]
        %1692 = vst [vmem:[%s1530 + $0x280] sm:$0xff] %v1691
        %v1693 = vld [vmem:[%s1529 + $0x288] sm:$0xff]
        %1694 = vst [vmem:[%s1530 + $0x288] sm:$0xff] %v1693
        %v1695 = vld [vmem:[%s1529 + $0x290] sm:$0xff]
        %1696 = vst [vmem:[%s1530 + $0x290] sm:$0xff] %v1695
        %v1697 = vld [vmem:[%s1529 + $0x298] sm:$0xff]
        %1698 = vst [vmem:[%s1530 + $0x298] sm:$0xff] %v1697
        %v1699 = vld [vmem:[%s1529 + $0x2a0] sm:$0xff]
        %1700 = vst [vmem:[%s1530 + $0x2a0] sm:$0xff] %v1699
        %v1701 = vld [vmem:[%s1529 + $0x2a8] sm:$0xff]
        %1702 = vst [vmem:[%s1530 + $0x2a8] sm:$0xff] %v1701
        %v1703 = vld [vmem:[%s1529 + $0x2b0] sm:$0xff]
        %1704 = vst [vmem:[%s1530 + $0x2b0] sm:$0xff] %v1703
        %v1705 = vld [vmem:[%s1529 + $0x2b8] sm:$0xff]
        %1706 = vst [vmem:[%s1530 + $0x2b8] sm:$0xff] %v1705
        %v1707 = vld [vmem:[%s1529 + $0x2c0] sm:$0xff]
        %1708 = vst [vmem:[%s1530 + $0x2c0] sm:$0xff] %v1707
        %v1709 = vld [vmem:[%s1529 + $0x2c8] sm:$0xff]
        %1710 = vst [vmem:[%s1530 + $0x2c8] sm:$0xff] %v1709
        %v1711 = vld [vmem:[%s1529 + $0x2d0] sm:$0xff]
        %1712 = vst [vmem:[%s1530 + $0x2d0] sm:$0xff] %v1711
        %v1713 = vld [vmem:[%s1529 + $0x2d8] sm:$0xff]
        %1714 = vst [vmem:[%s1530 + $0x2d8] sm:$0xff] %v1713
        %v1715 = vld [vmem:[%s1529 + $0x2e0] sm:$0xff]
        %1716 = vst [vmem:[%s1530 + $0x2e0] sm:$0xff] %v1715
        %v1717 = vld [vmem:[%s1529 + $0x2e8] sm:$0xff]
        %1718 = vst [vmem:[%s1530 + $0x2e8] sm:$0xff] %v1717
        %v1719 = vld [vmem:[%s1529 + $0x2f0] sm:$0xff]
        %1720 = vst [vmem:[%s1530 + $0x2f0] sm:$0xff] %v1719
        %v1721 = vld [vmem:[%s1529 + $0x2f8] sm:$0xff]
        %1722 = vst [vmem:[%s1530 + $0x2f8] sm:$0xff] %v1721
        %v1723 = vld [vmem:[%s1529 + $0x300] sm:$0xff]
        %1724 = vst [vmem:[%s1530 + $0x300] sm:$0xff] %v1723
        %v1725 = vld [vmem:[%s1529 + $0x308] sm:$0xff]
        %1726 = vst [vmem:[%s1530 + $0x308] sm:$0xff] %v1725
        %v1727 = vld [vmem:[%s1529 + $0x310] sm:$0xff]
        %1728 = vst [vmem:[%s1530 + $0x310] sm:$0xff] %v1727
        %v1729 = vld [vmem:[%s1529 + $0x318] sm:$0xff]
        %1730 = vst [vmem:[%s1530 + $0x318] sm:$0xff] %v1729
        %v1731 = vld [vmem:[%s1529 + $0x320] sm:$0xff]
        %1732 = vst [vmem:[%s1530 + $0x320] sm:$0xff] %v1731
        %v1733 = vld [vmem:[%s1529 + $0x328] sm:$0xff]
        %1734 = vst [vmem:[%s1530 + $0x328] sm:$0xff] %v1733
        %v1735 = vld [vmem:[%s1529 + $0x330] sm:$0xff]
        %1736 = vst [vmem:[%s1530 + $0x330] sm:$0xff] %v1735
        %v1737 = vld [vmem:[%s1529 + $0x338] sm:$0xff]
        %1738 = vst [vmem:[%s1530 + $0x338] sm:$0xff] %v1737
        %v1739 = vld [vmem:[%s1529 + $0x340] sm:$0xff]
        %1740 = vst [vmem:[%s1530 + $0x340] sm:$0xff] %v1739
        %v1741 = vld [vmem:[%s1529 + $0x348] sm:$0xff]
        %1742 = vst [vmem:[%s1530 + $0x348] sm:$0xff] %v1741
        %v1743 = vld [vmem:[%s1529 + $0x350] sm:$0xff]
        %1744 = vst [vmem:[%s1530 + $0x350] sm:$0xff] %v1743
        %v1745 = vld [vmem:[%s1529 + $0x358] sm:$0xff]
        %1746 = vst [vmem:[%s1530 + $0x358] sm:$0xff] %v1745
        %v1747 = vld [vmem:[%s1529 + $0x360] sm:$0xff]
        %1748 = vst [vmem:[%s1530 + $0x360] sm:$0xff] %v1747
        %v1749 = vld [vmem:[%s1529 + $0x368] sm:$0xff]
        %1750 = vst [vmem:[%s1530 + $0x368] sm:$0xff] %v1749
        %v1751 = vld [vmem:[%s1529 + $0x370] sm:$0xff]
        %1752 = vst [vmem:[%s1530 + $0x370] sm:$0xff] %v1751
        %v1753 = vld [vmem:[%s1529 + $0x378] sm:$0xff]
        %1754 = vst [vmem:[%s1530 + $0x378] sm:$0xff] %v1753
        %v1755 = vld [vmem:[%s1529 + $0x380] sm:$0xff]
        %1756 = vst [vmem:[%s1530 + $0x380] sm:$0xff] %v1755
        %v1757 = vld [vmem:[%s1529 + $0x388] sm:$0xff]
        %1758 = vst [vmem:[%s1530 + $0x388] sm:$0xff] %v1757
        %v1759 = vld [vmem:[%s1529 + $0x390] sm:$0xff]
        %1760 = vst [vmem:[%s1530 + $0x390] sm:$0xff] %v1759
        %v1761 = vld [vmem:[%s1529 + $0x398] sm:$0xff]
        %1762 = vst [vmem:[%s1530 + $0x398] sm:$0xff] %v1761
        %v1763 = vld [vmem:[%s1529 + $0x3a0] sm:$0xff]
        %1764 = vst [vmem:[%s1530 + $0x3a0] sm:$0xff] %v1763
        %v1765 = vld [vmem:[%s1529 + $0x3a8] sm:$0xff]
        %1766 = vst [vmem:[%s1530 + $0x3a8] sm:$0xff] %v1765
        %v1767 = vld [vmem:[%s1529 + $0x3b0] sm:$0xff]
        %1768 = vst [vmem:[%s1530 + $0x3b0] sm:$0xff] %v1767
        %v1769 = vld [vmem:[%s1529 + $0x3b8] sm:$0xff]
        %1770 = vst [vmem:[%s1530 + $0x3b8] sm:$0xff] %v1769
        %v1771 = vld [vmem:[%s1529 + $0x3c0] sm:$0xff]
        %1772 = vst [vmem:[%s1530 + $0x3c0] sm:$0xff] %v1771
        %v1773 = vld [vmem:[%s1529 + $0x3c8] sm:$0xff]
        %1774 = vst [vmem:[%s1530 + $0x3c8] sm:$0xff] %v1773
        %v1775 = vld [vmem:[%s1529 + $0x3d0] sm:$0xff]
        %1776 = vst [vmem:[%s1530 + $0x3d0] sm:$0xff] %v1775
        %v1777 = vld [vmem:[%s1529 + $0x3d8] sm:$0xff]
        %1778 = vst [vmem:[%s1530 + $0x3d8] sm:$0xff] %v1777
        %v1779 = vld [vmem:[%s1529 + $0x3e0] sm:$0xff]
        %1780 = vst [vmem:[%s1530 + $0x3e0] sm:$0xff] %v1779
        %v1781 = vld [vmem:[%s1529 + $0x3e8] sm:$0xff]
        %1782 = vst [vmem:[%s1530 + $0x3e8] sm:$0xff] %v1781
        %v1783 = vld [vmem:[%s1529 + $0x3f0] sm:$0xff]
        %1784 = vst [vmem:[%s1530 + $0x3f0] sm:$0xff] %v1783
        %v1785 = vld [vmem:[%s1529 + $0x3f8] sm:$0xff]
        %1786 = vst [vmem:[%s1530 + $0x3f8] sm:$0xff] %v1785
      $region111: #{siamese_forward.1} parent=105 // loop_footer
        %s1528 = sadd.s32 1, %s1524
      $region112: #{siamese_forward.1} parent=105 // loop_footer_branch
        %1523 = sbr.rel target = $region108
      $region113: #{siamese_forward.1} parent=105 // loop_exit
        _
    $region106: #{siamese_forward.1} parent=90 // pred_fallthru
      _
    %p1787 = pneg %p1519
    // Predicated region
    $region114: #{siamese_forward.1} parent=90 // pred_check
      _
    $region115: #{siamese_forward.1} parent=90 // pred_check_branch
      %1789 = sbr.rel (%p1519) target = $region117
    $region116: #{siamese_forward.1} parent=90 // pred_region
      %s1790 = sand.u32 1024, 7
    $region117: #{siamese_forward.1} parent=90 // pred_fallthru
      _
  $region91: #{siamese_forward.1} parent=0 // pred_fallthru
    _
  // Predicated region
  $region92: #{siamese_forward.1} parent=0 // pred_check
    %p1503 = pneg %p1499
  $region93: #{siamese_forward.1} parent=0 // pred_check_branch
    %1505 = sbr.rel (%p1503) target = $region95
  $region94: #{siamese_forward.1} parent=0 // pred_region
    %s1506 = sshll.u32 1, 1024
    %s1507 = ssub.s32 %s1506, 1
    loop: start=0, step=1, limit=1
    $region96: #{siamese_forward.1} parent=94 // loop_pre_header
      _
    $region97: #{siamese_forward.1} parent=94 // loop_header
      %s1509 = sphi 0, %s1513
      %p1510 = scmp.ge.s32.totalorder %s1509, 1
      %s1514 = sphi %s11, %s11
      %s1515 = sphi [#allocation3], [#allocation3]
    $region98: #{siamese_forward.1} parent=94 // loop_header_branch
      %1512 = sbr.rel (%p1510) target = $region102
    $region99: #{siamese_forward.1} parent=94 // loop_body
      %v1516 = vld [vmem:[%s1514] sm:%s1507]
      %1517 = vst [vmem:[%s1515] sm:%s1507] %v1516
    $region100: #{siamese_forward.1} parent=94 // loop_footer
      %s1513 = sadd.s32 1, %s1509
    $region101: #{siamese_forward.1} parent=94 // loop_footer_branch
      %1508 = sbr.rel target = $region97
    $region102: #{siamese_forward.1} parent=94 // loop_exit
      _
  $region95: #{siamese_forward.1} parent=0 // pred_fallthru
    _
  // Predicated region
  $region118: #{siamese_forward.1} parent=0 // pred_check
    _
  $region119: #{siamese_forward.1} parent=0 // pred_check_branch
    %1793 = sbr.rel (0) target = $region121
  $region120: #{siamese_forward.1} parent=0 // pred_region
    %1794 = vsyncadd %s1497, 16384
  $region121: #{siamese_forward.1} parent=0 // pred_fallthru
    _
  %v1795 = vld [vmem:[%s0] sm:$0xff]
  %v1796 = vld [vmem:[%s0 + $0x8] sm:$0xff]
  %v1797 = vld [vmem:[%s0 + $0x10] sm:$0xff]
  %v1798 = vld [vmem:[%s0 + $0x18] sm:$0xff]
  %v1799 = vld [vmem:[%s0 + $0x20] sm:$0xff]
  %v1800 = vld [vmem:[%s0 + $0x28] sm:$0xff]
  %v1801 = vld [vmem:[%s0 + $0x30] sm:$0xff]
  %v1802 = vld [vmem:[%s0 + $0x38] sm:$0xff]
  %v1803 = vld [vmem:[%s0 + $0x40] sm:$0xff]
  %v1804 = vld [vmem:[%s0 + $0x48] sm:$0xff]
  %v1805 = vld [vmem:[%s0 + $0x50] sm:$0xff]
  %v1806 = vld [vmem:[%s0 + $0x58] sm:$0xff]
  %v1807 = vld [vmem:[%s0 + $0x60] sm:$0xff]
  %v1808 = vld [vmem:[%s0 + $0x68] sm:$0xff]
  %v1809 = vld [vmem:[%s0 + $0x70] sm:$0xff]
  %v1810 = vld [vmem:[%s0 + $0x78] sm:$0xff]
  %v1811 = vld [vmem:[%s0 + $0x80] sm:$0xff]
  %v1812 = vld [vmem:[%s0 + $0x88] sm:$0xff]
  %v1813 = vld [vmem:[%s0 + $0x90] sm:$0xff]
  %v1814 = vld [vmem:[%s0 + $0x98] sm:$0xff]
  %v1815 = vld [vmem:[%s0 + $0xa0] sm:$0xff]
  %v1816 = vld [vmem:[%s0 + $0xa8] sm:$0xff]
  %v1817 = vld [vmem:[%s0 + $0xb0] sm:$0xff]
  %v1818 = vld [vmem:[%s0 + $0xb8] sm:$0xff]
  %v1819 = vld [vmem:[%s0 + $0xc0] sm:$0xff]
  %v1820 = vld [vmem:[%s0 + $0xc8] sm:$0xff]
  %v1821 = vld [vmem:[%s0 + $0xd0] sm:$0xff]
  %v1822 = vld [vmem:[%s0 + $0xd8] sm:$0xff]
  %v1823 = vld [vmem:[%s0 + $0xe0] sm:$0xff]
  %v1824 = vld [vmem:[%s0 + $0xe8] sm:$0xff]
  %v1825 = vld [vmem:[%s0 + $0xf0] sm:$0xff]
  %v1826 = vld [vmem:[%s0 + $0xf8] sm:$0xff]
  %v1827 = vld [vmem:[%s0 + $0x100] sm:$0xff]
  %v1828 = vld [vmem:[%s0 + $0x108] sm:$0xff]
  %v1829 = vld [vmem:[%s0 + $0x110] sm:$0xff]
  %v1830 = vld [vmem:[%s0 + $0x118] sm:$0xff]
  %v1831 = vld [vmem:[%s0 + $0x120] sm:$0xff]
  %v1832 = vld [vmem:[%s0 + $0x128] sm:$0xff]
  %v1833 = vld [vmem:[%s0 + $0x130] sm:$0xff]
  %v1834 = vld [vmem:[%s0 + $0x138] sm:$0xff]
  %v1835 = vld [vmem:[%s0 + $0x140] sm:$0xff]
  %v1836 = vld [vmem:[%s0 + $0x148] sm:$0xff]
  %v1837 = vld [vmem:[%s0 + $0x150] sm:$0xff]
  %v1838 = vld [vmem:[%s0 + $0x158] sm:$0xff]
  %v1839 = vld [vmem:[%s0 + $0x160] sm:$0xff]
  %v1840 = vld [vmem:[%s0 + $0x168] sm:$0xff]
  %v1841 = vld [vmem:[%s0 + $0x170] sm:$0xff]
  %v1842 = vld [vmem:[%s0 + $0x178] sm:$0xff]
  %v1843 = vld [vmem:[%s0 + $0x180] sm:$0xff]
  %v1844 = vld [vmem:[%s0 + $0x188] sm:$0xff]
  %v1845 = vld [vmem:[%s0 + $0x190] sm:$0xff]
  %v1846 = vld [vmem:[%s0 + $0x198] sm:$0xff]
  %v1847 = vld [vmem:[%s0 + $0x1a0] sm:$0xff]
  %v1848 = vld [vmem:[%s0 + $0x1a8] sm:$0xff]
  %v1849 = vld [vmem:[%s0 + $0x1b0] sm:$0xff]
  %v1850 = vld [vmem:[%s0 + $0x1b8] sm:$0xff]
  %v1851 = vld [vmem:[%s0 + $0x1c0] sm:$0xff]
  %v1852 = vld [vmem:[%s0 + $0x1c8] sm:$0xff]
  %v1853 = vld [vmem:[%s0 + $0x1d0] sm:$0xff]
  %v1854 = vld [vmem:[%s0 + $0x1d8] sm:$0xff]
  %v1855 = vld [vmem:[%s0 + $0x1e0] sm:$0xff]
  %v1856 = vld [vmem:[%s0 + $0x1e8] sm:$0xff]
  %v1857 = vld [vmem:[%s0 + $0x1f0] sm:$0xff]
  %v1858 = vld [vmem:[%s0 + $0x1f8] sm:$0xff]
  %v1859 = vld [vmem:[%s0 + $0x200] sm:$0xff]
  %v1860 = vld [vmem:[%s0 + $0x208] sm:$0xff]
  %v1861 = vld [vmem:[%s0 + $0x210] sm:$0xff]
  %v1862 = vld [vmem:[%s0 + $0x218] sm:$0xff]
  %v1863 = vld [vmem:[%s0 + $0x220] sm:$0xff]
  %v1864 = vld [vmem:[%s0 + $0x228] sm:$0xff]
  %v1865 = vld [vmem:[%s0 + $0x230] sm:$0xff]
  %v1866 = vld [vmem:[%s0 + $0x238] sm:$0xff]
  %v1867 = vld [vmem:[%s0 + $0x240] sm:$0xff]
  %v1868 = vld [vmem:[%s0 + $0x248] sm:$0xff]
  %v1869 = vld [vmem:[%s0 + $0x250] sm:$0xff]
  %v1870 = vld [vmem:[%s0 + $0x258] sm:$0xff]
  %v1871 = vld [vmem:[%s0 + $0x260] sm:$0xff]
  %v1872 = vld [vmem:[%s0 + $0x268] sm:$0xff]
  %v1873 = vld [vmem:[%s0 + $0x270] sm:$0xff]
  %v1874 = vld [vmem:[%s0 + $0x278] sm:$0xff]
  %v1875 = vld [vmem:[%s0 + $0x280] sm:$0xff]
  %v1876 = vld [vmem:[%s0 + $0x288] sm:$0xff]
  %v1877 = vld [vmem:[%s0 + $0x290] sm:$0xff]
  %v1878 = vld [vmem:[%s0 + $0x298] sm:$0xff]
  %v1879 = vld [vmem:[%s0 + $0x2a0] sm:$0xff]
  %v1880 = vld [vmem:[%s0 + $0x2a8] sm:$0xff]
  %v1881 = vld [vmem:[%s0 + $0x2b0] sm:$0xff]
  %v1882 = vld [vmem:[%s0 + $0x2b8] sm:$0xff]
  %v1883 = vld [vmem:[%s0 + $0x2c0] sm:$0xff]
  %v1884 = vld [vmem:[%s0 + $0x2c8] sm:$0xff]
  %v1885 = vld [vmem:[%s0 + $0x2d0] sm:$0xff]
  %v1886 = vld [vmem:[%s0 + $0x2d8] sm:$0xff]
  %v1887 = vld [vmem:[%s0 + $0x2e0] sm:$0xff]
  %v1888 = vld [vmem:[%s0 + $0x2e8] sm:$0xff]
  %v1889 = vld [vmem:[%s0 + $0x2f0] sm:$0xff]
  %v1890 = vld [vmem:[%s0 + $0x2f8] sm:$0xff]
  %v1891 = vld [vmem:[%s1] sm:$0xff]
  %v1892 = vld [vmem:[%s1 + $0x8] sm:$0xff]
  %v1893 = vld [vmem:[%s1 + $0x10] sm:$0x1]
  %v1894 = vld [vmem:[%s1 + $0x18] sm:$0x1]
  %v1895 = vld [vmem:[%s2] sm:$0x3]
  %v1897 = vlaneseq
  %v1898 = vshrl.u32 %v1897, 7
  %v1899 = vsub.s32 0, %v1898
  %v1900 = vrot.slane %v1895, %v1899
  %v1901 = vlaneseq
  %v1902 = vshrl.u32 %v1901, 7
  %v1903 = vsub.s32 1, %v1902
  %v1904 = vrot.slane %v1895, %v1903
  %vm1907 = vcmask 72704
  %v1909 = vsel %vm1907, %v1795, 0
  %v1912 = vsel %vm1907, %v1796, 0
  %v1915 = vsel %vm1907, %v1797, 0
  %v1918 = vsel %vm1907, %v1798, 0
  %v1921 = vsel %vm1907, %v1799, 0
  %v1924 = vsel %vm1907, %v1800, 0
  %v1927 = vsel %vm1907, %v1801, 0
  %v1930 = vsel %vm1907, %v1802, 0
  %v1933 = vsel %vm1907, %v1803, 0
  %v1936 = vsel %vm1907, %v1804, 0
  %v1939 = vsel %vm1907, %v1805, 0
  %v1942 = vsel %vm1907, %v1806, 0
  %v1945 = vsel %vm1907, %v1807, 0
  %v1948 = vsel %vm1907, %v1808, 0
  %v1951 = vsel %vm1907, %v1809, 0
  %v1954 = vsel %vm1907, %v1810, 0
  %v1957 = vsel %vm1907, %v1811, 0
  %v1960 = vsel %vm1907, %v1812, 0
  %v1963 = vsel %vm1907, %v1813, 0
  %v1966 = vsel %vm1907, %v1814, 0
  %v1969 = vsel %vm1907, %v1815, 0
  %v1972 = vsel %vm1907, %v1816, 0
  %v1975 = vsel %vm1907, %v1817, 0
  %v1978 = vsel %vm1907, %v1818, 0
  %v1981 = vsel %vm1907, %v1819, 0
  %v1984 = vsel %vm1907, %v1820, 0
  %v1987 = vsel %vm1907, %v1821, 0
  %v1990 = vsel %vm1907, %v1822, 0
  %v1993 = vsel %vm1907, %v1823, 0
  %v1996 = vsel %vm1907, %v1824, 0
  %v1999 = vsel %vm1907, %v1825, 0
  %v2002 = vsel %vm1907, %v1826, 0
  %v2005 = vsel %vm1907, %v1827, 0
  %v2008 = vsel %vm1907, %v1828, 0
  %v2011 = vsel %vm1907, %v1829, 0
  %v2014 = vsel %vm1907, %v1830, 0
  %v2017 = vsel %vm1907, %v1831, 0
  %v2020 = vsel %vm1907, %v1832, 0
  %v2023 = vsel %vm1907, %v1833, 0
  %v2026 = vsel %vm1907, %v1834, 0
  %v2029 = vsel %vm1907, %v1835, 0
  %v2032 = vsel %vm1907, %v1836, 0
  %v2035 = vsel %vm1907, %v1837, 0
  %v2038 = vsel %vm1907, %v1838, 0
  %v2041 = vsel %vm1907, %v1839, 0
  %v2044 = vsel %vm1907, %v1840, 0
  %v2047 = vsel %vm1907, %v1841, 0
  %v2050 = vsel %vm1907, %v1842, 0
  %v2053 = vsel %vm1907, %v1843, 0
  %v2056 = vsel %vm1907, %v1844, 0
  %v2059 = vsel %vm1907, %v1845, 0
  %v2062 = vsel %vm1907, %v1846, 0
  %v2065 = vsel %vm1907, %v1847, 0
  %v2068 = vsel %vm1907, %v1848, 0
  %v2071 = vsel %vm1907, %v1849, 0
  %v2074 = vsel %vm1907, %v1850, 0
  %v2077 = vsel %vm1907, %v1851, 0
  %v2080 = vsel %vm1907, %v1852, 0
  %v2083 = vsel %vm1907, %v1853, 0
  %v2086 = vsel %vm1907, %v1854, 0
  %v2089 = vsel %vm1907, %v1855, 0
  %v2092 = vsel %vm1907, %v1856, 0
  %v2095 = vsel %vm1907, %v1857, 0
  %v2098 = vsel %vm1907, %v1858, 0
  %v2101 = vsel %vm1907, %v1859, 0
  %v2104 = vsel %vm1907, %v1860, 0
  %v2107 = vsel %vm1907, %v1861, 0
  %v2110 = vsel %vm1907, %v1862, 0
  %v2113 = vsel %vm1907, %v1863, 0
  %v2116 = vsel %vm1907, %v1864, 0
  %v2119 = vsel %vm1907, %v1865, 0
  %v2122 = vsel %vm1907, %v1866, 0
  %v2125 = vsel %vm1907, %v1867, 0
  %v2128 = vsel %vm1907, %v1868, 0
  %v2131 = vsel %vm1907, %v1869, 0
  %v2134 = vsel %vm1907, %v1870, 0
  %v2137 = vsel %vm1907, %v1871, 0
  %v2140 = vsel %vm1907, %v1872, 0
  %v2143 = vsel %vm1907, %v1873, 0
  %v2146 = vsel %vm1907, %v1874, 0
  %v2149 = vsel %vm1907, %v1875, 0
  %v2152 = vsel %vm1907, %v1876, 0
  %v2155 = vsel %vm1907, %v1877, 0
  %v2158 = vsel %vm1907, %v1878, 0
  %v2161 = vsel %vm1907, %v1879, 0
  %v2164 = vsel %vm1907, %v1880, 0
  %v2167 = vsel %vm1907, %v1881, 0
  %v2170 = vsel %vm1907, %v1882, 0
  %v2173 = vsel %vm1907, %v1883, 0
  %v2176 = vsel %vm1907, %v1884, 0
  %v2179 = vsel %vm1907, %v1885, 0
  %v2182 = vsel %vm1907, %v1886, 0
  %v2185 = vsel %vm1907, %v1887, 0
  %v2188 = vsel %vm1907, %v1888, 0
  %v2191 = vsel %vm1907, %v1889, 0
  %v2194 = vsel %vm1907, %v1890, 0
  %vm2196 = vcmask 1040384
  %v2198 = vsel %vm2196, %v1893, 0
  %v2201 = vsel %vm2196, %v1894, 0
  %2203 = vmatprep.subr.mxu0 0.0
  %2204 = vmatpush1.msra.mxu0 0.0
  %2205 = vmatprep.subr.mxu0 0.0
  %2206 = vmatpush1.msra.mxu0 0.0
  %2207 = vmatprep.subr.mxu0 0.0
  %2208 = vmatpush1.msra.mxu0 0.0
  %2209 = vmatprep.subr.mxu0 0.0
  %2210 = vmatpush1.msra.mxu0 0.0
  %2211 = vmatprep.subr.mxu0 0.0
  %2212 = vmatpush1.msra.mxu0 0.0
  %2213 = vmatprep.subr.mxu0 0.0
  %2214 = vmatpush1.msra.mxu0 0.0
  %2215 = vmatprep.subr.mxu0 0.0
  %2216 = vmatpush1.msra.mxu0 0.0
  %2217 = vmatprep.subr.mxu0 0.0
  %2218 = vmatpush1.msra.mxu0 0.0
  %2219 = vmatprep.subr.mxu0 0.0
  %2220 = vmatpush1.msra.mxu0 0.0
  %2221 = vmatprep.subr.mxu0 0.0
  %2222 = vmatpush1.msra.mxu0 0.0
  %2223 = vmatprep.subr.mxu0 0.0
  %2224 = vmatpush1.msra.mxu0 0.0
  %2225 = vmatprep.subr.mxu0 0.0
  %2226 = vmatpush1.msra.mxu0 0.0
  %2227 = vmatprep.subr.mxu0 0.0
  %2228 = vmatpush1.msra.mxu0 0.0
  %2229 = vmatprep.subr.mxu0 0.0
  %2230 = vmatpush1.msra.mxu0 0.0
  %2231 = vmatprep.subr.mxu0 %v2201
  %2232 = vmatpush1.msra.mxu0 %v2198
  %2233 = vmatprep.subr.mxu0 %v1892
  %2234 = vmatpush1.msra.mxu0 %v1891
  %2235 = vmatprep.subr.mxu0 0.0
  %2236 = vmatpush2.msra.mxu0 0.0
  %2237 = vmatprep.subr.mxu0 0.0
  %2238 = vmatpush2.msra.mxu0 0.0
  %2239 = vmatprep.subr.mxu0 0.0
  %2240 = vmatpush2.msra.mxu0 0.0
  %2241 = vmatprep.subr.mxu0 0.0
  %2242 = vmatpush2.msra.mxu0 0.0
  %2243 = vmatprep.subr.mxu0 0.0
  %2244 = vmatpush2.msra.mxu0 0.0
  %2245 = vmatprep.subr.mxu0 0.0
  %2246 = vmatpush2.msra.mxu0 0.0
  %2247 = vmatprep.subr.mxu0 0.0
  %2248 = vmatpush2.msra.mxu0 0.0
  %2249 = vmatprep.subr.mxu0 0.0
  %2250 = vmatpush2.msra.mxu0 0.0
  %2251 = vmatprep.subr.mxu0 0.0
  %2252 = vmatpush2.msra.mxu0 0.0
  %2253 = vmatprep.subr.mxu0 0.0
  %2254 = vmatpush2.msra.mxu0 0.0
  %2255 = vmatprep.subr.mxu0 0.0
  %2256 = vmatpush2.msra.mxu0 0.0
  %2257 = vmatprep.subr.mxu0 0.0
  %2258 = vmatpush2.msra.mxu0 0.0
  %2259 = vmatprep.subr.mxu0 0.0
  %2260 = vmatpush2.msra.mxu0 0.0
  %2261 = vmatprep.subr.mxu0 0.0
  %2262 = vmatpush2.msra.mxu0 0.0
  %2263 = vmatprep.subr.mxu0 0.0
  %2264 = vmatpush2.msra.mxu0 0.0
  %2265 = vmatprep.subr.mxu0 0.0
  %2266 = vmatpush2.msra.mxu0 0.0
  %2267 = vmatprep.mubr.f32.mxu0 0.0
  %2268 = vmatmul.mubr.f32.gmra.mxu0 %v1909
  %v2269 = vpop.f32.mrf.mxu0
  %v2270 = vadd.f32 %v1900, %v2269
  %v2271 = vpop.f32.mrf.mxu0
  %v2272 = vadd.f32 %v1904, %v2271
  %2273 = vmatprep.mubr.f32.mxu0 0.0
  %2274 = vmatmul.mubr.f32.gmra.mxu0 %v1912
  %v2275 = vpop.f32.mrf.mxu0
  %v2276 = vadd.f32 %v1900, %v2275
  %v2277 = vpop.f32.mrf.mxu0
  %v2278 = vadd.f32 %v1904, %v2277
  %2279 = vmatprep.mubr.f32.mxu0 0.0
  %2280 = vmatmul.mubr.f32.gmra.mxu0 %v1915
  %v2281 = vpop.f32.mrf.mxu0
  %v2282 = vadd.f32 %v1900, %v2281
  %v2283 = vpop.f32.mrf.mxu0
  %v2284 = vadd.f32 %v1904, %v2283
  %2285 = vmatprep.mubr.f32.mxu0 0.0
  %2286 = vmatmul.mubr.f32.gmra.mxu0 %v1918
  %v2287 = vpop.f32.mrf.mxu0
  %v2288 = vadd.f32 %v1900, %v2287
  %v2289 = vpop.f32.mrf.mxu0
  %v2290 = vadd.f32 %v1904, %v2289
  %2291 = vmatprep.mubr.f32.mxu0 0.0
  %2292 = vmatmul.mubr.f32.gmra.mxu0 %v1921
  %v2293 = vpop.f32.mrf.mxu0
  %v2294 = vadd.f32 %v1900, %v2293
  %v2295 = vpop.f32.mrf.mxu0
  %v2296 = vadd.f32 %v1904, %v2295
  %2297 = vmatprep.mubr.f32.mxu0 0.0
  %2298 = vmatmul.mubr.f32.gmra.mxu0 %v1924
  %v2299 = vpop.f32.mrf.mxu0
  %v2300 = vadd.f32 %v1900, %v2299
  %v2301 = vpop.f32.mrf.mxu0
  %v2302 = vadd.f32 %v1904, %v2301
  %2303 = vmatprep.mubr.f32.mxu0 0.0
  %2304 = vmatmul.mubr.f32.gmra.mxu0 %v1927
  %v2305 = vpop.f32.mrf.mxu0
  %v2306 = vadd.f32 %v1900, %v2305
  %v2307 = vpop.f32.mrf.mxu0
  %v2308 = vadd.f32 %v1904, %v2307
  %2309 = vmatprep.mubr.f32.mxu0 0.0
  %2310 = vmatmul.mubr.f32.gmra.mxu0 %v1930
  %v2311 = vpop.f32.mrf.mxu0
  %v2312 = vadd.f32 %v1900, %v2311
  %v2313 = vpop.f32.mrf.mxu0
  %v2314 = vadd.f32 %v1904, %v2313
  %2315 = vmatprep.mubr.f32.mxu0 0.0
  %2316 = vmatmul.mubr.f32.gmra.mxu0 %v1933
  %v2317 = vpop.f32.mrf.mxu0
  %v2318 = vadd.f32 %v1900, %v2317
  %v2319 = vpop.f32.mrf.mxu0
  %v2320 = vadd.f32 %v1904, %v2319
  %2321 = vmatprep.mubr.f32.mxu0 0.0
  %2322 = vmatmul.mubr.f32.gmra.mxu0 %v1936
  %v2323 = vpop.f32.mrf.mxu0
  %v2324 = vadd.f32 %v1900, %v2323
  %v2325 = vpop.f32.mrf.mxu0
  %v2326 = vadd.f32 %v1904, %v2325
  %2327 = vmatprep.mubr.f32.mxu0 0.0
  %2328 = vmatmul.mubr.f32.gmra.mxu0 %v1939
  %v2329 = vpop.f32.mrf.mxu0
  %v2330 = vadd.f32 %v1900, %v2329
  %v2331 = vpop.f32.mrf.mxu0
  %v2332 = vadd.f32 %v1904, %v2331
  %2333 = vmatprep.mubr.f32.mxu0 0.0
  %2334 = vmatmul.mubr.f32.gmra.mxu0 %v1942
  %v2335 = vpop.f32.mrf.mxu0
  %v2336 = vadd.f32 %v1900, %v2335
  %v2337 = vpop.f32.mrf.mxu0
  %v2338 = vadd.f32 %v1904, %v2337
  %2339 = vmatprep.mubr.f32.mxu0 0.0
  %2340 = vmatmul.mubr.f32.gmra.mxu0 %v1945
  %v2341 = vpop.f32.mrf.mxu0
  %v2342 = vadd.f32 %v1900, %v2341
  %v2343 = vpop.f32.mrf.mxu0
  %v2344 = vadd.f32 %v1904, %v2343
  %2345 = vmatprep.mubr.f32.mxu0 0.0
  %2346 = vmatmul.mubr.f32.gmra.mxu0 %v1948
  %v2347 = vpop.f32.mrf.mxu0
  %v2348 = vadd.f32 %v1900, %v2347
  %v2349 = vpop.f32.mrf.mxu0
  %v2350 = vadd.f32 %v1904, %v2349
  %2351 = vmatprep.mubr.f32.mxu0 0.0
  %2352 = vmatmul.mubr.f32.gmra.mxu0 %v1951
  %v2353 = vpop.f32.mrf.mxu0
  %v2354 = vadd.f32 %v1900, %v2353
  %v2355 = vpop.f32.mrf.mxu0
  %v2356 = vadd.f32 %v1904, %v2355
  %2357 = vmatprep.mubr.f32.mxu0 0.0
  %2358 = vmatmul.mubr.f32.gmra.mxu0 %v1954
  %v2359 = vpop.f32.mrf.mxu0
  %v2360 = vadd.f32 %v1900, %v2359
  %v2361 = vpop.f32.mrf.mxu0
  %v2362 = vadd.f32 %v1904, %v2361
  %2363 = vmatprep.mubr.f32.mxu0 0.0
  %2364 = vmatmul.mubr.f32.gmra.mxu0 %v1957
  %v2365 = vpop.f32.mrf.mxu0
  %v2366 = vadd.f32 %v1900, %v2365
  %v2367 = vpop.f32.mrf.mxu0
  %v2368 = vadd.f32 %v1904, %v2367
  %2369 = vmatprep.mubr.f32.mxu0 0.0
  %2370 = vmatmul.mubr.f32.gmra.mxu0 %v1960
  %v2371 = vpop.f32.mrf.mxu0
  %v2372 = vadd.f32 %v1900, %v2371
  %v2373 = vpop.f32.mrf.mxu0
  %v2374 = vadd.f32 %v1904, %v2373
  %2375 = vmatprep.mubr.f32.mxu0 0.0
  %2376 = vmatmul.mubr.f32.gmra.mxu0 %v1963
  %v2377 = vpop.f32.mrf.mxu0
  %v2378 = vadd.f32 %v1900, %v2377
  %v2379 = vpop.f32.mrf.mxu0
  %v2380 = vadd.f32 %v1904, %v2379
  %2381 = vmatprep.mubr.f32.mxu0 0.0
  %2382 = vmatmul.mubr.f32.gmra.mxu0 %v1966
  %v2383 = vpop.f32.mrf.mxu0
  %v2384 = vadd.f32 %v1900, %v2383
  %v2385 = vpop.f32.mrf.mxu0
  %v2386 = vadd.f32 %v1904, %v2385
  %2387 = vmatprep.mubr.f32.mxu0 0.0
  %2388 = vmatmul.mubr.f32.gmra.mxu0 %v1969
  %v2389 = vpop.f32.mrf.mxu0
  %v2390 = vadd.f32 %v1900, %v2389
  %v2391 = vpop.f32.mrf.mxu0
  %v2392 = vadd.f32 %v1904, %v2391
  %2393 = vmatprep.mubr.f32.mxu0 0.0
  %2394 = vmatmul.mubr.f32.gmra.mxu0 %v1972
  %v2395 = vpop.f32.mrf.mxu0
  %v2396 = vadd.f32 %v1900, %v2395
  %v2397 = vpop.f32.mrf.mxu0
  %v2398 = vadd.f32 %v1904, %v2397
  %2399 = vmatprep.mubr.f32.mxu0 0.0
  %2400 = vmatmul.mubr.f32.gmra.mxu0 %v1975
  %v2401 = vpop.f32.mrf.mxu0
  %v2402 = vadd.f32 %v1900, %v2401
  %v2403 = vpop.f32.mrf.mxu0
  %v2404 = vadd.f32 %v1904, %v2403
  %2405 = vmatprep.mubr.f32.mxu0 0.0
  %2406 = vmatmul.mubr.f32.gmra.mxu0 %v1978
  %v2407 = vpop.f32.mrf.mxu0
  %v2408 = vadd.f32 %v1900, %v2407
  %v2409 = vpop.f32.mrf.mxu0
  %v2410 = vadd.f32 %v1904, %v2409
  %2411 = vmatprep.mubr.f32.mxu0 0.0
  %2412 = vmatmul.mubr.f32.gmra.mxu0 %v1981
  %v2413 = vpop.f32.mrf.mxu0
  %v2414 = vadd.f32 %v1900, %v2413
  %v2415 = vpop.f32.mrf.mxu0
  %v2416 = vadd.f32 %v1904, %v2415
  %2417 = vmatprep.mubr.f32.mxu0 0.0
  %2418 = vmatmul.mubr.f32.gmra.mxu0 %v1984
  %v2419 = vpop.f32.mrf.mxu0
  %v2420 = vadd.f32 %v1900, %v2419
  %v2421 = vpop.f32.mrf.mxu0
  %v2422 = vadd.f32 %v1904, %v2421
  %2423 = vmatprep.mubr.f32.mxu0 0.0
  %2424 = vmatmul.mubr.f32.gmra.mxu0 %v1987
  %v2425 = vpop.f32.mrf.mxu0
  %v2426 = vadd.f32 %v1900, %v2425
  %v2427 = vpop.f32.mrf.mxu0
  %v2428 = vadd.f32 %v1904, %v2427
  %2429 = vmatprep.mubr.f32.mxu0 0.0
  %2430 = vmatmul.mubr.f32.gmra.mxu0 %v1990
  %v2431 = vpop.f32.mrf.mxu0
  %v2432 = vadd.f32 %v1900, %v2431
  %v2433 = vpop.f32.mrf.mxu0
  %v2434 = vadd.f32 %v1904, %v2433
  %2435 = vmatprep.mubr.f32.mxu0 0.0
  %2436 = vmatmul.mubr.f32.gmra.mxu0 %v1993
  %v2437 = vpop.f32.mrf.mxu0
  %v2438 = vadd.f32 %v1900, %v2437
  %v2439 = vpop.f32.mrf.mxu0
  %v2440 = vadd.f32 %v1904, %v2439
  %2441 = vmatprep.mubr.f32.mxu0 0.0
  %2442 = vmatmul.mubr.f32.gmra.mxu0 %v1996
  %v2443 = vpop.f32.mrf.mxu0
  %v2444 = vadd.f32 %v1900, %v2443
  %v2445 = vpop.f32.mrf.mxu0
  %v2446 = vadd.f32 %v1904, %v2445
  %2447 = vmatprep.mubr.f32.mxu0 0.0
  %2448 = vmatmul.mubr.f32.gmra.mxu0 %v1999
  %v2449 = vpop.f32.mrf.mxu0
  %v2450 = vadd.f32 %v1900, %v2449
  %v2451 = vpop.f32.mrf.mxu0
  %v2452 = vadd.f32 %v1904, %v2451
  %2453 = vmatprep.mubr.f32.mxu0 0.0
  %2454 = vmatmul.mubr.f32.gmra.mxu0 %v2002
  %v2455 = vpop.f32.mrf.mxu0
  %v2456 = vadd.f32 %v1900, %v2455
  %v2457 = vpop.f32.mrf.mxu0
  %v2458 = vadd.f32 %v1904, %v2457
  %2459 = vmatprep.mubr.f32.mxu0 0.0
  %2460 = vmatmul.mubr.f32.gmra.mxu0 %v2005
  %v2461 = vpop.f32.mrf.mxu0
  %v2462 = vadd.f32 %v1900, %v2461
  %v2463 = vpop.f32.mrf.mxu0
  %v2464 = vadd.f32 %v1904, %v2463
  %2465 = vmatprep.mubr.f32.mxu0 0.0
  %2466 = vmatmul.mubr.f32.gmra.mxu0 %v2008
  %v2467 = vpop.f32.mrf.mxu0
  %v2468 = vadd.f32 %v1900, %v2467
  %v2469 = vpop.f32.mrf.mxu0
  %v2470 = vadd.f32 %v1904, %v2469
  %2471 = vmatprep.mubr.f32.mxu0 0.0
  %2472 = vmatmul.mubr.f32.gmra.mxu0 %v2011
  %v2473 = vpop.f32.mrf.mxu0
  %v2474 = vadd.f32 %v1900, %v2473
  %v2475 = vpop.f32.mrf.mxu0
  %v2476 = vadd.f32 %v1904, %v2475
  %2477 = vmatprep.mubr.f32.mxu0 0.0
  %2478 = vmatmul.mubr.f32.gmra.mxu0 %v2014
  %v2479 = vpop.f32.mrf.mxu0
  %v2480 = vadd.f32 %v1900, %v2479
  %v2481 = vpop.f32.mrf.mxu0
  %v2482 = vadd.f32 %v1904, %v2481
  %2483 = vmatprep.mubr.f32.mxu0 0.0
  %2484 = vmatmul.mubr.f32.gmra.mxu0 %v2017
  %v2485 = vpop.f32.mrf.mxu0
  %v2486 = vadd.f32 %v1900, %v2485
  %v2487 = vpop.f32.mrf.mxu0
  %v2488 = vadd.f32 %v1904, %v2487
  %2489 = vmatprep.mubr.f32.mxu0 0.0
  %2490 = vmatmul.mubr.f32.gmra.mxu0 %v2020
  %v2491 = vpop.f32.mrf.mxu0
  %v2492 = vadd.f32 %v1900, %v2491
  %v2493 = vpop.f32.mrf.mxu0
  %v2494 = vadd.f32 %v1904, %v2493
  %2495 = vmatprep.mubr.f32.mxu0 0.0
  %2496 = vmatmul.mubr.f32.gmra.mxu0 %v2023
  %v2497 = vpop.f32.mrf.mxu0
  %v2498 = vadd.f32 %v1900, %v2497
  %v2499 = vpop.f32.mrf.mxu0
  %v2500 = vadd.f32 %v1904, %v2499
  %2501 = vmatprep.mubr.f32.mxu0 0.0
  %2502 = vmatmul.mubr.f32.gmra.mxu0 %v2026
  %v2503 = vpop.f32.mrf.mxu0
  %v2504 = vadd.f32 %v1900, %v2503
  %v2505 = vpop.f32.mrf.mxu0
  %v2506 = vadd.f32 %v1904, %v2505
  %2507 = vmatprep.mubr.f32.mxu0 0.0
  %2508 = vmatmul.mubr.f32.gmra.mxu0 %v2029
  %v2509 = vpop.f32.mrf.mxu0
  %v2510 = vadd.f32 %v1900, %v2509
  %v2511 = vpop.f32.mrf.mxu0
  %v2512 = vadd.f32 %v1904, %v2511
  %2513 = vmatprep.mubr.f32.mxu0 0.0
  %2514 = vmatmul.mubr.f32.gmra.mxu0 %v2032
  %v2515 = vpop.f32.mrf.mxu0
  %v2516 = vadd.f32 %v1900, %v2515
  %v2517 = vpop.f32.mrf.mxu0
  %v2518 = vadd.f32 %v1904, %v2517
  %2519 = vmatprep.mubr.f32.mxu0 0.0
  %2520 = vmatmul.mubr.f32.gmra.mxu0 %v2035
  %v2521 = vpop.f32.mrf.mxu0
  %v2522 = vadd.f32 %v1900, %v2521
  %v2523 = vpop.f32.mrf.mxu0
  %v2524 = vadd.f32 %v1904, %v2523
  %2525 = vmatprep.mubr.f32.mxu0 0.0
  %2526 = vmatmul.mubr.f32.gmra.mxu0 %v2038
  %v2527 = vpop.f32.mrf.mxu0
  %v2528 = vadd.f32 %v1900, %v2527
  %v2529 = vpop.f32.mrf.mxu0
  %v2530 = vadd.f32 %v1904, %v2529
  %2531 = vmatprep.mubr.f32.mxu0 0.0
  %2532 = vmatmul.mubr.f32.gmra.mxu0 %v2041
  %v2533 = vpop.f32.mrf.mxu0
  %v2534 = vadd.f32 %v1900, %v2533
  %v2535 = vpop.f32.mrf.mxu0
  %v2536 = vadd.f32 %v1904, %v2535
  %2537 = vmatprep.mubr.f32.mxu0 0.0
  %2538 = vmatmul.mubr.f32.gmra.mxu0 %v2044
  %v2539 = vpop.f32.mrf.mxu0
  %v2540 = vadd.f32 %v1900, %v2539
  %v2541 = vpop.f32.mrf.mxu0
  %v2542 = vadd.f32 %v1904, %v2541
  %2543 = vmatprep.mubr.f32.mxu0 0.0
  %2544 = vmatmul.mubr.f32.gmra.mxu0 %v2047
  %v2545 = vpop.f32.mrf.mxu0
  %v2546 = vadd.f32 %v1900, %v2545
  %v2547 = vpop.f32.mrf.mxu0
  %v2548 = vadd.f32 %v1904, %v2547
  %2549 = vmatprep.mubr.f32.mxu0 0.0
  %2550 = vmatmul.mubr.f32.gmra.mxu0 %v2050
  %v2551 = vpop.f32.mrf.mxu0
  %v2552 = vadd.f32 %v1900, %v2551
  %v2553 = vpop.f32.mrf.mxu0
  %v2554 = vadd.f32 %v1904, %v2553
  %2555 = vmatprep.mubr.f32.mxu0 0.0
  %2556 = vmatmul.mubr.f32.gmra.mxu0 %v2053
  %v2557 = vpop.f32.mrf.mxu0
  %v2558 = vadd.f32 %v1900, %v2557
  %v2559 = vpop.f32.mrf.mxu0
  %v2560 = vadd.f32 %v1904, %v2559
  %2561 = vmatprep.mubr.f32.mxu0 0.0
  %2562 = vmatmul.mubr.f32.gmra.mxu0 %v2056
  %v2563 = vpop.f32.mrf.mxu0
  %v2564 = vadd.f32 %v1900, %v2563
  %v2565 = vpop.f32.mrf.mxu0
  %v2566 = vadd.f32 %v1904, %v2565
  %2567 = vmatprep.mubr.f32.mxu0 0.0
  %2568 = vmatmul.mubr.f32.gmra.mxu0 %v2059
  %v2569 = vpop.f32.mrf.mxu0
  %v2570 = vadd.f32 %v1900, %v2569
  %v2571 = vpop.f32.mrf.mxu0
  %v2572 = vadd.f32 %v1904, %v2571
  %2573 = vmatprep.mubr.f32.mxu0 0.0
  %2574 = vmatmul.mubr.f32.gmra.mxu0 %v2062
  %v2575 = vpop.f32.mrf.mxu0
  %v2576 = vadd.f32 %v1900, %v2575
  %v2577 = vpop.f32.mrf.mxu0
  %v2578 = vadd.f32 %v1904, %v2577
  %2579 = vmatprep.mubr.f32.mxu0 0.0
  %2580 = vmatmul.mubr.f32.gmra.mxu0 %v2065
  %v2581 = vpop.f32.mrf.mxu0
  %v2582 = vadd.f32 %v1900, %v2581
  %v2583 = vpop.f32.mrf.mxu0
  %v2584 = vadd.f32 %v1904, %v2583
  %2585 = vmatprep.mubr.f32.mxu0 0.0
  %2586 = vmatmul.mubr.f32.gmra.mxu0 %v2068
  %v2587 = vpop.f32.mrf.mxu0
  %v2588 = vadd.f32 %v1900, %v2587
  %v2589 = vpop.f32.mrf.mxu0
  %v2590 = vadd.f32 %v1904, %v2589
  %2591 = vmatprep.mubr.f32.mxu0 0.0
  %2592 = vmatmul.mubr.f32.gmra.mxu0 %v2071
  %v2593 = vpop.f32.mrf.mxu0
  %v2594 = vadd.f32 %v1900, %v2593
  %v2595 = vpop.f32.mrf.mxu0
  %v2596 = vadd.f32 %v1904, %v2595
  %2597 = vmatprep.mubr.f32.mxu0 0.0
  %2598 = vmatmul.mubr.f32.gmra.mxu0 %v2074
  %v2599 = vpop.f32.mrf.mxu0
  %v2600 = vadd.f32 %v1900, %v2599
  %v2601 = vpop.f32.mrf.mxu0
  %v2602 = vadd.f32 %v1904, %v2601
  %2603 = vmatprep.mubr.f32.mxu0 0.0
  %2604 = vmatmul.mubr.f32.gmra.mxu0 %v2077
  %v2605 = vpop.f32.mrf.mxu0
  %v2606 = vadd.f32 %v1900, %v2605
  %v2607 = vpop.f32.mrf.mxu0
  %v2608 = vadd.f32 %v1904, %v2607
  %2609 = vmatprep.mubr.f32.mxu0 0.0
  %2610 = vmatmul.mubr.f32.gmra.mxu0 %v2080
  %v2611 = vpop.f32.mrf.mxu0
  %v2612 = vadd.f32 %v1900, %v2611
  %v2613 = vpop.f32.mrf.mxu0
  %v2614 = vadd.f32 %v1904, %v2613
  %2615 = vmatprep.mubr.f32.mxu0 0.0
  %2616 = vmatmul.mubr.f32.gmra.mxu0 %v2083
  %v2617 = vpop.f32.mrf.mxu0
  %v2618 = vadd.f32 %v1900, %v2617
  %v2619 = vpop.f32.mrf.mxu0
  %v2620 = vadd.f32 %v1904, %v2619
  %2621 = vmatprep.mubr.f32.mxu0 0.0
  %2622 = vmatmul.mubr.f32.gmra.mxu0 %v2086
  %v2623 = vpop.f32.mrf.mxu0
  %v2624 = vadd.f32 %v1900, %v2623
  %v2625 = vpop.f32.mrf.mxu0
  %v2626 = vadd.f32 %v1904, %v2625
  %2627 = vmatprep.mubr.f32.mxu0 0.0
  %2628 = vmatmul.mubr.f32.gmra.mxu0 %v2089
  %v2629 = vpop.f32.mrf.mxu0
  %v2630 = vadd.f32 %v1900, %v2629
  %v2631 = vpop.f32.mrf.mxu0
  %v2632 = vadd.f32 %v1904, %v2631
  %2633 = vmatprep.mubr.f32.mxu0 0.0
  %2634 = vmatmul.mubr.f32.gmra.mxu0 %v2092
  %v2635 = vpop.f32.mrf.mxu0
  %v2636 = vadd.f32 %v1900, %v2635
  %v2637 = vpop.f32.mrf.mxu0
  %v2638 = vadd.f32 %v1904, %v2637
  %2639 = vmatprep.mubr.f32.mxu0 0.0
  %2640 = vmatmul.mubr.f32.gmra.mxu0 %v2095
  %v2641 = vpop.f32.mrf.mxu0
  %v2642 = vadd.f32 %v1900, %v2641
  %v2643 = vpop.f32.mrf.mxu0
  %v2644 = vadd.f32 %v1904, %v2643
  %2645 = vmatprep.mubr.f32.mxu0 0.0
  %2646 = vmatmul.mubr.f32.gmra.mxu0 %v2098
  %v2647 = vpop.f32.mrf.mxu0
  %v2648 = vadd.f32 %v1900, %v2647
  %v2649 = vpop.f32.mrf.mxu0
  %v2650 = vadd.f32 %v1904, %v2649
  %2651 = vmatprep.mubr.f32.mxu0 0.0
  %2652 = vmatmul.mubr.f32.gmra.mxu0 %v2101
  %v2653 = vpop.f32.mrf.mxu0
  %v2654 = vadd.f32 %v1900, %v2653
  %v2655 = vpop.f32.mrf.mxu0
  %v2656 = vadd.f32 %v1904, %v2655
  %2657 = vmatprep.mubr.f32.mxu0 0.0
  %2658 = vmatmul.mubr.f32.gmra.mxu0 %v2104
  %v2659 = vpop.f32.mrf.mxu0
  %v2660 = vadd.f32 %v1900, %v2659
  %v2661 = vpop.f32.mrf.mxu0
  %v2662 = vadd.f32 %v1904, %v2661
  %2663 = vmatprep.mubr.f32.mxu0 0.0
  %2664 = vmatmul.mubr.f32.gmra.mxu0 %v2107
  %v2665 = vpop.f32.mrf.mxu0
  %v2666 = vadd.f32 %v1900, %v2665
  %v2667 = vpop.f32.mrf.mxu0
  %v2668 = vadd.f32 %v1904, %v2667
  %2669 = vmatprep.mubr.f32.mxu0 0.0
  %2670 = vmatmul.mubr.f32.gmra.mxu0 %v2110
  %v2671 = vpop.f32.mrf.mxu0
  %v2672 = vadd.f32 %v1900, %v2671
  %v2673 = vpop.f32.mrf.mxu0
  %v2674 = vadd.f32 %v1904, %v2673
  %2675 = vmatprep.mubr.f32.mxu0 0.0
  %2676 = vmatmul.mubr.f32.gmra.mxu0 %v2113
  %v2677 = vpop.f32.mrf.mxu0
  %v2678 = vadd.f32 %v1900, %v2677
  %v2679 = vpop.f32.mrf.mxu0
  %v2680 = vadd.f32 %v1904, %v2679
  %2681 = vmatprep.mubr.f32.mxu0 0.0
  %2682 = vmatmul.mubr.f32.gmra.mxu0 %v2116
  %v2683 = vpop.f32.mrf.mxu0
  %v2684 = vadd.f32 %v1900, %v2683
  %v2685 = vpop.f32.mrf.mxu0
  %v2686 = vadd.f32 %v1904, %v2685
  %2687 = vmatprep.mubr.f32.mxu0 0.0
  %2688 = vmatmul.mubr.f32.gmra.mxu0 %v2119
  %v2689 = vpop.f32.mrf.mxu0
  %v2690 = vadd.f32 %v1900, %v2689
  %v2691 = vpop.f32.mrf.mxu0
  %v2692 = vadd.f32 %v1904, %v2691
  %2693 = vmatprep.mubr.f32.mxu0 0.0
  %2694 = vmatmul.mubr.f32.gmra.mxu0 %v2122
  %v2695 = vpop.f32.mrf.mxu0
  %v2696 = vadd.f32 %v1900, %v2695
  %v2697 = vpop.f32.mrf.mxu0
  %v2698 = vadd.f32 %v1904, %v2697
  %2699 = vmatprep.mubr.f32.mxu0 0.0
  %2700 = vmatmul.mubr.f32.gmra.mxu0 %v2125
  %v2701 = vpop.f32.mrf.mxu0
  %v2702 = vadd.f32 %v1900, %v2701
  %v2703 = vpop.f32.mrf.mxu0
  %v2704 = vadd.f32 %v1904, %v2703
  %2705 = vmatprep.mubr.f32.mxu0 0.0
  %2706 = vmatmul.mubr.f32.gmra.mxu0 %v2128
  %v2707 = vpop.f32.mrf.mxu0
  %v2708 = vadd.f32 %v1900, %v2707
  %v2709 = vpop.f32.mrf.mxu0
  %v2710 = vadd.f32 %v1904, %v2709
  %2711 = vmatprep.mubr.f32.mxu0 0.0
  %2712 = vmatmul.mubr.f32.gmra.mxu0 %v2131
  %v2713 = vpop.f32.mrf.mxu0
  %v2714 = vadd.f32 %v1900, %v2713
  %v2715 = vpop.f32.mrf.mxu0
  %v2716 = vadd.f32 %v1904, %v2715
  %2717 = vmatprep.mubr.f32.mxu0 0.0
  %2718 = vmatmul.mubr.f32.gmra.mxu0 %v2134
  %v2719 = vpop.f32.mrf.mxu0
  %v2720 = vadd.f32 %v1900, %v2719
  %v2721 = vpop.f32.mrf.mxu0
  %v2722 = vadd.f32 %v1904, %v2721
  %2723 = vmatprep.mubr.f32.mxu0 0.0
  %2724 = vmatmul.mubr.f32.gmra.mxu0 %v2137
  %v2725 = vpop.f32.mrf.mxu0
  %v2726 = vadd.f32 %v1900, %v2725
  %v2727 = vpop.f32.mrf.mxu0
  %v2728 = vadd.f32 %v1904, %v2727
  %2729 = vmatprep.mubr.f32.mxu0 0.0
  %2730 = vmatmul.mubr.f32.gmra.mxu0 %v2140
  %v2731 = vpop.f32.mrf.mxu0
  %v2732 = vadd.f32 %v1900, %v2731
  %v2733 = vpop.f32.mrf.mxu0
  %v2734 = vadd.f32 %v1904, %v2733
  %2735 = vmatprep.mubr.f32.mxu0 0.0
  %2736 = vmatmul.mubr.f32.gmra.mxu0 %v2143
  %v2737 = vpop.f32.mrf.mxu0
  %v2738 = vadd.f32 %v1900, %v2737
  %v2739 = vpop.f32.mrf.mxu0
  %v2740 = vadd.f32 %v1904, %v2739
  %2741 = vmatprep.mubr.f32.mxu0 0.0
  %2742 = vmatmul.mubr.f32.gmra.mxu0 %v2146
  %v2743 = vpop.f32.mrf.mxu0
  %v2744 = vadd.f32 %v1900, %v2743
  %v2745 = vpop.f32.mrf.mxu0
  %v2746 = vadd.f32 %v1904, %v2745
  %2747 = vmatprep.mubr.f32.mxu0 0.0
  %2748 = vmatmul.mubr.f32.gmra.mxu0 %v2149
  %v2749 = vpop.f32.mrf.mxu0
  %v2750 = vadd.f32 %v1900, %v2749
  %v2751 = vpop.f32.mrf.mxu0
  %v2752 = vadd.f32 %v1904, %v2751
  %2753 = vmatprep.mubr.f32.mxu0 0.0
  %2754 = vmatmul.mubr.f32.gmra.mxu0 %v2152
  %v2755 = vpop.f32.mrf.mxu0
  %v2756 = vadd.f32 %v1900, %v2755
  %v2757 = vpop.f32.mrf.mxu0
  %v2758 = vadd.f32 %v1904, %v2757
  %2759 = vmatprep.mubr.f32.mxu0 0.0
  %2760 = vmatmul.mubr.f32.gmra.mxu0 %v2155
  %v2761 = vpop.f32.mrf.mxu0
  %v2762 = vadd.f32 %v1900, %v2761
  %v2763 = vpop.f32.mrf.mxu0
  %v2764 = vadd.f32 %v1904, %v2763
  %2765 = vmatprep.mubr.f32.mxu0 0.0
  %2766 = vmatmul.mubr.f32.gmra.mxu0 %v2158
  %v2767 = vpop.f32.mrf.mxu0
  %v2768 = vadd.f32 %v1900, %v2767
  %v2769 = vpop.f32.mrf.mxu0
  %v2770 = vadd.f32 %v1904, %v2769
  %2771 = vmatprep.mubr.f32.mxu0 0.0
  %2772 = vmatmul.mubr.f32.gmra.mxu0 %v2161
  %v2773 = vpop.f32.mrf.mxu0
  %v2774 = vadd.f32 %v1900, %v2773
  %v2775 = vpop.f32.mrf.mxu0
  %v2776 = vadd.f32 %v1904, %v2775
  %2777 = vmatprep.mubr.f32.mxu0 0.0
  %2778 = vmatmul.mubr.f32.gmra.mxu0 %v2164
  %v2779 = vpop.f32.mrf.mxu0
  %v2780 = vadd.f32 %v1900, %v2779
  %v2781 = vpop.f32.mrf.mxu0
  %v2782 = vadd.f32 %v1904, %v2781
  %2783 = vmatprep.mubr.f32.mxu0 0.0
  %2784 = vmatmul.mubr.f32.gmra.mxu0 %v2167
  %v2785 = vpop.f32.mrf.mxu0
  %v2786 = vadd.f32 %v1900, %v2785
  %v2787 = vpop.f32.mrf.mxu0
  %v2788 = vadd.f32 %v1904, %v2787
  %2789 = vmatprep.mubr.f32.mxu0 0.0
  %2790 = vmatmul.mubr.f32.gmra.mxu0 %v2170
  %v2791 = vpop.f32.mrf.mxu0
  %v2792 = vadd.f32 %v1900, %v2791
  %v2793 = vpop.f32.mrf.mxu0
  %v2794 = vadd.f32 %v1904, %v2793
  %2795 = vmatprep.mubr.f32.mxu0 0.0
  %2796 = vmatmul.mubr.f32.gmra.mxu0 %v2173
  %v2797 = vpop.f32.mrf.mxu0
  %v2798 = vadd.f32 %v1900, %v2797
  %v2799 = vpop.f32.mrf.mxu0
  %v2800 = vadd.f32 %v1904, %v2799
  %2801 = vmatprep.mubr.f32.mxu0 0.0
  %2802 = vmatmul.mubr.f32.gmra.mxu0 %v2176
  %v2803 = vpop.f32.mrf.mxu0
  %v2804 = vadd.f32 %v1900, %v2803
  %v2805 = vpop.f32.mrf.mxu0
  %v2806 = vadd.f32 %v1904, %v2805
  %2807 = vmatprep.mubr.f32.mxu0 0.0
  %2808 = vmatmul.mubr.f32.gmra.mxu0 %v2179
  %v2809 = vpop.f32.mrf.mxu0
  %v2810 = vadd.f32 %v1900, %v2809
  %v2811 = vpop.f32.mrf.mxu0
  %v2812 = vadd.f32 %v1904, %v2811
  %2813 = vmatprep.mubr.f32.mxu0 0.0
  %2814 = vmatmul.mubr.f32.gmra.mxu0 %v2182
  %v2815 = vpop.f32.mrf.mxu0
  %v2816 = vadd.f32 %v1900, %v2815
  %v2817 = vpop.f32.mrf.mxu0
  %v2818 = vadd.f32 %v1904, %v2817
  %2819 = vmatprep.mubr.f32.mxu0 0.0
  %2820 = vmatmul.mubr.f32.gmra.mxu0 %v2185
  %v2821 = vpop.f32.mrf.mxu0
  %v2822 = vadd.f32 %v1900, %v2821
  %v2823 = vpop.f32.mrf.mxu0
  %v2824 = vadd.f32 %v1904, %v2823
  %2825 = vmatprep.mubr.f32.mxu0 0.0
  %2826 = vmatmul.mubr.f32.gmra.mxu0 %v2188
  %v2827 = vpop.f32.mrf.mxu0
  %v2828 = vadd.f32 %v1900, %v2827
  %v2829 = vpop.f32.mrf.mxu0
  %v2830 = vadd.f32 %v1904, %v2829
  %2831 = vmatprep.mubr.f32.mxu0 0.0
  %2832 = vmatmul.mubr.f32.gmra.mxu0 %v2191
  %v2833 = vpop.f32.mrf.mxu0
  %v2834 = vadd.f32 %v1900, %v2833
  %v2835 = vpop.f32.mrf.mxu0
  %v2836 = vadd.f32 %v1904, %v2835
  %2837 = vmatprep.mubr.f32.mxu0 0.0
  %2838 = vmatmul.mubr.f32.gmra.mxu0 %v2194
  %v2839 = vpop.f32.mrf.mxu0
  %v2840 = vadd.f32 %v1900, %v2839
  %v2841 = vpop.f32.mrf.mxu0
  %v2842 = vadd.f32 %v1904, %v2841
  %2843 = vdwg.mxu0
  %v2844 = vmul.f32 %v2270, 0.01
  %v2845 = vmul.f32 %v2272, 0.01
  %v2846 = vmul.f32 %v2276, 0.01
  %v2847 = vmul.f32 %v2278, 0.01
  %v2848 = vmul.f32 %v2282, 0.01
  %v2849 = vmul.f32 %v2284, 0.01
  %v2850 = vmul.f32 %v2288, 0.01
  %v2851 = vmul.f32 %v2290, 0.01
  %v2852 = vmul.f32 %v2294, 0.01
  %v2853 = vmul.f32 %v2296, 0.01
  %v2854 = vmul.f32 %v2300, 0.01
  %v2855 = vmul.f32 %v2302, 0.01
  %v2856 = vmul.f32 %v2306, 0.01
  %v2857 = vmul.f32 %v2308, 0.01
  %v2858 = vmul.f32 %v2312, 0.01
  %v2859 = vmul.f32 %v2314, 0.01
  %v2860 = vmul.f32 %v2318, 0.01
  %v2861 = vmul.f32 %v2320, 0.01
  %v2862 = vmul.f32 %v2324, 0.01
  %v2863 = vmul.f32 %v2326, 0.01
  %v2864 = vmul.f32 %v2330, 0.01
  %v2865 = vmul.f32 %v2332, 0.01
  %v2866 = vmul.f32 %v2336, 0.01
  %v2867 = vmul.f32 %v2338, 0.01
  %v2868 = vmul.f32 %v2342, 0.01
  %v2869 = vmul.f32 %v2344, 0.01
  %v2870 = vmul.f32 %v2348, 0.01
  %v2871 = vmul.f32 %v2350, 0.01
  %v2872 = vmul.f32 %v2354, 0.01
  %v2873 = vmul.f32 %v2356, 0.01
  %v2874 = vmul.f32 %v2360, 0.01
  %v2875 = vmul.f32 %v2362, 0.01
  %v2876 = vmul.f32 %v2366, 0.01
  %v2877 = vmul.f32 %v2368, 0.01
  %v2878 = vmul.f32 %v2372, 0.01
  %v2879 = vmul.f32 %v2374, 0.01
  %v2880 = vmul.f32 %v2378, 0.01
  %v2881 = vmul.f32 %v2380, 0.01
  %v2882 = vmul.f32 %v2384, 0.01
  %v2883 = vmul.f32 %v2386, 0.01
  %v2884 = vmul.f32 %v2390, 0.01
  %v2885 = vmul.f32 %v2392, 0.01
  %v2886 = vmul.f32 %v2396, 0.01
  %v2887 = vmul.f32 %v2398, 0.01
  %v2888 = vmul.f32 %v2402, 0.01
  %v2889 = vmul.f32 %v2404, 0.01
  %v2890 = vmul.f32 %v2408, 0.01
  %v2891 = vmul.f32 %v2410, 0.01
  %v2892 = vmul.f32 %v2414, 0.01
  %v2893 = vmul.f32 %v2416, 0.01
  %v2894 = vmul.f32 %v2420, 0.01
  %v2895 = vmul.f32 %v2422, 0.01
  %v2896 = vmul.f32 %v2426, 0.01
  %v2897 = vmul.f32 %v2428, 0.01
  %v2898 = vmul.f32 %v2432, 0.01
  %v2899 = vmul.f32 %v2434, 0.01
  %v2900 = vmul.f32 %v2438, 0.01
  %v2901 = vmul.f32 %v2440, 0.01
  %v2902 = vmul.f32 %v2444, 0.01
  %v2903 = vmul.f32 %v2446, 0.01
  %v2904 = vmul.f32 %v2450, 0.01
  %v2905 = vmul.f32 %v2452, 0.01
  %v2906 = vmul.f32 %v2456, 0.01
  %v2907 = vmul.f32 %v2458, 0.01
  %v2908 = vmul.f32 %v2462, 0.01
  %v2909 = vmul.f32 %v2464, 0.01
  %v2910 = vmul.f32 %v2468, 0.01
  %v2911 = vmul.f32 %v2470, 0.01
  %v2912 = vmul.f32 %v2474, 0.01
  %v2913 = vmul.f32 %v2476, 0.01
  %v2914 = vmul.f32 %v2480, 0.01
  %v2915 = vmul.f32 %v2482, 0.01
  %v2916 = vmul.f32 %v2486, 0.01
  %v2917 = vmul.f32 %v2488, 0.01
  %v2918 = vmul.f32 %v2492, 0.01
  %v2919 = vmul.f32 %v2494, 0.01
  %v2920 = vmul.f32 %v2498, 0.01
  %v2921 = vmul.f32 %v2500, 0.01
  %v2922 = vmul.f32 %v2504, 0.01
  %v2923 = vmul.f32 %v2506, 0.01
  %v2924 = vmul.f32 %v2510, 0.01
  %v2925 = vmul.f32 %v2512, 0.01
  %v2926 = vmul.f32 %v2516, 0.01
  %v2927 = vmul.f32 %v2518, 0.01
  %v2928 = vmul.f32 %v2522, 0.01
  %v2929 = vmul.f32 %v2524, 0.01
  %v2930 = vmul.f32 %v2528, 0.01
  %v2931 = vmul.f32 %v2530, 0.01
  %v2932 = vmul.f32 %v2534, 0.01
  %v2933 = vmul.f32 %v2536, 0.01
  %v2934 = vmul.f32 %v2540, 0.01
  %v2935 = vmul.f32 %v2542, 0.01
  %v2936 = vmul.f32 %v2546, 0.01
  %v2937 = vmul.f32 %v2548, 0.01
  %v2938 = vmul.f32 %v2552, 0.01
  %v2939 = vmul.f32 %v2554, 0.01
  %v2940 = vmul.f32 %v2558, 0.01
  %v2941 = vmul.f32 %v2560, 0.01
  %v2942 = vmul.f32 %v2564, 0.01
  %v2943 = vmul.f32 %v2566, 0.01
  %v2944 = vmul.f32 %v2570, 0.01
  %v2945 = vmul.f32 %v2572, 0.01
  %v2946 = vmul.f32 %v2576, 0.01
  %v2947 = vmul.f32 %v2578, 0.01
  %v2948 = vmul.f32 %v2582, 0.01
  %v2949 = vmul.f32 %v2584, 0.01
  %v2950 = vmul.f32 %v2588, 0.01
  %v2951 = vmul.f32 %v2590, 0.01
  %v2952 = vmul.f32 %v2594, 0.01
  %v2953 = vmul.f32 %v2596, 0.01
  %v2954 = vmul.f32 %v2600, 0.01
  %v2955 = vmul.f32 %v2602, 0.01
  %v2956 = vmul.f32 %v2606, 0.01
  %v2957 = vmul.f32 %v2608, 0.01
  %v2958 = vmul.f32 %v2612, 0.01
  %v2959 = vmul.f32 %v2614, 0.01
  %v2960 = vmul.f32 %v2618, 0.01
  %v2961 = vmul.f32 %v2620, 0.01
  %v2962 = vmul.f32 %v2624, 0.01
  %v2963 = vmul.f32 %v2626, 0.01
  %v2964 = vmul.f32 %v2630, 0.01
  %v2965 = vmul.f32 %v2632, 0.01
  %v2966 = vmul.f32 %v2636, 0.01
  %v2967 = vmul.f32 %v2638, 0.01
  %v2968 = vmul.f32 %v2642, 0.01
  %v2969 = vmul.f32 %v2644, 0.01
  %v2970 = vmul.f32 %v2648, 0.01
  %v2971 = vmul.f32 %v2650, 0.01
  %v2972 = vmul.f32 %v2654, 0.01
  %v2973 = vmul.f32 %v2656, 0.01
  %v2974 = vmul.f32 %v2660, 0.01
  %v2975 = vmul.f32 %v2662, 0.01
  %v2976 = vmul.f32 %v2666, 0.01
  %v2977 = vmul.f32 %v2668, 0.01
  %v2978 = vmul.f32 %v2672, 0.01
  %v2979 = vmul.f32 %v2674, 0.01
  %v2980 = vmul.f32 %v2678, 0.01
  %v2981 = vmul.f32 %v2680, 0.01
  %v2982 = vmul.f32 %v2684, 0.01
  %v2983 = vmul.f32 %v2686, 0.01
  %v2984 = vmul.f32 %v2690, 0.01
  %v2985 = vmul.f32 %v2692, 0.01
  %v2986 = vmul.f32 %v2696, 0.01
  %v2987 = vmul.f32 %v2698, 0.01
  %v2988 = vmul.f32 %v2702, 0.01
  %v2989 = vmul.f32 %v2704, 0.01
  %v2990 = vmul.f32 %v2708, 0.01
  %v2991 = vmul.f32 %v2710, 0.01
  %v2992 = vmul.f32 %v2714, 0.01
  %v2993 = vmul.f32 %v2716, 0.01
  %v2994 = vmul.f32 %v2720, 0.01
  %v2995 = vmul.f32 %v2722, 0.01
  %v2996 = vmul.f32 %v2726, 0.01
  %v2997 = vmul.f32 %v2728, 0.01
  %v2998 = vmul.f32 %v2732, 0.01
  %v2999 = vmul.f32 %v2734, 0.01
  %v3000 = vmul.f32 %v2738, 0.01
  %v3001 = vmul.f32 %v2740, 0.01
  %v3002 = vmul.f32 %v2744, 0.01
  %v3003 = vmul.f32 %v2746, 0.01
  %v3004 = vmul.f32 %v2750, 0.01
  %v3005 = vmul.f32 %v2752, 0.01
  %v3006 = vmul.f32 %v2756, 0.01
  %v3007 = vmul.f32 %v2758, 0.01
  %v3008 = vmul.f32 %v2762, 0.01
  %v3009 = vmul.f32 %v2764, 0.01
  %v3010 = vmul.f32 %v2768, 0.01
  %v3011 = vmul.f32 %v2770, 0.01
  %v3012 = vmul.f32 %v2774, 0.01
  %v3013 = vmul.f32 %v2776, 0.01
  %v3014 = vmul.f32 %v2780, 0.01
  %v3015 = vmul.f32 %v2782, 0.01
  %v3016 = vmul.f32 %v2786, 0.01
  %v3017 = vmul.f32 %v2788, 0.01
  %v3018 = vmul.f32 %v2792, 0.01
  %v3019 = vmul.f32 %v2794, 0.01
  %v3020 = vmul.f32 %v2798, 0.01
  %v3021 = vmul.f32 %v2800, 0.01
  %v3022 = vmul.f32 %v2804, 0.01
  %v3023 = vmul.f32 %v2806, 0.01
  %v3024 = vmul.f32 %v2810, 0.01
  %v3025 = vmul.f32 %v2812, 0.01
  %v3026 = vmul.f32 %v2816, 0.01
  %v3027 = vmul.f32 %v2818, 0.01
  %v3028 = vmul.f32 %v2822, 0.01
  %v3029 = vmul.f32 %v2824, 0.01
  %v3030 = vmul.f32 %v2828, 0.01
  %v3031 = vmul.f32 %v2830, 0.01
  %v3032 = vmul.f32 %v2834, 0.01
  %v3033 = vmul.f32 %v2836, 0.01
  %v3034 = vmul.f32 %v2840, 0.01
  %v3035 = vmul.f32 %v2842, 0.01
  %v3036 = vmax.f32 %v2270, %v2844
  %v3037 = vmax.f32 %v2272, %v2845
  %v3038 = vmax.f32 %v2276, %v2846
  %v3039 = vmax.f32 %v2278, %v2847
  %v3040 = vmax.f32 %v2282, %v2848
  %v3041 = vmax.f32 %v2284, %v2849
  %v3042 = vmax.f32 %v2288, %v2850
  %v3043 = vmax.f32 %v2290, %v2851
  %v3044 = vmax.f32 %v2294, %v2852
  %v3045 = vmax.f32 %v2296, %v2853
  %v3046 = vmax.f32 %v2300, %v2854
  %v3047 = vmax.f32 %v2302, %v2855
  %v3048 = vmax.f32 %v2306, %v2856
  %v3049 = vmax.f32 %v2308, %v2857
  %v3050 = vmax.f32 %v2312, %v2858
  %v3051 = vmax.f32 %v2314, %v2859
  %v3052 = vmax.f32 %v2318, %v2860
  %v3053 = vmax.f32 %v2320, %v2861
  %v3054 = vmax.f32 %v2324, %v2862
  %v3055 = vmax.f32 %v2326, %v2863
  %v3056 = vmax.f32 %v2330, %v2864
  %v3057 = vmax.f32 %v2332, %v2865
  %v3058 = vmax.f32 %v2336, %v2866
  %v3059 = vmax.f32 %v2338, %v2867
  %v3060 = vmax.f32 %v2342, %v2868
  %v3061 = vmax.f32 %v2344, %v2869
  %v3062 = vmax.f32 %v2348, %v2870
  %v3063 = vmax.f32 %v2350, %v2871
  %v3064 = vmax.f32 %v2354, %v2872
  %v3065 = vmax.f32 %v2356, %v2873
  %v3066 = vmax.f32 %v2360, %v2874
  %v3067 = vmax.f32 %v2362, %v2875
  %v3068 = vmax.f32 %v2366, %v2876
  %v3069 = vmax.f32 %v2368, %v2877
  %v3070 = vmax.f32 %v2372, %v2878
  %v3071 = vmax.f32 %v2374, %v2879
  %v3072 = vmax.f32 %v2378, %v2880
  %v3073 = vmax.f32 %v2380, %v2881
  %v3074 = vmax.f32 %v2384, %v2882
  %v3075 = vmax.f32 %v2386, %v2883
  %v3076 = vmax.f32 %v2390, %v2884
  %v3077 = vmax.f32 %v2392, %v2885
  %v3078 = vmax.f32 %v2396, %v2886
  %v3079 = vmax.f32 %v2398, %v2887
  %v3080 = vmax.f32 %v2402, %v2888
  %v3081 = vmax.f32 %v2404, %v2889
  %v3082 = vmax.f32 %v2408, %v2890
  %v3083 = vmax.f32 %v2410, %v2891
  %v3084 = vmax.f32 %v2414, %v2892
  %v3085 = vmax.f32 %v2416, %v2893
  %v3086 = vmax.f32 %v2420, %v2894
  %v3087 = vmax.f32 %v2422, %v2895
  %v3088 = vmax.f32 %v2426, %v2896
  %v3089 = vmax.f32 %v2428, %v2897
  %v3090 = vmax.f32 %v2432, %v2898
  %v3091 = vmax.f32 %v2434, %v2899
  %v3092 = vmax.f32 %v2438, %v2900
  %v3093 = vmax.f32 %v2440, %v2901
  %v3094 = vmax.f32 %v2444, %v2902
  %v3095 = vmax.f32 %v2446, %v2903
  %v3096 = vmax.f32 %v2450, %v2904
  %v3097 = vmax.f32 %v2452, %v2905
  %v3098 = vmax.f32 %v2456, %v2906
  %v3099 = vmax.f32 %v2458, %v2907
  %v3100 = vmax.f32 %v2462, %v2908
  %v3101 = vmax.f32 %v2464, %v2909
  %v3102 = vmax.f32 %v2468, %v2910
  %v3103 = vmax.f32 %v2470, %v2911
  %v3104 = vmax.f32 %v2474, %v2912
  %v3105 = vmax.f32 %v2476, %v2913
  %v3106 = vmax.f32 %v2480, %v2914
  %v3107 = vmax.f32 %v2482, %v2915
  %v3108 = vmax.f32 %v2486, %v2916
  %v3109 = vmax.f32 %v2488, %v2917
  %v3110 = vmax.f32 %v2492, %v2918
  %v3111 = vmax.f32 %v2494, %v2919
  %v3112 = vmax.f32 %v2498, %v2920
  %v3113 = vmax.f32 %v2500, %v2921
  %v3114 = vmax.f32 %v2504, %v2922
  %v3115 = vmax.f32 %v2506, %v2923
  %v3116 = vmax.f32 %v2510, %v2924
  %v3117 = vmax.f32 %v2512, %v2925
  %v3118 = vmax.f32 %v2516, %v2926
  %v3119 = vmax.f32 %v2518, %v2927
  %v3120 = vmax.f32 %v2522, %v2928
  %v3121 = vmax.f32 %v2524, %v2929
  %v3122 = vmax.f32 %v2528, %v2930
  %v3123 = vmax.f32 %v2530, %v2931
  %v3124 = vmax.f32 %v2534, %v2932
  %v3125 = vmax.f32 %v2536, %v2933
  %v3126 = vmax.f32 %v2540, %v2934
  %v3127 = vmax.f32 %v2542, %v2935
  %v3128 = vmax.f32 %v2546, %v2936
  %v3129 = vmax.f32 %v2548, %v2937
  %v3130 = vmax.f32 %v2552, %v2938
  %v3131 = vmax.f32 %v2554, %v2939
  %v3132 = vmax.f32 %v2558, %v2940
  %v3133 = vmax.f32 %v2560, %v2941
  %v3134 = vmax.f32 %v2564, %v2942
  %v3135 = vmax.f32 %v2566, %v2943
  %v3136 = vmax.f32 %v2570, %v2944
  %v3137 = vmax.f32 %v2572, %v2945
  %v3138 = vmax.f32 %v2576, %v2946
  %v3139 = vmax.f32 %v2578, %v2947
  %v3140 = vmax.f32 %v2582, %v2948
  %v3141 = vmax.f32 %v2584, %v2949
  %v3142 = vmax.f32 %v2588, %v2950
  %v3143 = vmax.f32 %v2590, %v2951
  %v3144 = vmax.f32 %v2594, %v2952
  %v3145 = vmax.f32 %v2596, %v2953
  %v3146 = vmax.f32 %v2600, %v2954
  %v3147 = vmax.f32 %v2602, %v2955
  %v3148 = vmax.f32 %v2606, %v2956
  %v3149 = vmax.f32 %v2608, %v2957
  %v3150 = vmax.f32 %v2612, %v2958
  %v3151 = vmax.f32 %v2614, %v2959
  %v3152 = vmax.f32 %v2618, %v2960
  %v3153 = vmax.f32 %v2620, %v2961
  %v3154 = vmax.f32 %v2624, %v2962
  %v3155 = vmax.f32 %v2626, %v2963
  %v3156 = vmax.f32 %v2630, %v2964
  %v3157 = vmax.f32 %v2632, %v2965
  %v3158 = vmax.f32 %v2636, %v2966
  %v3159 = vmax.f32 %v2638, %v2967
  %v3160 = vmax.f32 %v2642, %v2968
  %v3161 = vmax.f32 %v2644, %v2969
  %v3162 = vmax.f32 %v2648, %v2970
  %v3163 = vmax.f32 %v2650, %v2971
  %v3164 = vmax.f32 %v2654, %v2972
  %v3165 = vmax.f32 %v2656, %v2973
  %v3166 = vmax.f32 %v2660, %v2974
  %v3167 = vmax.f32 %v2662, %v2975
  %v3168 = vmax.f32 %v2666, %v2976
  %v3169 = vmax.f32 %v2668, %v2977
  %v3170 = vmax.f32 %v2672, %v2978
  %v3171 = vmax.f32 %v2674, %v2979
  %v3172 = vmax.f32 %v2678, %v2980
  %v3173 = vmax.f32 %v2680, %v2981
  %v3174 = vmax.f32 %v2684, %v2982
  %v3175 = vmax.f32 %v2686, %v2983
  %v3176 = vmax.f32 %v2690, %v2984
  %v3177 = vmax.f32 %v2692, %v2985
  %v3178 = vmax.f32 %v2696, %v2986
  %v3179 = vmax.f32 %v2698, %v2987
  %v3180 = vmax.f32 %v2702, %v2988
  %v3181 = vmax.f32 %v2704, %v2989
  %v3182 = vmax.f32 %v2708, %v2990
  %v3183 = vmax.f32 %v2710, %v2991
  %v3184 = vmax.f32 %v2714, %v2992
  %v3185 = vmax.f32 %v2716, %v2993
  %v3186 = vmax.f32 %v2720, %v2994
  %v3187 = vmax.f32 %v2722, %v2995
  %v3188 = vmax.f32 %v2726, %v2996
  %v3189 = vmax.f32 %v2728, %v2997
  %v3190 = vmax.f32 %v2732, %v2998
  %v3191 = vmax.f32 %v2734, %v2999
  %v3192 = vmax.f32 %v2738, %v3000
  %v3193 = vmax.f32 %v2740, %v3001
  %v3194 = vmax.f32 %v2744, %v3002
  %v3195 = vmax.f32 %v2746, %v3003
  %v3196 = vmax.f32 %v2750, %v3004
  %v3197 = vmax.f32 %v2752, %v3005
  %v3198 = vmax.f32 %v2756, %v3006
  %v3199 = vmax.f32 %v2758, %v3007
  %v3200 = vmax.f32 %v2762, %v3008
  %v3201 = vmax.f32 %v2764, %v3009
  %v3202 = vmax.f32 %v2768, %v3010
  %v3203 = vmax.f32 %v2770, %v3011
  %v3204 = vmax.f32 %v2774, %v3012
  %v3205 = vmax.f32 %v2776, %v3013
  %v3206 = vmax.f32 %v2780, %v3014
  %v3207 = vmax.f32 %v2782, %v3015
  %v3208 = vmax.f32 %v2786, %v3016
  %v3209 = vmax.f32 %v2788, %v3017
  %v3210 = vmax.f32 %v2792, %v3018
  %v3211 = vmax.f32 %v2794, %v3019
  %v3212 = vmax.f32 %v2798, %v3020
  %v3213 = vmax.f32 %v2800, %v3021
  %v3214 = vmax.f32 %v2804, %v3022
  %v3215 = vmax.f32 %v2806, %v3023
  %v3216 = vmax.f32 %v2810, %v3024
  %v3217 = vmax.f32 %v2812, %v3025
  %v3218 = vmax.f32 %v2816, %v3026
  %v3219 = vmax.f32 %v2818, %v3027
  %v3220 = vmax.f32 %v2822, %v3028
  %v3221 = vmax.f32 %v2824, %v3029
  %v3222 = vmax.f32 %v2828, %v3030
  %v3223 = vmax.f32 %v2830, %v3031
  %v3224 = vmax.f32 %v2834, %v3032
  %v3225 = vmax.f32 %v2836, %v3033
  %v3226 = vmax.f32 %v2840, %v3034
  %v3227 = vmax.f32 %v2842, %v3035
  %v3228 = vld [vmem:[%s3] sm:$0x3]
  %v3230 = vlaneseq
  %v3231 = vshrl.u32 %v3230, 7
  %v3232 = vsub.s32 0, %v3231
  %v3233 = vrot.slane %v3228, %v3232
  %v3234 = vlaneseq
  %v3235 = vshrl.u32 %v3234, 7
  %v3236 = vsub.s32 1, %v3235
  %v3237 = vrot.slane %v3228, %v3236
  %v3240 = vmul.f32 %v3036, %v3233
  %v3241 = vmul.f32 %v3037, %v3237
  %v3242 = vmul.f32 %v3038, %v3233
  %v3243 = vmul.f32 %v3039, %v3237
  %v3244 = vmul.f32 %v3040, %v3233
  %v3245 = vmul.f32 %v3041, %v3237
  %v3246 = vmul.f32 %v3042, %v3233
  %v3247 = vmul.f32 %v3043, %v3237
  %v3248 = vmul.f32 %v3044, %v3233
  %v3249 = vmul.f32 %v3045, %v3237
  %v3250 = vmul.f32 %v3046, %v3233
  %v3251 = vmul.f32 %v3047, %v3237
  %v3252 = vmul.f32 %v3048, %v3233
  %v3253 = vmul.f32 %v3049, %v3237
  %v3254 = vmul.f32 %v3050, %v3233
  %v3255 = vmul.f32 %v3051, %v3237
  %v3256 = vmul.f32 %v3052, %v3233
  %v3257 = vmul.f32 %v3053, %v3237
  %v3258 = vmul.f32 %v3054, %v3233
  %v3259 = vmul.f32 %v3055, %v3237
  %v3260 = vmul.f32 %v3056, %v3233
  %v3261 = vmul.f32 %v3057, %v3237
  %v3262 = vmul.f32 %v3058, %v3233
  %v3263 = vmul.f32 %v3059, %v3237
  %v3264 = vmul.f32 %v3060, %v3233
  %v3265 = vmul.f32 %v3061, %v3237
  %v3266 = vmul.f32 %v3062, %v3233
  %v3267 = vmul.f32 %v3063, %v3237
  %v3268 = vmul.f32 %v3064, %v3233
  %v3269 = vmul.f32 %v3065, %v3237
  %v3270 = vmul.f32 %v3066, %v3233
  %v3271 = vmul.f32 %v3067, %v3237
  %v3272 = vmul.f32 %v3068, %v3233
  %v3273 = vmul.f32 %v3069, %v3237
  %v3274 = vmul.f32 %v3070, %v3233
  %v3275 = vmul.f32 %v3071, %v3237
  %v3276 = vmul.f32 %v3072, %v3233
  %v3277 = vmul.f32 %v3073, %v3237
  %v3278 = vmul.f32 %v3074, %v3233
  %v3279 = vmul.f32 %v3075, %v3237
  %v3280 = vmul.f32 %v3076, %v3233
  %v3281 = vmul.f32 %v3077, %v3237
  %v3282 = vmul.f32 %v3078, %v3233
  %v3283 = vmul.f32 %v3079, %v3237
  %v3284 = vmul.f32 %v3080, %v3233
  %v3285 = vmul.f32 %v3081, %v3237
  %v3286 = vmul.f32 %v3082, %v3233
  %v3287 = vmul.f32 %v3083, %v3237
  %v3288 = vmul.f32 %v3084, %v3233
  %v3289 = vmul.f32 %v3085, %v3237
  %v3290 = vmul.f32 %v3086, %v3233
  %v3291 = vmul.f32 %v3087, %v3237
  %v3292 = vmul.f32 %v3088, %v3233
  %v3293 = vmul.f32 %v3089, %v3237
  %v3294 = vmul.f32 %v3090, %v3233
  %v3295 = vmul.f32 %v3091, %v3237
  %v3296 = vmul.f32 %v3092, %v3233
  %v3297 = vmul.f32 %v3093, %v3237
  %v3298 = vmul.f32 %v3094, %v3233
  %v3299 = vmul.f32 %v3095, %v3237
  %v3300 = vmul.f32 %v3096, %v3233
  %v3301 = vmul.f32 %v3097, %v3237
  %v3302 = vmul.f32 %v3098, %v3233
  %v3303 = vmul.f32 %v3099, %v3237
  %v3304 = vmul.f32 %v3100, %v3233
  %v3305 = vmul.f32 %v3101, %v3237
  %v3306 = vmul.f32 %v3102, %v3233
  %v3307 = vmul.f32 %v3103, %v3237
  %v3308 = vmul.f32 %v3104, %v3233
  %v3309 = vmul.f32 %v3105, %v3237
  %v3310 = vmul.f32 %v3106, %v3233
  %v3311 = vmul.f32 %v3107, %v3237
  %v3312 = vmul.f32 %v3108, %v3233
  %v3313 = vmul.f32 %v3109, %v3237
  %v3314 = vmul.f32 %v3110, %v3233
  %v3315 = vmul.f32 %v3111, %v3237
  %v3316 = vmul.f32 %v3112, %v3233
  %v3317 = vmul.f32 %v3113, %v3237
  %v3318 = vmul.f32 %v3114, %v3233
  %v3319 = vmul.f32 %v3115, %v3237
  %v3320 = vmul.f32 %v3116, %v3233
  %v3321 = vmul.f32 %v3117, %v3237
  %v3322 = vmul.f32 %v3118, %v3233
  %v3323 = vmul.f32 %v3119, %v3237
  %v3324 = vmul.f32 %v3120, %v3233
  %v3325 = vmul.f32 %v3121, %v3237
  %v3326 = vmul.f32 %v3122, %v3233
  %v3327 = vmul.f32 %v3123, %v3237
  %v3328 = vmul.f32 %v3124, %v3233
  %v3329 = vmul.f32 %v3125, %v3237
  %v3330 = vmul.f32 %v3126, %v3233
  %v3331 = vmul.f32 %v3127, %v3237
  %v3332 = vmul.f32 %v3128, %v3233
  %v3333 = vmul.f32 %v3129, %v3237
  %v3334 = vmul.f32 %v3130, %v3233
  %v3335 = vmul.f32 %v3131, %v3237
  %v3336 = vmul.f32 %v3132, %v3233
  %v3337 = vmul.f32 %v3133, %v3237
  %v3338 = vmul.f32 %v3134, %v3233
  %v3339 = vmul.f32 %v3135, %v3237
  %v3340 = vmul.f32 %v3136, %v3233
  %v3341 = vmul.f32 %v3137, %v3237
  %v3342 = vmul.f32 %v3138, %v3233
  %v3343 = vmul.f32 %v3139, %v3237
  %v3344 = vmul.f32 %v3140, %v3233
  %v3345 = vmul.f32 %v3141, %v3237
  %v3346 = vmul.f32 %v3142, %v3233
  %v3347 = vmul.f32 %v3143, %v3237
  %v3348 = vmul.f32 %v3144, %v3233
  %v3349 = vmul.f32 %v3145, %v3237
  %v3350 = vmul.f32 %v3146, %v3233
  %v3351 = vmul.f32 %v3147, %v3237
  %v3352 = vmul.f32 %v3148, %v3233
  %v3353 = vmul.f32 %v3149, %v3237
  %v3354 = vmul.f32 %v3150, %v3233
  %v3355 = vmul.f32 %v3151, %v3237
  %v3356 = vmul.f32 %v3152, %v3233
  %v3357 = vmul.f32 %v3153, %v3237
  %v3358 = vmul.f32 %v3154, %v3233
  %v3359 = vmul.f32 %v3155, %v3237
  %v3360 = vmul.f32 %v3156, %v3233
  %v3361 = vmul.f32 %v3157, %v3237
  %v3362 = vmul.f32 %v3158, %v3233
  %v3363 = vmul.f32 %v3159, %v3237
  %v3364 = vmul.f32 %v3160, %v3233
  %v3365 = vmul.f32 %v3161, %v3237
  %v3366 = vmul.f32 %v3162, %v3233
  %v3367 = vmul.f32 %v3163, %v3237
  %v3368 = vmul.f32 %v3164, %v3233
  %v3369 = vmul.f32 %v3165, %v3237
  %v3370 = vmul.f32 %v3166, %v3233
  %v3371 = vmul.f32 %v3167, %v3237
  %v3372 = vmul.f32 %v3168, %v3233
  %v3373 = vmul.f32 %v3169, %v3237
  %v3374 = vmul.f32 %v3170, %v3233
  %v3375 = vmul.f32 %v3171, %v3237
  %v3376 = vmul.f32 %v3172, %v3233
  %v3377 = vmul.f32 %v3173, %v3237
  %v3378 = vmul.f32 %v3174, %v3233
  %v3379 = vmul.f32 %v3175, %v3237
  %v3380 = vmul.f32 %v3176, %v3233
  %v3381 = vmul.f32 %v3177, %v3237
  %v3382 = vmul.f32 %v3178, %v3233
  %v3383 = vmul.f32 %v3179, %v3237
  %v3384 = vmul.f32 %v3180, %v3233
  %v3385 = vmul.f32 %v3181, %v3237
  %v3386 = vmul.f32 %v3182, %v3233
  %v3387 = vmul.f32 %v3183, %v3237
  %v3388 = vmul.f32 %v3184, %v3233
  %v3389 = vmul.f32 %v3185, %v3237
  %v3390 = vmul.f32 %v3186, %v3233
  %v3391 = vmul.f32 %v3187, %v3237
  %v3392 = vmul.f32 %v3188, %v3233
  %v3393 = vmul.f32 %v3189, %v3237
  %v3394 = vmul.f32 %v3190, %v3233
  %v3395 = vmul.f32 %v3191, %v3237
  %v3396 = vmul.f32 %v3192, %v3233
  %v3397 = vmul.f32 %v3193, %v3237
  %v3398 = vmul.f32 %v3194, %v3233
  %v3399 = vmul.f32 %v3195, %v3237
  %v3400 = vmul.f32 %v3196, %v3233
  %v3401 = vmul.f32 %v3197, %v3237
  %v3402 = vmul.f32 %v3198, %v3233
  %v3403 = vmul.f32 %v3199, %v3237
  %v3404 = vmul.f32 %v3200, %v3233
  %v3405 = vmul.f32 %v3201, %v3237
  %v3406 = vmul.f32 %v3202, %v3233
  %v3407 = vmul.f32 %v3203, %v3237
  %v3408 = vmul.f32 %v3204, %v3233
  %v3409 = vmul.f32 %v3205, %v3237
  %v3410 = vmul.f32 %v3206, %v3233
  %v3411 = vmul.f32 %v3207, %v3237
  %v3412 = vmul.f32 %v3208, %v3233
  %v3413 = vmul.f32 %v3209, %v3237
  %v3414 = vmul.f32 %v3210, %v3233
  %v3415 = vmul.f32 %v3211, %v3237
  %v3416 = vmul.f32 %v3212, %v3233
  %v3417 = vmul.f32 %v3213, %v3237
  %v3418 = vmul.f32 %v3214, %v3233
  %v3419 = vmul.f32 %v3215, %v3237
  %v3420 = vmul.f32 %v3216, %v3233
  %v3421 = vmul.f32 %v3217, %v3237
  %v3422 = vmul.f32 %v3218, %v3233
  %v3423 = vmul.f32 %v3219, %v3237
  %v3424 = vmul.f32 %v3220, %v3233
  %v3425 = vmul.f32 %v3221, %v3237
  %v3426 = vmul.f32 %v3222, %v3233
  %v3427 = vmul.f32 %v3223, %v3237
  %v3428 = vmul.f32 %v3224, %v3233
  %v3429 = vmul.f32 %v3225, %v3237
  %v3430 = vmul.f32 %v3226, %v3233
  %v3431 = vmul.f32 %v3227, %v3237
  %v3432 = vld [vmem:[%s4] sm:$0x3]
  %v3434 = vlaneseq
  %v3435 = vshrl.u32 %v3434, 7
  %v3436 = vsub.s32 0, %v3435
  %v3437 = vrot.slane %v3432, %v3436
  %v3438 = vlaneseq
  %v3439 = vshrl.u32 %v3438, 7
  %v3440 = vsub.s32 1, %v3439
  %v3441 = vrot.slane %v3432, %v3440
  %v3444 = vadd.f32 %v3240, %v3437
  %v3445 = vadd.f32 %v3241, %v3441
  %v3446 = vadd.f32 %v3242, %v3437
  %v3447 = vadd.f32 %v3243, %v3441
  %v3448 = vadd.f32 %v3244, %v3437
  %v3449 = vadd.f32 %v3245, %v3441
  %v3450 = vadd.f32 %v3246, %v3437
  %v3451 = vadd.f32 %v3247, %v3441
  %v3452 = vadd.f32 %v3248, %v3437
  %v3453 = vadd.f32 %v3249, %v3441
  %v3454 = vadd.f32 %v3250, %v3437
  %v3455 = vadd.f32 %v3251, %v3441
  %v3456 = vadd.f32 %v3252, %v3437
  %v3457 = vadd.f32 %v3253, %v3441
  %v3458 = vadd.f32 %v3254, %v3437
  %v3459 = vadd.f32 %v3255, %v3441
  %v3460 = vadd.f32 %v3256, %v3437
  %v3461 = vadd.f32 %v3257, %v3441
  %v3462 = vadd.f32 %v3258, %v3437
  %v3463 = vadd.f32 %v3259, %v3441
  %v3464 = vadd.f32 %v3260, %v3437
  %v3465 = vadd.f32 %v3261, %v3441
  %v3466 = vadd.f32 %v3262, %v3437
  %v3467 = vadd.f32 %v3263, %v3441
  %v3468 = vadd.f32 %v3264, %v3437
  %v3469 = vadd.f32 %v3265, %v3441
  %v3470 = vadd.f32 %v3266, %v3437
  %v3471 = vadd.f32 %v3267, %v3441
  %v3472 = vadd.f32 %v3268, %v3437
  %v3473 = vadd.f32 %v3269, %v3441
  %v3474 = vadd.f32 %v3270, %v3437
  %v3475 = vadd.f32 %v3271, %v3441
  %v3476 = vadd.f32 %v3272, %v3437
  %v3477 = vadd.f32 %v3273, %v3441
  %v3478 = vadd.f32 %v3274, %v3437
  %v3479 = vadd.f32 %v3275, %v3441
  %v3480 = vadd.f32 %v3276, %v3437
  %v3481 = vadd.f32 %v3277, %v3441
  %v3482 = vadd.f32 %v3278, %v3437
  %v3483 = vadd.f32 %v3279, %v3441
  %v3484 = vadd.f32 %v3280, %v3437
  %v3485 = vadd.f32 %v3281, %v3441
  %v3486 = vadd.f32 %v3282, %v3437
  %v3487 = vadd.f32 %v3283, %v3441
  %v3488 = vadd.f32 %v3284, %v3437
  %v3489 = vadd.f32 %v3285, %v3441
  %v3490 = vadd.f32 %v3286, %v3437
  %v3491 = vadd.f32 %v3287, %v3441
  %v3492 = vadd.f32 %v3288, %v3437
  %v3493 = vadd.f32 %v3289, %v3441
  %v3494 = vadd.f32 %v3290, %v3437
  %v3495 = vadd.f32 %v3291, %v3441
  %v3496 = vadd.f32 %v3292, %v3437
  %v3497 = vadd.f32 %v3293, %v3441
  %v3498 = vadd.f32 %v3294, %v3437
  %v3499 = vadd.f32 %v3295, %v3441
  %v3500 = vadd.f32 %v3296, %v3437
  %v3501 = vadd.f32 %v3297, %v3441
  %v3502 = vadd.f32 %v3298, %v3437
  %v3503 = vadd.f32 %v3299, %v3441
  %v3504 = vadd.f32 %v3300, %v3437
  %v3505 = vadd.f32 %v3301, %v3441
  %v3506 = vadd.f32 %v3302, %v3437
  %v3507 = vadd.f32 %v3303, %v3441
  %v3508 = vadd.f32 %v3304, %v3437
  %v3509 = vadd.f32 %v3305, %v3441
  %v3510 = vadd.f32 %v3306, %v3437
  %v3511 = vadd.f32 %v3307, %v3441
  %v3512 = vadd.f32 %v3308, %v3437
  %v3513 = vadd.f32 %v3309, %v3441
  %v3514 = vadd.f32 %v3310, %v3437
  %v3515 = vadd.f32 %v3311, %v3441
  %v3516 = vadd.f32 %v3312, %v3437
  %v3517 = vadd.f32 %v3313, %v3441
  %v3518 = vadd.f32 %v3314, %v3437
  %v3519 = vadd.f32 %v3315, %v3441
  %v3520 = vadd.f32 %v3316, %v3437
  %v3521 = vadd.f32 %v3317, %v3441
  %v3522 = vadd.f32 %v3318, %v3437
  %v3523 = vadd.f32 %v3319, %v3441
  %v3524 = vadd.f32 %v3320, %v3437
  %v3525 = vadd.f32 %v3321, %v3441
  %v3526 = vadd.f32 %v3322, %v3437
  %v3527 = vadd.f32 %v3323, %v3441
  %v3528 = vadd.f32 %v3324, %v3437
  %v3529 = vadd.f32 %v3325, %v3441
  %v3530 = vadd.f32 %v3326, %v3437
  %v3531 = vadd.f32 %v3327, %v3441
  %v3532 = vadd.f32 %v3328, %v3437
  %v3533 = vadd.f32 %v3329, %v3441
  %v3534 = vadd.f32 %v3330, %v3437
  %v3535 = vadd.f32 %v3331, %v3441
  %v3536 = vadd.f32 %v3332, %v3437
  %v3537 = vadd.f32 %v3333, %v3441
  %v3538 = vadd.f32 %v3334, %v3437
  %v3539 = vadd.f32 %v3335, %v3441
  %v3540 = vadd.f32 %v3336, %v3437
  %v3541 = vadd.f32 %v3337, %v3441
  %v3542 = vadd.f32 %v3338, %v3437
  %v3543 = vadd.f32 %v3339, %v3441
  %v3544 = vadd.f32 %v3340, %v3437
  %v3545 = vadd.f32 %v3341, %v3441
  %v3546 = vadd.f32 %v3342, %v3437
  %v3547 = vadd.f32 %v3343, %v3441
  %v3548 = vadd.f32 %v3344, %v3437
  %v3549 = vadd.f32 %v3345, %v3441
  %v3550 = vadd.f32 %v3346, %v3437
  %v3551 = vadd.f32 %v3347, %v3441
  %v3552 = vadd.f32 %v3348, %v3437
  %v3553 = vadd.f32 %v3349, %v3441
  %v3554 = vadd.f32 %v3350, %v3437
  %v3555 = vadd.f32 %v3351, %v3441
  %v3556 = vadd.f32 %v3352, %v3437
  %v3557 = vadd.f32 %v3353, %v3441
  %v3558 = vadd.f32 %v3354, %v3437
  %v3559 = vadd.f32 %v3355, %v3441
  %v3560 = vadd.f32 %v3356, %v3437
  %v3561 = vadd.f32 %v3357, %v3441
  %v3562 = vadd.f32 %v3358, %v3437
  %v3563 = vadd.f32 %v3359, %v3441
  %v3564 = vadd.f32 %v3360, %v3437
  %v3565 = vadd.f32 %v3361, %v3441
  %v3566 = vadd.f32 %v3362, %v3437
  %v3567 = vadd.f32 %v3363, %v3441
  %v3568 = vadd.f32 %v3364, %v3437
  %v3569 = vadd.f32 %v3365, %v3441
  %v3570 = vadd.f32 %v3366, %v3437
  %v3571 = vadd.f32 %v3367, %v3441
  %v3572 = vadd.f32 %v3368, %v3437
  %v3573 = vadd.f32 %v3369, %v3441
  %v3574 = vadd.f32 %v3370, %v3437
  %v3575 = vadd.f32 %v3371, %v3441
  %v3576 = vadd.f32 %v3372, %v3437
  %v3577 = vadd.f32 %v3373, %v3441
  %v3578 = vadd.f32 %v3374, %v3437
  %v3579 = vadd.f32 %v3375, %v3441
  %v3580 = vadd.f32 %v3376, %v3437
  %v3581 = vadd.f32 %v3377, %v3441
  %v3582 = vadd.f32 %v3378, %v3437
  %v3583 = vadd.f32 %v3379, %v3441
  %v3584 = vadd.f32 %v3380, %v3437
  %v3585 = vadd.f32 %v3381, %v3441
  %v3586 = vadd.f32 %v3382, %v3437
  %v3587 = vadd.f32 %v3383, %v3441
  %v3588 = vadd.f32 %v3384, %v3437
  %v3589 = vadd.f32 %v3385, %v3441
  %v3590 = vadd.f32 %v3386, %v3437
  %v3591 = vadd.f32 %v3387, %v3441
  %v3592 = vadd.f32 %v3388, %v3437
  %v3593 = vadd.f32 %v3389, %v3441
  %v3594 = vadd.f32 %v3390, %v3437
  %v3595 = vadd.f32 %v3391, %v3441
  %v3596 = vadd.f32 %v3392, %v3437
  %v3597 = vadd.f32 %v3393, %v3441
  %v3598 = vadd.f32 %v3394, %v3437
  %v3599 = vadd.f32 %v3395, %v3441
  %v3600 = vadd.f32 %v3396, %v3437
  %v3601 = vadd.f32 %v3397, %v3441
  %v3602 = vadd.f32 %v3398, %v3437
  %v3603 = vadd.f32 %v3399, %v3441
  %v3604 = vadd.f32 %v3400, %v3437
  %v3605 = vadd.f32 %v3401, %v3441
  %v3606 = vadd.f32 %v3402, %v3437
  %v3607 = vadd.f32 %v3403, %v3441
  %v3608 = vadd.f32 %v3404, %v3437
  %v3609 = vadd.f32 %v3405, %v3441
  %v3610 = vadd.f32 %v3406, %v3437
  %v3611 = vadd.f32 %v3407, %v3441
  %v3612 = vadd.f32 %v3408, %v3437
  %v3613 = vadd.f32 %v3409, %v3441
  %v3614 = vadd.f32 %v3410, %v3437
  %v3615 = vadd.f32 %v3411, %v3441
  %v3616 = vadd.f32 %v3412, %v3437
  %v3617 = vadd.f32 %v3413, %v3441
  %v3618 = vadd.f32 %v3414, %v3437
  %v3619 = vadd.f32 %v3415, %v3441
  %v3620 = vadd.f32 %v3416, %v3437
  %v3621 = vadd.f32 %v3417, %v3441
  %v3622 = vadd.f32 %v3418, %v3437
  %v3623 = vadd.f32 %v3419, %v3441
  %v3624 = vadd.f32 %v3420, %v3437
  %v3625 = vadd.f32 %v3421, %v3441
  %v3626 = vadd.f32 %v3422, %v3437
  %v3627 = vadd.f32 %v3423, %v3441
  %v3628 = vadd.f32 %v3424, %v3437
  %v3629 = vadd.f32 %v3425, %v3441
  %v3630 = vadd.f32 %v3426, %v3437
  %v3631 = vadd.f32 %v3427, %v3441
  %v3632 = vadd.f32 %v3428, %v3437
  %v3633 = vadd.f32 %v3429, %v3441
  %v3634 = vadd.f32 %v3430, %v3437
  %v3635 = vadd.f32 %v3431, %v3441
  %v3636 = vmax.f32 %v3444, %v3540
  %v3637 = vmax.f32 %v3445, %v3541
  %v3638 = vmax.f32 %v3446, %v3542
  %v3639 = vmax.f32 %v3447, %v3543
  %v3640 = vmax.f32 %v3448, %v3544
  %v3641 = vmax.f32 %v3449, %v3545
  %v3642 = vmax.f32 %v3450, %v3546
  %v3643 = vmax.f32 %v3451, %v3547
  %v3644 = vmax.f32 %v3452, %v3548
  %v3645 = vmax.f32 %v3453, %v3549
  %v3646 = vmax.f32 %v3454, %v3550
  %v3647 = vmax.f32 %v3455, %v3551
  %v3648 = vmax.f32 %v3456, %v3552
  %v3649 = vmax.f32 %v3457, %v3553
  %v3650 = vmax.f32 %v3458, %v3554
  %v3651 = vmax.f32 %v3459, %v3555
  %v3652 = vmax.f32 %v3460, %v3556
  %v3653 = vmax.f32 %v3461, %v3557
  %v3654 = vmax.f32 %v3462, %v3558
  %v3655 = vmax.f32 %v3463, %v3559
  %v3656 = vmax.f32 %v3464, %v3560
  %v3657 = vmax.f32 %v3465, %v3561
  %v3658 = vmax.f32 %v3466, %v3562
  %v3659 = vmax.f32 %v3467, %v3563
  %v3660 = vmax.f32 %v3468, %v3564
  %v3661 = vmax.f32 %v3469, %v3565
  %v3662 = vmax.f32 %v3470, %v3566
  %v3663 = vmax.f32 %v3471, %v3567
  %v3664 = vmax.f32 %v3472, %v3568
  %v3665 = vmax.f32 %v3473, %v3569
  %v3666 = vmax.f32 %v3474, %v3570
  %v3667 = vmax.f32 %v3475, %v3571
  %v3668 = vmax.f32 %v3476, %v3572
  %v3669 = vmax.f32 %v3477, %v3573
  %v3670 = vmax.f32 %v3478, %v3574
  %v3671 = vmax.f32 %v3479, %v3575
  %v3672 = vmax.f32 %v3480, %v3576
  %v3673 = vmax.f32 %v3481, %v3577
  %v3674 = vmax.f32 %v3482, %v3578
  %v3675 = vmax.f32 %v3483, %v3579
  %v3676 = vmax.f32 %v3484, %v3580
  %v3677 = vmax.f32 %v3485, %v3581
  %v3678 = vmax.f32 %v3486, %v3582
  %v3679 = vmax.f32 %v3487, %v3583
  %v3680 = vmax.f32 %v3488, %v3584
  %v3681 = vmax.f32 %v3489, %v3585
  %v3682 = vmax.f32 %v3490, %v3586
  %v3683 = vmax.f32 %v3491, %v3587
  %v3684 = vmax.f32 %v3492, %v3588
  %v3685 = vmax.f32 %v3493, %v3589
  %v3686 = vmax.f32 %v3494, %v3590
  %v3687 = vmax.f32 %v3495, %v3591
  %v3688 = vmax.f32 %v3496, %v3592
  %v3689 = vmax.f32 %v3497, %v3593
  %v3690 = vmax.f32 %v3498, %v3594
  %v3691 = vmax.f32 %v3499, %v3595
  %v3692 = vmax.f32 %v3500, %v3596
  %v3693 = vmax.f32 %v3501, %v3597
  %v3694 = vmax.f32 %v3502, %v3598
  %v3695 = vmax.f32 %v3503, %v3599
  %v3696 = vmax.f32 %v3504, %v3600
  %v3697 = vmax.f32 %v3505, %v3601
  %v3698 = vmax.f32 %v3506, %v3602
  %v3699 = vmax.f32 %v3507, %v3603
  %v3700 = vmax.f32 %v3508, %v3604
  %v3701 = vmax.f32 %v3509, %v3605
  %v3702 = vmax.f32 %v3510, %v3606
  %v3703 = vmax.f32 %v3511, %v3607
  %v3704 = vmax.f32 %v3512, %v3608
  %v3705 = vmax.f32 %v3513, %v3609
  %v3706 = vmax.f32 %v3514, %v3610
  %v3707 = vmax.f32 %v3515, %v3611
  %v3708 = vmax.f32 %v3516, %v3612
  %v3709 = vmax.f32 %v3517, %v3613
  %v3710 = vmax.f32 %v3518, %v3614
  %v3711 = vmax.f32 %v3519, %v3615
  %v3712 = vmax.f32 %v3520, %v3616
  %v3713 = vmax.f32 %v3521, %v3617
  %v3714 = vmax.f32 %v3522, %v3618
  %v3715 = vmax.f32 %v3523, %v3619
  %v3716 = vmax.f32 %v3524, %v3620
  %v3717 = vmax.f32 %v3525, %v3621
  %v3718 = vmax.f32 %v3526, %v3622
  %v3719 = vmax.f32 %v3527, %v3623
  %v3720 = vmax.f32 %v3528, %v3624
  %v3721 = vmax.f32 %v3529, %v3625
  %v3722 = vmax.f32 %v3530, %v3626
  %v3723 = vmax.f32 %v3531, %v3627
  %v3724 = vmax.f32 %v3532, %v3628
  %v3725 = vmax.f32 %v3533, %v3629
  %v3726 = vmax.f32 %v3534, %v3630
  %v3727 = vmax.f32 %v3535, %v3631
  %v3728 = vmax.f32 %v3536, %v3632
  %v3729 = vmax.f32 %v3537, %v3633
  %v3730 = vmax.f32 %v3538, %v3634
  %v3731 = vmax.f32 %v3539, %v3635
  %v3732 = vld [vmem:[%s6] sm:$0x1]
  %v3733 = vld [vmem:[%s7] sm:$0x1]
  %v3734 = vld [vmem:[%s8] sm:$0x1]
  %v3735 = vld [vmem:[%s5] sm:$0xff]
  %v3736 = vld [vmem:[%s5 + $0x8] sm:$0xff]
  %v3737 = vld [vmem:[%s5 + $0x10] sm:$0xff]
  %v3738 = vld [vmem:[%s5 + $0x18] sm:$0xff]
  %v3739 = vld [vmem:[%s5 + $0x20] sm:$0xff]
  %v3740 = vld [vmem:[%s5 + $0x28] sm:$0xff]
  %v3741 = vld [vmem:[%s5 + $0x30] sm:$0xff]
  %v3742 = vld [vmem:[%s5 + $0x38] sm:$0xff]
  %v3743 = vld [vmem:[%s5 + $0x40] sm:$0xff]
  %v3744 = vld [vmem:[%s5 + $0x48] sm:$0xff]
  %v3745 = vld [vmem:[%s5 + $0x50] sm:$0xff]
  %v3746 = vld [vmem:[%s5 + $0x58] sm:$0xff]
  %v3747 = vld [vmem:[%s5 + $0x60] sm:$0xff]
  %v3748 = vld [vmem:[%s5 + $0x68] sm:$0xff]
  %v3749 = vld [vmem:[%s5 + $0x70] sm:$0xff]
  %v3750 = vld [vmem:[%s5 + $0x78] sm:$0xff]
  %v3751 = vld [vmem:[%s5 + $0x80] sm:$0xff]
  %v3752 = vld [vmem:[%s5 + $0x88] sm:$0xff]
  %v3753 = vld [vmem:[%s5 + $0x90] sm:$0xff]
  %v3754 = vld [vmem:[%s5 + $0x98] sm:$0xff]
  %v3755 = vld [vmem:[%s5 + $0xa0] sm:$0xff]
  %v3756 = vld [vmem:[%s5 + $0xa8] sm:$0xff]
  %v3757 = vld [vmem:[%s5 + $0xb0] sm:$0xff]
  %v3758 = vld [vmem:[%s5 + $0xb8] sm:$0xff]
  %v3759 = vld [vmem:[%s5 + $0xc0] sm:$0xff]
  %v3760 = vld [vmem:[%s5 + $0xc8] sm:$0xff]
  %v3761 = vld [vmem:[%s5 + $0xd0] sm:$0xff]
  %v3762 = vld [vmem:[%s5 + $0xd8] sm:$0xff]
  %v3763 = vld [vmem:[%s5 + $0xe0] sm:$0xff]
  %v3764 = vld [vmem:[%s5 + $0xe8] sm:$0xff]
  %v3765 = vld [vmem:[%s5 + $0xf0] sm:$0xff]
  %v3766 = vld [vmem:[%s5 + $0xf8] sm:$0xff]
  %v3767 = vld [vmem:[%s5 + $0x100] sm:$0xff]
  %v3768 = vld [vmem:[%s5 + $0x108] sm:$0xff]
  %v3769 = vld [vmem:[%s5 + $0x110] sm:$0xff]
  %v3770 = vld [vmem:[%s5 + $0x118] sm:$0xff]
  %v3771 = vld [vmem:[%s5 + $0x120] sm:$0xff]
  %v3772 = vld [vmem:[%s5 + $0x128] sm:$0xff]
  %v3773 = vld [vmem:[%s5 + $0x130] sm:$0xff]
  %v3774 = vld [vmem:[%s5 + $0x138] sm:$0xff]
  %v3775 = vld [vmem:[%s5 + $0x140] sm:$0xff]
  %v3776 = vld [vmem:[%s5 + $0x148] sm:$0xff]
  %v3777 = vld [vmem:[%s5 + $0x150] sm:$0xff]
  %v3778 = vld [vmem:[%s5 + $0x158] sm:$0xff]
  %v3779 = vld [vmem:[%s5 + $0x160] sm:$0xff]
  %v3780 = vld [vmem:[%s5 + $0x168] sm:$0xff]
  %v3781 = vld [vmem:[%s5 + $0x170] sm:$0xff]
  %v3782 = vld [vmem:[%s5 + $0x178] sm:$0xff]
  %v3783 = vld [vmem:[%s5 + $0x180] sm:$0xff]
  %v3784 = vld [vmem:[%s5 + $0x188] sm:$0xff]
  %v3785 = vld [vmem:[%s5 + $0x190] sm:$0xff]
  %v3786 = vld [vmem:[%s5 + $0x198] sm:$0xff]
  %v3787 = vld [vmem:[%s5 + $0x1a0] sm:$0xff]
  %v3788 = vld [vmem:[%s5 + $0x1a8] sm:$0xff]
  %v3789 = vld [vmem:[%s5 + $0x1b0] sm:$0xff]
  %v3790 = vld [vmem:[%s5 + $0x1b8] sm:$0xff]
  %v3791 = vld [vmem:[%s5 + $0x1c0] sm:$0xff]
  %v3792 = vld [vmem:[%s5 + $0x1c8] sm:$0xff]
  %v3793 = vld [vmem:[%s5 + $0x1d0] sm:$0xff]
  %v3794 = vld [vmem:[%s5 + $0x1d8] sm:$0xff]
  %v3795 = vld [vmem:[%s5 + $0x1e0] sm:$0xff]
  %v3796 = vld [vmem:[%s5 + $0x1e8] sm:$0xff]
  %v3797 = vld [vmem:[%s5 + $0x1f0] sm:$0xff]
  %v3798 = vld [vmem:[%s5 + $0x1f8] sm:$0xff]
  %v3799 = vld [vmem:[%s5 + $0x200] sm:$0xff]
  %v3800 = vld [vmem:[%s5 + $0x208] sm:$0xff]
  %v3801 = vld [vmem:[%s5 + $0x210] sm:$0xff]
  %v3802 = vld [vmem:[%s5 + $0x218] sm:$0xff]
  %v3803 = vld [vmem:[%s5 + $0x220] sm:$0xff]
  %v3804 = vld [vmem:[%s5 + $0x228] sm:$0xff]
  %v3805 = vld [vmem:[%s5 + $0x230] sm:$0xff]
  %v3806 = vld [vmem:[%s5 + $0x238] sm:$0xff]
  %v3807 = vld [vmem:[%s5 + $0x240] sm:$0xff]
  %v3808 = vld [vmem:[%s5 + $0x248] sm:$0xff]
  %v3809 = vld [vmem:[%s5 + $0x250] sm:$0xff]
  %v3810 = vld [vmem:[%s5 + $0x258] sm:$0xff]
  %v3811 = vld [vmem:[%s5 + $0x260] sm:$0xff]
  %v3812 = vld [vmem:[%s5 + $0x268] sm:$0xff]
  %v3813 = vld [vmem:[%s5 + $0x270] sm:$0xff]
  %v3814 = vld [vmem:[%s5 + $0x278] sm:$0xff]
  %v3815 = vld [vmem:[%s5 + $0x280] sm:$0xff]
  %v3816 = vld [vmem:[%s5 + $0x288] sm:$0xff]
  %v3817 = vld [vmem:[%s5 + $0x290] sm:$0xff]
  %v3818 = vld [vmem:[%s5 + $0x298] sm:$0xff]
  %v3819 = vld [vmem:[%s5 + $0x2a0] sm:$0xff]
  %v3820 = vld [vmem:[%s5 + $0x2a8] sm:$0xff]
  %v3821 = vld [vmem:[%s5 + $0x2b0] sm:$0xff]
  %v3822 = vld [vmem:[%s5 + $0x2b8] sm:$0xff]
  %v3823 = vld [vmem:[%s5 + $0x2c0] sm:$0xff]
  %v3824 = vld [vmem:[%s5 + $0x2c8] sm:$0xff]
  %v3825 = vld [vmem:[%s5 + $0x2d0] sm:$0xff]
  %v3826 = vld [vmem:[%s5 + $0x2d8] sm:$0xff]
  %v3827 = vld [vmem:[%s5 + $0x2e0] sm:$0xff]
  %v3828 = vld [vmem:[%s5 + $0x2e8] sm:$0xff]
  %v3829 = vld [vmem:[%s5 + $0x2f0] sm:$0xff]
  %v3830 = vld [vmem:[%s5 + $0x2f8] sm:$0xff]
  %v3831 = vld [vmem:[%s5 + $0x300] sm:$0xff]
  %v3832 = vld [vmem:[%s5 + $0x308] sm:$0xff]
  %v3833 = vld [vmem:[%s5 + $0x310] sm:$0xff]
  %v3834 = vld [vmem:[%s5 + $0x318] sm:$0xff]
  %v3835 = vld [vmem:[%s5 + $0x320] sm:$0xff]
  %v3836 = vld [vmem:[%s5 + $0x328] sm:$0xff]
  %v3837 = vld [vmem:[%s5 + $0x330] sm:$0xff]
  %v3838 = vld [vmem:[%s5 + $0x338] sm:$0xff]
  %v3839 = vld [vmem:[%s5 + $0x340] sm:$0xff]
  %v3840 = vld [vmem:[%s5 + $0x348] sm:$0xff]
  %v3841 = vld [vmem:[%s5 + $0x350] sm:$0xff]
  %v3842 = vld [vmem:[%s5 + $0x358] sm:$0xff]
  %v3843 = vld [vmem:[%s5 + $0x360] sm:$0xff]
  %v3844 = vld [vmem:[%s5 + $0x368] sm:$0xff]
  %v3845 = vld [vmem:[%s5 + $0x370] sm:$0xff]
  %v3846 = vld [vmem:[%s5 + $0x378] sm:$0xff]
  %v3847 = vld [vmem:[%s5 + $0x380] sm:$0xff]
  %v3848 = vld [vmem:[%s5 + $0x388] sm:$0xff]
  %v3849 = vld [vmem:[%s5 + $0x390] sm:$0xff]
  %v3850 = vld [vmem:[%s5 + $0x398] sm:$0xff]
  %v3851 = vld [vmem:[%s5 + $0x3a0] sm:$0xff]
  %v3852 = vld [vmem:[%s5 + $0x3a8] sm:$0xff]
  %v3853 = vld [vmem:[%s5 + $0x3b0] sm:$0xff]
  %v3854 = vld [vmem:[%s5 + $0x3b8] sm:$0xff]
  %v3855 = vld [vmem:[%s5 + $0x3c0] sm:$0xff]
  %v3856 = vld [vmem:[%s5 + $0x3c8] sm:$0xff]
  %v3857 = vld [vmem:[%s5 + $0x3d0] sm:$0xff]
  %v3858 = vld [vmem:[%s5 + $0x3d8] sm:$0xff]
  %v3859 = vld [vmem:[%s5 + $0x3e0] sm:$0xff]
  %v3860 = vld [vmem:[%s5 + $0x3e8] sm:$0xff]
  %v3861 = vld [vmem:[%s5 + $0x3f0] sm:$0xff]
  %v3862 = vld [vmem:[%s5 + $0x3f8] sm:$0xff]
  %v3864 = vlaneseq
  %v3865 = vshrl.u32 %v3864, 7
  %v3866 = vsub.s32 0, %v3865
  %v3867 = vrot.slane %v3732, %v3866
  %3869 = vmatprep.subr.mxu0 0.0
  %3870 = vmatpush1.msra.mxu0 %v3750
  %3871 = vmatprep.subr.mxu0 0.0
  %3872 = vmatpush1.msra.mxu0 %v3749
  %3873 = vmatprep.subr.mxu0 0.0
  %3874 = vmatpush1.msra.mxu0 %v3748
  %3875 = vmatprep.subr.mxu0 0.0
  %3876 = vmatpush1.msra.mxu0 %v3747
  %3877 = vmatprep.subr.mxu0 0.0
  %3878 = vmatpush1.msra.mxu0 %v3746
  %3879 = vmatprep.subr.mxu0 0.0
  %3880 = vmatpush1.msra.mxu0 %v3745
  %3881 = vmatprep.subr.mxu0 0.0
  %3882 = vmatpush1.msra.mxu0 %v3744
  %3883 = vmatprep.subr.mxu0 0.0
  %3884 = vmatpush1.msra.mxu0 %v3743
  %3885 = vmatprep.subr.mxu0 0.0
  %3886 = vmatpush1.msra.mxu0 %v3742
  %3887 = vmatprep.subr.mxu0 0.0
  %3888 = vmatpush1.msra.mxu0 %v3741
  %3889 = vmatprep.subr.mxu0 0.0
  %3890 = vmatpush1.msra.mxu0 %v3740
  %3891 = vmatprep.subr.mxu0 0.0
  %3892 = vmatpush1.msra.mxu0 %v3739
  %3893 = vmatprep.subr.mxu0 0.0
  %3894 = vmatpush1.msra.mxu0 %v3738
  %3895 = vmatprep.subr.mxu0 0.0
  %3896 = vmatpush1.msra.mxu0 %v3737
  %3897 = vmatprep.subr.mxu0 0.0
  %3898 = vmatpush1.msra.mxu0 %v3736
  %3899 = vmatprep.subr.mxu0 0.0
  %3900 = vmatpush1.msra.mxu0 %v3735
  %3901 = vmatprep.subr.mxu0 0.0
  %3902 = vmatpush2.msra.mxu0 %v3766
  %3903 = vmatprep.subr.mxu0 0.0
  %3904 = vmatpush2.msra.mxu0 %v3765
  %3905 = vmatprep.subr.mxu0 0.0
  %3906 = vmatpush2.msra.mxu0 %v3764
  %3907 = vmatprep.subr.mxu0 0.0
  %3908 = vmatpush2.msra.mxu0 %v3763
  %3909 = vmatprep.subr.mxu0 0.0
  %3910 = vmatpush2.msra.mxu0 %v3762
  %3911 = vmatprep.subr.mxu0 0.0
  %3912 = vmatpush2.msra.mxu0 %v3761
  %3913 = vmatprep.subr.mxu0 0.0
  %3914 = vmatpush2.msra.mxu0 %v3760
  %3915 = vmatprep.subr.mxu0 0.0
  %3916 = vmatpush2.msra.mxu0 %v3759
  %3917 = vmatprep.subr.mxu0 0.0
  %3918 = vmatpush2.msra.mxu0 %v3758
  %3919 = vmatprep.subr.mxu0 0.0
  %3920 = vmatpush2.msra.mxu0 %v3757
  %3921 = vmatprep.subr.mxu0 0.0
  %3922 = vmatpush2.msra.mxu0 %v3756
  %3923 = vmatprep.subr.mxu0 0.0
  %3924 = vmatpush2.msra.mxu0 %v3755
  %3925 = vmatprep.subr.mxu0 0.0
  %3926 = vmatpush2.msra.mxu0 %v3754
  %3927 = vmatprep.subr.mxu0 0.0
  %3928 = vmatpush2.msra.mxu0 %v3753
  %3929 = vmatprep.subr.mxu0 0.0
  %3930 = vmatpush2.msra.mxu0 %v3752
  %3931 = vmatprep.subr.mxu0 0.0
  %3932 = vmatpush2.msra.mxu0 %v3751
  %3933 = vmatprep.mubr.f32.mxu0 %v3637
  %3934 = vmatmul.mubr.f32.gmra.mxu0 %v3636
  %v3935 = vpop.f32.mrf.mxu0
  %v3936 = vadd.f32 %v3867, %v3935
  %v3937 = vpop.f32.mrf.mxu0
  %3938 = vmatprep.mubr.f32.mxu0 %v3639
  %3939 = vmatmul.mubr.f32.gmra.mxu0 %v3638
  %v3940 = vpop.f32.mrf.mxu0
  %v3941 = vadd.f32 %v3867, %v3940
  %v3942 = vpop.f32.mrf.mxu0
  %3943 = vmatprep.mubr.f32.mxu0 %v3641
  %3944 = vmatmul.mubr.f32.gmra.mxu0 %v3640
  %v3945 = vpop.f32.mrf.mxu0
  %v3946 = vadd.f32 %v3867, %v3945
  %v3947 = vpop.f32.mrf.mxu0
  %3948 = vmatprep.mubr.f32.mxu0 %v3643
  %3949 = vmatmul.mubr.f32.gmra.mxu0 %v3642
  %v3950 = vpop.f32.mrf.mxu0
  %v3951 = vadd.f32 %v3867, %v3950
  %v3952 = vpop.f32.mrf.mxu0
  %3953 = vmatprep.mubr.f32.mxu0 %v3645
  %3954 = vmatmul.mubr.f32.gmra.mxu0 %v3644
  %v3955 = vpop.f32.mrf.mxu0
  %v3956 = vadd.f32 %v3867, %v3955
  %v3957 = vpop.f32.mrf.mxu0
  %3958 = vmatprep.mubr.f32.mxu0 %v3647
  %3959 = vmatmul.mubr.f32.gmra.mxu0 %v3646
  %v3960 = vpop.f32.mrf.mxu0
  %v3961 = vadd.f32 %v3867, %v3960
  %v3962 = vpop.f32.mrf.mxu0
  %3963 = vdwg.mxu0
  %3964 = vmatprep.subr.mxu0 0.0
  %3965 = vmatpush1.msra.mxu0 %v3782
  %3966 = vmatprep.subr.mxu0 0.0
  %3967 = vmatpush1.msra.mxu0 %v3781
  %3968 = vmatprep.subr.mxu0 0.0
  %3969 = vmatpush1.msra.mxu0 %v3780
  %3970 = vmatprep.subr.mxu0 0.0
  %3971 = vmatpush1.msra.mxu0 %v3779
  %3972 = vmatprep.subr.mxu0 0.0
  %3973 = vmatpush1.msra.mxu0 %v3778
  %3974 = vmatprep.subr.mxu0 0.0
  %3975 = vmatpush1.msra.mxu0 %v3777
  %3976 = vmatprep.subr.mxu0 0.0
  %3977 = vmatpush1.msra.mxu0 %v3776
  %3978 = vmatprep.subr.mxu0 0.0
  %3979 = vmatpush1.msra.mxu0 %v3775
  %3980 = vmatprep.subr.mxu0 0.0
  %3981 = vmatpush1.msra.mxu0 %v3774
  %3982 = vmatprep.subr.mxu0 0.0
  %3983 = vmatpush1.msra.mxu0 %v3773
  %3984 = vmatprep.subr.mxu0 0.0
  %3985 = vmatpush1.msra.mxu0 %v3772
  %3986 = vmatprep.subr.mxu0 0.0
  %3987 = vmatpush1.msra.mxu0 %v3771
  %3988 = vmatprep.subr.mxu0 0.0
  %3989 = vmatpush1.msra.mxu0 %v3770
  %3990 = vmatprep.subr.mxu0 0.0
  %3991 = vmatpush1.msra.mxu0 %v3769
  %3992 = vmatprep.subr.mxu0 0.0
  %3993 = vmatpush1.msra.mxu0 %v3768
  %3994 = vmatprep.subr.mxu0 0.0
  %3995 = vmatpush1.msra.mxu0 %v3767
  %3996 = vmatprep.subr.mxu0 0.0
  %3997 = vmatpush2.msra.mxu0 %v3798
  %3998 = vmatprep.subr.mxu0 0.0
  %3999 = vmatpush2.msra.mxu0 %v3797
  %4000 = vmatprep.subr.mxu0 0.0
  %4001 = vmatpush2.msra.mxu0 %v3796
  %4002 = vmatprep.subr.mxu0 0.0
  %4003 = vmatpush2.msra.mxu0 %v3795
  %4004 = vmatprep.subr.mxu0 0.0
  %4005 = vmatpush2.msra.mxu0 %v3794
  %4006 = vmatprep.subr.mxu0 0.0
  %4007 = vmatpush2.msra.mxu0 %v3793
  %4008 = vmatprep.subr.mxu0 0.0
  %4009 = vmatpush2.msra.mxu0 %v3792
  %4010 = vmatprep.subr.mxu0 0.0
  %4011 = vmatpush2.msra.mxu0 %v3791
  %4012 = vmatprep.subr.mxu0 0.0
  %4013 = vmatpush2.msra.mxu0 %v3790
  %4014 = vmatprep.subr.mxu0 0.0
  %4015 = vmatpush2.msra.mxu0 %v3789
  %4016 = vmatprep.subr.mxu0 0.0
  %4017 = vmatpush2.msra.mxu0 %v3788
  %4018 = vmatprep.subr.mxu0 0.0
  %4019 = vmatpush2.msra.mxu0 %v3787
  %4020 = vmatprep.subr.mxu0 0.0
  %4021 = vmatpush2.msra.mxu0 %v3786
  %4022 = vmatprep.subr.mxu0 0.0
  %4023 = vmatpush2.msra.mxu0 %v3785
  %4024 = vmatprep.subr.mxu0 0.0
  %4025 = vmatpush2.msra.mxu0 %v3784
  %4026 = vmatprep.subr.mxu0 0.0
  %4027 = vmatpush2.msra.mxu0 %v3783
  %4028 = vmatprep.mubr.f32.mxu0 %v3649
  %4029 = vmatmul.mubr.f32.gmra.mxu0 %v3648
  %v4030 = vpop.f32.mrf.mxu0
  %v4031 = vadd.f32 %v3936, %v4030
  %v4032 = vpop.f32.mrf.mxu0
  %4033 = vmatprep.mubr.f32.mxu0 %v3651
  %4034 = vmatmul.mubr.f32.gmra.mxu0 %v3650
  %v4035 = vpop.f32.mrf.mxu0
  %v4036 = vadd.f32 %v3941, %v4035
  %v4037 = vpop.f32.mrf.mxu0
  %4038 = vmatprep.mubr.f32.mxu0 %v3653
  %4039 = vmatmul.mubr.f32.gmra.mxu0 %v3652
  %v4040 = vpop.f32.mrf.mxu0
  %v4041 = vadd.f32 %v3946, %v4040
  %v4042 = vpop.f32.mrf.mxu0
  %4043 = vmatprep.mubr.f32.mxu0 %v3655
  %4044 = vmatmul.mubr.f32.gmra.mxu0 %v3654
  %v4045 = vpop.f32.mrf.mxu0
  %v4046 = vadd.f32 %v3951, %v4045
  %v4047 = vpop.f32.mrf.mxu0
  %4048 = vmatprep.mubr.f32.mxu0 %v3657
  %4049 = vmatmul.mubr.f32.gmra.mxu0 %v3656
  %v4050 = vpop.f32.mrf.mxu0
  %v4051 = vadd.f32 %v3956, %v4050
  %v4052 = vpop.f32.mrf.mxu0
  %4053 = vmatprep.mubr.f32.mxu0 %v3659
  %4054 = vmatmul.mubr.f32.gmra.mxu0 %v3658
  %v4055 = vpop.f32.mrf.mxu0
  %v4056 = vadd.f32 %v3961, %v4055
  %v4057 = vpop.f32.mrf.mxu0
  %4058 = vdwg.mxu0
  %4059 = vmatprep.subr.mxu0 0.0
  %4060 = vmatpush1.msra.mxu0 %v3814
  %4061 = vmatprep.subr.mxu0 0.0
  %4062 = vmatpush1.msra.mxu0 %v3813
  %4063 = vmatprep.subr.mxu0 0.0
  %4064 = vmatpush1.msra.mxu0 %v3812
  %4065 = vmatprep.subr.mxu0 0.0
  %4066 = vmatpush1.msra.mxu0 %v3811
  %4067 = vmatprep.subr.mxu0 0.0
  %4068 = vmatpush1.msra.mxu0 %v3810
  %4069 = vmatprep.subr.mxu0 0.0
  %4070 = vmatpush1.msra.mxu0 %v3809
  %4071 = vmatprep.subr.mxu0 0.0
  %4072 = vmatpush1.msra.mxu0 %v3808
  %4073 = vmatprep.subr.mxu0 0.0
  %4074 = vmatpush1.msra.mxu0 %v3807
  %4075 = vmatprep.subr.mxu0 0.0
  %4076 = vmatpush1.msra.mxu0 %v3806
  %4077 = vmatprep.subr.mxu0 0.0
  %4078 = vmatpush1.msra.mxu0 %v3805
  %4079 = vmatprep.subr.mxu0 0.0
  %4080 = vmatpush1.msra.mxu0 %v3804
  %4081 = vmatprep.subr.mxu0 0.0
  %4082 = vmatpush1.msra.mxu0 %v3803
  %4083 = vmatprep.subr.mxu0 0.0
  %4084 = vmatpush1.msra.mxu0 %v3802
  %4085 = vmatprep.subr.mxu0 0.0
  %4086 = vmatpush1.msra.mxu0 %v3801
  %4087 = vmatprep.subr.mxu0 0.0
  %4088 = vmatpush1.msra.mxu0 %v3800
  %4089 = vmatprep.subr.mxu0 0.0
  %4090 = vmatpush1.msra.mxu0 %v3799
  %4091 = vmatprep.subr.mxu0 0.0
  %4092 = vmatpush2.msra.mxu0 %v3830
  %4093 = vmatprep.subr.mxu0 0.0
  %4094 = vmatpush2.msra.mxu0 %v3829
  %4095 = vmatprep.subr.mxu0 0.0
  %4096 = vmatpush2.msra.mxu0 %v3828
  %4097 = vmatprep.subr.mxu0 0.0
  %4098 = vmatpush2.msra.mxu0 %v3827
  %4099 = vmatprep.subr.mxu0 0.0
  %4100 = vmatpush2.msra.mxu0 %v3826
  %4101 = vmatprep.subr.mxu0 0.0
  %4102 = vmatpush2.msra.mxu0 %v3825
  %4103 = vmatprep.subr.mxu0 0.0
  %4104 = vmatpush2.msra.mxu0 %v3824
  %4105 = vmatprep.subr.mxu0 0.0
  %4106 = vmatpush2.msra.mxu0 %v3823
  %4107 = vmatprep.subr.mxu0 0.0
  %4108 = vmatpush2.msra.mxu0 %v3822
  %4109 = vmatprep.subr.mxu0 0.0
  %4110 = vmatpush2.msra.mxu0 %v3821
  %4111 = vmatprep.subr.mxu0 0.0
  %4112 = vmatpush2.msra.mxu0 %v3820
  %4113 = vmatprep.subr.mxu0 0.0
  %4114 = vmatpush2.msra.mxu0 %v3819
  %4115 = vmatprep.subr.mxu0 0.0
  %4116 = vmatpush2.msra.mxu0 %v3818
  %4117 = vmatprep.subr.mxu0 0.0
  %4118 = vmatpush2.msra.mxu0 %v3817
  %4119 = vmatprep.subr.mxu0 0.0
  %4120 = vmatpush2.msra.mxu0 %v3816
  %4121 = vmatprep.subr.mxu0 0.0
  %4122 = vmatpush2.msra.mxu0 %v3815
  %4123 = vmatprep.mubr.f32.mxu0 %v3661
  %4124 = vmatmul.mubr.f32.gmra.mxu0 %v3660
  %v4125 = vpop.f32.mrf.mxu0
  %v4126 = vadd.f32 %v4031, %v4125
  %v4127 = vpop.f32.mrf.mxu0
  %4128 = vmatprep.mubr.f32.mxu0 %v3663
  %4129 = vmatmul.mubr.f32.gmra.mxu0 %v3662
  %v4130 = vpop.f32.mrf.mxu0
  %v4131 = vadd.f32 %v4036, %v4130
  %v4132 = vpop.f32.mrf.mxu0
  %4133 = vmatprep.mubr.f32.mxu0 %v3665
  %4134 = vmatmul.mubr.f32.gmra.mxu0 %v3664
  %v4135 = vpop.f32.mrf.mxu0
  %v4136 = vadd.f32 %v4041, %v4135
  %v4137 = vpop.f32.mrf.mxu0
  %4138 = vmatprep.mubr.f32.mxu0 %v3667
  %4139 = vmatmul.mubr.f32.gmra.mxu0 %v3666
  %v4140 = vpop.f32.mrf.mxu0
  %v4141 = vadd.f32 %v4046, %v4140
  %v4142 = vpop.f32.mrf.mxu0
  %4143 = vmatprep.mubr.f32.mxu0 %v3669
  %4144 = vmatmul.mubr.f32.gmra.mxu0 %v3668
  %v4145 = vpop.f32.mrf.mxu0
  %v4146 = vadd.f32 %v4051, %v4145
  %v4147 = vpop.f32.mrf.mxu0
  %4148 = vmatprep.mubr.f32.mxu0 %v3671
  %4149 = vmatmul.mubr.f32.gmra.mxu0 %v3670
  %v4150 = vpop.f32.mrf.mxu0
  %v4151 = vadd.f32 %v4056, %v4150
  %v4152 = vpop.f32.mrf.mxu0
  %4153 = vdwg.mxu0
  %4154 = vmatprep.subr.mxu0 0.0
  %4155 = vmatpush1.msra.mxu0 %v3846
  %4156 = vmatprep.subr.mxu0 0.0
  %4157 = vmatpush1.msra.mxu0 %v3845
  %4158 = vmatprep.subr.mxu0 0.0
  %4159 = vmatpush1.msra.mxu0 %v3844
  %4160 = vmatprep.subr.mxu0 0.0
  %4161 = vmatpush1.msra.mxu0 %v3843
  %4162 = vmatprep.subr.mxu0 0.0
  %4163 = vmatpush1.msra.mxu0 %v3842
  %4164 = vmatprep.subr.mxu0 0.0
  %4165 = vmatpush1.msra.mxu0 %v3841
  %4166 = vmatprep.subr.mxu0 0.0
  %4167 = vmatpush1.msra.mxu0 %v3840
  %4168 = vmatprep.subr.mxu0 0.0
  %4169 = vmatpush1.msra.mxu0 %v3839
  %4170 = vmatprep.subr.mxu0 0.0
  %4171 = vmatpush1.msra.mxu0 %v3838
  %4172 = vmatprep.subr.mxu0 0.0
  %4173 = vmatpush1.msra.mxu0 %v3837
  %4174 = vmatprep.subr.mxu0 0.0
  %4175 = vmatpush1.msra.mxu0 %v3836
  %4176 = vmatprep.subr.mxu0 0.0
  %4177 = vmatpush1.msra.mxu0 %v3835
  %4178 = vmatprep.subr.mxu0 0.0
  %4179 = vmatpush1.msra.mxu0 %v3834
  %4180 = vmatprep.subr.mxu0 0.0
  %4181 = vmatpush1.msra.mxu0 %v3833
  %4182 = vmatprep.subr.mxu0 0.0
  %4183 = vmatpush1.msra.mxu0 %v3832
  %4184 = vmatprep.subr.mxu0 0.0
  %4185 = vmatpush1.msra.mxu0 %v3831
  %4186 = vmatprep.subr.mxu0 0.0
  %4187 = vmatpush2.msra.mxu0 %v3862
  %4188 = vmatprep.subr.mxu0 0.0
  %4189 = vmatpush2.msra.mxu0 %v3861
  %4190 = vmatprep.subr.mxu0 0.0
  %4191 = vmatpush2.msra.mxu0 %v3860
  %4192 = vmatprep.subr.mxu0 0.0
  %4193 = vmatpush2.msra.mxu0 %v3859
  %4194 = vmatprep.subr.mxu0 0.0
  %4195 = vmatpush2.msra.mxu0 %v3858
  %4196 = vmatprep.subr.mxu0 0.0
  %4197 = vmatpush2.msra.mxu0 %v3857
  %4198 = vmatprep.subr.mxu0 0.0
  %4199 = vmatpush2.msra.mxu0 %v3856
  %4200 = vmatprep.subr.mxu0 0.0
  %4201 = vmatpush2.msra.mxu0 %v3855
  %4202 = vmatprep.subr.mxu0 0.0
  %4203 = vmatpush2.msra.mxu0 %v3854
  %4204 = vmatprep.subr.mxu0 0.0
  %4205 = vmatpush2.msra.mxu0 %v3853
  %4206 = vmatprep.subr.mxu0 0.0
  %4207 = vmatpush2.msra.mxu0 %v3852
  %4208 = vmatprep.subr.mxu0 0.0
  %4209 = vmatpush2.msra.mxu0 %v3851
  %4210 = vmatprep.subr.mxu0 0.0
  %4211 = vmatpush2.msra.mxu0 %v3850
  %4212 = vmatprep.subr.mxu0 0.0
  %4213 = vmatpush2.msra.mxu0 %v3849
  %4214 = vmatprep.subr.mxu0 0.0
  %4215 = vmatpush2.msra.mxu0 %v3848
  %4216 = vmatprep.subr.mxu0 0.0
  %4217 = vmatpush2.msra.mxu0 %v3847
  %4218 = vmatprep.mubr.f32.mxu0 %v3673
  %4219 = vmatmul.mubr.f32.gmra.mxu0 %v3672
  %v4220 = vpop.f32.mrf.mxu0
  %v4221 = vadd.f32 %v4126, %v4220
  %v4222 = vpop.f32.mrf.mxu0
  %4223 = vmatprep.mubr.f32.mxu0 %v3675
  %4224 = vmatmul.mubr.f32.gmra.mxu0 %v3674
  %v4225 = vpop.f32.mrf.mxu0
  %v4226 = vadd.f32 %v4131, %v4225
  %v4227 = vpop.f32.mrf.mxu0
  %4228 = vmatprep.mubr.f32.mxu0 %v3677
  %4229 = vmatmul.mubr.f32.gmra.mxu0 %v3676
  %v4230 = vpop.f32.mrf.mxu0
  %v4231 = vadd.f32 %v4136, %v4230
  %v4232 = vpop.f32.mrf.mxu0
  %4233 = vmatprep.mubr.f32.mxu0 %v3679
  %4234 = vmatmul.mubr.f32.gmra.mxu0 %v3678
  %v4235 = vpop.f32.mrf.mxu0
  %v4236 = vadd.f32 %v4141, %v4235
  %v4237 = vpop.f32.mrf.mxu0
  %4238 = vmatprep.mubr.f32.mxu0 %v3681
  %4239 = vmatmul.mubr.f32.gmra.mxu0 %v3680
  %v4240 = vpop.f32.mrf.mxu0
  %v4241 = vadd.f32 %v4146, %v4240
  %v4242 = vpop.f32.mrf.mxu0
  %4243 = vmatprep.mubr.f32.mxu0 %v3683
  %4244 = vmatmul.mubr.f32.gmra.mxu0 %v3682
  %v4245 = vpop.f32.mrf.mxu0
  %v4246 = vadd.f32 %v4151, %v4245
  %v4247 = vpop.f32.mrf.mxu0
  %4248 = vdwg.mxu0
  %v4249 = vmul.f32 %v4221, 0.01
  %v4250 = vmul.f32 %v4226, 0.01
  %v4251 = vmul.f32 %v4231, 0.01
  %v4252 = vmul.f32 %v4236, 0.01
  %v4253 = vmul.f32 %v4241, 0.01
  %v4254 = vmul.f32 %v4246, 0.01
  %v4255 = vmax.f32 %v4221, %v4249
  %v4256 = vmax.f32 %v4226, %v4250
  %v4257 = vmax.f32 %v4231, %v4251
  %v4258 = vmax.f32 %v4236, %v4252
  %v4259 = vmax.f32 %v4241, %v4253
  %v4260 = vmax.f32 %v4246, %v4254
  %v4262 = vlaneseq
  %v4263 = vshrl.u32 %v4262, 7
  %v4264 = vsub.s32 0, %v4263
  %v4265 = vrot.slane %v3733, %v4264
  %v4267 = vmul.f32 %v4255, %v4265
  %v4268 = vmul.f32 %v4256, %v4265
  %v4269 = vmul.f32 %v4257, %v4265
  %v4270 = vmul.f32 %v4258, %v4265
  %v4271 = vmul.f32 %v4259, %v4265
  %v4272 = vmul.f32 %v4260, %v4265
  %v4274 = vlaneseq
  %v4275 = vshrl.u32 %v4274, 7
  %v4276 = vsub.s32 0, %v4275
  %v4277 = vrot.slane %v3734, %v4276
  %v4279 = vadd.f32 %v4267, %v4277
  %v4280 = vadd.f32 %v4268, %v4277
  %v4281 = vadd.f32 %v4269, %v4277
  %v4282 = vadd.f32 %v4270, %v4277
  %v4283 = vadd.f32 %v4271, %v4277
  %v4284 = vadd.f32 %v4272, %v4277
  %4285 = vmatprep.subr.mxu0 0.0
  %4286 = vmatpush1.msra.mxu0 %v3750
  %4287 = vmatprep.subr.mxu0 0.0
  %4288 = vmatpush1.msra.mxu0 %v3749
  %4289 = vmatprep.subr.mxu0 0.0
  %4290 = vmatpush1.msra.mxu0 %v3748
  %4291 = vmatprep.subr.mxu0 0.0
  %4292 = vmatpush1.msra.mxu0 %v3747
  %4293 = vmatprep.subr.mxu0 0.0
  %4294 = vmatpush1.msra.mxu0 %v3746
  %4295 = vmatprep.subr.mxu0 0.0
  %4296 = vmatpush1.msra.mxu0 %v3745
  %4297 = vmatprep.subr.mxu0 0.0
  %4298 = vmatpush1.msra.mxu0 %v3744
  %4299 = vmatprep.subr.mxu0 0.0
  %4300 = vmatpush1.msra.mxu0 %v3743
  %4301 = vmatprep.subr.mxu0 0.0
  %4302 = vmatpush1.msra.mxu0 %v3742
  %4303 = vmatprep.subr.mxu0 0.0
  %4304 = vmatpush1.msra.mxu0 %v3741
  %4305 = vmatprep.subr.mxu0 0.0
  %4306 = vmatpush1.msra.mxu0 %v3740
  %4307 = vmatprep.subr.mxu0 0.0
  %4308 = vmatpush1.msra.mxu0 %v3739
  %4309 = vmatprep.subr.mxu0 0.0
  %4310 = vmatpush1.msra.mxu0 %v3738
  %4311 = vmatprep.subr.mxu0 0.0
  %4312 = vmatpush1.msra.mxu0 %v3737
  %4313 = vmatprep.subr.mxu0 0.0
  %4314 = vmatpush1.msra.mxu0 %v3736
  %4315 = vmatprep.subr.mxu0 0.0
  %4316 = vmatpush1.msra.mxu0 %v3735
  %4317 = vmatprep.subr.mxu0 0.0
  %4318 = vmatpush2.msra.mxu0 %v3766
  %4319 = vmatprep.subr.mxu0 0.0
  %4320 = vmatpush2.msra.mxu0 %v3765
  %4321 = vmatprep.subr.mxu0 0.0
  %4322 = vmatpush2.msra.mxu0 %v3764
  %4323 = vmatprep.subr.mxu0 0.0
  %4324 = vmatpush2.msra.mxu0 %v3763
  %4325 = vmatprep.subr.mxu0 0.0
  %4326 = vmatpush2.msra.mxu0 %v3762
  %4327 = vmatprep.subr.mxu0 0.0
  %4328 = vmatpush2.msra.mxu0 %v3761
  %4329 = vmatprep.subr.mxu0 0.0
  %4330 = vmatpush2.msra.mxu0 %v3760
  %4331 = vmatprep.subr.mxu0 0.0
  %4332 = vmatpush2.msra.mxu0 %v3759
  %4333 = vmatprep.subr.mxu0 0.0
  %4334 = vmatpush2.msra.mxu0 %v3758
  %4335 = vmatprep.subr.mxu0 0.0
  %4336 = vmatpush2.msra.mxu0 %v3757
  %4337 = vmatprep.subr.mxu0 0.0
  %4338 = vmatpush2.msra.mxu0 %v3756
  %4339 = vmatprep.subr.mxu0 0.0
  %4340 = vmatpush2.msra.mxu0 %v3755
  %4341 = vmatprep.subr.mxu0 0.0
  %4342 = vmatpush2.msra.mxu0 %v3754
  %4343 = vmatprep.subr.mxu0 0.0
  %4344 = vmatpush2.msra.mxu0 %v3753
  %4345 = vmatprep.subr.mxu0 0.0
  %4346 = vmatpush2.msra.mxu0 %v3752
  %4347 = vmatprep.subr.mxu0 0.0
  %4348 = vmatpush2.msra.mxu0 %v3751
  %4349 = vmatprep.mubr.f32.mxu0 %v3661
  %4350 = vmatmul.mubr.f32.gmra.mxu0 %v3660
  %v4351 = vpop.f32.mrf.mxu0
  %v4352 = vadd.f32 %v3867, %v4351
  %v4353 = vpop.f32.mrf.mxu0
  %4354 = vmatprep.mubr.f32.mxu0 %v3663
  %4355 = vmatmul.mubr.f32.gmra.mxu0 %v3662
  %v4356 = vpop.f32.mrf.mxu0
  %v4357 = vadd.f32 %v3867, %v4356
  %v4358 = vpop.f32.mrf.mxu0
  %4359 = vmatprep.mubr.f32.mxu0 %v3665
  %4360 = vmatmul.mubr.f32.gmra.mxu0 %v3664
  %v4361 = vpop.f32.mrf.mxu0
  %v4362 = vadd.f32 %v3867, %v4361
  %v4363 = vpop.f32.mrf.mxu0
  %4364 = vmatprep.mubr.f32.mxu0 %v3667
  %4365 = vmatmul.mubr.f32.gmra.mxu0 %v3666
  %v4366 = vpop.f32.mrf.mxu0
  %v4367 = vadd.f32 %v3867, %v4366
  %v4368 = vpop.f32.mrf.mxu0
  %4369 = vmatprep.mubr.f32.mxu0 %v3669
  %4370 = vmatmul.mubr.f32.gmra.mxu0 %v3668
  %v4371 = vpop.f32.mrf.mxu0
  %v4372 = vadd.f32 %v3867, %v4371
  %v4373 = vpop.f32.mrf.mxu0
  %4374 = vmatprep.mubr.f32.mxu0 %v3671
  %4375 = vmatmul.mubr.f32.gmra.mxu0 %v3670
  %v4376 = vpop.f32.mrf.mxu0
  %v4377 = vadd.f32 %v3867, %v4376
  %v4378 = vpop.f32.mrf.mxu0
  %4379 = vdwg.mxu0
  %4380 = vmatprep.subr.mxu0 0.0
  %4381 = vmatpush1.msra.mxu0 %v3782
  %4382 = vmatprep.subr.mxu0 0.0
  %4383 = vmatpush1.msra.mxu0 %v3781
  %4384 = vmatprep.subr.mxu0 0.0
  %4385 = vmatpush1.msra.mxu0 %v3780
  %4386 = vmatprep.subr.mxu0 0.0
  %4387 = vmatpush1.msra.mxu0 %v3779
  %4388 = vmatprep.subr.mxu0 0.0
  %4389 = vmatpush1.msra.mxu0 %v3778
  %4390 = vmatprep.subr.mxu0 0.0
  %4391 = vmatpush1.msra.mxu0 %v3777
  %4392 = vmatprep.subr.mxu0 0.0
  %4393 = vmatpush1.msra.mxu0 %v3776
  %4394 = vmatprep.subr.mxu0 0.0
  %4395 = vmatpush1.msra.mxu0 %v3775
  %4396 = vmatprep.subr.mxu0 0.0
  %4397 = vmatpush1.msra.mxu0 %v3774
  %4398 = vmatprep.subr.mxu0 0.0
  %4399 = vmatpush1.msra.mxu0 %v3773
  %4400 = vmatprep.subr.mxu0 0.0
  %4401 = vmatpush1.msra.mxu0 %v3772
  %4402 = vmatprep.subr.mxu0 0.0
  %4403 = vmatpush1.msra.mxu0 %v3771
  %4404 = vmatprep.subr.mxu0 0.0
  %4405 = vmatpush1.msra.mxu0 %v3770
  %4406 = vmatprep.subr.mxu0 0.0
  %4407 = vmatpush1.msra.mxu0 %v3769
  %4408 = vmatprep.subr.mxu0 0.0
  %4409 = vmatpush1.msra.mxu0 %v3768
  %4410 = vmatprep.subr.mxu0 0.0
  %4411 = vmatpush1.msra.mxu0 %v3767
  %4412 = vmatprep.subr.mxu0 0.0
  %4413 = vmatpush2.msra.mxu0 %v3798
  %4414 = vmatprep.subr.mxu0 0.0
  %4415 = vmatpush2.msra.mxu0 %v3797
  %4416 = vmatprep.subr.mxu0 0.0
  %4417 = vmatpush2.msra.mxu0 %v3796
  %4418 = vmatprep.subr.mxu0 0.0
  %4419 = vmatpush2.msra.mxu0 %v3795
  %4420 = vmatprep.subr.mxu0 0.0
  %4421 = vmatpush2.msra.mxu0 %v3794
  %4422 = vmatprep.subr.mxu0 0.0
  %4423 = vmatpush2.msra.mxu0 %v3793
  %4424 = vmatprep.subr.mxu0 0.0
  %4425 = vmatpush2.msra.mxu0 %v3792
  %4426 = vmatprep.subr.mxu0 0.0
  %4427 = vmatpush2.msra.mxu0 %v3791
  %4428 = vmatprep.subr.mxu0 0.0
  %4429 = vmatpush2.msra.mxu0 %v3790
  %4430 = vmatprep.subr.mxu0 0.0
  %4431 = vmatpush2.msra.mxu0 %v3789
  %4432 = vmatprep.subr.mxu0 0.0
  %4433 = vmatpush2.msra.mxu0 %v3788
  %4434 = vmatprep.subr.mxu0 0.0
  %4435 = vmatpush2.msra.mxu0 %v3787
  %4436 = vmatprep.subr.mxu0 0.0
  %4437 = vmatpush2.msra.mxu0 %v3786
  %4438 = vmatprep.subr.mxu0 0.0
  %4439 = vmatpush2.msra.mxu0 %v3785
  %4440 = vmatprep.subr.mxu0 0.0
  %4441 = vmatpush2.msra.mxu0 %v3784
  %4442 = vmatprep.subr.mxu0 0.0
  %4443 = vmatpush2.msra.mxu0 %v3783
  %4444 = vmatprep.mubr.f32.mxu0 %v3673
  %4445 = vmatmul.mubr.f32.gmra.mxu0 %v3672
  %v4446 = vpop.f32.mrf.mxu0
  %v4447 = vadd.f32 %v4352, %v4446
  %v4448 = vpop.f32.mrf.mxu0
  %4449 = vmatprep.mubr.f32.mxu0 %v3675
  %4450 = vmatmul.mubr.f32.gmra.mxu0 %v3674
  %v4451 = vpop.f32.mrf.mxu0
  %v4452 = vadd.f32 %v4357, %v4451
  %v4453 = vpop.f32.mrf.mxu0
  %4454 = vmatprep.mubr.f32.mxu0 %v3677
  %4455 = vmatmul.mubr.f32.gmra.mxu0 %v3676
  %v4456 = vpop.f32.mrf.mxu0
  %v4457 = vadd.f32 %v4362, %v4456
  %v4458 = vpop.f32.mrf.mxu0
  %4459 = vmatprep.mubr.f32.mxu0 %v3679
  %4460 = vmatmul.mubr.f32.gmra.mxu0 %v3678
  %v4461 = vpop.f32.mrf.mxu0
  %v4462 = vadd.f32 %v4367, %v4461
  %v4463 = vpop.f32.mrf.mxu0
  %4464 = vmatprep.mubr.f32.mxu0 %v3681
  %4465 = vmatmul.mubr.f32.gmra.mxu0 %v3680
  %v4466 = vpop.f32.mrf.mxu0
  %v4467 = vadd.f32 %v4372, %v4466
  %v4468 = vpop.f32.mrf.mxu0
  %4469 = vmatprep.mubr.f32.mxu0 %v3683
  %4470 = vmatmul.mubr.f32.gmra.mxu0 %v3682
  %v4471 = vpop.f32.mrf.mxu0
  %v4472 = vadd.f32 %v4377, %v4471
  %v4473 = vpop.f32.mrf.mxu0
  %4474 = vdwg.mxu0
  %4475 = vmatprep.subr.mxu0 0.0
  %4476 = vmatpush1.msra.mxu0 %v3814
  %4477 = vmatprep.subr.mxu0 0.0
  %4478 = vmatpush1.msra.mxu0 %v3813
  %4479 = vmatprep.subr.mxu0 0.0
  %4480 = vmatpush1.msra.mxu0 %v3812
  %4481 = vmatprep.subr.mxu0 0.0
  %4482 = vmatpush1.msra.mxu0 %v3811
  %4483 = vmatprep.subr.mxu0 0.0
  %4484 = vmatpush1.msra.mxu0 %v3810
  %4485 = vmatprep.subr.mxu0 0.0
  %4486 = vmatpush1.msra.mxu0 %v3809
  %4487 = vmatprep.subr.mxu0 0.0
  %4488 = vmatpush1.msra.mxu0 %v3808
  %4489 = vmatprep.subr.mxu0 0.0
  %4490 = vmatpush1.msra.mxu0 %v3807
  %4491 = vmatprep.subr.mxu0 0.0
  %4492 = vmatpush1.msra.mxu0 %v3806
  %4493 = vmatprep.subr.mxu0 0.0
  %4494 = vmatpush1.msra.mxu0 %v3805
  %4495 = vmatprep.subr.mxu0 0.0
  %4496 = vmatpush1.msra.mxu0 %v3804
  %4497 = vmatprep.subr.mxu0 0.0
  %4498 = vmatpush1.msra.mxu0 %v3803
  %4499 = vmatprep.subr.mxu0 0.0
  %4500 = vmatpush1.msra.mxu0 %v3802
  %4501 = vmatprep.subr.mxu0 0.0
  %4502 = vmatpush1.msra.mxu0 %v3801
  %4503 = vmatprep.subr.mxu0 0.0
  %4504 = vmatpush1.msra.mxu0 %v3800
  %4505 = vmatprep.subr.mxu0 0.0
  %4506 = vmatpush1.msra.mxu0 %v3799
  %4507 = vmatprep.subr.mxu0 0.0
  %4508 = vmatpush2.msra.mxu0 %v3830
  %4509 = vmatprep.subr.mxu0 0.0
  %4510 = vmatpush2.msra.mxu0 %v3829
  %4511 = vmatprep.subr.mxu0 0.0
  %4512 = vmatpush2.msra.mxu0 %v3828
  %4513 = vmatprep.subr.mxu0 0.0
  %4514 = vmatpush2.msra.mxu0 %v3827
  %4515 = vmatprep.subr.mxu0 0.0
  %4516 = vmatpush2.msra.mxu0 %v3826
  %4517 = vmatprep.subr.mxu0 0.0
  %4518 = vmatpush2.msra.mxu0 %v3825
  %4519 = vmatprep.subr.mxu0 0.0
  %4520 = vmatpush2.msra.mxu0 %v3824
  %4521 = vmatprep.subr.mxu0 0.0
  %4522 = vmatpush2.msra.mxu0 %v3823
  %4523 = vmatprep.subr.mxu0 0.0
  %4524 = vmatpush2.msra.mxu0 %v3822
  %4525 = vmatprep.subr.mxu0 0.0
  %4526 = vmatpush2.msra.mxu0 %v3821
  %4527 = vmatprep.subr.mxu0 0.0
  %4528 = vmatpush2.msra.mxu0 %v3820
  %4529 = vmatprep.subr.mxu0 0.0
  %4530 = vmatpush2.msra.mxu0 %v3819
  %4531 = vmatprep.subr.mxu0 0.0
  %4532 = vmatpush2.msra.mxu0 %v3818
  %4533 = vmatprep.subr.mxu0 0.0
  %4534 = vmatpush2.msra.mxu0 %v3817
  %4535 = vmatprep.subr.mxu0 0.0
  %4536 = vmatpush2.msra.mxu0 %v3816
  %4537 = vmatprep.subr.mxu0 0.0
  %4538 = vmatpush2.msra.mxu0 %v3815
  %4539 = vmatprep.mubr.f32.mxu0 %v3685
  %4540 = vmatmul.mubr.f32.gmra.mxu0 %v3684
  %v4541 = vpop.f32.mrf.mxu0
  %v4542 = vadd.f32 %v4447, %v4541
  %v4543 = vpop.f32.mrf.mxu0
  %4544 = vmatprep.mubr.f32.mxu0 %v3687
  %4545 = vmatmul.mubr.f32.gmra.mxu0 %v3686
  %v4546 = vpop.f32.mrf.mxu0
  %v4547 = vadd.f32 %v4452, %v4546
  %v4548 = vpop.f32.mrf.mxu0
  %4549 = vmatprep.mubr.f32.mxu0 %v3689
  %4550 = vmatmul.mubr.f32.gmra.mxu0 %v3688
  %v4551 = vpop.f32.mrf.mxu0
  %v4552 = vadd.f32 %v4457, %v4551
  %v4553 = vpop.f32.mrf.mxu0
  %4554 = vmatprep.mubr.f32.mxu0 %v3691
  %4555 = vmatmul.mubr.f32.gmra.mxu0 %v3690
  %v4556 = vpop.f32.mrf.mxu0
  %v4557 = vadd.f32 %v4462, %v4556
  %v4558 = vpop.f32.mrf.mxu0
  %4559 = vmatprep.mubr.f32.mxu0 %v3693
  %4560 = vmatmul.mubr.f32.gmra.mxu0 %v3692
  %v4561 = vpop.f32.mrf.mxu0
  %v4562 = vadd.f32 %v4467, %v4561
  %v4563 = vpop.f32.mrf.mxu0
  %4564 = vmatprep.mubr.f32.mxu0 %v3695
  %4565 = vmatmul.mubr.f32.gmra.mxu0 %v3694
  %v4566 = vpop.f32.mrf.mxu0
  %v4567 = vadd.f32 %v4472, %v4566
  %v4568 = vpop.f32.mrf.mxu0
  %4569 = vdwg.mxu0
  %4570 = vmatprep.subr.mxu0 0.0
  %4571 = vmatpush1.msra.mxu0 %v3846
  %4572 = vmatprep.subr.mxu0 0.0
  %4573 = vmatpush1.msra.mxu0 %v3845
  %4574 = vmatprep.subr.mxu0 0.0
  %4575 = vmatpush1.msra.mxu0 %v3844
  %4576 = vmatprep.subr.mxu0 0.0
  %4577 = vmatpush1.msra.mxu0 %v3843
  %4578 = vmatprep.subr.mxu0 0.0
  %4579 = vmatpush1.msra.mxu0 %v3842
  %4580 = vmatprep.subr.mxu0 0.0
  %4581 = vmatpush1.msra.mxu0 %v3841
  %4582 = vmatprep.subr.mxu0 0.0
  %4583 = vmatpush1.msra.mxu0 %v3840
  %4584 = vmatprep.subr.mxu0 0.0
  %4585 = vmatpush1.msra.mxu0 %v3839
  %4586 = vmatprep.subr.mxu0 0.0
  %4587 = vmatpush1.msra.mxu0 %v3838
  %4588 = vmatprep.subr.mxu0 0.0
  %4589 = vmatpush1.msra.mxu0 %v3837
  %4590 = vmatprep.subr.mxu0 0.0
  %4591 = vmatpush1.msra.mxu0 %v3836
  %4592 = vmatprep.subr.mxu0 0.0
  %4593 = vmatpush1.msra.mxu0 %v3835
  %4594 = vmatprep.subr.mxu0 0.0
  %4595 = vmatpush1.msra.mxu0 %v3834
  %4596 = vmatprep.subr.mxu0 0.0
  %4597 = vmatpush1.msra.mxu0 %v3833
  %4598 = vmatprep.subr.mxu0 0.0
  %4599 = vmatpush1.msra.mxu0 %v3832
  %4600 = vmatprep.subr.mxu0 0.0
  %4601 = vmatpush1.msra.mxu0 %v3831
  %4602 = vmatprep.subr.mxu0 0.0
  %4603 = vmatpush2.msra.mxu0 %v3862
  %4604 = vmatprep.subr.mxu0 0.0
  %4605 = vmatpush2.msra.mxu0 %v3861
  %4606 = vmatprep.subr.mxu0 0.0
  %4607 = vmatpush2.msra.mxu0 %v3860
  %4608 = vmatprep.subr.mxu0 0.0
  %4609 = vmatpush2.msra.mxu0 %v3859
  %4610 = vmatprep.subr.mxu0 0.0
  %4611 = vmatpush2.msra.mxu0 %v3858
  %4612 = vmatprep.subr.mxu0 0.0
  %4613 = vmatpush2.msra.mxu0 %v3857
  %4614 = vmatprep.subr.mxu0 0.0
  %4615 = vmatpush2.msra.mxu0 %v3856
  %4616 = vmatprep.subr.mxu0 0.0
  %4617 = vmatpush2.msra.mxu0 %v3855
  %4618 = vmatprep.subr.mxu0 0.0
  %4619 = vmatpush2.msra.mxu0 %v3854
  %4620 = vmatprep.subr.mxu0 0.0
  %4621 = vmatpush2.msra.mxu0 %v3853
  %4622 = vmatprep.subr.mxu0 0.0
  %4623 = vmatpush2.msra.mxu0 %v3852
  %4624 = vmatprep.subr.mxu0 0.0
  %4625 = vmatpush2.msra.mxu0 %v3851
  %4626 = vmatprep.subr.mxu0 0.0
  %4627 = vmatpush2.msra.mxu0 %v3850
  %4628 = vmatprep.subr.mxu0 0.0
  %4629 = vmatpush2.msra.mxu0 %v3849
  %4630 = vmatprep.subr.mxu0 0.0
  %4631 = vmatpush2.msra.mxu0 %v3848
  %4632 = vmatprep.subr.mxu0 0.0
  %4633 = vmatpush2.msra.mxu0 %v3847
  %4634 = vmatprep.mubr.f32.mxu0 %v3697
  %4635 = vmatmul.mubr.f32.gmra.mxu0 %v3696
  %v4636 = vpop.f32.mrf.mxu0
  %v4637 = vadd.f32 %v4542, %v4636
  %v4638 = vpop.f32.mrf.mxu0
  %4639 = vmatprep.mubr.f32.mxu0 %v3699
  %4640 = vmatmul.mubr.f32.gmra.mxu0 %v3698
  %v4641 = vpop.f32.mrf.mxu0
  %v4642 = vadd.f32 %v4547, %v4641
  %v4643 = vpop.f32.mrf.mxu0
  %4644 = vmatprep.mubr.f32.mxu0 %v3701
  %4645 = vmatmul.mubr.f32.gmra.mxu0 %v3700
  %v4646 = vpop.f32.mrf.mxu0
  %v4647 = vadd.f32 %v4552, %v4646
  %v4648 = vpop.f32.mrf.mxu0
  %4649 = vmatprep.mubr.f32.mxu0 %v3703
  %4650 = vmatmul.mubr.f32.gmra.mxu0 %v3702
  %v4651 = vpop.f32.mrf.mxu0
  %v4652 = vadd.f32 %v4557, %v4651
  %v4653 = vpop.f32.mrf.mxu0
  %4654 = vmatprep.mubr.f32.mxu0 %v3705
  %4655 = vmatmul.mubr.f32.gmra.mxu0 %v3704
  %v4656 = vpop.f32.mrf.mxu0
  %v4657 = vadd.f32 %v4562, %v4656
  %v4658 = vpop.f32.mrf.mxu0
  %4659 = vmatprep.mubr.f32.mxu0 %v3707
  %4660 = vmatmul.mubr.f32.gmra.mxu0 %v3706
  %v4661 = vpop.f32.mrf.mxu0
  %v4662 = vadd.f32 %v4567, %v4661
  %v4663 = vpop.f32.mrf.mxu0
  %4664 = vdwg.mxu0
  %v4665 = vmul.f32 %v4637, 0.01
  %v4666 = vmul.f32 %v4642, 0.01
  %v4667 = vmul.f32 %v4647, 0.01
  %v4668 = vmul.f32 %v4652, 0.01
  %v4669 = vmul.f32 %v4657, 0.01
  %v4670 = vmul.f32 %v4662, 0.01
  %v4671 = vmax.f32 %v4637, %v4665
  %v4672 = vmax.f32 %v4642, %v4666
  %v4673 = vmax.f32 %v4647, %v4667
  %v4674 = vmax.f32 %v4652, %v4668
  %v4675 = vmax.f32 %v4657, %v4669
  %v4676 = vmax.f32 %v4662, %v4670
  %v4677 = vmul.f32 %v4671, %v4265
  %v4678 = vmul.f32 %v4672, %v4265
  %v4679 = vmul.f32 %v4673, %v4265
  %v4680 = vmul.f32 %v4674, %v4265
  %v4681 = vmul.f32 %v4675, %v4265
  %v4682 = vmul.f32 %v4676, %v4265
  %v4683 = vadd.f32 %v4677, %v4277
  %v4684 = vadd.f32 %v4678, %v4277
  %v4685 = vadd.f32 %v4679, %v4277
  %v4686 = vadd.f32 %v4680, %v4277
  %v4687 = vadd.f32 %v4681, %v4277
  %v4688 = vadd.f32 %v4682, %v4277
  %4689 = vmatprep.subr.mxu0 0.0
  %4690 = vmatpush1.msra.mxu0 %v3750
  %4691 = vmatprep.subr.mxu0 0.0
  %4692 = vmatpush1.msra.mxu0 %v3749
  %4693 = vmatprep.subr.mxu0 0.0
  %4694 = vmatpush1.msra.mxu0 %v3748
  %4695 = vmatprep.subr.mxu0 0.0
  %4696 = vmatpush1.msra.mxu0 %v3747
  %4697 = vmatprep.subr.mxu0 0.0
  %4698 = vmatpush1.msra.mxu0 %v3746
  %4699 = vmatprep.subr.mxu0 0.0
  %4700 = vmatpush1.msra.mxu0 %v3745
  %4701 = vmatprep.subr.mxu0 0.0
  %4702 = vmatpush1.msra.mxu0 %v3744
  %4703 = vmatprep.subr.mxu0 0.0
  %4704 = vmatpush1.msra.mxu0 %v3743
  %4705 = vmatprep.subr.mxu0 0.0
  %4706 = vmatpush1.msra.mxu0 %v3742
  %4707 = vmatprep.subr.mxu0 0.0
  %4708 = vmatpush1.msra.mxu0 %v3741
  %4709 = vmatprep.subr.mxu0 0.0
  %4710 = vmatpush1.msra.mxu0 %v3740
  %4711 = vmatprep.subr.mxu0 0.0
  %4712 = vmatpush1.msra.mxu0 %v3739
  %4713 = vmatprep.subr.mxu0 0.0
  %4714 = vmatpush1.msra.mxu0 %v3738
  %4715 = vmatprep.subr.mxu0 0.0
  %4716 = vmatpush1.msra.mxu0 %v3737
  %4717 = vmatprep.subr.mxu0 0.0
  %4718 = vmatpush1.msra.mxu0 %v3736
  %4719 = vmatprep.subr.mxu0 0.0
  %4720 = vmatpush1.msra.mxu0 %v3735
  %4721 = vmatprep.subr.mxu0 0.0
  %4722 = vmatpush2.msra.mxu0 %v3766
  %4723 = vmatprep.subr.mxu0 0.0
  %4724 = vmatpush2.msra.mxu0 %v3765
  %4725 = vmatprep.subr.mxu0 0.0
  %4726 = vmatpush2.msra.mxu0 %v3764
  %4727 = vmatprep.subr.mxu0 0.0
  %4728 = vmatpush2.msra.mxu0 %v3763
  %4729 = vmatprep.subr.mxu0 0.0
  %4730 = vmatpush2.msra.mxu0 %v3762
  %4731 = vmatprep.subr.mxu0 0.0
  %4732 = vmatpush2.msra.mxu0 %v3761
  %4733 = vmatprep.subr.mxu0 0.0
  %4734 = vmatpush2.msra.mxu0 %v3760
  %4735 = vmatprep.subr.mxu0 0.0
  %4736 = vmatpush2.msra.mxu0 %v3759
  %4737 = vmatprep.subr.mxu0 0.0
  %4738 = vmatpush2.msra.mxu0 %v3758
  %4739 = vmatprep.subr.mxu0 0.0
  %4740 = vmatpush2.msra.mxu0 %v3757
  %4741 = vmatprep.subr.mxu0 0.0
  %4742 = vmatpush2.msra.mxu0 %v3756
  %4743 = vmatprep.subr.mxu0 0.0
  %4744 = vmatpush2.msra.mxu0 %v3755
  %4745 = vmatprep.subr.mxu0 0.0
  %4746 = vmatpush2.msra.mxu0 %v3754
  %4747 = vmatprep.subr.mxu0 0.0
  %4748 = vmatpush2.msra.mxu0 %v3753
  %4749 = vmatprep.subr.mxu0 0.0
  %4750 = vmatpush2.msra.mxu0 %v3752
  %4751 = vmatprep.subr.mxu0 0.0
  %4752 = vmatpush2.msra.mxu0 %v3751
  %4753 = vmatprep.mubr.f32.mxu0 %v3685
  %4754 = vmatmul.mubr.f32.gmra.mxu0 %v3684
  %v4755 = vpop.f32.mrf.mxu0
  %v4756 = vadd.f32 %v3867, %v4755
  %v4757 = vpop.f32.mrf.mxu0
  %4758 = vmatprep.mubr.f32.mxu0 %v3687
  %4759 = vmatmul.mubr.f32.gmra.mxu0 %v3686
  %v4760 = vpop.f32.mrf.mxu0
  %v4761 = vadd.f32 %v3867, %v4760
  %v4762 = vpop.f32.mrf.mxu0
  %4763 = vmatprep.mubr.f32.mxu0 %v3689
  %4764 = vmatmul.mubr.f32.gmra.mxu0 %v3688
  %v4765 = vpop.f32.mrf.mxu0
  %v4766 = vadd.f32 %v3867, %v4765
  %v4767 = vpop.f32.mrf.mxu0
  %4768 = vmatprep.mubr.f32.mxu0 %v3691
  %4769 = vmatmul.mubr.f32.gmra.mxu0 %v3690
  %v4770 = vpop.f32.mrf.mxu0
  %v4771 = vadd.f32 %v3867, %v4770
  %v4772 = vpop.f32.mrf.mxu0
  %4773 = vmatprep.mubr.f32.mxu0 %v3693
  %4774 = vmatmul.mubr.f32.gmra.mxu0 %v3692
  %v4775 = vpop.f32.mrf.mxu0
  %v4776 = vadd.f32 %v3867, %v4775
  %v4777 = vpop.f32.mrf.mxu0
  %4778 = vmatprep.mubr.f32.mxu0 %v3695
  %4779 = vmatmul.mubr.f32.gmra.mxu0 %v3694
  %v4780 = vpop.f32.mrf.mxu0
  %v4781 = vadd.f32 %v3867, %v4780
  %v4782 = vpop.f32.mrf.mxu0
  %4783 = vdwg.mxu0
  %4784 = vmatprep.subr.mxu0 0.0
  %4785 = vmatpush1.msra.mxu0 %v3782
  %4786 = vmatprep.subr.mxu0 0.0
  %4787 = vmatpush1.msra.mxu0 %v3781
  %4788 = vmatprep.subr.mxu0 0.0
  %4789 = vmatpush1.msra.mxu0 %v3780
  %4790 = vmatprep.subr.mxu0 0.0
  %4791 = vmatpush1.msra.mxu0 %v3779
  %4792 = vmatprep.subr.mxu0 0.0
  %4793 = vmatpush1.msra.mxu0 %v3778
  %4794 = vmatprep.subr.mxu0 0.0
  %4795 = vmatpush1.msra.mxu0 %v3777
  %4796 = vmatprep.subr.mxu0 0.0
  %4797 = vmatpush1.msra.mxu0 %v3776
  %4798 = vmatprep.subr.mxu0 0.0
  %4799 = vmatpush1.msra.mxu0 %v3775
  %4800 = vmatprep.subr.mxu0 0.0
  %4801 = vmatpush1.msra.mxu0 %v3774
  %4802 = vmatprep.subr.mxu0 0.0
  %4803 = vmatpush1.msra.mxu0 %v3773
  %4804 = vmatprep.subr.mxu0 0.0
  %4805 = vmatpush1.msra.mxu0 %v3772
  %4806 = vmatprep.subr.mxu0 0.0
  %4807 = vmatpush1.msra.mxu0 %v3771
  %4808 = vmatprep.subr.mxu0 0.0
  %4809 = vmatpush1.msra.mxu0 %v3770
  %4810 = vmatprep.subr.mxu0 0.0
  %4811 = vmatpush1.msra.mxu0 %v3769
  %4812 = vmatprep.subr.mxu0 0.0
  %4813 = vmatpush1.msra.mxu0 %v3768
  %4814 = vmatprep.subr.mxu0 0.0
  %4815 = vmatpush1.msra.mxu0 %v3767
  %4816 = vmatprep.subr.mxu0 0.0
  %4817 = vmatpush2.msra.mxu0 %v3798
  %4818 = vmatprep.subr.mxu0 0.0
  %4819 = vmatpush2.msra.mxu0 %v3797
  %4820 = vmatprep.subr.mxu0 0.0
  %4821 = vmatpush2.msra.mxu0 %v3796
  %4822 = vmatprep.subr.mxu0 0.0
  %4823 = vmatpush2.msra.mxu0 %v3795
  %4824 = vmatprep.subr.mxu0 0.0
  %4825 = vmatpush2.msra.mxu0 %v3794
  %4826 = vmatprep.subr.mxu0 0.0
  %4827 = vmatpush2.msra.mxu0 %v3793
  %4828 = vmatprep.subr.mxu0 0.0
  %4829 = vmatpush2.msra.mxu0 %v3792
  %4830 = vmatprep.subr.mxu0 0.0
  %4831 = vmatpush2.msra.mxu0 %v3791
  %4832 = vmatprep.subr.mxu0 0.0
  %4833 = vmatpush2.msra.mxu0 %v3790
  %4834 = vmatprep.subr.mxu0 0.0
  %4835 = vmatpush2.msra.mxu0 %v3789
  %4836 = vmatprep.subr.mxu0 0.0
  %4837 = vmatpush2.msra.mxu0 %v3788
  %4838 = vmatprep.subr.mxu0 0.0
  %4839 = vmatpush2.msra.mxu0 %v3787
  %4840 = vmatprep.subr.mxu0 0.0
  %4841 = vmatpush2.msra.mxu0 %v3786
  %4842 = vmatprep.subr.mxu0 0.0
  %4843 = vmatpush2.msra.mxu0 %v3785
  %4844 = vmatprep.subr.mxu0 0.0
  %4845 = vmatpush2.msra.mxu0 %v3784
  %4846 = vmatprep.subr.mxu0 0.0
  %4847 = vmatpush2.msra.mxu0 %v3783
  %4848 = vmatprep.mubr.f32.mxu0 %v3697
  %4849 = vmatmul.mubr.f32.gmra.mxu0 %v3696
  %v4850 = vpop.f32.mrf.mxu0
  %v4851 = vadd.f32 %v4756, %v4850
  %v4852 = vpop.f32.mrf.mxu0
  %4853 = vmatprep.mubr.f32.mxu0 %v3699
  %4854 = vmatmul.mubr.f32.gmra.mxu0 %v3698
  %v4855 = vpop.f32.mrf.mxu0
  %v4856 = vadd.f32 %v4761, %v4855
  %v4857 = vpop.f32.mrf.mxu0
  %4858 = vmatprep.mubr.f32.mxu0 %v3701
  %4859 = vmatmul.mubr.f32.gmra.mxu0 %v3700
  %v4860 = vpop.f32.mrf.mxu0
  %v4861 = vadd.f32 %v4766, %v4860
  %v4862 = vpop.f32.mrf.mxu0
  %4863 = vmatprep.mubr.f32.mxu0 %v3703
  %4864 = vmatmul.mubr.f32.gmra.mxu0 %v3702
  %v4865 = vpop.f32.mrf.mxu0
  %v4866 = vadd.f32 %v4771, %v4865
  %v4867 = vpop.f32.mrf.mxu0
  %4868 = vmatprep.mubr.f32.mxu0 %v3705
  %4869 = vmatmul.mubr.f32.gmra.mxu0 %v3704
  %v4870 = vpop.f32.mrf.mxu0
  %v4871 = vadd.f32 %v4776, %v4870
  %v4872 = vpop.f32.mrf.mxu0
  %4873 = vmatprep.mubr.f32.mxu0 %v3707
  %4874 = vmatmul.mubr.f32.gmra.mxu0 %v3706
  %v4875 = vpop.f32.mrf.mxu0
  %v4876 = vadd.f32 %v4781, %v4875
  %v4877 = vpop.f32.mrf.mxu0
  %4878 = vdwg.mxu0
  %4879 = vmatprep.subr.mxu0 0.0
  %4880 = vmatpush1.msra.mxu0 %v3814
  %4881 = vmatprep.subr.mxu0 0.0
  %4882 = vmatpush1.msra.mxu0 %v3813
  %4883 = vmatprep.subr.mxu0 0.0
  %4884 = vmatpush1.msra.mxu0 %v3812
  %4885 = vmatprep.subr.mxu0 0.0
  %4886 = vmatpush1.msra.mxu0 %v3811
  %4887 = vmatprep.subr.mxu0 0.0
  %4888 = vmatpush1.msra.mxu0 %v3810
  %4889 = vmatprep.subr.mxu0 0.0
  %4890 = vmatpush1.msra.mxu0 %v3809
  %4891 = vmatprep.subr.mxu0 0.0
  %4892 = vmatpush1.msra.mxu0 %v3808
  %4893 = vmatprep.subr.mxu0 0.0
  %4894 = vmatpush1.msra.mxu0 %v3807
  %4895 = vmatprep.subr.mxu0 0.0
  %4896 = vmatpush1.msra.mxu0 %v3806
  %4897 = vmatprep.subr.mxu0 0.0
  %4898 = vmatpush1.msra.mxu0 %v3805
  %4899 = vmatprep.subr.mxu0 0.0
  %4900 = vmatpush1.msra.mxu0 %v3804
  %4901 = vmatprep.subr.mxu0 0.0
  %4902 = vmatpush1.msra.mxu0 %v3803
  %4903 = vmatprep.subr.mxu0 0.0
  %4904 = vmatpush1.msra.mxu0 %v3802
  %4905 = vmatprep.subr.mxu0 0.0
  %4906 = vmatpush1.msra.mxu0 %v3801
  %4907 = vmatprep.subr.mxu0 0.0
  %4908 = vmatpush1.msra.mxu0 %v3800
  %4909 = vmatprep.subr.mxu0 0.0
  %4910 = vmatpush1.msra.mxu0 %v3799
  %4911 = vmatprep.subr.mxu0 0.0
  %4912 = vmatpush2.msra.mxu0 %v3830
  %4913 = vmatprep.subr.mxu0 0.0
  %4914 = vmatpush2.msra.mxu0 %v3829
  %4915 = vmatprep.subr.mxu0 0.0
  %4916 = vmatpush2.msra.mxu0 %v3828
  %4917 = vmatprep.subr.mxu0 0.0
  %4918 = vmatpush2.msra.mxu0 %v3827
  %4919 = vmatprep.subr.mxu0 0.0
  %4920 = vmatpush2.msra.mxu0 %v3826
  %4921 = vmatprep.subr.mxu0 0.0
  %4922 = vmatpush2.msra.mxu0 %v3825
  %4923 = vmatprep.subr.mxu0 0.0
  %4924 = vmatpush2.msra.mxu0 %v3824
  %4925 = vmatprep.subr.mxu0 0.0
  %4926 = vmatpush2.msra.mxu0 %v3823
  %4927 = vmatprep.subr.mxu0 0.0
  %4928 = vmatpush2.msra.mxu0 %v3822
  %4929 = vmatprep.subr.mxu0 0.0
  %4930 = vmatpush2.msra.mxu0 %v3821
  %4931 = vmatprep.subr.mxu0 0.0
  %4932 = vmatpush2.msra.mxu0 %v3820
  %4933 = vmatprep.subr.mxu0 0.0
  %4934 = vmatpush2.msra.mxu0 %v3819
  %4935 = vmatprep.subr.mxu0 0.0
  %4936 = vmatpush2.msra.mxu0 %v3818
  %4937 = vmatprep.subr.mxu0 0.0
  %4938 = vmatpush2.msra.mxu0 %v3817
  %4939 = vmatprep.subr.mxu0 0.0
  %4940 = vmatpush2.msra.mxu0 %v3816
  %4941 = vmatprep.subr.mxu0 0.0
  %4942 = vmatpush2.msra.mxu0 %v3815
  %4943 = vmatprep.mubr.f32.mxu0 %v3709
  %4944 = vmatmul.mubr.f32.gmra.mxu0 %v3708
  %v4945 = vpop.f32.mrf.mxu0
  %v4946 = vadd.f32 %v4851, %v4945
  %v4947 = vpop.f32.mrf.mxu0
  %4948 = vmatprep.mubr.f32.mxu0 %v3711
  %4949 = vmatmul.mubr.f32.gmra.mxu0 %v3710
  %v4950 = vpop.f32.mrf.mxu0
  %v4951 = vadd.f32 %v4856, %v4950
  %v4952 = vpop.f32.mrf.mxu0
  %4953 = vmatprep.mubr.f32.mxu0 %v3713
  %4954 = vmatmul.mubr.f32.gmra.mxu0 %v3712
  %v4955 = vpop.f32.mrf.mxu0
  %v4956 = vadd.f32 %v4861, %v4955
  %v4957 = vpop.f32.mrf.mxu0
  %4958 = vmatprep.mubr.f32.mxu0 %v3715
  %4959 = vmatmul.mubr.f32.gmra.mxu0 %v3714
  %v4960 = vpop.f32.mrf.mxu0
  %v4961 = vadd.f32 %v4866, %v4960
  %v4962 = vpop.f32.mrf.mxu0
  %4963 = vmatprep.mubr.f32.mxu0 %v3717
  %4964 = vmatmul.mubr.f32.gmra.mxu0 %v3716
  %v4965 = vpop.f32.mrf.mxu0
  %v4966 = vadd.f32 %v4871, %v4965
  %v4967 = vpop.f32.mrf.mxu0
  %4968 = vmatprep.mubr.f32.mxu0 %v3719
  %4969 = vmatmul.mubr.f32.gmra.mxu0 %v3718
  %v4970 = vpop.f32.mrf.mxu0
  %v4971 = vadd.f32 %v4876, %v4970
  %v4972 = vpop.f32.mrf.mxu0
  %4973 = vdwg.mxu0
  %4974 = vmatprep.subr.mxu0 0.0
  %4975 = vmatpush1.msra.mxu0 %v3846
  %4976 = vmatprep.subr.mxu0 0.0
  %4977 = vmatpush1.msra.mxu0 %v3845
  %4978 = vmatprep.subr.mxu0 0.0
  %4979 = vmatpush1.msra.mxu0 %v3844
  %4980 = vmatprep.subr.mxu0 0.0
  %4981 = vmatpush1.msra.mxu0 %v3843
  %4982 = vmatprep.subr.mxu0 0.0
  %4983 = vmatpush1.msra.mxu0 %v3842
  %4984 = vmatprep.subr.mxu0 0.0
  %4985 = vmatpush1.msra.mxu0 %v3841
  %4986 = vmatprep.subr.mxu0 0.0
  %4987 = vmatpush1.msra.mxu0 %v3840
  %4988 = vmatprep.subr.mxu0 0.0
  %4989 = vmatpush1.msra.mxu0 %v3839
  %4990 = vmatprep.subr.mxu0 0.0
  %4991 = vmatpush1.msra.mxu0 %v3838
  %4992 = vmatprep.subr.mxu0 0.0
  %4993 = vmatpush1.msra.mxu0 %v3837
  %4994 = vmatprep.subr.mxu0 0.0
  %4995 = vmatpush1.msra.mxu0 %v3836
  %4996 = vmatprep.subr.mxu0 0.0
  %4997 = vmatpush1.msra.mxu0 %v3835
  %4998 = vmatprep.subr.mxu0 0.0
  %4999 = vmatpush1.msra.mxu0 %v3834
  %5000 = vmatprep.subr.mxu0 0.0
  %5001 = vmatpush1.msra.mxu0 %v3833
  %5002 = vmatprep.subr.mxu0 0.0
  %5003 = vmatpush1.msra.mxu0 %v3832
  %5004 = vmatprep.subr.mxu0 0.0
  %5005 = vmatpush1.msra.mxu0 %v3831
  %5006 = vmatprep.subr.mxu0 0.0
  %5007 = vmatpush2.msra.mxu0 %v3862
  %5008 = vmatprep.subr.mxu0 0.0
  %5009 = vmatpush2.msra.mxu0 %v3861
  %5010 = vmatprep.subr.mxu0 0.0
  %5011 = vmatpush2.msra.mxu0 %v3860
  %5012 = vmatprep.subr.mxu0 0.0
  %5013 = vmatpush2.msra.mxu0 %v3859
  %5014 = vmatprep.subr.mxu0 0.0
  %5015 = vmatpush2.msra.mxu0 %v3858
  %5016 = vmatprep.subr.mxu0 0.0
  %5017 = vmatpush2.msra.mxu0 %v3857
  %5018 = vmatprep.subr.mxu0 0.0
  %5019 = vmatpush2.msra.mxu0 %v3856
  %5020 = vmatprep.subr.mxu0 0.0
  %5021 = vmatpush2.msra.mxu0 %v3855
  %5022 = vmatprep.subr.mxu0 0.0
  %5023 = vmatpush2.msra.mxu0 %v3854
  %5024 = vmatprep.subr.mxu0 0.0
  %5025 = vmatpush2.msra.mxu0 %v3853
  %5026 = vmatprep.subr.mxu0 0.0
  %5027 = vmatpush2.msra.mxu0 %v3852
  %5028 = vmatprep.subr.mxu0 0.0
  %5029 = vmatpush2.msra.mxu0 %v3851
  %5030 = vmatprep.subr.mxu0 0.0
  %5031 = vmatpush2.msra.mxu0 %v3850
  %5032 = vmatprep.subr.mxu0 0.0
  %5033 = vmatpush2.msra.mxu0 %v3849
  %5034 = vmatprep.subr.mxu0 0.0
  %5035 = vmatpush2.msra.mxu0 %v3848
  %5036 = vmatprep.subr.mxu0 0.0
  %5037 = vmatpush2.msra.mxu0 %v3847
  %5038 = vmatprep.mubr.f32.mxu0 %v3721
  %5039 = vmatmul.mubr.f32.gmra.mxu0 %v3720
  %v5040 = vpop.f32.mrf.mxu0
  %v5041 = vadd.f32 %v4946, %v5040
  %v5042 = vpop.f32.mrf.mxu0
  %5043 = vmatprep.mubr.f32.mxu0 %v3723
  %5044 = vmatmul.mubr.f32.gmra.mxu0 %v3722
  %v5045 = vpop.f32.mrf.mxu0
  %v5046 = vadd.f32 %v4951, %v5045
  %v5047 = vpop.f32.mrf.mxu0
  %5048 = vmatprep.mubr.f32.mxu0 %v3725
  %5049 = vmatmul.mubr.f32.gmra.mxu0 %v3724
  %v5050 = vpop.f32.mrf.mxu0
  %v5051 = vadd.f32 %v4956, %v5050
  %v5052 = vpop.f32.mrf.mxu0
  %5053 = vmatprep.mubr.f32.mxu0 %v3727
  %5054 = vmatmul.mubr.f32.gmra.mxu0 %v3726
  %v5055 = vpop.f32.mrf.mxu0
  %v5056 = vadd.f32 %v4961, %v5055
  %v5057 = vpop.f32.mrf.mxu0
  %5058 = vmatprep.mubr.f32.mxu0 %v3729
  %5059 = vmatmul.mubr.f32.gmra.mxu0 %v3728
  %v5060 = vpop.f32.mrf.mxu0
  %v5061 = vadd.f32 %v4966, %v5060
  %v5062 = vpop.f32.mrf.mxu0
  %5063 = vmatprep.mubr.f32.mxu0 %v3731
  %5064 = vmatmul.mubr.f32.gmra.mxu0 %v3730
  %v5065 = vpop.f32.mrf.mxu0
  %v5066 = vadd.f32 %v4971, %v5065
  %v5067 = vpop.f32.mrf.mxu0
  %5068 = vdwg.mxu0
  %v5069 = vmul.f32 %v5041, 0.01
  %v5070 = vmul.f32 %v5046, 0.01
  %v5071 = vmul.f32 %v5051, 0.01
  %v5072 = vmul.f32 %v5056, 0.01
  %v5073 = vmul.f32 %v5061, 0.01
  %v5074 = vmul.f32 %v5066, 0.01
  %v5075 = vmax.f32 %v5041, %v5069
  %v5076 = vmax.f32 %v5046, %v5070
  %v5077 = vmax.f32 %v5051, %v5071
  %v5078 = vmax.f32 %v5056, %v5072
  %v5079 = vmax.f32 %v5061, %v5073
  %v5080 = vmax.f32 %v5066, %v5074
  %v5081 = vmul.f32 %v5075, %v4265
  %v5082 = vmul.f32 %v5076, %v4265
  %v5083 = vmul.f32 %v5077, %v4265
  %v5084 = vmul.f32 %v5078, %v4265
  %v5085 = vmul.f32 %v5079, %v4265
  %v5086 = vmul.f32 %v5080, %v4265
  %v5087 = vadd.f32 %v5081, %v4277
  %v5088 = vadd.f32 %v5082, %v4277
  %v5089 = vadd.f32 %v5083, %v4277
  %v5090 = vadd.f32 %v5084, %v4277
  %v5091 = vadd.f32 %v5085, %v4277
  %v5092 = vadd.f32 %v5086, %v4277
  %v5093 = vmax.f32 %v4279, %v4683
  %v5094 = vmax.f32 %v4280, %v4684
  %v5095 = vmax.f32 %v4281, %v4685
  %v5096 = vmax.f32 %v4282, %v4686
  %v5097 = vmax.f32 %v4283, %v4687
  %v5098 = vmax.f32 %v4284, %v4688
  %v5099 = vmax.f32 %v5093, %v5087
  %v5100 = vmax.f32 %v5094, %v5088
  %v5101 = vmax.f32 %v5095, %v5089
  %v5102 = vmax.f32 %v5096, %v5090
  %v5103 = vmax.f32 %v5097, %v5091
  %v5104 = vmax.f32 %v5098, %v5092
  %v5106 = vrot.slane %v5099, 1
  %v5108 = vrot.slane %v5099, 2
  %v5110 = vrot.slane %v5099, 3
  %v5112 = vrot.slane %v5099, 4
  %v5114 = vrot.slane %v5099, 5
  %v5116 = vrot.slane %v5099, 6
  %v5118 = vrot.slane %v5099, 7
  %v5121 = vrot.slane %v5100, 1
  %v5123 = vrot.slane %v5100, 2
  %v5125 = vrot.slane %v5100, 3
  %v5127 = vrot.slane %v5101, 4
  %v5128 = vrot.slane %v5101, 5
  %v5129 = vrot.slane %v5101, 6
  %v5130 = vrot.slane %v5101, 7
  %v5131 = vrot.slane %v5101, 1
  %v5132 = vrot.slane %v5101, 2
  %v5134 = vrot.slane %v5102, 1
  %v5135 = vrot.slane %v5102, 2
  %v5136 = vrot.slane %v5102, 3
  %v5137 = vrot.slane %v5102, 4
  %v5138 = vrot.slane %v5102, 5
  %v5139 = vrot.slane %v5102, 6
  %v5140 = vrot.slane %v5102, 7
  %v5142 = vrot.slane %v5103, 1
  %v5143 = vrot.slane %v5103, 2
  %v5144 = vrot.slane %v5103, 3
  %v5146 = vrot.slane %v5104, 4
  %v5147 = vrot.slane %v5104, 5
  %v5148 = vrot.slane %v5104, 6
  %v5149 = vrot.slane %v5104, 7
  %v5150 = vrot.slane %v5104, 1
  %v5151 = vrot.slane %v5104, 2
  %v5152 = vrot.slane %v5121, 3
  %v5153 = vrot.slane %v5123, 3
  %v5154 = vrot.slane %v5125, 3
  %v5155 = vrot.slane %v5127, 3
  %v5156 = vrot.slane %v5128, 3
  %v5157 = vrot.slane %v5129, 3
  %v5158 = vrot.slane %v5130, 3
  %v5159 = vrot.slane %v5101, 3
  %v5160 = vrot.slane %v5131, 3
  %v5161 = vrot.slane %v5132, 3
  %v5173 = vrot.slane %v5134, 6
  %v5174 = vrot.slane %v5135, 6
  %v5175 = vrot.slane %v5136, 6
  %v5176 = vrot.slane %v5137, 6
  %v5177 = vrot.slane %v5138, 6
  %v5178 = vrot.slane %v5139, 6
  %v5179 = vrot.slane %v5140, 6
  %v5180 = vrot.slane %v5103, 6
  %v5181 = vrot.slane %v5142, 6
  %v5182 = vrot.slane %v5143, 6
  %v5194 = vrot.slane %v5142, 1
  %v5195 = vrot.slane %v5143, 1
  %v5196 = vrot.slane %v5144, 1
  %v5197 = vrot.slane %v5146, 1
  %v5198 = vrot.slane %v5147, 1
  %v5199 = vrot.slane %v5148, 1
  %v5200 = vrot.slane %v5149, 1
  %v5201 = vrot.slane %v5150, 1
  %v5202 = vrot.slane %v5151, 1
  %v5214 = vsel %vm2196, %v5099, %v5125
  %v5215 = vsel %vm2196, %v5106, %v5152
  %v5216 = vsel %vm2196, %v5108, %v5153
  %v5217 = vsel %vm2196, %v5110, %v5154
  %v5218 = vsel %vm2196, %v5112, %v5155
  %v5219 = vsel %vm2196, %v5114, %v5156
  %v5220 = vsel %vm2196, %v5116, %v5157
  %v5221 = vsel %vm2196, %v5118, %v5158
  %v5222 = vsel %vm2196, %v5100, %v5159
  %v5223 = vsel %vm2196, %v5121, %v5160
  %v5224 = vsel %vm2196, %v5123, %v5161
  %vm5225 = vcmask 1041408
  %v5226 = vsel %vm5225, %v5214, %v5139
  %v5227 = vsel %vm5225, %v5215, %v5173
  %v5228 = vsel %vm5225, %v5216, %v5174
  %v5229 = vsel %vm5225, %v5217, %v5175
  %v5230 = vsel %vm5225, %v5218, %v5176
  %v5231 = vsel %vm5225, %v5219, %v5177
  %v5232 = vsel %vm5225, %v5220, %v5178
  %v5233 = vsel %vm5225, %v5221, %v5179
  %v5234 = vsel %vm5225, %v5222, %v5180
  %v5235 = vsel %vm5225, %v5223, %v5181
  %v5236 = vsel %vm5225, %v5224, %v5182
  %vm5237 = vcmask 1042432
  %v5238 = vsel %vm5237, %v5226, %v5142
  %v5239 = vsel %vm5237, %v5227, %v5194
  %v5240 = vsel %vm5237, %v5228, %v5195
  %v5241 = vsel %vm5237, %v5229, %v5196
  %v5242 = vsel %vm5237, %v5230, %v5197
  %v5243 = vsel %vm5237, %v5231, %v5198
  %v5244 = vsel %vm5237, %v5232, %v5199
  %v5245 = vsel %vm5237, %v5233, %v5200
  %v5246 = vsel %vm5237, %v5234, %v5150
  %v5247 = vsel %vm5237, %v5235, %v5201
  %v5248 = vsel %vm5237, %v5236, %v5202
  %s5249 = smul.u32 8, 176
  %s5250 = smul.u32 %s5249, 4
  %s5251 = sshll.u32 %s5250, 4
  %5252 = dma.done [#allocation4], %s5251
  %v5253 = vld [vmem:[#allocation2] sm:$0xff]
  %v5254 = vld [vmem:[#allocation2 + $0x8] sm:$0xff]
  %v5255 = vld [vmem:[#allocation2 + $0x10] sm:$0xff]
  %v5256 = vld [vmem:[#allocation2 + $0x18] sm:$0xff]
  %v5257 = vld [vmem:[#allocation2 + $0x20] sm:$0xff]
  %v5258 = vld [vmem:[#allocation2 + $0x28] sm:$0xff]
  %v5259 = vld [vmem:[#allocation2 + $0x30] sm:$0xff]
  %v5260 = vld [vmem:[#allocation2 + $0x38] sm:$0xff]
  %v5261 = vld [vmem:[#allocation2 + $0x40] sm:$0xff]
  %v5262 = vld [vmem:[#allocation2 + $0x48] sm:$0xff]
  %v5263 = vld [vmem:[#allocation2 + $0x50] sm:$0xff]
  %v5264 = vld [vmem:[#allocation2 + $0x58] sm:$0xff]
  %v5265 = vld [vmem:[#allocation2 + $0x60] sm:$0xff]
  %v5266 = vld [vmem:[#allocation2 + $0x68] sm:$0xff]
  %v5267 = vld [vmem:[#allocation2 + $0x70] sm:$0xff]
  %v5268 = vld [vmem:[#allocation2 + $0x78] sm:$0xff]
  %v5269 = vld [vmem:[#allocation2 + $0x80] sm:$0xff]
  %v5270 = vld [vmem:[#allocation2 + $0x88] sm:$0xff]
  %v5271 = vld [vmem:[#allocation2 + $0x90] sm:$0xff]
  %v5272 = vld [vmem:[#allocation2 + $0x98] sm:$0xff]
  %v5273 = vld [vmem:[#allocation2 + $0xa0] sm:$0xff]
  %v5274 = vld [vmem:[#allocation2 + $0xa8] sm:$0xff]
  %v5275 = vld [vmem:[#allocation2 + $0xb0] sm:$0xff]
  %v5276 = vld [vmem:[#allocation2 + $0xb8] sm:$0xff]
  %v5277 = vld [vmem:[#allocation2 + $0xc0] sm:$0xff]
  %v5278 = vld [vmem:[#allocation2 + $0xc8] sm:$0xff]
  %v5279 = vld [vmem:[#allocation2 + $0xd0] sm:$0xff]
  %v5280 = vld [vmem:[#allocation2 + $0xd8] sm:$0xff]
  %v5281 = vld [vmem:[#allocation2 + $0xe0] sm:$0xff]
  %v5282 = vld [vmem:[#allocation2 + $0xe8] sm:$0xff]
  %v5283 = vld [vmem:[#allocation2 + $0xf0] sm:$0xff]
  %v5284 = vld [vmem:[#allocation2 + $0xf8] sm:$0xff]
  %v5285 = vld [vmem:[#allocation2 + $0x100] sm:$0xff]
  %v5286 = vld [vmem:[#allocation2 + $0x108] sm:$0xff]
  %v5287 = vld [vmem:[#allocation2 + $0x110] sm:$0xff]
  %v5288 = vld [vmem:[#allocation2 + $0x118] sm:$0xff]
  %v5289 = vld [vmem:[#allocation2 + $0x120] sm:$0xff]
  %v5290 = vld [vmem:[#allocation2 + $0x128] sm:$0xff]
  %v5291 = vld [vmem:[#allocation2 + $0x130] sm:$0xff]
  %v5292 = vld [vmem:[#allocation2 + $0x138] sm:$0xff]
  %v5293 = vld [vmem:[#allocation2 + $0x140] sm:$0xff]
  %v5294 = vld [vmem:[#allocation2 + $0x148] sm:$0xff]
  %v5295 = vld [vmem:[#allocation2 + $0x150] sm:$0xff]
  %v5296 = vld [vmem:[#allocation2 + $0x158] sm:$0xff]
  %v5297 = vld [vmem:[#allocation2 + $0x160] sm:$0xff]
  %v5298 = vld [vmem:[#allocation2 + $0x168] sm:$0xff]
  %v5299 = vld [vmem:[#allocation2 + $0x170] sm:$0xff]
  %v5300 = vld [vmem:[#allocation2 + $0x178] sm:$0xff]
  %v5301 = vld [vmem:[#allocation2 + $0x180] sm:$0xff]
  %v5302 = vld [vmem:[#allocation2 + $0x188] sm:$0xff]
  %v5303 = vld [vmem:[#allocation2 + $0x190] sm:$0xff]
  %v5304 = vld [vmem:[#allocation2 + $0x198] sm:$0xff]
  %v5305 = vld [vmem:[#allocation2 + $0x1a0] sm:$0xff]
  %v5306 = vld [vmem:[#allocation2 + $0x1a8] sm:$0xff]
  %v5307 = vld [vmem:[#allocation2 + $0x1b0] sm:$0xff]
  %v5308 = vld [vmem:[#allocation2 + $0x1b8] sm:$0xff]
  %v5309 = vld [vmem:[#allocation2 + $0x1c0] sm:$0xff]
  %v5310 = vld [vmem:[#allocation2 + $0x1c8] sm:$0xff]
  %v5311 = vld [vmem:[#allocation2 + $0x1d0] sm:$0xff]
  %v5312 = vld [vmem:[#allocation2 + $0x1d8] sm:$0xff]
  %v5313 = vld [vmem:[#allocation2 + $0x1e0] sm:$0xff]
  %v5314 = vld [vmem:[#allocation2 + $0x1e8] sm:$0xff]
  %v5315 = vld [vmem:[#allocation2 + $0x1f0] sm:$0xff]
  %v5316 = vld [vmem:[#allocation2 + $0x1f8] sm:$0xff]
  %v5317 = vld [vmem:[#allocation2 + $0x200] sm:$0xff]
  %v5318 = vld [vmem:[#allocation2 + $0x208] sm:$0xff]
  %v5319 = vld [vmem:[#allocation2 + $0x210] sm:$0xff]
  %v5320 = vld [vmem:[#allocation2 + $0x218] sm:$0xff]
  %v5321 = vld [vmem:[#allocation2 + $0x220] sm:$0xff]
  %v5322 = vld [vmem:[#allocation2 + $0x228] sm:$0xff]
  %v5323 = vld [vmem:[#allocation2 + $0x230] sm:$0xff]
  %v5324 = vld [vmem:[#allocation2 + $0x238] sm:$0xff]
  %v5325 = vld [vmem:[#allocation2 + $0x240] sm:$0xff]
  %v5326 = vld [vmem:[#allocation2 + $0x248] sm:$0xff]
  %v5327 = vld [vmem:[#allocation2 + $0x250] sm:$0xff]
  %v5328 = vld [vmem:[#allocation2 + $0x258] sm:$0xff]
  %v5329 = vld [vmem:[#allocation2 + $0x260] sm:$0xff]
  %v5330 = vld [vmem:[#allocation2 + $0x268] sm:$0xff]
  %v5331 = vld [vmem:[#allocation2 + $0x270] sm:$0xff]
  %v5332 = vld [vmem:[#allocation2 + $0x278] sm:$0xff]
  %v5333 = vld [vmem:[#allocation2 + $0x280] sm:$0xff]
  %v5334 = vld [vmem:[#allocation2 + $0x288] sm:$0xff]
  %v5335 = vld [vmem:[#allocation2 + $0x290] sm:$0xff]
  %v5336 = vld [vmem:[#allocation2 + $0x298] sm:$0xff]
  %v5337 = vld [vmem:[#allocation2 + $0x2a0] sm:$0xff]
  %v5338 = vld [vmem:[#allocation2 + $0x2a8] sm:$0xff]
  %v5339 = vld [vmem:[#allocation2 + $0x2b0] sm:$0xff]
  %v5340 = vld [vmem:[#allocation2 + $0x2b8] sm:$0xff]
  %v5341 = vld [vmem:[#allocation2 + $0x2c0] sm:$0xff]
  %v5342 = vld [vmem:[#allocation2 + $0x2c8] sm:$0xff]
  %v5343 = vld [vmem:[#allocation2 + $0x2d0] sm:$0xff]
  %v5344 = vld [vmem:[#allocation2 + $0x2d8] sm:$0xff]
  %v5345 = vld [vmem:[#allocation2 + $0x2e0] sm:$0xff]
  %v5346 = vld [vmem:[#allocation2 + $0x2e8] sm:$0xff]
  %v5347 = vld [vmem:[#allocation2 + $0x2f0] sm:$0xff]
  %v5348 = vld [vmem:[#allocation2 + $0x2f8] sm:$0xff]
  %v5349 = vld [vmem:[#allocation2 + $0x300] sm:$0xff]
  %v5350 = vld [vmem:[#allocation2 + $0x308] sm:$0xff]
  %v5351 = vld [vmem:[#allocation2 + $0x310] sm:$0xff]
  %v5352 = vld [vmem:[#allocation2 + $0x318] sm:$0xff]
  %v5353 = vld [vmem:[#allocation2 + $0x320] sm:$0xff]
  %v5354 = vld [vmem:[#allocation2 + $0x328] sm:$0xff]
  %v5355 = vld [vmem:[#allocation2 + $0x330] sm:$0xff]
  %v5356 = vld [vmem:[#allocation2 + $0x338] sm:$0xff]
  %v5357 = vld [vmem:[#allocation2 + $0x340] sm:$0xff]
  %v5358 = vld [vmem:[#allocation2 + $0x348] sm:$0xff]
  %v5359 = vld [vmem:[#allocation2 + $0x350] sm:$0xff]
  %v5360 = vld [vmem:[#allocation2 + $0x358] sm:$0xff]
  %v5361 = vld [vmem:[#allocation2 + $0x360] sm:$0xff]
  %v5362 = vld [vmem:[#allocation2 + $0x368] sm:$0xff]
  %v5363 = vld [vmem:[#allocation2 + $0x370] sm:$0xff]
  %v5364 = vld [vmem:[#allocation2 + $0x378] sm:$0xff]
  %v5365 = vld [vmem:[#allocation2 + $0x380] sm:$0xff]
  %v5366 = vld [vmem:[#allocation2 + $0x388] sm:$0xff]
  %v5367 = vld [vmem:[#allocation2 + $0x390] sm:$0xff]
  %v5368 = vld [vmem:[#allocation2 + $0x398] sm:$0xff]
  %v5369 = vld [vmem:[#allocation2 + $0x3a0] sm:$0xff]
  %v5370 = vld [vmem:[#allocation2 + $0x3a8] sm:$0xff]
  %v5371 = vld [vmem:[#allocation2 + $0x3b0] sm:$0xff]
  %v5372 = vld [vmem:[#allocation2 + $0x3b8] sm:$0xff]
  %v5373 = vld [vmem:[#allocation2 + $0x3c0] sm:$0xff]
  %v5374 = vld [vmem:[#allocation2 + $0x3c8] sm:$0xff]
  %v5375 = vld [vmem:[#allocation2 + $0x3d0] sm:$0xff]
  %v5376 = vld [vmem:[#allocation2 + $0x3d8] sm:$0xff]
  %v5377 = vld [vmem:[#allocation2 + $0x3e0] sm:$0xff]
  %v5378 = vld [vmem:[#allocation2 + $0x3e8] sm:$0xff]
  %v5379 = vld [vmem:[#allocation2 + $0x3f0] sm:$0xff]
  %v5380 = vld [vmem:[#allocation2 + $0x3f8] sm:$0xff]
  %v5381 = vld [vmem:[#allocation2 + $0x400] sm:$0xff]
  %v5382 = vld [vmem:[#allocation2 + $0x408] sm:$0xff]
  %v5383 = vld [vmem:[#allocation2 + $0x410] sm:$0xff]
  %v5384 = vld [vmem:[#allocation2 + $0x418] sm:$0xff]
  %v5385 = vld [vmem:[#allocation2 + $0x420] sm:$0xff]
  %v5386 = vld [vmem:[#allocation2 + $0x428] sm:$0xff]
  %v5387 = vld [vmem:[#allocation2 + $0x430] sm:$0xff]
  %v5388 = vld [vmem:[#allocation2 + $0x438] sm:$0xff]
  %v5389 = vld [vmem:[#allocation2 + $0x440] sm:$0xff]
  %v5390 = vld [vmem:[#allocation2 + $0x448] sm:$0xff]
  %v5391 = vld [vmem:[#allocation2 + $0x450] sm:$0xff]
  %v5392 = vld [vmem:[#allocation2 + $0x458] sm:$0xff]
  %v5393 = vld [vmem:[#allocation2 + $0x460] sm:$0xff]
  %v5394 = vld [vmem:[#allocation2 + $0x468] sm:$0xff]
  %v5395 = vld [vmem:[#allocation2 + $0x470] sm:$0xff]
  %v5396 = vld [vmem:[#allocation2 + $0x478] sm:$0xff]
  %v5397 = vld [vmem:[#allocation2 + $0x480] sm:$0xff]
  %v5398 = vld [vmem:[#allocation2 + $0x488] sm:$0xff]
  %v5399 = vld [vmem:[#allocation2 + $0x490] sm:$0xff]
  %v5400 = vld [vmem:[#allocation2 + $0x498] sm:$0xff]
  %v5401 = vld [vmem:[#allocation2 + $0x4a0] sm:$0xff]
  %v5402 = vld [vmem:[#allocation2 + $0x4a8] sm:$0xff]
  %v5403 = vld [vmem:[#allocation2 + $0x4b0] sm:$0xff]
  %v5404 = vld [vmem:[#allocation2 + $0x4b8] sm:$0xff]
  %v5405 = vld [vmem:[#allocation2 + $0x4c0] sm:$0xff]
  %v5406 = vld [vmem:[#allocation2 + $0x4c8] sm:$0xff]
  %v5407 = vld [vmem:[#allocation2 + $0x4d0] sm:$0xff]
  %v5408 = vld [vmem:[#allocation2 + $0x4d8] sm:$0xff]
  %v5409 = vld [vmem:[#allocation2 + $0x4e0] sm:$0xff]
  %v5410 = vld [vmem:[#allocation2 + $0x4e8] sm:$0xff]
  %v5411 = vld [vmem:[#allocation2 + $0x4f0] sm:$0xff]
  %v5412 = vld [vmem:[#allocation2 + $0x4f8] sm:$0xff]
  %v5413 = vld [vmem:[#allocation2 + $0x500] sm:$0xff]
  %v5414 = vld [vmem:[#allocation2 + $0x508] sm:$0xff]
  %v5415 = vld [vmem:[#allocation2 + $0x510] sm:$0xff]
  %v5416 = vld [vmem:[#allocation2 + $0x518] sm:$0xff]
  %v5417 = vld [vmem:[#allocation2 + $0x520] sm:$0xff]
  %v5418 = vld [vmem:[#allocation2 + $0x528] sm:$0xff]
  %v5419 = vld [vmem:[#allocation2 + $0x530] sm:$0xff]
  %v5420 = vld [vmem:[#allocation2 + $0x538] sm:$0xff]
  %v5421 = vld [vmem:[#allocation2 + $0x540] sm:$0xff]
  %v5422 = vld [vmem:[#allocation2 + $0x548] sm:$0xff]
  %v5423 = vld [vmem:[#allocation2 + $0x550] sm:$0xff]
  %v5424 = vld [vmem:[#allocation2 + $0x558] sm:$0xff]
  %v5425 = vld [vmem:[#allocation2 + $0x560] sm:$0xff]
  %v5426 = vld [vmem:[#allocation2 + $0x568] sm:$0xff]
  %v5427 = vld [vmem:[#allocation2 + $0x570] sm:$0xff]
  %v5428 = vld [vmem:[#allocation2 + $0x578] sm:$0xff]
  %v5429 = vld [vmem:[#allocation2 + $0x580] sm:$0xff]
  %v5430 = vld [vmem:[#allocation2 + $0x588] sm:$0xff]
  %v5431 = vld [vmem:[#allocation2 + $0x590] sm:$0xff]
  %v5432 = vld [vmem:[#allocation2 + $0x598] sm:$0xff]
  %v5433 = vld [vmem:[#allocation2 + $0x5a0] sm:$0xff]
  %v5434 = vld [vmem:[#allocation2 + $0x5a8] sm:$0xff]
  %v5435 = vld [vmem:[#allocation2 + $0x5b0] sm:$0xff]
  %v5436 = vld [vmem:[#allocation2 + $0x5b8] sm:$0xff]
  %v5437 = vld [vmem:[#allocation2 + $0x5c0] sm:$0xff]
  %v5438 = vld [vmem:[#allocation2 + $0x5c8] sm:$0xff]
  %v5439 = vld [vmem:[#allocation2 + $0x5d0] sm:$0xff]
  %v5440 = vld [vmem:[#allocation2 + $0x5d8] sm:$0xff]
  %v5441 = vld [vmem:[#allocation2 + $0x5e0] sm:$0xff]
  %v5442 = vld [vmem:[#allocation2 + $0x5e8] sm:$0xff]
  %v5443 = vld [vmem:[#allocation2 + $0x5f0] sm:$0xff]
  %v5444 = vld [vmem:[#allocation2 + $0x5f8] sm:$0xff]
  %v5445 = vld [vmem:[#allocation2 + $0x600] sm:$0xff]
  %v5446 = vld [vmem:[#allocation2 + $0x608] sm:$0xff]
  %v5447 = vld [vmem:[#allocation2 + $0x610] sm:$0xff]
  %v5448 = vld [vmem:[#allocation2 + $0x618] sm:$0xff]
  %v5449 = vld [vmem:[#allocation2 + $0x620] sm:$0xff]
  %v5450 = vld [vmem:[#allocation2 + $0x628] sm:$0xff]
  %v5451 = vld [vmem:[#allocation2 + $0x630] sm:$0xff]
  %v5452 = vld [vmem:[#allocation2 + $0x638] sm:$0xff]
  %v5453 = vld [vmem:[#allocation2 + $0x640] sm:$0xff]
  %v5454 = vld [vmem:[#allocation2 + $0x648] sm:$0xff]
  %v5455 = vld [vmem:[#allocation2 + $0x650] sm:$0xff]
  %v5456 = vld [vmem:[#allocation2 + $0x658] sm:$0xff]
  %v5457 = vld [vmem:[#allocation2 + $0x660] sm:$0xff]
  %v5458 = vld [vmem:[#allocation2 + $0x668] sm:$0xff]
  %v5459 = vld [vmem:[#allocation2 + $0x670] sm:$0xff]
  %v5460 = vld [vmem:[#allocation2 + $0x678] sm:$0xff]
  %v5461 = vld [vmem:[#allocation2 + $0x680] sm:$0xff]
  %v5462 = vld [vmem:[#allocation2 + $0x688] sm:$0xff]
  %v5463 = vld [vmem:[#allocation2 + $0x690] sm:$0xff]
  %v5464 = vld [vmem:[#allocation2 + $0x698] sm:$0xff]
  %v5465 = vld [vmem:[#allocation2 + $0x6a0] sm:$0xff]
  %v5466 = vld [vmem:[#allocation2 + $0x6a8] sm:$0xff]
  %v5467 = vld [vmem:[#allocation2 + $0x6b0] sm:$0xff]
  %v5468 = vld [vmem:[#allocation2 + $0x6b8] sm:$0xff]
  %v5469 = vld [vmem:[#allocation2 + $0x6c0] sm:$0xff]
  %v5470 = vld [vmem:[#allocation2 + $0x6c8] sm:$0xff]
  %v5471 = vld [vmem:[#allocation2 + $0x6d0] sm:$0xff]
  %v5472 = vld [vmem:[#allocation2 + $0x6d8] sm:$0xff]
  %v5473 = vld [vmem:[#allocation2 + $0x6e0] sm:$0xff]
  %v5474 = vld [vmem:[#allocation2 + $0x6e8] sm:$0xff]
  %v5475 = vld [vmem:[#allocation2 + $0x6f0] sm:$0xff]
  %v5476 = vld [vmem:[#allocation2 + $0x6f8] sm:$0xff]
  %v5477 = vld [vmem:[#allocation2 + $0x700] sm:$0xff]
  %v5478 = vld [vmem:[#allocation2 + $0x708] sm:$0xff]
  %v5479 = vld [vmem:[#allocation2 + $0x710] sm:$0xff]
  %v5480 = vld [vmem:[#allocation2 + $0x718] sm:$0xff]
  %v5481 = vld [vmem:[#allocation2 + $0x720] sm:$0xff]
  %v5482 = vld [vmem:[#allocation2 + $0x728] sm:$0xff]
  %v5483 = vld [vmem:[#allocation2 + $0x730] sm:$0xff]
  %v5484 = vld [vmem:[#allocation2 + $0x738] sm:$0xff]
  %v5485 = vld [vmem:[#allocation2 + $0x740] sm:$0xff]
  %v5486 = vld [vmem:[#allocation2 + $0x748] sm:$0xff]
  %v5487 = vld [vmem:[#allocation2 + $0x750] sm:$0xff]
  %v5488 = vld [vmem:[#allocation2 + $0x758] sm:$0xff]
  %v5489 = vld [vmem:[#allocation2 + $0x760] sm:$0xff]
  %v5490 = vld [vmem:[#allocation2 + $0x768] sm:$0xff]
  %v5491 = vld [vmem:[#allocation2 + $0x770] sm:$0xff]
  %v5492 = vld [vmem:[#allocation2 + $0x778] sm:$0xff]
  %v5493 = vld [vmem:[#allocation2 + $0x780] sm:$0xff]
  %v5494 = vld [vmem:[#allocation2 + $0x788] sm:$0xff]
  %v5495 = vld [vmem:[#allocation2 + $0x790] sm:$0xff]
  %v5496 = vld [vmem:[#allocation2 + $0x798] sm:$0xff]
  %v5497 = vld [vmem:[#allocation2 + $0x7a0] sm:$0xff]
  %v5498 = vld [vmem:[#allocation2 + $0x7a8] sm:$0xff]
  %v5499 = vld [vmem:[#allocation2 + $0x7b0] sm:$0xff]
  %v5500 = vld [vmem:[#allocation2 + $0x7b8] sm:$0xff]
  %v5501 = vld [vmem:[#allocation2 + $0x7c0] sm:$0xff]
  %v5502 = vld [vmem:[#allocation2 + $0x7c8] sm:$0xff]
  %v5503 = vld [vmem:[#allocation2 + $0x7d0] sm:$0xff]
  %v5504 = vld [vmem:[#allocation2 + $0x7d8] sm:$0xff]
  %v5505 = vld [vmem:[#allocation2 + $0x7e0] sm:$0xff]
  %v5506 = vld [vmem:[#allocation2 + $0x7e8] sm:$0xff]
  %v5507 = vld [vmem:[#allocation2 + $0x7f0] sm:$0xff]
  %v5508 = vld [vmem:[#allocation2 + $0x7f8] sm:$0xff]
  %v5509 = vld [vmem:[#allocation2 + $0x800] sm:$0xff]
  %v5510 = vld [vmem:[#allocation2 + $0x808] sm:$0xff]
  %v5511 = vld [vmem:[#allocation2 + $0x810] sm:$0xff]
  %v5512 = vld [vmem:[#allocation2 + $0x818] sm:$0xff]
  %v5513 = vld [vmem:[#allocation2 + $0x820] sm:$0xff]
  %v5514 = vld [vmem:[#allocation2 + $0x828] sm:$0xff]
  %v5515 = vld [vmem:[#allocation2 + $0x830] sm:$0xff]
  %v5516 = vld [vmem:[#allocation2 + $0x838] sm:$0xff]
  %v5517 = vld [vmem:[#allocation2 + $0x840] sm:$0xff]
  %v5518 = vld [vmem:[#allocation2 + $0x848] sm:$0xff]
  %v5519 = vld [vmem:[#allocation2 + $0x850] sm:$0xff]
  %v5520 = vld [vmem:[#allocation2 + $0x858] sm:$0xff]
  %v5521 = vld [vmem:[#allocation2 + $0x860] sm:$0xff]
  %v5522 = vld [vmem:[#allocation2 + $0x868] sm:$0xff]
  %v5523 = vld [vmem:[#allocation2 + $0x870] sm:$0xff]
  %v5524 = vld [vmem:[#allocation2 + $0x878] sm:$0xff]
  %v5525 = vld [vmem:[#allocation2 + $0x880] sm:$0xff]
  %v5526 = vld [vmem:[#allocation2 + $0x888] sm:$0xff]
  %v5527 = vld [vmem:[#allocation2 + $0x890] sm:$0xff]
  %v5528 = vld [vmem:[#allocation2 + $0x898] sm:$0xff]
  %v5529 = vld [vmem:[#allocation2 + $0x8a0] sm:$0xff]
  %v5530 = vld [vmem:[#allocation2 + $0x8a8] sm:$0xff]
  %v5531 = vld [vmem:[#allocation2 + $0x8b0] sm:$0xff]
  %v5532 = vld [vmem:[#allocation2 + $0x8b8] sm:$0xff]
  %v5533 = vld [vmem:[#allocation2 + $0x8c0] sm:$0xff]
  %v5534 = vld [vmem:[#allocation2 + $0x8c8] sm:$0xff]
  %v5535 = vld [vmem:[#allocation2 + $0x8d0] sm:$0xff]
  %v5536 = vld [vmem:[#allocation2 + $0x8d8] sm:$0xff]
  %v5537 = vld [vmem:[#allocation2 + $0x8e0] sm:$0xff]
  %v5538 = vld [vmem:[#allocation2 + $0x8e8] sm:$0xff]
  %v5539 = vld [vmem:[#allocation2 + $0x8f0] sm:$0xff]
  %v5540 = vld [vmem:[#allocation2 + $0x8f8] sm:$0xff]
  %v5541 = vld [vmem:[#allocation2 + $0x900] sm:$0xff]
  %v5542 = vld [vmem:[#allocation2 + $0x908] sm:$0xff]
  %v5543 = vld [vmem:[#allocation2 + $0x910] sm:$0xff]
  %v5544 = vld [vmem:[#allocation2 + $0x918] sm:$0xff]
  %v5545 = vld [vmem:[#allocation2 + $0x920] sm:$0xff]
  %v5546 = vld [vmem:[#allocation2 + $0x928] sm:$0xff]
  %v5547 = vld [vmem:[#allocation2 + $0x930] sm:$0xff]
  %v5548 = vld [vmem:[#allocation2 + $0x938] sm:$0xff]
  %v5549 = vld [vmem:[#allocation2 + $0x940] sm:$0xff]
  %v5550 = vld [vmem:[#allocation2 + $0x948] sm:$0xff]
  %v5551 = vld [vmem:[#allocation2 + $0x950] sm:$0xff]
  %v5552 = vld [vmem:[#allocation2 + $0x958] sm:$0xff]
  %v5553 = vld [vmem:[#allocation2 + $0x960] sm:$0xff]
  %v5554 = vld [vmem:[#allocation2 + $0x968] sm:$0xff]
  %v5555 = vld [vmem:[#allocation2 + $0x970] sm:$0xff]
  %v5556 = vld [vmem:[#allocation2 + $0x978] sm:$0xff]
  %v5557 = vld [vmem:[#allocation2 + $0x980] sm:$0xff]
  %v5558 = vld [vmem:[#allocation2 + $0x988] sm:$0xff]
  %v5559 = vld [vmem:[#allocation2 + $0x990] sm:$0xff]
  %v5560 = vld [vmem:[#allocation2 + $0x998] sm:$0xff]
  %v5561 = vld [vmem:[#allocation2 + $0x9a0] sm:$0xff]
  %v5562 = vld [vmem:[#allocation2 + $0x9a8] sm:$0xff]
  %v5563 = vld [vmem:[#allocation2 + $0x9b0] sm:$0xff]
  %v5564 = vld [vmem:[#allocation2 + $0x9b8] sm:$0xff]
  %v5565 = vld [vmem:[#allocation2 + $0x9c0] sm:$0xff]
  %v5566 = vld [vmem:[#allocation2 + $0x9c8] sm:$0xff]
  %v5567 = vld [vmem:[#allocation2 + $0x9d0] sm:$0xff]
  %v5568 = vld [vmem:[#allocation2 + $0x9d8] sm:$0xff]
  %v5569 = vld [vmem:[#allocation2 + $0x9e0] sm:$0xff]
  %v5570 = vld [vmem:[#allocation2 + $0x9e8] sm:$0xff]
  %v5571 = vld [vmem:[#allocation2 + $0x9f0] sm:$0xff]
  %v5572 = vld [vmem:[#allocation2 + $0x9f8] sm:$0xff]
  %v5573 = vld [vmem:[#allocation2 + $0xa00] sm:$0xff]
  %v5574 = vld [vmem:[#allocation2 + $0xa08] sm:$0xff]
  %v5575 = vld [vmem:[#allocation2 + $0xa10] sm:$0xff]
  %v5576 = vld [vmem:[#allocation2 + $0xa18] sm:$0xff]
  %v5577 = vld [vmem:[#allocation2 + $0xa20] sm:$0xff]
  %v5578 = vld [vmem:[#allocation2 + $0xa28] sm:$0xff]
  %v5579 = vld [vmem:[#allocation2 + $0xa30] sm:$0xff]
  %v5580 = vld [vmem:[#allocation2 + $0xa38] sm:$0xff]
  %v5581 = vld [vmem:[#allocation2 + $0xa40] sm:$0xff]
  %v5582 = vld [vmem:[#allocation2 + $0xa48] sm:$0xff]
  %v5583 = vld [vmem:[#allocation2 + $0xa50] sm:$0xff]
  %v5584 = vld [vmem:[#allocation2 + $0xa58] sm:$0xff]
  %v5585 = vld [vmem:[#allocation2 + $0xa60] sm:$0xff]
  %v5586 = vld [vmem:[#allocation2 + $0xa68] sm:$0xff]
  %v5587 = vld [vmem:[#allocation2 + $0xa70] sm:$0xff]
  %v5588 = vld [vmem:[#allocation2 + $0xa78] sm:$0xff]
  %v5589 = vld [vmem:[#allocation2 + $0xa80] sm:$0xff]
  %v5590 = vld [vmem:[#allocation2 + $0xa88] sm:$0xff]
  %v5591 = vld [vmem:[#allocation2 + $0xa90] sm:$0xff]
  %v5592 = vld [vmem:[#allocation2 + $0xa98] sm:$0xff]
  %v5593 = vld [vmem:[#allocation2 + $0xaa0] sm:$0xff]
  %v5594 = vld [vmem:[#allocation2 + $0xaa8] sm:$0xff]
  %v5595 = vld [vmem:[#allocation2 + $0xab0] sm:$0xff]
  %v5596 = vld [vmem:[#allocation2 + $0xab8] sm:$0xff]
  %v5597 = vld [vmem:[#allocation2 + $0xac0] sm:$0xff]
  %v5598 = vld [vmem:[#allocation2 + $0xac8] sm:$0xff]
  %v5599 = vld [vmem:[#allocation2 + $0xad0] sm:$0xff]
  %v5600 = vld [vmem:[#allocation2 + $0xad8] sm:$0xff]
  %v5601 = vld [vmem:[#allocation2 + $0xae0] sm:$0xff]
  %v5602 = vld [vmem:[#allocation2 + $0xae8] sm:$0xff]
  %v5603 = vld [vmem:[#allocation2 + $0xaf0] sm:$0xff]
  %v5604 = vld [vmem:[#allocation2 + $0xaf8] sm:$0xff]
  %v5605 = vld [vmem:[#allocation2 + $0xb00] sm:$0xff]
  %v5606 = vld [vmem:[#allocation2 + $0xb08] sm:$0xff]
  %v5607 = vld [vmem:[#allocation2 + $0xb10] sm:$0xff]
  %v5608 = vld [vmem:[#allocation2 + $0xb18] sm:$0xff]
  %v5609 = vld [vmem:[#allocation2 + $0xb20] sm:$0xff]
  %v5610 = vld [vmem:[#allocation2 + $0xb28] sm:$0xff]
  %v5611 = vld [vmem:[#allocation2 + $0xb30] sm:$0xff]
  %v5612 = vld [vmem:[#allocation2 + $0xb38] sm:$0xff]
  %v5613 = vld [vmem:[#allocation2 + $0xb40] sm:$0xff]
  %v5614 = vld [vmem:[#allocation2 + $0xb48] sm:$0xff]
  %v5615 = vld [vmem:[#allocation2 + $0xb50] sm:$0xff]
  %v5616 = vld [vmem:[#allocation2 + $0xb58] sm:$0xff]
  %v5617 = vld [vmem:[#allocation2 + $0xb60] sm:$0xff]
  %v5618 = vld [vmem:[#allocation2 + $0xb68] sm:$0xff]
  %v5619 = vld [vmem:[#allocation2 + $0xb70] sm:$0xff]
  %v5620 = vld [vmem:[#allocation2 + $0xb78] sm:$0xff]
  %v5621 = vld [vmem:[#allocation2 + $0xb80] sm:$0xff]
  %v5622 = vld [vmem:[#allocation2 + $0xb88] sm:$0xff]
  %v5623 = vld [vmem:[#allocation2 + $0xb90] sm:$0xff]
  %v5624 = vld [vmem:[#allocation2 + $0xb98] sm:$0xff]
  %v5625 = vld [vmem:[#allocation2 + $0xba0] sm:$0xff]
  %v5626 = vld [vmem:[#allocation2 + $0xba8] sm:$0xff]
  %v5627 = vld [vmem:[#allocation2 + $0xbb0] sm:$0xff]
  %v5628 = vld [vmem:[#allocation2 + $0xbb8] sm:$0xff]
  %v5629 = vld [vmem:[#allocation2 + $0xbc0] sm:$0xff]
  %v5630 = vld [vmem:[#allocation2 + $0xbc8] sm:$0xff]
  %v5631 = vld [vmem:[#allocation2 + $0xbd0] sm:$0xff]
  %v5632 = vld [vmem:[#allocation2 + $0xbd8] sm:$0xff]
  %v5633 = vld [vmem:[#allocation2 + $0xbe0] sm:$0xff]
  %v5634 = vld [vmem:[#allocation2 + $0xbe8] sm:$0xff]
  %v5635 = vld [vmem:[#allocation2 + $0xbf0] sm:$0xff]
  %v5636 = vld [vmem:[#allocation2 + $0xbf8] sm:$0xff]
  %v5637 = vld [vmem:[#allocation2 + $0xc00] sm:$0xff]
  %v5638 = vld [vmem:[#allocation2 + $0xc08] sm:$0xff]
  %v5639 = vld [vmem:[#allocation2 + $0xc10] sm:$0xff]
  %v5640 = vld [vmem:[#allocation2 + $0xc18] sm:$0xff]
  %v5641 = vld [vmem:[#allocation2 + $0xc20] sm:$0xff]
  %v5642 = vld [vmem:[#allocation2 + $0xc28] sm:$0xff]
  %v5643 = vld [vmem:[#allocation2 + $0xc30] sm:$0xff]
  %v5644 = vld [vmem:[#allocation2 + $0xc38] sm:$0xff]
  %v5645 = vld [vmem:[#allocation2 + $0xc40] sm:$0xff]
  %v5646 = vld [vmem:[#allocation2 + $0xc48] sm:$0xff]
  %v5647 = vld [vmem:[#allocation2 + $0xc50] sm:$0xff]
  %v5648 = vld [vmem:[#allocation2 + $0xc58] sm:$0xff]
  %v5649 = vld [vmem:[#allocation2 + $0xc60] sm:$0xff]
  %v5650 = vld [vmem:[#allocation2 + $0xc68] sm:$0xff]
  %v5651 = vld [vmem:[#allocation2 + $0xc70] sm:$0xff]
  %v5652 = vld [vmem:[#allocation2 + $0xc78] sm:$0xff]
  %v5653 = vld [vmem:[#allocation2 + $0xc80] sm:$0xff]
  %v5654 = vld [vmem:[#allocation2 + $0xc88] sm:$0xff]
  %v5655 = vld [vmem:[#allocation2 + $0xc90] sm:$0xff]
  %v5656 = vld [vmem:[#allocation2 + $0xc98] sm:$0xff]
  %v5657 = vld [vmem:[#allocation2 + $0xca0] sm:$0xff]
  %v5658 = vld [vmem:[#allocation2 + $0xca8] sm:$0xff]
  %v5659 = vld [vmem:[#allocation2 + $0xcb0] sm:$0xff]
  %v5660 = vld [vmem:[#allocation2 + $0xcb8] sm:$0xff]
  %v5661 = vld [vmem:[#allocation2 + $0xcc0] sm:$0xff]
  %v5662 = vld [vmem:[#allocation2 + $0xcc8] sm:$0xff]
  %v5663 = vld [vmem:[#allocation2 + $0xcd0] sm:$0xff]
  %v5664 = vld [vmem:[#allocation2 + $0xcd8] sm:$0xff]
  %v5665 = vld [vmem:[#allocation2 + $0xce0] sm:$0xff]
  %v5666 = vld [vmem:[#allocation2 + $0xce8] sm:$0xff]
  %v5667 = vld [vmem:[#allocation2 + $0xcf0] sm:$0xff]
  %v5668 = vld [vmem:[#allocation2 + $0xcf8] sm:$0xff]
  %v5669 = vld [vmem:[#allocation2 + $0xd00] sm:$0xff]
  %v5670 = vld [vmem:[#allocation2 + $0xd08] sm:$0xff]
  %v5671 = vld [vmem:[#allocation2 + $0xd10] sm:$0xff]
  %v5672 = vld [vmem:[#allocation2 + $0xd18] sm:$0xff]
  %v5673 = vld [vmem:[#allocation2 + $0xd20] sm:$0xff]
  %v5674 = vld [vmem:[#allocation2 + $0xd28] sm:$0xff]
  %v5675 = vld [vmem:[#allocation2 + $0xd30] sm:$0xff]
  %v5676 = vld [vmem:[#allocation2 + $0xd38] sm:$0xff]
  %v5677 = vld [vmem:[#allocation2 + $0xd40] sm:$0xff]
  %v5678 = vld [vmem:[#allocation2 + $0xd48] sm:$0xff]
  %v5679 = vld [vmem:[#allocation2 + $0xd50] sm:$0xff]
  %v5680 = vld [vmem:[#allocation2 + $0xd58] sm:$0xff]
  %v5681 = vld [vmem:[#allocation2 + $0xd60] sm:$0xff]
  %v5682 = vld [vmem:[#allocation2 + $0xd68] sm:$0xff]
  %v5683 = vld [vmem:[#allocation2 + $0xd70] sm:$0xff]
  %v5684 = vld [vmem:[#allocation2 + $0xd78] sm:$0xff]
  %v5685 = vld [vmem:[#allocation2 + $0xd80] sm:$0xff]
  %v5686 = vld [vmem:[#allocation2 + $0xd88] sm:$0xff]
  %v5687 = vld [vmem:[#allocation2 + $0xd90] sm:$0xff]
  %v5688 = vld [vmem:[#allocation2 + $0xd98] sm:$0xff]
  %v5689 = vld [vmem:[#allocation2 + $0xda0] sm:$0xff]
  %v5690 = vld [vmem:[#allocation2 + $0xda8] sm:$0xff]
  %v5691 = vld [vmem:[#allocation2 + $0xdb0] sm:$0xff]
  %v5692 = vld [vmem:[#allocation2 + $0xdb8] sm:$0xff]
  %v5693 = vld [vmem:[#allocation2 + $0xdc0] sm:$0xff]
  %v5694 = vld [vmem:[#allocation2 + $0xdc8] sm:$0xff]
  %v5695 = vld [vmem:[#allocation2 + $0xdd0] sm:$0xff]
  %v5696 = vld [vmem:[#allocation2 + $0xdd8] sm:$0xff]
  %v5697 = vld [vmem:[#allocation2 + $0xde0] sm:$0xff]
  %v5698 = vld [vmem:[#allocation2 + $0xde8] sm:$0xff]
  %v5699 = vld [vmem:[#allocation2 + $0xdf0] sm:$0xff]
  %v5700 = vld [vmem:[#allocation2 + $0xdf8] sm:$0xff]
  %v5701 = vld [vmem:[#allocation2 + $0xe00] sm:$0xff]
  %v5702 = vld [vmem:[#allocation2 + $0xe08] sm:$0xff]
  %v5703 = vld [vmem:[#allocation2 + $0xe10] sm:$0xff]
  %v5704 = vld [vmem:[#allocation2 + $0xe18] sm:$0xff]
  %v5705 = vld [vmem:[#allocation2 + $0xe20] sm:$0xff]
  %v5706 = vld [vmem:[#allocation2 + $0xe28] sm:$0xff]
  %v5707 = vld [vmem:[#allocation2 + $0xe30] sm:$0xff]
  %v5708 = vld [vmem:[#allocation2 + $0xe38] sm:$0xff]
  %v5709 = vld [vmem:[#allocation2 + $0xe40] sm:$0xff]
  %v5710 = vld [vmem:[#allocation2 + $0xe48] sm:$0xff]
  %v5711 = vld [vmem:[#allocation2 + $0xe50] sm:$0xff]
  %v5712 = vld [vmem:[#allocation2 + $0xe58] sm:$0xff]
  %v5713 = vld [vmem:[#allocation2 + $0xe60] sm:$0xff]
  %v5714 = vld [vmem:[#allocation2 + $0xe68] sm:$0xff]
  %v5715 = vld [vmem:[#allocation2 + $0xe70] sm:$0xff]
  %v5716 = vld [vmem:[#allocation2 + $0xe78] sm:$0xff]
  %v5717 = vld [vmem:[#allocation2 + $0xe80] sm:$0xff]
  %v5718 = vld [vmem:[#allocation2 + $0xe88] sm:$0xff]
  %v5719 = vld [vmem:[#allocation2 + $0xe90] sm:$0xff]
  %v5720 = vld [vmem:[#allocation2 + $0xe98] sm:$0xff]
  %v5721 = vld [vmem:[#allocation2 + $0xea0] sm:$0xff]
  %v5722 = vld [vmem:[#allocation2 + $0xea8] sm:$0xff]
  %v5723 = vld [vmem:[#allocation2 + $0xeb0] sm:$0xff]
  %v5724 = vld [vmem:[#allocation2 + $0xeb8] sm:$0xff]
  %v5725 = vld [vmem:[#allocation2 + $0xec0] sm:$0xff]
  %v5726 = vld [vmem:[#allocation2 + $0xec8] sm:$0xff]
  %v5727 = vld [vmem:[#allocation2 + $0xed0] sm:$0xff]
  %v5728 = vld [vmem:[#allocation2 + $0xed8] sm:$0xff]
  %v5729 = vld [vmem:[#allocation2 + $0xee0] sm:$0xff]
  %v5730 = vld [vmem:[#allocation2 + $0xee8] sm:$0xff]
  %v5731 = vld [vmem:[#allocation2 + $0xef0] sm:$0xff]
  %v5732 = vld [vmem:[#allocation2 + $0xef8] sm:$0xff]
  %v5733 = vld [vmem:[#allocation2 + $0xf00] sm:$0xff]
  %v5734 = vld [vmem:[#allocation2 + $0xf08] sm:$0xff]
  %v5735 = vld [vmem:[#allocation2 + $0xf10] sm:$0xff]
  %v5736 = vld [vmem:[#allocation2 + $0xf18] sm:$0xff]
  %v5737 = vld [vmem:[#allocation2 + $0xf20] sm:$0xff]
  %v5738 = vld [vmem:[#allocation2 + $0xf28] sm:$0xff]
  %v5739 = vld [vmem:[#allocation2 + $0xf30] sm:$0xff]
  %v5740 = vld [vmem:[#allocation2 + $0xf38] sm:$0xff]
  %v5741 = vld [vmem:[#allocation2 + $0xf40] sm:$0xff]
  %v5742 = vld [vmem:[#allocation2 + $0xf48] sm:$0xff]
  %v5743 = vld [vmem:[#allocation2 + $0xf50] sm:$0xff]
  %v5744 = vld [vmem:[#allocation2 + $0xf58] sm:$0xff]
  %v5745 = vld [vmem:[#allocation2 + $0xf60] sm:$0xff]
  %v5746 = vld [vmem:[#allocation2 + $0xf68] sm:$0xff]
  %v5747 = vld [vmem:[#allocation2 + $0xf70] sm:$0xff]
  %v5748 = vld [vmem:[#allocation2 + $0xf78] sm:$0xff]
  %v5749 = vld [vmem:[#allocation2 + $0xf80] sm:$0xff]
  %v5750 = vld [vmem:[#allocation2 + $0xf88] sm:$0xff]
  %v5751 = vld [vmem:[#allocation2 + $0xf90] sm:$0xff]
  %v5752 = vld [vmem:[#allocation2 + $0xf98] sm:$0xff]
  %v5753 = vld [vmem:[#allocation2 + $0xfa0] sm:$0xff]
  %v5754 = vld [vmem:[#allocation2 + $0xfa8] sm:$0xff]
  %v5755 = vld [vmem:[#allocation2 + $0xfb0] sm:$0xff]
  %v5756 = vld [vmem:[#allocation2 + $0xfb8] sm:$0xff]
  %v5757 = vld [vmem:[#allocation2 + $0xfc0] sm:$0xff]
  %v5758 = vld [vmem:[#allocation2 + $0xfc8] sm:$0xff]
  %v5759 = vld [vmem:[#allocation2 + $0xfd0] sm:$0xff]
  %v5760 = vld [vmem:[#allocation2 + $0xfd8] sm:$0xff]
  %v5761 = vld [vmem:[#allocation2 + $0xfe0] sm:$0xff]
  %v5762 = vld [vmem:[#allocation2 + $0xfe8] sm:$0xff]
  %v5763 = vld [vmem:[#allocation2 + $0xff0] sm:$0xff]
  %v5764 = vld [vmem:[#allocation2 + $0xff8] sm:$0xff]
  %v5765 = vld [vmem:[#allocation2 + $0x1000] sm:$0xff]
  %v5766 = vld [vmem:[#allocation2 + $0x1008] sm:$0xff]
  %v5767 = vld [vmem:[#allocation2 + $0x1010] sm:$0xff]
  %v5768 = vld [vmem:[#allocation2 + $0x1018] sm:$0xff]
  %v5769 = vld [vmem:[#allocation2 + $0x1020] sm:$0xff]
  %v5770 = vld [vmem:[#allocation2 + $0x1028] sm:$0xff]
  %v5771 = vld [vmem:[#allocation2 + $0x1030] sm:$0xff]
  %v5772 = vld [vmem:[#allocation2 + $0x1038] sm:$0xff]
  %v5773 = vld [vmem:[#allocation2 + $0x1040] sm:$0xff]
  %v5774 = vld [vmem:[#allocation2 + $0x1048] sm:$0xff]
  %v5775 = vld [vmem:[#allocation2 + $0x1050] sm:$0xff]
  %v5776 = vld [vmem:[#allocation2 + $0x1058] sm:$0xff]
  %v5777 = vld [vmem:[#allocation2 + $0x1060] sm:$0xff]
  %v5778 = vld [vmem:[#allocation2 + $0x1068] sm:$0xff]
  %v5779 = vld [vmem:[#allocation2 + $0x1070] sm:$0xff]
  %v5780 = vld [vmem:[#allocation2 + $0x1078] sm:$0xff]
  %v5781 = vld [vmem:[#allocation2 + $0x1080] sm:$0xff]
  %v5782 = vld [vmem:[#allocation2 + $0x1088] sm:$0xff]
  %v5783 = vld [vmem:[#allocation2 + $0x1090] sm:$0xff]
  %v5784 = vld [vmem:[#allocation2 + $0x1098] sm:$0xff]
  %v5785 = vld [vmem:[#allocation2 + $0x10a0] sm:$0xff]
  %v5786 = vld [vmem:[#allocation2 + $0x10a8] sm:$0xff]
  %v5787 = vld [vmem:[#allocation2 + $0x10b0] sm:$0xff]
  %v5788 = vld [vmem:[#allocation2 + $0x10b8] sm:$0xff]
  %v5789 = vld [vmem:[#allocation2 + $0x10c0] sm:$0xff]
  %v5790 = vld [vmem:[#allocation2 + $0x10c8] sm:$0xff]
  %v5791 = vld [vmem:[#allocation2 + $0x10d0] sm:$0xff]
  %v5792 = vld [vmem:[#allocation2 + $0x10d8] sm:$0xff]
  %v5793 = vld [vmem:[#allocation2 + $0x10e0] sm:$0xff]
  %v5794 = vld [vmem:[#allocation2 + $0x10e8] sm:$0xff]
  %v5795 = vld [vmem:[#allocation2 + $0x10f0] sm:$0xff]
  %v5796 = vld [vmem:[#allocation2 + $0x10f8] sm:$0xff]
  %v5797 = vld [vmem:[#allocation2 + $0x1100] sm:$0xff]
  %v5798 = vld [vmem:[#allocation2 + $0x1108] sm:$0xff]
  %v5799 = vld [vmem:[#allocation2 + $0x1110] sm:$0xff]
  %v5800 = vld [vmem:[#allocation2 + $0x1118] sm:$0xff]
  %v5801 = vld [vmem:[#allocation2 + $0x1120] sm:$0xff]
  %v5802 = vld [vmem:[#allocation2 + $0x1128] sm:$0xff]
  %v5803 = vld [vmem:[#allocation2 + $0x1130] sm:$0xff]
  %v5804 = vld [vmem:[#allocation2 + $0x1138] sm:$0xff]
  %v5805 = vld [vmem:[#allocation2 + $0x1140] sm:$0xff]
  %v5806 = vld [vmem:[#allocation2 + $0x1148] sm:$0xff]
  %v5807 = vld [vmem:[#allocation2 + $0x1150] sm:$0xff]
  %v5808 = vld [vmem:[#allocation2 + $0x1158] sm:$0xff]
  %v5809 = vld [vmem:[#allocation2 + $0x1160] sm:$0xff]
  %v5810 = vld [vmem:[#allocation2 + $0x1168] sm:$0xff]
  %v5811 = vld [vmem:[#allocation2 + $0x1170] sm:$0xff]
  %v5812 = vld [vmem:[#allocation2 + $0x1178] sm:$0xff]
  %v5813 = vld [vmem:[#allocation2 + $0x1180] sm:$0xff]
  %v5814 = vld [vmem:[#allocation2 + $0x1188] sm:$0xff]
  %v5815 = vld [vmem:[#allocation2 + $0x1190] sm:$0xff]
  %v5816 = vld [vmem:[#allocation2 + $0x1198] sm:$0xff]
  %v5817 = vld [vmem:[#allocation2 + $0x11a0] sm:$0xff]
  %v5818 = vld [vmem:[#allocation2 + $0x11a8] sm:$0xff]
  %v5819 = vld [vmem:[#allocation2 + $0x11b0] sm:$0xff]
  %v5820 = vld [vmem:[#allocation2 + $0x11b8] sm:$0xff]
  %v5821 = vld [vmem:[#allocation2 + $0x11c0] sm:$0xff]
  %v5822 = vld [vmem:[#allocation2 + $0x11c8] sm:$0xff]
  %v5823 = vld [vmem:[#allocation2 + $0x11d0] sm:$0xff]
  %v5824 = vld [vmem:[#allocation2 + $0x11d8] sm:$0xff]
  %v5825 = vld [vmem:[#allocation2 + $0x11e0] sm:$0xff]
  %v5826 = vld [vmem:[#allocation2 + $0x11e8] sm:$0xff]
  %v5827 = vld [vmem:[#allocation2 + $0x11f0] sm:$0xff]
  %v5828 = vld [vmem:[#allocation2 + $0x11f8] sm:$0xff]
  %v5829 = vld [vmem:[#allocation2 + $0x1200] sm:$0xff]
  %v5830 = vld [vmem:[#allocation2 + $0x1208] sm:$0xff]
  %v5831 = vld [vmem:[#allocation2 + $0x1210] sm:$0xff]
  %v5832 = vld [vmem:[#allocation2 + $0x1218] sm:$0xff]
  %v5833 = vld [vmem:[#allocation2 + $0x1220] sm:$0xff]
  %v5834 = vld [vmem:[#allocation2 + $0x1228] sm:$0xff]
  %v5835 = vld [vmem:[#allocation2 + $0x1230] sm:$0xff]
  %v5836 = vld [vmem:[#allocation2 + $0x1238] sm:$0xff]
  %v5837 = vld [vmem:[#allocation2 + $0x1240] sm:$0xff]
  %v5838 = vld [vmem:[#allocation2 + $0x1248] sm:$0xff]
  %v5839 = vld [vmem:[#allocation2 + $0x1250] sm:$0xff]
  %v5840 = vld [vmem:[#allocation2 + $0x1258] sm:$0xff]
  %v5841 = vld [vmem:[#allocation2 + $0x1260] sm:$0xff]
  %v5842 = vld [vmem:[#allocation2 + $0x1268] sm:$0xff]
  %v5843 = vld [vmem:[#allocation2 + $0x1270] sm:$0xff]
  %v5844 = vld [vmem:[#allocation2 + $0x1278] sm:$0xff]
  %v5845 = vld [vmem:[#allocation2 + $0x1280] sm:$0xff]
  %v5846 = vld [vmem:[#allocation2 + $0x1288] sm:$0xff]
  %v5847 = vld [vmem:[#allocation2 + $0x1290] sm:$0xff]
  %v5848 = vld [vmem:[#allocation2 + $0x1298] sm:$0xff]
  %v5849 = vld [vmem:[#allocation2 + $0x12a0] sm:$0xff]
  %v5850 = vld [vmem:[#allocation2 + $0x12a8] sm:$0xff]
  %v5851 = vld [vmem:[#allocation2 + $0x12b0] sm:$0xff]
  %v5852 = vld [vmem:[#allocation2 + $0x12b8] sm:$0xff]
  %v5853 = vld [vmem:[#allocation2 + $0x12c0] sm:$0xff]
  %v5854 = vld [vmem:[#allocation2 + $0x12c8] sm:$0xff]
  %v5855 = vld [vmem:[#allocation2 + $0x12d0] sm:$0xff]
  %v5856 = vld [vmem:[#allocation2 + $0x12d8] sm:$0xff]
  %v5857 = vld [vmem:[#allocation2 + $0x12e0] sm:$0xff]
  %v5858 = vld [vmem:[#allocation2 + $0x12e8] sm:$0xff]
  %v5859 = vld [vmem:[#allocation2 + $0x12f0] sm:$0xff]
  %v5860 = vld [vmem:[#allocation2 + $0x12f8] sm:$0xff]
  %v5861 = vld [vmem:[#allocation2 + $0x1300] sm:$0xff]
  %v5862 = vld [vmem:[#allocation2 + $0x1308] sm:$0xff]
  %v5863 = vld [vmem:[#allocation2 + $0x1310] sm:$0xff]
  %v5864 = vld [vmem:[#allocation2 + $0x1318] sm:$0xff]
  %v5865 = vld [vmem:[#allocation2 + $0x1320] sm:$0xff]
  %v5866 = vld [vmem:[#allocation2 + $0x1328] sm:$0xff]
  %v5867 = vld [vmem:[#allocation2 + $0x1330] sm:$0xff]
  %v5868 = vld [vmem:[#allocation2 + $0x1338] sm:$0xff]
  %v5869 = vld [vmem:[#allocation2 + $0x1340] sm:$0xff]
  %v5870 = vld [vmem:[#allocation2 + $0x1348] sm:$0xff]
  %v5871 = vld [vmem:[#allocation2 + $0x1350] sm:$0xff]
  %v5872 = vld [vmem:[#allocation2 + $0x1358] sm:$0xff]
  %v5873 = vld [vmem:[#allocation2 + $0x1360] sm:$0xff]
  %v5874 = vld [vmem:[#allocation2 + $0x1368] sm:$0xff]
  %v5875 = vld [vmem:[#allocation2 + $0x1370] sm:$0xff]
  %v5876 = vld [vmem:[#allocation2 + $0x1378] sm:$0xff]
  %v5877 = vld [vmem:[#allocation2 + $0x1380] sm:$0xff]
  %v5878 = vld [vmem:[#allocation2 + $0x1388] sm:$0xff]
  %v5879 = vld [vmem:[#allocation2 + $0x1390] sm:$0xff]
  %v5880 = vld [vmem:[#allocation2 + $0x1398] sm:$0xff]
  %v5881 = vld [vmem:[#allocation2 + $0x13a0] sm:$0xff]
  %v5882 = vld [vmem:[#allocation2 + $0x13a8] sm:$0xff]
  %v5883 = vld [vmem:[#allocation2 + $0x13b0] sm:$0xff]
  %v5884 = vld [vmem:[#allocation2 + $0x13b8] sm:$0xff]
  %v5885 = vld [vmem:[#allocation2 + $0x13c0] sm:$0xff]
  %v5886 = vld [vmem:[#allocation2 + $0x13c8] sm:$0xff]
  %v5887 = vld [vmem:[#allocation2 + $0x13d0] sm:$0xff]
  %v5888 = vld [vmem:[#allocation2 + $0x13d8] sm:$0xff]
  %v5889 = vld [vmem:[#allocation2 + $0x13e0] sm:$0xff]
  %v5890 = vld [vmem:[#allocation2 + $0x13e8] sm:$0xff]
  %v5891 = vld [vmem:[#allocation2 + $0x13f0] sm:$0xff]
  %v5892 = vld [vmem:[#allocation2 + $0x13f8] sm:$0xff]
  %v5893 = vld [vmem:[#allocation2 + $0x1400] sm:$0xff]
  %v5894 = vld [vmem:[#allocation2 + $0x1408] sm:$0xff]
  %v5895 = vld [vmem:[#allocation2 + $0x1410] sm:$0xff]
  %v5896 = vld [vmem:[#allocation2 + $0x1418] sm:$0xff]
  %v5897 = vld [vmem:[#allocation2 + $0x1420] sm:$0xff]
  %v5898 = vld [vmem:[#allocation2 + $0x1428] sm:$0xff]
  %v5899 = vld [vmem:[#allocation2 + $0x1430] sm:$0xff]
  %v5900 = vld [vmem:[#allocation2 + $0x1438] sm:$0xff]
  %v5901 = vld [vmem:[#allocation2 + $0x1440] sm:$0xff]
  %v5902 = vld [vmem:[#allocation2 + $0x1448] sm:$0xff]
  %v5903 = vld [vmem:[#allocation2 + $0x1450] sm:$0xff]
  %v5904 = vld [vmem:[#allocation2 + $0x1458] sm:$0xff]
  %v5905 = vld [vmem:[#allocation2 + $0x1460] sm:$0xff]
  %v5906 = vld [vmem:[#allocation2 + $0x1468] sm:$0xff]
  %v5907 = vld [vmem:[#allocation2 + $0x1470] sm:$0xff]
  %v5908 = vld [vmem:[#allocation2 + $0x1478] sm:$0xff]
  %v5909 = vld [vmem:[#allocation2 + $0x1480] sm:$0xff]
  %v5910 = vld [vmem:[#allocation2 + $0x1488] sm:$0xff]
  %v5911 = vld [vmem:[#allocation2 + $0x1490] sm:$0xff]
  %v5912 = vld [vmem:[#allocation2 + $0x1498] sm:$0xff]
  %v5913 = vld [vmem:[#allocation2 + $0x14a0] sm:$0xff]
  %v5914 = vld [vmem:[#allocation2 + $0x14a8] sm:$0xff]
  %v5915 = vld [vmem:[#allocation2 + $0x14b0] sm:$0xff]
  %v5916 = vld [vmem:[#allocation2 + $0x14b8] sm:$0xff]
  %v5917 = vld [vmem:[#allocation2 + $0x14c0] sm:$0xff]
  %v5918 = vld [vmem:[#allocation2 + $0x14c8] sm:$0xff]
  %v5919 = vld [vmem:[#allocation2 + $0x14d0] sm:$0xff]
  %v5920 = vld [vmem:[#allocation2 + $0x14d8] sm:$0xff]
  %v5921 = vld [vmem:[#allocation2 + $0x14e0] sm:$0xff]
  %v5922 = vld [vmem:[#allocation2 + $0x14e8] sm:$0xff]
  %v5923 = vld [vmem:[#allocation2 + $0x14f0] sm:$0xff]
  %v5924 = vld [vmem:[#allocation2 + $0x14f8] sm:$0xff]
  %v5925 = vld [vmem:[#allocation2 + $0x1500] sm:$0xff]
  %v5926 = vld [vmem:[#allocation2 + $0x1508] sm:$0xff]
  %v5927 = vld [vmem:[#allocation2 + $0x1510] sm:$0xff]
  %v5928 = vld [vmem:[#allocation2 + $0x1518] sm:$0xff]
  %v5929 = vld [vmem:[#allocation2 + $0x1520] sm:$0xff]
  %v5930 = vld [vmem:[#allocation2 + $0x1528] sm:$0xff]
  %v5931 = vld [vmem:[#allocation2 + $0x1530] sm:$0xff]
  %v5932 = vld [vmem:[#allocation2 + $0x1538] sm:$0xff]
  %v5933 = vld [vmem:[#allocation2 + $0x1540] sm:$0xff]
  %v5934 = vld [vmem:[#allocation2 + $0x1548] sm:$0xff]
  %v5935 = vld [vmem:[#allocation2 + $0x1550] sm:$0xff]
  %v5936 = vld [vmem:[#allocation2 + $0x1558] sm:$0xff]
  %v5937 = vld [vmem:[#allocation2 + $0x1560] sm:$0xff]
  %v5938 = vld [vmem:[#allocation2 + $0x1568] sm:$0xff]
  %v5939 = vld [vmem:[#allocation2 + $0x1570] sm:$0xff]
  %v5940 = vld [vmem:[#allocation2 + $0x1578] sm:$0xff]
  %v5941 = vld [vmem:[#allocation2 + $0x1580] sm:$0xff]
  %v5942 = vld [vmem:[#allocation2 + $0x1588] sm:$0xff]
  %v5943 = vld [vmem:[#allocation2 + $0x1590] sm:$0xff]
  %v5944 = vld [vmem:[#allocation2 + $0x1598] sm:$0xff]
  %v5945 = vld [vmem:[#allocation2 + $0x15a0] sm:$0xff]
  %v5946 = vld [vmem:[#allocation2 + $0x15a8] sm:$0xff]
  %v5947 = vld [vmem:[#allocation2 + $0x15b0] sm:$0xff]
  %v5948 = vld [vmem:[#allocation2 + $0x15b8] sm:$0xff]
  %v5949 = vld [vmem:[#allocation2 + $0x15c0] sm:$0xff]
  %v5950 = vld [vmem:[#allocation2 + $0x15c8] sm:$0xff]
  %v5951 = vld [vmem:[#allocation2 + $0x15d0] sm:$0xff]
  %v5952 = vld [vmem:[#allocation2 + $0x15d8] sm:$0xff]
  %v5953 = vld [vmem:[#allocation2 + $0x15e0] sm:$0xff]
  %v5954 = vld [vmem:[#allocation2 + $0x15e8] sm:$0xff]
  %v5955 = vld [vmem:[#allocation2 + $0x15f0] sm:$0xff]
  %v5956 = vld [vmem:[#allocation2 + $0x15f8] sm:$0xff]
  %v5957 = vld [vmem:[%s10] sm:$0xf]
  %v5959 = vlaneseq
  %v5960 = vshrl.u32 %v5959, 7
  %v5961 = vsub.s32 0, %v5960
  %v5962 = vrot.slane %v5957, %v5961
  %v5963 = vlaneseq
  %v5964 = vshrl.u32 %v5963, 7
  %v5965 = vsub.s32 1, %v5964
  %v5966 = vrot.slane %v5957, %v5965
  %v5967 = vlaneseq
  %v5968 = vshrl.u32 %v5967, 7
  %v5969 = vsub.s32 2, %v5968
  %v5970 = vrot.slane %v5957, %v5969
  %v5971 = vlaneseq
  %v5972 = vshrl.u32 %v5971, 7
  %v5973 = vsub.s32 3, %v5972
  %v5974 = vrot.slane %v5957, %v5973
  %5979 = vmatprep.subr.mxu0 %v5314
  %5980 = vmatpush1.msra.mxu0 %v5313
  %5981 = vmatprep.subr.mxu0 %v5310
  %5982 = vmatpush1.msra.mxu0 %v5309
  %5983 = vmatprep.subr.mxu0 %v5306
  %5984 = vmatpush1.msra.mxu0 %v5305
  %5985 = vmatprep.subr.mxu0 %v5302
  %5986 = vmatpush1.msra.mxu0 %v5301
  %5987 = vmatprep.subr.mxu0 %v5298
  %5988 = vmatpush1.msra.mxu0 %v5297
  %5989 = vmatprep.subr.mxu0 %v5294
  %5990 = vmatpush1.msra.mxu0 %v5293
  %5991 = vmatprep.subr.mxu0 %v5290
  %5992 = vmatpush1.msra.mxu0 %v5289
  %5993 = vmatprep.subr.mxu0 %v5286
  %5994 = vmatpush1.msra.mxu0 %v5285
  %5995 = vmatprep.subr.mxu0 %v5282
  %5996 = vmatpush1.msra.mxu0 %v5281
  %5997 = vmatprep.subr.mxu0 %v5278
  %5998 = vmatpush1.msra.mxu0 %v5277
  %5999 = vmatprep.subr.mxu0 %v5274
  %6000 = vmatpush1.msra.mxu0 %v5273
  %6001 = vmatprep.subr.mxu0 %v5270
  %6002 = vmatpush1.msra.mxu0 %v5269
  %6003 = vmatprep.subr.mxu0 %v5266
  %6004 = vmatpush1.msra.mxu0 %v5265
  %6005 = vmatprep.subr.mxu0 %v5262
  %6006 = vmatpush1.msra.mxu0 %v5261
  %6007 = vmatprep.subr.mxu0 %v5258
  %6008 = vmatpush1.msra.mxu0 %v5257
  %6009 = vmatprep.subr.mxu0 %v5254
  %6010 = vmatpush1.msra.mxu0 %v5253
  %6011 = vmatprep.subr.mxu0 %v5378
  %6012 = vmatpush2.msra.mxu0 %v5377
  %6013 = vmatprep.subr.mxu0 %v5374
  %6014 = vmatpush2.msra.mxu0 %v5373
  %6015 = vmatprep.subr.mxu0 %v5370
  %6016 = vmatpush2.msra.mxu0 %v5369
  %6017 = vmatprep.subr.mxu0 %v5366
  %6018 = vmatpush2.msra.mxu0 %v5365
  %6019 = vmatprep.subr.mxu0 %v5362
  %6020 = vmatpush2.msra.mxu0 %v5361
  %6021 = vmatprep.subr.mxu0 %v5358
  %6022 = vmatpush2.msra.mxu0 %v5357
  %6023 = vmatprep.subr.mxu0 %v5354
  %6024 = vmatpush2.msra.mxu0 %v5353
  %6025 = vmatprep.subr.mxu0 %v5350
  %6026 = vmatpush2.msra.mxu0 %v5349
  %6027 = vmatprep.subr.mxu0 %v5346
  %6028 = vmatpush2.msra.mxu0 %v5345
  %6029 = vmatprep.subr.mxu0 %v5342
  %6030 = vmatpush2.msra.mxu0 %v5341
  %6031 = vmatprep.subr.mxu0 %v5338
  %6032 = vmatpush2.msra.mxu0 %v5337
  %6033 = vmatprep.subr.mxu0 %v5334
  %6034 = vmatpush2.msra.mxu0 %v5333
  %6035 = vmatprep.subr.mxu0 %v5330
  %6036 = vmatpush2.msra.mxu0 %v5329
  %6037 = vmatprep.subr.mxu0 %v5326
  %6038 = vmatpush2.msra.mxu0 %v5325
  %6039 = vmatprep.subr.mxu0 %v5322
  %6040 = vmatpush2.msra.mxu0 %v5321
  %6041 = vmatprep.subr.mxu0 %v5318
  %6042 = vmatpush2.msra.mxu0 %v5317
  %6043 = vmatprep.mubr.f32.mxu0 %v5239
  %6044 = vmatmul.mubr.f32.gmra.mxu0 %v5238
  %v6045 = vpop.f32.mrf.mxu0
  %v6046 = vadd.f32 %v5962, %v6045
  %v6047 = vpop.f32.mrf.mxu0
  %v6048 = vadd.f32 %v5966, %v6047
  %6049 = vdwg.mxu0
  %6050 = vmatprep.subr.mxu0 %v5442
  %6051 = vmatpush1.msra.mxu0 %v5441
  %6052 = vmatprep.subr.mxu0 %v5438
  %6053 = vmatpush1.msra.mxu0 %v5437
  %6054 = vmatprep.subr.mxu0 %v5434
  %6055 = vmatpush1.msra.mxu0 %v5433
  %6056 = vmatprep.subr.mxu0 %v5430
  %6057 = vmatpush1.msra.mxu0 %v5429
  %6058 = vmatprep.subr.mxu0 %v5426
  %6059 = vmatpush1.msra.mxu0 %v5425
  %6060 = vmatprep.subr.mxu0 %v5422
  %6061 = vmatpush1.msra.mxu0 %v5421
  %6062 = vmatprep.subr.mxu0 %v5418
  %6063 = vmatpush1.msra.mxu0 %v5417
  %6064 = vmatprep.subr.mxu0 %v5414
  %6065 = vmatpush1.msra.mxu0 %v5413
  %6066 = vmatprep.subr.mxu0 %v5410
  %6067 = vmatpush1.msra.mxu0 %v5409
  %6068 = vmatprep.subr.mxu0 %v5406
  %6069 = vmatpush1.msra.mxu0 %v5405
  %6070 = vmatprep.subr.mxu0 %v5402
  %6071 = vmatpush1.msra.mxu0 %v5401
  %6072 = vmatprep.subr.mxu0 %v5398
  %6073 = vmatpush1.msra.mxu0 %v5397
  %6074 = vmatprep.subr.mxu0 %v5394
  %6075 = vmatpush1.msra.mxu0 %v5393
  %6076 = vmatprep.subr.mxu0 %v5390
  %6077 = vmatpush1.msra.mxu0 %v5389
  %6078 = vmatprep.subr.mxu0 %v5386
  %6079 = vmatpush1.msra.mxu0 %v5385
  %6080 = vmatprep.subr.mxu0 %v5382
  %6081 = vmatpush1.msra.mxu0 %v5381
  %6082 = vmatprep.subr.mxu0 %v5506
  %6083 = vmatpush2.msra.mxu0 %v5505
  %6084 = vmatprep.subr.mxu0 %v5502
  %6085 = vmatpush2.msra.mxu0 %v5501
  %6086 = vmatprep.subr.mxu0 %v5498
  %6087 = vmatpush2.msra.mxu0 %v5497
  %6088 = vmatprep.subr.mxu0 %v5494
  %6089 = vmatpush2.msra.mxu0 %v5493
  %6090 = vmatprep.subr.mxu0 %v5490
  %6091 = vmatpush2.msra.mxu0 %v5489
  %6092 = vmatprep.subr.mxu0 %v5486
  %6093 = vmatpush2.msra.mxu0 %v5485
  %6094 = vmatprep.subr.mxu0 %v5482
  %6095 = vmatpush2.msra.mxu0 %v5481
  %6096 = vmatprep.subr.mxu0 %v5478
  %6097 = vmatpush2.msra.mxu0 %v5477
  %6098 = vmatprep.subr.mxu0 %v5474
  %6099 = vmatpush2.msra.mxu0 %v5473
  %6100 = vmatprep.subr.mxu0 %v5470
  %6101 = vmatpush2.msra.mxu0 %v5469
  %6102 = vmatprep.subr.mxu0 %v5466
  %6103 = vmatpush2.msra.mxu0 %v5465
  %6104 = vmatprep.subr.mxu0 %v5462
  %6105 = vmatpush2.msra.mxu0 %v5461
  %6106 = vmatprep.subr.mxu0 %v5458
  %6107 = vmatpush2.msra.mxu0 %v5457
  %6108 = vmatprep.subr.mxu0 %v5454
  %6109 = vmatpush2.msra.mxu0 %v5453
  %6110 = vmatprep.subr.mxu0 %v5450
  %6111 = vmatpush2.msra.mxu0 %v5449
  %6112 = vmatprep.subr.mxu0 %v5446
  %6113 = vmatpush2.msra.mxu0 %v5445
  %6114 = vmatprep.mubr.f32.mxu0 %v5241
  %6115 = vmatmul.mubr.f32.gmra.mxu0 %v5240
  %v6116 = vpop.f32.mrf.mxu0
  %v6117 = vadd.f32 %v6046, %v6116
  %v6118 = vpop.f32.mrf.mxu0
  %v6119 = vadd.f32 %v6048, %v6118
  %6120 = vdwg.mxu0
  %6121 = vmatprep.subr.mxu0 %v5570
  %6122 = vmatpush1.msra.mxu0 %v5569
  %6123 = vmatprep.subr.mxu0 %v5566
  %6124 = vmatpush1.msra.mxu0 %v5565
  %6125 = vmatprep.subr.mxu0 %v5562
  %6126 = vmatpush1.msra.mxu0 %v5561
  %6127 = vmatprep.subr.mxu0 %v5558
  %6128 = vmatpush1.msra.mxu0 %v5557
  %6129 = vmatprep.subr.mxu0 %v5554
  %6130 = vmatpush1.msra.mxu0 %v5553
  %6131 = vmatprep.subr.mxu0 %v5550
  %6132 = vmatpush1.msra.mxu0 %v5549
  %6133 = vmatprep.subr.mxu0 %v5546
  %6134 = vmatpush1.msra.mxu0 %v5545
  %6135 = vmatprep.subr.mxu0 %v5542
  %6136 = vmatpush1.msra.mxu0 %v5541
  %6137 = vmatprep.subr.mxu0 %v5538
  %6138 = vmatpush1.msra.mxu0 %v5537
  %6139 = vmatprep.subr.mxu0 %v5534
  %6140 = vmatpush1.msra.mxu0 %v5533
  %6141 = vmatprep.subr.mxu0 %v5530
  %6142 = vmatpush1.msra.mxu0 %v5529
  %6143 = vmatprep.subr.mxu0 %v5526
  %6144 = vmatpush1.msra.mxu0 %v5525
  %6145 = vmatprep.subr.mxu0 %v5522
  %6146 = vmatpush1.msra.mxu0 %v5521
  %6147 = vmatprep.subr.mxu0 %v5518
  %6148 = vmatpush1.msra.mxu0 %v5517
  %6149 = vmatprep.subr.mxu0 %v5514
  %6150 = vmatpush1.msra.mxu0 %v5513
  %6151 = vmatprep.subr.mxu0 %v5510
  %6152 = vmatpush1.msra.mxu0 %v5509
  %6153 = vmatprep.subr.mxu0 %v5634
  %6154 = vmatpush2.msra.mxu0 %v5633
  %6155 = vmatprep.subr.mxu0 %v5630
  %6156 = vmatpush2.msra.mxu0 %v5629
  %6157 = vmatprep.subr.mxu0 %v5626
  %6158 = vmatpush2.msra.mxu0 %v5625
  %6159 = vmatprep.subr.mxu0 %v5622
  %6160 = vmatpush2.msra.mxu0 %v5621
  %6161 = vmatprep.subr.mxu0 %v5618
  %6162 = vmatpush2.msra.mxu0 %v5617
  %6163 = vmatprep.subr.mxu0 %v5614
  %6164 = vmatpush2.msra.mxu0 %v5613
  %6165 = vmatprep.subr.mxu0 %v5610
  %6166 = vmatpush2.msra.mxu0 %v5609
  %6167 = vmatprep.subr.mxu0 %v5606
  %6168 = vmatpush2.msra.mxu0 %v5605
  %6169 = vmatprep.subr.mxu0 %v5602
  %6170 = vmatpush2.msra.mxu0 %v5601
  %6171 = vmatprep.subr.mxu0 %v5598
  %6172 = vmatpush2.msra.mxu0 %v5597
  %6173 = vmatprep.subr.mxu0 %v5594
  %6174 = vmatpush2.msra.mxu0 %v5593
  %6175 = vmatprep.subr.mxu0 %v5590
  %6176 = vmatpush2.msra.mxu0 %v5589
  %6177 = vmatprep.subr.mxu0 %v5586
  %6178 = vmatpush2.msra.mxu0 %v5585
  %6179 = vmatprep.subr.mxu0 %v5582
  %6180 = vmatpush2.msra.mxu0 %v5581
  %6181 = vmatprep.subr.mxu0 %v5578
  %6182 = vmatpush2.msra.mxu0 %v5577
  %6183 = vmatprep.subr.mxu0 %v5574
  %6184 = vmatpush2.msra.mxu0 %v5573
  %6185 = vmatprep.mubr.f32.mxu0 %v5243
  %6186 = vmatmul.mubr.f32.gmra.mxu0 %v5242
  %v6187 = vpop.f32.mrf.mxu0
  %v6188 = vadd.f32 %v6117, %v6187
  %v6189 = vpop.f32.mrf.mxu0
  %v6190 = vadd.f32 %v6119, %v6189
  %6191 = vdwg.mxu0
  %6192 = vmatprep.subr.mxu0 %v5698
  %6193 = vmatpush1.msra.mxu0 %v5697
  %6194 = vmatprep.subr.mxu0 %v5694
  %6195 = vmatpush1.msra.mxu0 %v5693
  %6196 = vmatprep.subr.mxu0 %v5690
  %6197 = vmatpush1.msra.mxu0 %v5689
  %6198 = vmatprep.subr.mxu0 %v5686
  %6199 = vmatpush1.msra.mxu0 %v5685
  %6200 = vmatprep.subr.mxu0 %v5682
  %6201 = vmatpush1.msra.mxu0 %v5681
  %6202 = vmatprep.subr.mxu0 %v5678
  %6203 = vmatpush1.msra.mxu0 %v5677
  %6204 = vmatprep.subr.mxu0 %v5674
  %6205 = vmatpush1.msra.mxu0 %v5673
  %6206 = vmatprep.subr.mxu0 %v5670
  %6207 = vmatpush1.msra.mxu0 %v5669
  %6208 = vmatprep.subr.mxu0 %v5666
  %6209 = vmatpush1.msra.mxu0 %v5665
  %6210 = vmatprep.subr.mxu0 %v5662
  %6211 = vmatpush1.msra.mxu0 %v5661
  %6212 = vmatprep.subr.mxu0 %v5658
  %6213 = vmatpush1.msra.mxu0 %v5657
  %6214 = vmatprep.subr.mxu0 %v5654
  %6215 = vmatpush1.msra.mxu0 %v5653
  %6216 = vmatprep.subr.mxu0 %v5650
  %6217 = vmatpush1.msra.mxu0 %v5649
  %6218 = vmatprep.subr.mxu0 %v5646
  %6219 = vmatpush1.msra.mxu0 %v5645
  %6220 = vmatprep.subr.mxu0 %v5642
  %6221 = vmatpush1.msra.mxu0 %v5641
  %6222 = vmatprep.subr.mxu0 %v5638
  %6223 = vmatpush1.msra.mxu0 %v5637
  %6224 = vmatprep.subr.mxu0 %v5762
  %6225 = vmatpush2.msra.mxu0 %v5761
  %6226 = vmatprep.subr.mxu0 %v5758
  %6227 = vmatpush2.msra.mxu0 %v5757
  %6228 = vmatprep.subr.mxu0 %v5754
  %6229 = vmatpush2.msra.mxu0 %v5753
  %6230 = vmatprep.subr.mxu0 %v5750
  %6231 = vmatpush2.msra.mxu0 %v5749
  %6232 = vmatprep.subr.mxu0 %v5746
  %6233 = vmatpush2.msra.mxu0 %v5745
  %6234 = vmatprep.subr.mxu0 %v5742
  %6235 = vmatpush2.msra.mxu0 %v5741
  %6236 = vmatprep.subr.mxu0 %v5738
  %6237 = vmatpush2.msra.mxu0 %v5737
  %6238 = vmatprep.subr.mxu0 %v5734
  %6239 = vmatpush2.msra.mxu0 %v5733
  %6240 = vmatprep.subr.mxu0 %v5730
  %6241 = vmatpush2.msra.mxu0 %v5729
  %6242 = vmatprep.subr.mxu0 %v5726
  %6243 = vmatpush2.msra.mxu0 %v5725
  %6244 = vmatprep.subr.mxu0 %v5722
  %6245 = vmatpush2.msra.mxu0 %v5721
  %6246 = vmatprep.subr.mxu0 %v5718
  %6247 = vmatpush2.msra.mxu0 %v5717
  %6248 = vmatprep.subr.mxu0 %v5714
  %6249 = vmatpush2.msra.mxu0 %v5713
  %6250 = vmatprep.subr.mxu0 %v5710
  %6251 = vmatpush2.msra.mxu0 %v5709
  %6252 = vmatprep.subr.mxu0 %v5706
  %6253 = vmatpush2.msra.mxu0 %v5705
  %6254 = vmatprep.subr.mxu0 %v5702
  %6255 = vmatpush2.msra.mxu0 %v5701
  %6256 = vmatprep.mubr.f32.mxu0 %v5245
  %6257 = vmatmul.mubr.f32.gmra.mxu0 %v5244
  %v6258 = vpop.f32.mrf.mxu0
  %v6259 = vadd.f32 %v6188, %v6258
  %v6260 = vpop.f32.mrf.mxu0
  %v6261 = vadd.f32 %v6190, %v6260
  %6262 = vdwg.mxu0
  %6263 = vmatprep.subr.mxu0 %v5826
  %6264 = vmatpush1.msra.mxu0 %v5825
  %6265 = vmatprep.subr.mxu0 %v5822
  %6266 = vmatpush1.msra.mxu0 %v5821
  %6267 = vmatprep.subr.mxu0 %v5818
  %6268 = vmatpush1.msra.mxu0 %v5817
  %6269 = vmatprep.subr.mxu0 %v5814
  %6270 = vmatpush1.msra.mxu0 %v5813
  %6271 = vmatprep.subr.mxu0 %v5810
  %6272 = vmatpush1.msra.mxu0 %v5809
  %6273 = vmatprep.subr.mxu0 %v5806
  %6274 = vmatpush1.msra.mxu0 %v5805
  %6275 = vmatprep.subr.mxu0 %v5802
  %6276 = vmatpush1.msra.mxu0 %v5801
  %6277 = vmatprep.subr.mxu0 %v5798
  %6278 = vmatpush1.msra.mxu0 %v5797
  %6279 = vmatprep.subr.mxu0 %v5794
  %6280 = vmatpush1.msra.mxu0 %v5793
  %6281 = vmatprep.subr.mxu0 %v5790
  %6282 = vmatpush1.msra.mxu0 %v5789
  %6283 = vmatprep.subr.mxu0 %v5786
  %6284 = vmatpush1.msra.mxu0 %v5785
  %6285 = vmatprep.subr.mxu0 %v5782
  %6286 = vmatpush1.msra.mxu0 %v5781
  %6287 = vmatprep.subr.mxu0 %v5778
  %6288 = vmatpush1.msra.mxu0 %v5777
  %6289 = vmatprep.subr.mxu0 %v5774
  %6290 = vmatpush1.msra.mxu0 %v5773
  %6291 = vmatprep.subr.mxu0 %v5770
  %6292 = vmatpush1.msra.mxu0 %v5769
  %6293 = vmatprep.subr.mxu0 %v5766
  %6294 = vmatpush1.msra.mxu0 %v5765
  %6295 = vmatprep.subr.mxu0 %v5890
  %6296 = vmatpush2.msra.mxu0 %v5889
  %6297 = vmatprep.subr.mxu0 %v5886
  %6298 = vmatpush2.msra.mxu0 %v5885
  %6299 = vmatprep.subr.mxu0 %v5882
  %6300 = vmatpush2.msra.mxu0 %v5881
  %6301 = vmatprep.subr.mxu0 %v5878
  %6302 = vmatpush2.msra.mxu0 %v5877
  %6303 = vmatprep.subr.mxu0 %v5874
  %6304 = vmatpush2.msra.mxu0 %v5873
  %6305 = vmatprep.subr.mxu0 %v5870
  %6306 = vmatpush2.msra.mxu0 %v5869
  %6307 = vmatprep.subr.mxu0 %v5866
  %6308 = vmatpush2.msra.mxu0 %v5865
  %6309 = vmatprep.subr.mxu0 %v5862
  %6310 = vmatpush2.msra.mxu0 %v5861
  %6311 = vmatprep.subr.mxu0 %v5858
  %6312 = vmatpush2.msra.mxu0 %v5857
  %6313 = vmatprep.subr.mxu0 %v5854
  %6314 = vmatpush2.msra.mxu0 %v5853
  %6315 = vmatprep.subr.mxu0 %v5850
  %6316 = vmatpush2.msra.mxu0 %v5849
  %6317 = vmatprep.subr.mxu0 %v5846
  %6318 = vmatpush2.msra.mxu0 %v5845
  %6319 = vmatprep.subr.mxu0 %v5842
  %6320 = vmatpush2.msra.mxu0 %v5841
  %6321 = vmatprep.subr.mxu0 %v5838
  %6322 = vmatpush2.msra.mxu0 %v5837
  %6323 = vmatprep.subr.mxu0 %v5834
  %6324 = vmatpush2.msra.mxu0 %v5833
  %6325 = vmatprep.subr.mxu0 %v5830
  %6326 = vmatpush2.msra.mxu0 %v5829
  %6327 = vmatprep.mubr.f32.mxu0 %v5247
  %6328 = vmatmul.mubr.f32.gmra.mxu0 %v5246
  %v6329 = vpop.f32.mrf.mxu0
  %v6330 = vadd.f32 %v6259, %v6329
  %v6331 = vpop.f32.mrf.mxu0
  %v6332 = vadd.f32 %v6261, %v6331
  %6333 = vdwg.mxu0
  %6334 = vmatprep.subr.mxu0 %v5954
  %6335 = vmatpush1.msra.mxu0 %v5953
  %6336 = vmatprep.subr.mxu0 %v5950
  %6337 = vmatpush1.msra.mxu0 %v5949
  %6338 = vmatprep.subr.mxu0 %v5946
  %6339 = vmatpush1.msra.mxu0 %v5945
  %6340 = vmatprep.subr.mxu0 %v5942
  %6341 = vmatpush1.msra.mxu0 %v5941
  %6342 = vmatprep.subr.mxu0 %v5938
  %6343 = vmatpush1.msra.mxu0 %v5937
  %6344 = vmatprep.subr.mxu0 %v5934
  %6345 = vmatpush1.msra.mxu0 %v5933
  %6346 = vmatprep.subr.mxu0 %v5930
  %6347 = vmatpush1.msra.mxu0 %v5929
  %6348 = vmatprep.subr.mxu0 %v5926
  %6349 = vmatpush1.msra.mxu0 %v5925
  %6350 = vmatprep.subr.mxu0 %v5922
  %6351 = vmatpush1.msra.mxu0 %v5921
  %6352 = vmatprep.subr.mxu0 %v5918
  %6353 = vmatpush1.msra.mxu0 %v5917
  %6354 = vmatprep.subr.mxu0 %v5914
  %6355 = vmatpush1.msra.mxu0 %v5913
  %6356 = vmatprep.subr.mxu0 %v5910
  %6357 = vmatpush1.msra.mxu0 %v5909
  %6358 = vmatprep.subr.mxu0 %v5906
  %6359 = vmatpush1.msra.mxu0 %v5905
  %6360 = vmatprep.subr.mxu0 %v5902
  %6361 = vmatpush1.msra.mxu0 %v5901
  %6362 = vmatprep.subr.mxu0 %v5898
  %6363 = vmatpush1.msra.mxu0 %v5897
  %6364 = vmatprep.subr.mxu0 %v5894
  %6365 = vmatpush1.msra.mxu0 %v5893
  %6366 = vmatprep.subr.mxu0 0.0
  %6367 = vmatpush2.msra.mxu0 0.0
  %6368 = vmatprep.subr.mxu0 0.0
  %6369 = vmatpush2.msra.mxu0 0.0
  %6370 = vmatprep.subr.mxu0 0.0
  %6371 = vmatpush2.msra.mxu0 0.0
  %6372 = vmatprep.subr.mxu0 0.0
  %6373 = vmatpush2.msra.mxu0 0.0
  %6374 = vmatprep.subr.mxu0 0.0
  %6375 = vmatpush2.msra.mxu0 0.0
  %6376 = vmatprep.subr.mxu0 0.0
  %6377 = vmatpush2.msra.mxu0 0.0
  %6378 = vmatprep.subr.mxu0 0.0
  %6379 = vmatpush2.msra.mxu0 0.0
  %6380 = vmatprep.subr.mxu0 0.0
  %6381 = vmatpush2.msra.mxu0 0.0
  %6382 = vmatprep.subr.mxu0 0.0
  %6383 = vmatpush2.msra.mxu0 0.0
  %6384 = vmatprep.subr.mxu0 0.0
  %6385 = vmatpush2.msra.mxu0 0.0
  %6386 = vmatprep.subr.mxu0 0.0
  %6387 = vmatpush2.msra.mxu0 0.0
  %6388 = vmatprep.subr.mxu0 0.0
  %6389 = vmatpush2.msra.mxu0 0.0
  %6390 = vmatprep.subr.mxu0 0.0
  %6391 = vmatpush2.msra.mxu0 0.0
  %6392 = vmatprep.subr.mxu0 0.0
  %6393 = vmatpush2.msra.mxu0 0.0
  %6394 = vmatprep.subr.mxu0 0.0
  %6395 = vmatpush2.msra.mxu0 0.0
  %6396 = vmatprep.subr.mxu0 0.0
  %6397 = vmatpush2.msra.mxu0 0.0
  %6398 = vmatprep.mubr.f32.mxu0 0.0
  %6399 = vmatmul.mubr.f32.gmra.mxu0 %v5248
  %v6400 = vpop.f32.mrf.mxu0
  %v6401 = vadd.f32 %v6330, %v6400
  %v6402 = vpop.f32.mrf.mxu0
  %v6403 = vadd.f32 %v6332, %v6402
  %6404 = vdwg.mxu0
  %6405 = vmatprep.subr.mxu0 %v5316
  %6406 = vmatpush1.msra.mxu0 %v5315
  %6407 = vmatprep.subr.mxu0 %v5312
  %6408 = vmatpush1.msra.mxu0 %v5311
  %6409 = vmatprep.subr.mxu0 %v5308
  %6410 = vmatpush1.msra.mxu0 %v5307
  %6411 = vmatprep.subr.mxu0 %v5304
  %6412 = vmatpush1.msra.mxu0 %v5303
  %6413 = vmatprep.subr.mxu0 %v5300
  %6414 = vmatpush1.msra.mxu0 %v5299
  %6415 = vmatprep.subr.mxu0 %v5296
  %6416 = vmatpush1.msra.mxu0 %v5295
  %6417 = vmatprep.subr.mxu0 %v5292
  %6418 = vmatpush1.msra.mxu0 %v5291
  %6419 = vmatprep.subr.mxu0 %v5288
  %6420 = vmatpush1.msra.mxu0 %v5287
  %6421 = vmatprep.subr.mxu0 %v5284
  %6422 = vmatpush1.msra.mxu0 %v5283
  %6423 = vmatprep.subr.mxu0 %v5280
  %6424 = vmatpush1.msra.mxu0 %v5279
  %6425 = vmatprep.subr.mxu0 %v5276
  %6426 = vmatpush1.msra.mxu0 %v5275
  %6427 = vmatprep.subr.mxu0 %v5272
  %6428 = vmatpush1.msra.mxu0 %v5271
  %6429 = vmatprep.subr.mxu0 %v5268
  %6430 = vmatpush1.msra.mxu0 %v5267
  %6431 = vmatprep.subr.mxu0 %v5264
  %6432 = vmatpush1.msra.mxu0 %v5263
  %6433 = vmatprep.subr.mxu0 %v5260
  %6434 = vmatpush1.msra.mxu0 %v5259
  %6435 = vmatprep.subr.mxu0 %v5256
  %6436 = vmatpush1.msra.mxu0 %v5255
  %6437 = vmatprep.subr.mxu0 %v5380
  %6438 = vmatpush2.msra.mxu0 %v5379
  %6439 = vmatprep.subr.mxu0 %v5376
  %6440 = vmatpush2.msra.mxu0 %v5375
  %6441 = vmatprep.subr.mxu0 %v5372
  %6442 = vmatpush2.msra.mxu0 %v5371
  %6443 = vmatprep.subr.mxu0 %v5368
  %6444 = vmatpush2.msra.mxu0 %v5367
  %6445 = vmatprep.subr.mxu0 %v5364
  %6446 = vmatpush2.msra.mxu0 %v5363
  %6447 = vmatprep.subr.mxu0 %v5360
  %6448 = vmatpush2.msra.mxu0 %v5359
  %6449 = vmatprep.subr.mxu0 %v5356
  %6450 = vmatpush2.msra.mxu0 %v5355
  %6451 = vmatprep.subr.mxu0 %v5352
  %6452 = vmatpush2.msra.mxu0 %v5351
  %6453 = vmatprep.subr.mxu0 %v5348
  %6454 = vmatpush2.msra.mxu0 %v5347
  %6455 = vmatprep.subr.mxu0 %v5344
  %6456 = vmatpush2.msra.mxu0 %v5343
  %6457 = vmatprep.subr.mxu0 %v5340
  %6458 = vmatpush2.msra.mxu0 %v5339
  %6459 = vmatprep.subr.mxu0 %v5336
  %6460 = vmatpush2.msra.mxu0 %v5335
  %6461 = vmatprep.subr.mxu0 %v5332
  %6462 = vmatpush2.msra.mxu0 %v5331
  %6463 = vmatprep.subr.mxu0 %v5328
  %6464 = vmatpush2.msra.mxu0 %v5327
  %6465 = vmatprep.subr.mxu0 %v5324
  %6466 = vmatpush2.msra.mxu0 %v5323
  %6467 = vmatprep.subr.mxu0 %v5320
  %6468 = vmatpush2.msra.mxu0 %v5319
  %6469 = vmatprep.mubr.f32.mxu0 %v5239
  %6470 = vmatmul.mubr.f32.gmra.mxu0 %v5238
  %v6471 = vpop.f32.mrf.mxu0
  %v6472 = vadd.f32 %v5970, %v6471
  %v6473 = vpop.f32.mrf.mxu0
  %v6474 = vadd.f32 %v5974, %v6473
  %6475 = vdwg.mxu0
  %6476 = vmatprep.subr.mxu0 %v5444
  %6477 = vmatpush1.msra.mxu0 %v5443
  %6478 = vmatprep.subr.mxu0 %v5440
  %6479 = vmatpush1.msra.mxu0 %v5439
  %6480 = vmatprep.subr.mxu0 %v5436
  %6481 = vmatpush1.msra.mxu0 %v5435
  %6482 = vmatprep.subr.mxu0 %v5432
  %6483 = vmatpush1.msra.mxu0 %v5431
  %6484 = vmatprep.subr.mxu0 %v5428
  %6485 = vmatpush1.msra.mxu0 %v5427
  %6486 = vmatprep.subr.mxu0 %v5424
  %6487 = vmatpush1.msra.mxu0 %v5423
  %6488 = vmatprep.subr.mxu0 %v5420
  %6489 = vmatpush1.msra.mxu0 %v5419
  %6490 = vmatprep.subr.mxu0 %v5416
  %6491 = vmatpush1.msra.mxu0 %v5415
  %6492 = vmatprep.subr.mxu0 %v5412
  %6493 = vmatpush1.msra.mxu0 %v5411
  %6494 = vmatprep.subr.mxu0 %v5408
  %6495 = vmatpush1.msra.mxu0 %v5407
  %6496 = vmatprep.subr.mxu0 %v5404
  %6497 = vmatpush1.msra.mxu0 %v5403
  %6498 = vmatprep.subr.mxu0 %v5400
  %6499 = vmatpush1.msra.mxu0 %v5399
  %6500 = vmatprep.subr.mxu0 %v5396
  %6501 = vmatpush1.msra.mxu0 %v5395
  %6502 = vmatprep.subr.mxu0 %v5392
  %6503 = vmatpush1.msra.mxu0 %v5391
  %6504 = vmatprep.subr.mxu0 %v5388
  %6505 = vmatpush1.msra.mxu0 %v5387
  %6506 = vmatprep.subr.mxu0 %v5384
  %6507 = vmatpush1.msra.mxu0 %v5383
  %6508 = vmatprep.subr.mxu0 %v5508
  %6509 = vmatpush2.msra.mxu0 %v5507
  %6510 = vmatprep.subr.mxu0 %v5504
  %6511 = vmatpush2.msra.mxu0 %v5503
  %6512 = vmatprep.subr.mxu0 %v5500
  %6513 = vmatpush2.msra.mxu0 %v5499
  %6514 = vmatprep.subr.mxu0 %v5496
  %6515 = vmatpush2.msra.mxu0 %v5495
  %6516 = vmatprep.subr.mxu0 %v5492
  %6517 = vmatpush2.msra.mxu0 %v5491
  %6518 = vmatprep.subr.mxu0 %v5488
  %6519 = vmatpush2.msra.mxu0 %v5487
  %6520 = vmatprep.subr.mxu0 %v5484
  %6521 = vmatpush2.msra.mxu0 %v5483
  %6522 = vmatprep.subr.mxu0 %v5480
  %6523 = vmatpush2.msra.mxu0 %v5479
  %6524 = vmatprep.subr.mxu0 %v5476
  %6525 = vmatpush2.msra.mxu0 %v5475
  %6526 = vmatprep.subr.mxu0 %v5472
  %6527 = vmatpush2.msra.mxu0 %v5471
  %6528 = vmatprep.subr.mxu0 %v5468
  %6529 = vmatpush2.msra.mxu0 %v5467
  %6530 = vmatprep.subr.mxu0 %v5464
  %6531 = vmatpush2.msra.mxu0 %v5463
  %6532 = vmatprep.subr.mxu0 %v5460
  %6533 = vmatpush2.msra.mxu0 %v5459
  %6534 = vmatprep.subr.mxu0 %v5456
  %6535 = vmatpush2.msra.mxu0 %v5455
  %6536 = vmatprep.subr.mxu0 %v5452
  %6537 = vmatpush2.msra.mxu0 %v5451
  %6538 = vmatprep.subr.mxu0 %v5448
  %6539 = vmatpush2.msra.mxu0 %v5447
  %6540 = vmatprep.mubr.f32.mxu0 %v5241
  %6541 = vmatmul.mubr.f32.gmra.mxu0 %v5240
  %v6542 = vpop.f32.mrf.mxu0
  %v6543 = vadd.f32 %v6472, %v6542
  %v6544 = vpop.f32.mrf.mxu0
  %v6545 = vadd.f32 %v6474, %v6544
  %6546 = vdwg.mxu0
  %6547 = vmatprep.subr.mxu0 %v5572
  %6548 = vmatpush1.msra.mxu0 %v5571
  %6549 = vmatprep.subr.mxu0 %v5568
  %6550 = vmatpush1.msra.mxu0 %v5567
  %6551 = vmatprep.subr.mxu0 %v5564
  %6552 = vmatpush1.msra.mxu0 %v5563
  %6553 = vmatprep.subr.mxu0 %v5560
  %6554 = vmatpush1.msra.mxu0 %v5559
  %6555 = vmatprep.subr.mxu0 %v5556
  %6556 = vmatpush1.msra.mxu0 %v5555
  %6557 = vmatprep.subr.mxu0 %v5552
  %6558 = vmatpush1.msra.mxu0 %v5551
  %6559 = vmatprep.subr.mxu0 %v5548
  %6560 = vmatpush1.msra.mxu0 %v5547
  %6561 = vmatprep.subr.mxu0 %v5544
  %6562 = vmatpush1.msra.mxu0 %v5543
  %6563 = vmatprep.subr.mxu0 %v5540
  %6564 = vmatpush1.msra.mxu0 %v5539
  %6565 = vmatprep.subr.mxu0 %v5536
  %6566 = vmatpush1.msra.mxu0 %v5535
  %6567 = vmatprep.subr.mxu0 %v5532
  %6568 = vmatpush1.msra.mxu0 %v5531
  %6569 = vmatprep.subr.mxu0 %v5528
  %6570 = vmatpush1.msra.mxu0 %v5527
  %6571 = vmatprep.subr.mxu0 %v5524
  %6572 = vmatpush1.msra.mxu0 %v5523
  %6573 = vmatprep.subr.mxu0 %v5520
  %6574 = vmatpush1.msra.mxu0 %v5519
  %6575 = vmatprep.subr.mxu0 %v5516
  %6576 = vmatpush1.msra.mxu0 %v5515
  %6577 = vmatprep.subr.mxu0 %v5512
  %6578 = vmatpush1.msra.mxu0 %v5511
  %6579 = vmatprep.subr.mxu0 %v5636
  %6580 = vmatpush2.msra.mxu0 %v5635
  %6581 = vmatprep.subr.mxu0 %v5632
  %6582 = vmatpush2.msra.mxu0 %v5631
  %6583 = vmatprep.subr.mxu0 %v5628
  %6584 = vmatpush2.msra.mxu0 %v5627
  %6585 = vmatprep.subr.mxu0 %v5624
  %6586 = vmatpush2.msra.mxu0 %v5623
  %6587 = vmatprep.subr.mxu0 %v5620
  %6588 = vmatpush2.msra.mxu0 %v5619
  %6589 = vmatprep.subr.mxu0 %v5616
  %6590 = vmatpush2.msra.mxu0 %v5615
  %6591 = vmatprep.subr.mxu0 %v5612
  %6592 = vmatpush2.msra.mxu0 %v5611
  %6593 = vmatprep.subr.mxu0 %v5608
  %6594 = vmatpush2.msra.mxu0 %v5607
  %6595 = vmatprep.subr.mxu0 %v5604
  %6596 = vmatpush2.msra.mxu0 %v5603
  %6597 = vmatprep.subr.mxu0 %v5600
  %6598 = vmatpush2.msra.mxu0 %v5599
  %6599 = vmatprep.subr.mxu0 %v5596
  %6600 = vmatpush2.msra.mxu0 %v5595
  %6601 = vmatprep.subr.mxu0 %v5592
  %6602 = vmatpush2.msra.mxu0 %v5591
  %6603 = vmatprep.subr.mxu0 %v5588
  %6604 = vmatpush2.msra.mxu0 %v5587
  %6605 = vmatprep.subr.mxu0 %v5584
  %6606 = vmatpush2.msra.mxu0 %v5583
  %6607 = vmatprep.subr.mxu0 %v5580
  %6608 = vmatpush2.msra.mxu0 %v5579
  %6609 = vmatprep.subr.mxu0 %v5576
  %6610 = vmatpush2.msra.mxu0 %v5575
  %6611 = vmatprep.mubr.f32.mxu0 %v5243
  %6612 = vmatmul.mubr.f32.gmra.mxu0 %v5242
  %v6613 = vpop.f32.mrf.mxu0
  %v6614 = vadd.f32 %v6543, %v6613
  %v6615 = vpop.f32.mrf.mxu0
  %v6616 = vadd.f32 %v6545, %v6615
  %6617 = vdwg.mxu0
  %6618 = vmatprep.subr.mxu0 %v5700
  %6619 = vmatpush1.msra.mxu0 %v5699
  %6620 = vmatprep.subr.mxu0 %v5696
  %6621 = vmatpush1.msra.mxu0 %v5695
  %6622 = vmatprep.subr.mxu0 %v5692
  %6623 = vmatpush1.msra.mxu0 %v5691
  %6624 = vmatprep.subr.mxu0 %v5688
  %6625 = vmatpush1.msra.mxu0 %v5687
  %6626 = vmatprep.subr.mxu0 %v5684
  %6627 = vmatpush1.msra.mxu0 %v5683
  %6628 = vmatprep.subr.mxu0 %v5680
  %6629 = vmatpush1.msra.mxu0 %v5679
  %6630 = vmatprep.subr.mxu0 %v5676
  %6631 = vmatpush1.msra.mxu0 %v5675
  %6632 = vmatprep.subr.mxu0 %v5672
  %6633 = vmatpush1.msra.mxu0 %v5671
  %6634 = vmatprep.subr.mxu0 %v5668
  %6635 = vmatpush1.msra.mxu0 %v5667
  %6636 = vmatprep.subr.mxu0 %v5664
  %6637 = vmatpush1.msra.mxu0 %v5663
  %6638 = vmatprep.subr.mxu0 %v5660
  %6639 = vmatpush1.msra.mxu0 %v5659
  %6640 = vmatprep.subr.mxu0 %v5656
  %6641 = vmatpush1.msra.mxu0 %v5655
  %6642 = vmatprep.subr.mxu0 %v5652
  %6643 = vmatpush1.msra.mxu0 %v5651
  %6644 = vmatprep.subr.mxu0 %v5648
  %6645 = vmatpush1.msra.mxu0 %v5647
  %6646 = vmatprep.subr.mxu0 %v5644
  %6647 = vmatpush1.msra.mxu0 %v5643
  %6648 = vmatprep.subr.mxu0 %v5640
  %6649 = vmatpush1.msra.mxu0 %v5639
  %6650 = vmatprep.subr.mxu0 %v5764
  %6651 = vmatpush2.msra.mxu0 %v5763
  %6652 = vmatprep.subr.mxu0 %v5760
  %6653 = vmatpush2.msra.mxu0 %v5759
  %6654 = vmatprep.subr.mxu0 %v5756
  %6655 = vmatpush2.msra.mxu0 %v5755
  %6656 = vmatprep.subr.mxu0 %v5752
  %6657 = vmatpush2.msra.mxu0 %v5751
  %6658 = vmatprep.subr.mxu0 %v5748
  %6659 = vmatpush2.msra.mxu0 %v5747
  %6660 = vmatprep.subr.mxu0 %v5744
  %6661 = vmatpush2.msra.mxu0 %v5743
  %6662 = vmatprep.subr.mxu0 %v5740
  %6663 = vmatpush2.msra.mxu0 %v5739
  %6664 = vmatprep.subr.mxu0 %v5736
  %6665 = vmatpush2.msra.mxu0 %v5735
  %6666 = vmatprep.subr.mxu0 %v5732
  %6667 = vmatpush2.msra.mxu0 %v5731
  %6668 = vmatprep.subr.mxu0 %v5728
  %6669 = vmatpush2.msra.mxu0 %v5727
  %6670 = vmatprep.subr.mxu0 %v5724
  %6671 = vmatpush2.msra.mxu0 %v5723
  %6672 = vmatprep.subr.mxu0 %v5720
  %6673 = vmatpush2.msra.mxu0 %v5719
  %6674 = vmatprep.subr.mxu0 %v5716
  %6675 = vmatpush2.msra.mxu0 %v5715
  %6676 = vmatprep.subr.mxu0 %v5712
  %6677 = vmatpush2.msra.mxu0 %v5711
  %6678 = vmatprep.subr.mxu0 %v5708
  %6679 = vmatpush2.msra.mxu0 %v5707
  %6680 = vmatprep.subr.mxu0 %v5704
  %6681 = vmatpush2.msra.mxu0 %v5703
  %6682 = vmatprep.mubr.f32.mxu0 %v5245
  %6683 = vmatmul.mubr.f32.gmra.mxu0 %v5244
  %v6684 = vpop.f32.mrf.mxu0
  %v6685 = vadd.f32 %v6614, %v6684
  %v6686 = vpop.f32.mrf.mxu0
  %v6687 = vadd.f32 %v6616, %v6686
  %6688 = vdwg.mxu0
  %6689 = vmatprep.subr.mxu0 %v5828
  %6690 = vmatpush1.msra.mxu0 %v5827
  %6691 = vmatprep.subr.mxu0 %v5824
  %6692 = vmatpush1.msra.mxu0 %v5823
  %6693 = vmatprep.subr.mxu0 %v5820
  %6694 = vmatpush1.msra.mxu0 %v5819
  %6695 = vmatprep.subr.mxu0 %v5816
  %6696 = vmatpush1.msra.mxu0 %v5815
  %6697 = vmatprep.subr.mxu0 %v5812
  %6698 = vmatpush1.msra.mxu0 %v5811
  %6699 = vmatprep.subr.mxu0 %v5808
  %6700 = vmatpush1.msra.mxu0 %v5807
  %6701 = vmatprep.subr.mxu0 %v5804
  %6702 = vmatpush1.msra.mxu0 %v5803
  %6703 = vmatprep.subr.mxu0 %v5800
  %6704 = vmatpush1.msra.mxu0 %v5799
  %6705 = vmatprep.subr.mxu0 %v5796
  %6706 = vmatpush1.msra.mxu0 %v5795
  %6707 = vmatprep.subr.mxu0 %v5792
  %6708 = vmatpush1.msra.mxu0 %v5791
  %6709 = vmatprep.subr.mxu0 %v5788
  %6710 = vmatpush1.msra.mxu0 %v5787
  %6711 = vmatprep.subr.mxu0 %v5784
  %6712 = vmatpush1.msra.mxu0 %v5783
  %6713 = vmatprep.subr.mxu0 %v5780
  %6714 = vmatpush1.msra.mxu0 %v5779
  %6715 = vmatprep.subr.mxu0 %v5776
  %6716 = vmatpush1.msra.mxu0 %v5775
  %6717 = vmatprep.subr.mxu0 %v5772
  %6718 = vmatpush1.msra.mxu0 %v5771
  %6719 = vmatprep.subr.mxu0 %v5768
  %6720 = vmatpush1.msra.mxu0 %v5767
  %6721 = vmatprep.subr.mxu0 %v5892
  %6722 = vmatpush2.msra.mxu0 %v5891
  %6723 = vmatprep.subr.mxu0 %v5888
  %6724 = vmatpush2.msra.mxu0 %v5887
  %6725 = vmatprep.subr.mxu0 %v5884
  %6726 = vmatpush2.msra.mxu0 %v5883
  %6727 = vmatprep.subr.mxu0 %v5880
  %6728 = vmatpush2.msra.mxu0 %v5879
  %6729 = vmatprep.subr.mxu0 %v5876
  %6730 = vmatpush2.msra.mxu0 %v5875
  %6731 = vmatprep.subr.mxu0 %v5872
  %6732 = vmatpush2.msra.mxu0 %v5871
  %6733 = vmatprep.subr.mxu0 %v5868
  %6734 = vmatpush2.msra.mxu0 %v5867
  %6735 = vmatprep.subr.mxu0 %v5864
  %6736 = vmatpush2.msra.mxu0 %v5863
  %6737 = vmatprep.subr.mxu0 %v5860
  %6738 = vmatpush2.msra.mxu0 %v5859
  %6739 = vmatprep.subr.mxu0 %v5856
  %6740 = vmatpush2.msra.mxu0 %v5855
  %6741 = vmatprep.subr.mxu0 %v5852
  %6742 = vmatpush2.msra.mxu0 %v5851
  %6743 = vmatprep.subr.mxu0 %v5848
  %6744 = vmatpush2.msra.mxu0 %v5847
  %6745 = vmatprep.subr.mxu0 %v5844
  %6746 = vmatpush2.msra.mxu0 %v5843
  %6747 = vmatprep.subr.mxu0 %v5840
  %6748 = vmatpush2.msra.mxu0 %v5839
  %6749 = vmatprep.subr.mxu0 %v5836
  %6750 = vmatpush2.msra.mxu0 %v5835
  %6751 = vmatprep.subr.mxu0 %v5832
  %6752 = vmatpush2.msra.mxu0 %v5831
  %6753 = vmatprep.mubr.f32.mxu0 %v5247
  %6754 = vmatmul.mubr.f32.gmra.mxu0 %v5246
  %v6755 = vpop.f32.mrf.mxu0
  %v6756 = vadd.f32 %v6685, %v6755
  %v6757 = vpop.f32.mrf.mxu0
  %v6758 = vadd.f32 %v6687, %v6757
  %6759 = vdwg.mxu0
  %6760 = vmatprep.subr.mxu0 %v5956
  %6761 = vmatpush1.msra.mxu0 %v5955
  %6762 = vmatprep.subr.mxu0 %v5952
  %6763 = vmatpush1.msra.mxu0 %v5951
  %6764 = vmatprep.subr.mxu0 %v5948
  %6765 = vmatpush1.msra.mxu0 %v5947
  %6766 = vmatprep.subr.mxu0 %v5944
  %6767 = vmatpush1.msra.mxu0 %v5943
  %6768 = vmatprep.subr.mxu0 %v5940
  %6769 = vmatpush1.msra.mxu0 %v5939
  %6770 = vmatprep.subr.mxu0 %v5936
  %6771 = vmatpush1.msra.mxu0 %v5935
  %6772 = vmatprep.subr.mxu0 %v5932
  %6773 = vmatpush1.msra.mxu0 %v5931
  %6774 = vmatprep.subr.mxu0 %v5928
  %6775 = vmatpush1.msra.mxu0 %v5927
  %6776 = vmatprep.subr.mxu0 %v5924
  %6777 = vmatpush1.msra.mxu0 %v5923
  %6778 = vmatprep.subr.mxu0 %v5920
  %6779 = vmatpush1.msra.mxu0 %v5919
  %6780 = vmatprep.subr.mxu0 %v5916
  %6781 = vmatpush1.msra.mxu0 %v5915
  %6782 = vmatprep.subr.mxu0 %v5912
  %6783 = vmatpush1.msra.mxu0 %v5911
  %6784 = vmatprep.subr.mxu0 %v5908
  %6785 = vmatpush1.msra.mxu0 %v5907
  %6786 = vmatprep.subr.mxu0 %v5904
  %6787 = vmatpush1.msra.mxu0 %v5903
  %6788 = vmatprep.subr.mxu0 %v5900
  %6789 = vmatpush1.msra.mxu0 %v5899
  %6790 = vmatprep.subr.mxu0 %v5896
  %6791 = vmatpush1.msra.mxu0 %v5895
  %6792 = vmatprep.subr.mxu0 0.0
  %6793 = vmatpush2.msra.mxu0 0.0
  %6794 = vmatprep.subr.mxu0 0.0
  %6795 = vmatpush2.msra.mxu0 0.0
  %6796 = vmatprep.subr.mxu0 0.0
  %6797 = vmatpush2.msra.mxu0 0.0
  %6798 = vmatprep.subr.mxu0 0.0
  %6799 = vmatpush2.msra.mxu0 0.0
  %6800 = vmatprep.subr.mxu0 0.0
  %6801 = vmatpush2.msra.mxu0 0.0
  %6802 = vmatprep.subr.mxu0 0.0
  %6803 = vmatpush2.msra.mxu0 0.0
  %6804 = vmatprep.subr.mxu0 0.0
  %6805 = vmatpush2.msra.mxu0 0.0
  %6806 = vmatprep.subr.mxu0 0.0
  %6807 = vmatpush2.msra.mxu0 0.0
  %6808 = vmatprep.subr.mxu0 0.0
  %6809 = vmatpush2.msra.mxu0 0.0
  %6810 = vmatprep.subr.mxu0 0.0
  %6811 = vmatpush2.msra.mxu0 0.0
  %6812 = vmatprep.subr.mxu0 0.0
  %6813 = vmatpush2.msra.mxu0 0.0
  %6814 = vmatprep.subr.mxu0 0.0
  %6815 = vmatpush2.msra.mxu0 0.0
  %6816 = vmatprep.subr.mxu0 0.0
  %6817 = vmatpush2.msra.mxu0 0.0
  %6818 = vmatprep.subr.mxu0 0.0
  %6819 = vmatpush2.msra.mxu0 0.0
  %6820 = vmatprep.subr.mxu0 0.0
  %6821 = vmatpush2.msra.mxu0 0.0
  %6822 = vmatprep.subr.mxu0 0.0
  %6823 = vmatpush2.msra.mxu0 0.0
  %6824 = vmatprep.mubr.f32.mxu0 0.0
  %6825 = vmatmul.mubr.f32.gmra.mxu0 %v5248
  %v6826 = vpop.f32.mrf.mxu0
  %v6827 = vadd.f32 %v6756, %v6826
  %v6828 = vpop.f32.mrf.mxu0
  %v6829 = vadd.f32 %v6758, %v6828
  %6830 = vdwg.mxu0
  %v6831 = vmul.f32 %v6401, 0.01
  %v6832 = vmul.f32 %v6403, 0.01
  %v6833 = vmul.f32 %v6827, 0.01
  %v6834 = vmul.f32 %v6829, 0.01
  %v6835 = vmax.f32 %v6401, %v6831
  %v6836 = vmax.f32 %v6403, %v6832
  %v6837 = vmax.f32 %v6827, %v6833
  %v6838 = vmax.f32 %v6829, %v6834
  %s6839 = smul.u32 8, 64
  %s6840 = smul.u32 %s6839, 2
  %s6841 = sshll.u32 %s6840, 4
  %6842 = dma.done %s1497, %s6841
  %v6843 = vld [vmem:[#allocation3] sm:$0xff]
  %v6844 = vld [vmem:[#allocation3 + $0x8] sm:$0xff]
  %v6845 = vld [vmem:[#allocation3 + $0x10] sm:$0xff]
  %v6846 = vld [vmem:[#allocation3 + $0x18] sm:$0xff]
  %v6847 = vld [vmem:[#allocation3 + $0x20] sm:$0xff]
  %v6848 = vld [vmem:[#allocation3 + $0x28] sm:$0xff]
  %v6849 = vld [vmem:[#allocation3 + $0x30] sm:$0xff]
  %v6850 = vld [vmem:[#allocation3 + $0x38] sm:$0xff]
  %v6851 = vld [vmem:[#allocation3 + $0x40] sm:$0xff]
  %v6852 = vld [vmem:[#allocation3 + $0x48] sm:$0xff]
  %v6853 = vld [vmem:[#allocation3 + $0x50] sm:$0xff]
  %v6854 = vld [vmem:[#allocation3 + $0x58] sm:$0xff]
  %v6855 = vld [vmem:[#allocation3 + $0x60] sm:$0xff]
  %v6856 = vld [vmem:[#allocation3 + $0x68] sm:$0xff]
  %v6857 = vld [vmem:[#allocation3 + $0x70] sm:$0xff]
  %v6858 = vld [vmem:[#allocation3 + $0x78] sm:$0xff]
  %v6859 = vld [vmem:[#allocation3 + $0x80] sm:$0xff]
  %v6860 = vld [vmem:[#allocation3 + $0x88] sm:$0xff]
  %v6861 = vld [vmem:[#allocation3 + $0x90] sm:$0xff]
  %v6862 = vld [vmem:[#allocation3 + $0x98] sm:$0xff]
  %v6863 = vld [vmem:[#allocation3 + $0xa0] sm:$0xff]
  %v6864 = vld [vmem:[#allocation3 + $0xa8] sm:$0xff]
  %v6865 = vld [vmem:[#allocation3 + $0xb0] sm:$0xff]
  %v6866 = vld [vmem:[#allocation3 + $0xb8] sm:$0xff]
  %v6867 = vld [vmem:[#allocation3 + $0xc0] sm:$0xff]
  %v6868 = vld [vmem:[#allocation3 + $0xc8] sm:$0xff]
  %v6869 = vld [vmem:[#allocation3 + $0xd0] sm:$0xff]
  %v6870 = vld [vmem:[#allocation3 + $0xd8] sm:$0xff]
  %v6871 = vld [vmem:[#allocation3 + $0xe0] sm:$0xff]
  %v6872 = vld [vmem:[#allocation3 + $0xe8] sm:$0xff]
  %v6873 = vld [vmem:[#allocation3 + $0xf0] sm:$0xff]
  %v6874 = vld [vmem:[#allocation3 + $0xf8] sm:$0xff]
  %v6875 = vld [vmem:[#allocation3 + $0x100] sm:$0xff]
  %v6876 = vld [vmem:[#allocation3 + $0x108] sm:$0xff]
  %v6877 = vld [vmem:[#allocation3 + $0x110] sm:$0xff]
  %v6878 = vld [vmem:[#allocation3 + $0x118] sm:$0xff]
  %v6879 = vld [vmem:[#allocation3 + $0x120] sm:$0xff]
  %v6880 = vld [vmem:[#allocation3 + $0x128] sm:$0xff]
  %v6881 = vld [vmem:[#allocation3 + $0x130] sm:$0xff]
  %v6882 = vld [vmem:[#allocation3 + $0x138] sm:$0xff]
  %v6883 = vld [vmem:[#allocation3 + $0x140] sm:$0xff]
  %v6884 = vld [vmem:[#allocation3 + $0x148] sm:$0xff]
  %v6885 = vld [vmem:[#allocation3 + $0x150] sm:$0xff]
  %v6886 = vld [vmem:[#allocation3 + $0x158] sm:$0xff]
  %v6887 = vld [vmem:[#allocation3 + $0x160] sm:$0xff]
  %v6888 = vld [vmem:[#allocation3 + $0x168] sm:$0xff]
  %v6889 = vld [vmem:[#allocation3 + $0x170] sm:$0xff]
  %v6890 = vld [vmem:[#allocation3 + $0x178] sm:$0xff]
  %v6891 = vld [vmem:[#allocation3 + $0x180] sm:$0xff]
  %v6892 = vld [vmem:[#allocation3 + $0x188] sm:$0xff]
  %v6893 = vld [vmem:[#allocation3 + $0x190] sm:$0xff]
  %v6894 = vld [vmem:[#allocation3 + $0x198] sm:$0xff]
  %v6895 = vld [vmem:[#allocation3 + $0x1a0] sm:$0xff]
  %v6896 = vld [vmem:[#allocation3 + $0x1a8] sm:$0xff]
  %v6897 = vld [vmem:[#allocation3 + $0x1b0] sm:$0xff]
  %v6898 = vld [vmem:[#allocation3 + $0x1b8] sm:$0xff]
  %v6899 = vld [vmem:[#allocation3 + $0x1c0] sm:$0xff]
  %v6900 = vld [vmem:[#allocation3 + $0x1c8] sm:$0xff]
  %v6901 = vld [vmem:[#allocation3 + $0x1d0] sm:$0xff]
  %v6902 = vld [vmem:[#allocation3 + $0x1d8] sm:$0xff]
  %v6903 = vld [vmem:[#allocation3 + $0x1e0] sm:$0xff]
  %v6904 = vld [vmem:[#allocation3 + $0x1e8] sm:$0xff]
  %v6905 = vld [vmem:[#allocation3 + $0x1f0] sm:$0xff]
  %v6906 = vld [vmem:[#allocation3 + $0x1f8] sm:$0xff]
  %v6907 = vld [vmem:[#allocation3 + $0x200] sm:$0xff]
  %v6908 = vld [vmem:[#allocation3 + $0x208] sm:$0xff]
  %v6909 = vld [vmem:[#allocation3 + $0x210] sm:$0xff]
  %v6910 = vld [vmem:[#allocation3 + $0x218] sm:$0xff]
  %v6911 = vld [vmem:[#allocation3 + $0x220] sm:$0xff]
  %v6912 = vld [vmem:[#allocation3 + $0x228] sm:$0xff]
  %v6913 = vld [vmem:[#allocation3 + $0x230] sm:$0xff]
  %v6914 = vld [vmem:[#allocation3 + $0x238] sm:$0xff]
  %v6915 = vld [vmem:[#allocation3 + $0x240] sm:$0xff]
  %v6916 = vld [vmem:[#allocation3 + $0x248] sm:$0xff]
  %v6917 = vld [vmem:[#allocation3 + $0x250] sm:$0xff]
  %v6918 = vld [vmem:[#allocation3 + $0x258] sm:$0xff]
  %v6919 = vld [vmem:[#allocation3 + $0x260] sm:$0xff]
  %v6920 = vld [vmem:[#allocation3 + $0x268] sm:$0xff]
  %v6921 = vld [vmem:[#allocation3 + $0x270] sm:$0xff]
  %v6922 = vld [vmem:[#allocation3 + $0x278] sm:$0xff]
  %v6923 = vld [vmem:[#allocation3 + $0x280] sm:$0xff]
  %v6924 = vld [vmem:[#allocation3 + $0x288] sm:$0xff]
  %v6925 = vld [vmem:[#allocation3 + $0x290] sm:$0xff]
  %v6926 = vld [vmem:[#allocation3 + $0x298] sm:$0xff]
  %v6927 = vld [vmem:[#allocation3 + $0x2a0] sm:$0xff]
  %v6928 = vld [vmem:[#allocation3 + $0x2a8] sm:$0xff]
  %v6929 = vld [vmem:[#allocation3 + $0x2b0] sm:$0xff]
  %v6930 = vld [vmem:[#allocation3 + $0x2b8] sm:$0xff]
  %v6931 = vld [vmem:[#allocation3 + $0x2c0] sm:$0xff]
  %v6932 = vld [vmem:[#allocation3 + $0x2c8] sm:$0xff]
  %v6933 = vld [vmem:[#allocation3 + $0x2d0] sm:$0xff]
  %v6934 = vld [vmem:[#allocation3 + $0x2d8] sm:$0xff]
  %v6935 = vld [vmem:[#allocation3 + $0x2e0] sm:$0xff]
  %v6936 = vld [vmem:[#allocation3 + $0x2e8] sm:$0xff]
  %v6937 = vld [vmem:[#allocation3 + $0x2f0] sm:$0xff]
  %v6938 = vld [vmem:[#allocation3 + $0x2f8] sm:$0xff]
  %v6939 = vld [vmem:[#allocation3 + $0x300] sm:$0xff]
  %v6940 = vld [vmem:[#allocation3 + $0x308] sm:$0xff]
  %v6941 = vld [vmem:[#allocation3 + $0x310] sm:$0xff]
  %v6942 = vld [vmem:[#allocation3 + $0x318] sm:$0xff]
  %v6943 = vld [vmem:[#allocation3 + $0x320] sm:$0xff]
  %v6944 = vld [vmem:[#allocation3 + $0x328] sm:$0xff]
  %v6945 = vld [vmem:[#allocation3 + $0x330] sm:$0xff]
  %v6946 = vld [vmem:[#allocation3 + $0x338] sm:$0xff]
  %v6947 = vld [vmem:[#allocation3 + $0x340] sm:$0xff]
  %v6948 = vld [vmem:[#allocation3 + $0x348] sm:$0xff]
  %v6949 = vld [vmem:[#allocation3 + $0x350] sm:$0xff]
  %v6950 = vld [vmem:[#allocation3 + $0x358] sm:$0xff]
  %v6951 = vld [vmem:[#allocation3 + $0x360] sm:$0xff]
  %v6952 = vld [vmem:[#allocation3 + $0x368] sm:$0xff]
  %v6953 = vld [vmem:[#allocation3 + $0x370] sm:$0xff]
  %v6954 = vld [vmem:[#allocation3 + $0x378] sm:$0xff]
  %v6955 = vld [vmem:[#allocation3 + $0x380] sm:$0xff]
  %v6956 = vld [vmem:[#allocation3 + $0x388] sm:$0xff]
  %v6957 = vld [vmem:[#allocation3 + $0x390] sm:$0xff]
  %v6958 = vld [vmem:[#allocation3 + $0x398] sm:$0xff]
  %v6959 = vld [vmem:[#allocation3 + $0x3a0] sm:$0xff]
  %v6960 = vld [vmem:[#allocation3 + $0x3a8] sm:$0xff]
  %v6961 = vld [vmem:[#allocation3 + $0x3b0] sm:$0xff]
  %v6962 = vld [vmem:[#allocation3 + $0x3b8] sm:$0xff]
  %v6963 = vld [vmem:[#allocation3 + $0x3c0] sm:$0xff]
  %v6964 = vld [vmem:[#allocation3 + $0x3c8] sm:$0xff]
  %v6965 = vld [vmem:[#allocation3 + $0x3d0] sm:$0xff]
  %v6966 = vld [vmem:[#allocation3 + $0x3d8] sm:$0xff]
  %v6967 = vld [vmem:[#allocation3 + $0x3e0] sm:$0xff]
  %v6968 = vld [vmem:[#allocation3 + $0x3e8] sm:$0xff]
  %v6969 = vld [vmem:[#allocation3 + $0x3f0] sm:$0xff]
  %v6970 = vld [vmem:[#allocation3 + $0x3f8] sm:$0xff]
  %v6971 = vld [vmem:[%s12] sm:$0x3]
  %v6973 = vlaneseq
  %v6974 = vshrl.u32 %v6973, 7
  %v6975 = vsub.s32 0, %v6974
  %v6976 = vrot.slane %v6971, %v6975
  %v6977 = vlaneseq
  %v6978 = vshrl.u32 %v6977, 7
  %v6979 = vsub.s32 1, %v6978
  %v6980 = vrot.slane %v6971, %v6979
  %6983 = vmatprep.subr.mxu0 %v6874
  %6984 = vmatpush1.msra.mxu0 %v6873
  %6985 = vmatprep.subr.mxu0 %v6872
  %6986 = vmatpush1.msra.mxu0 %v6871
  %6987 = vmatprep.subr.mxu0 %v6870
  %6988 = vmatpush1.msra.mxu0 %v6869
  %6989 = vmatprep.subr.mxu0 %v6868
  %6990 = vmatpush1.msra.mxu0 %v6867
  %6991 = vmatprep.subr.mxu0 %v6866
  %6992 = vmatpush1.msra.mxu0 %v6865
  %6993 = vmatprep.subr.mxu0 %v6864
  %6994 = vmatpush1.msra.mxu0 %v6863
  %6995 = vmatprep.subr.mxu0 %v6862
  %6996 = vmatpush1.msra.mxu0 %v6861
  %6997 = vmatprep.subr.mxu0 %v6860
  %6998 = vmatpush1.msra.mxu0 %v6859
  %6999 = vmatprep.subr.mxu0 %v6858
  %7000 = vmatpush1.msra.mxu0 %v6857
  %7001 = vmatprep.subr.mxu0 %v6856
  %7002 = vmatpush1.msra.mxu0 %v6855
  %7003 = vmatprep.subr.mxu0 %v6854
  %7004 = vmatpush1.msra.mxu0 %v6853
  %7005 = vmatprep.subr.mxu0 %v6852
  %7006 = vmatpush1.msra.mxu0 %v6851
  %7007 = vmatprep.subr.mxu0 %v6850
  %7008 = vmatpush1.msra.mxu0 %v6849
  %7009 = vmatprep.subr.mxu0 %v6848
  %7010 = vmatpush1.msra.mxu0 %v6847
  %7011 = vmatprep.subr.mxu0 %v6846
  %7012 = vmatpush1.msra.mxu0 %v6845
  %7013 = vmatprep.subr.mxu0 %v6844
  %7014 = vmatpush1.msra.mxu0 %v6843
  %7015 = vmatprep.subr.mxu0 %v6906
  %7016 = vmatpush2.msra.mxu0 %v6905
  %7017 = vmatprep.subr.mxu0 %v6904
  %7018 = vmatpush2.msra.mxu0 %v6903
  %7019 = vmatprep.subr.mxu0 %v6902
  %7020 = vmatpush2.msra.mxu0 %v6901
  %7021 = vmatprep.subr.mxu0 %v6900
  %7022 = vmatpush2.msra.mxu0 %v6899
  %7023 = vmatprep.subr.mxu0 %v6898
  %7024 = vmatpush2.msra.mxu0 %v6897
  %7025 = vmatprep.subr.mxu0 %v6896
  %7026 = vmatpush2.msra.mxu0 %v6895
  %7027 = vmatprep.subr.mxu0 %v6894
  %7028 = vmatpush2.msra.mxu0 %v6893
  %7029 = vmatprep.subr.mxu0 %v6892
  %7030 = vmatpush2.msra.mxu0 %v6891
  %7031 = vmatprep.subr.mxu0 %v6890
  %7032 = vmatpush2.msra.mxu0 %v6889
  %7033 = vmatprep.subr.mxu0 %v6888
  %7034 = vmatpush2.msra.mxu0 %v6887
  %7035 = vmatprep.subr.mxu0 %v6886
  %7036 = vmatpush2.msra.mxu0 %v6885
  %7037 = vmatprep.subr.mxu0 %v6884
  %7038 = vmatpush2.msra.mxu0 %v6883
  %7039 = vmatprep.subr.mxu0 %v6882
  %7040 = vmatpush2.msra.mxu0 %v6881
  %7041 = vmatprep.subr.mxu0 %v6880
  %7042 = vmatpush2.msra.mxu0 %v6879
  %7043 = vmatprep.subr.mxu0 %v6878
  %7044 = vmatpush2.msra.mxu0 %v6877
  %7045 = vmatprep.subr.mxu0 %v6876
  %7046 = vmatpush2.msra.mxu0 %v6875
  %7047 = vmatprep.mubr.f32.mxu0 %v6836
  %7048 = vmatmul.mubr.f32.gmra.mxu0 %v6835
  %v7049 = vpop.f32.mrf.mxu0
  %v7050 = vadd.f32 %v6976, %v7049
  %v7051 = vpop.f32.mrf.mxu0
  %v7052 = vadd.f32 %v6980, %v7051
  %7053 = vdwg.mxu0
  %7054 = vmatprep.subr.mxu0 %v6938
  %7055 = vmatpush1.msra.mxu0 %v6937
  %7056 = vmatprep.subr.mxu0 %v6936
  %7057 = vmatpush1.msra.mxu0 %v6935
  %7058 = vmatprep.subr.mxu0 %v6934
  %7059 = vmatpush1.msra.mxu0 %v6933
  %7060 = vmatprep.subr.mxu0 %v6932
  %7061 = vmatpush1.msra.mxu0 %v6931
  %7062 = vmatprep.subr.mxu0 %v6930
  %7063 = vmatpush1.msra.mxu0 %v6929
  %7064 = vmatprep.subr.mxu0 %v6928
  %7065 = vmatpush1.msra.mxu0 %v6927
  %7066 = vmatprep.subr.mxu0 %v6926
  %7067 = vmatpush1.msra.mxu0 %v6925
  %7068 = vmatprep.subr.mxu0 %v6924
  %7069 = vmatpush1.msra.mxu0 %v6923
  %7070 = vmatprep.subr.mxu0 %v6922
  %7071 = vmatpush1.msra.mxu0 %v6921
  %7072 = vmatprep.subr.mxu0 %v6920
  %7073 = vmatpush1.msra.mxu0 %v6919
  %7074 = vmatprep.subr.mxu0 %v6918
  %7075 = vmatpush1.msra.mxu0 %v6917
  %7076 = vmatprep.subr.mxu0 %v6916
  %7077 = vmatpush1.msra.mxu0 %v6915
  %7078 = vmatprep.subr.mxu0 %v6914
  %7079 = vmatpush1.msra.mxu0 %v6913
  %7080 = vmatprep.subr.mxu0 %v6912
  %7081 = vmatpush1.msra.mxu0 %v6911
  %7082 = vmatprep.subr.mxu0 %v6910
  %7083 = vmatpush1.msra.mxu0 %v6909
  %7084 = vmatprep.subr.mxu0 %v6908
  %7085 = vmatpush1.msra.mxu0 %v6907
  %7086 = vmatprep.subr.mxu0 %v6970
  %7087 = vmatpush2.msra.mxu0 %v6969
  %7088 = vmatprep.subr.mxu0 %v6968
  %7089 = vmatpush2.msra.mxu0 %v6967
  %7090 = vmatprep.subr.mxu0 %v6966
  %7091 = vmatpush2.msra.mxu0 %v6965
  %7092 = vmatprep.subr.mxu0 %v6964
  %7093 = vmatpush2.msra.mxu0 %v6963
  %7094 = vmatprep.subr.mxu0 %v6962
  %7095 = vmatpush2.msra.mxu0 %v6961
  %7096 = vmatprep.subr.mxu0 %v6960
  %7097 = vmatpush2.msra.mxu0 %v6959
  %7098 = vmatprep.subr.mxu0 %v6958
  %7099 = vmatpush2.msra.mxu0 %v6957
  %7100 = vmatprep.subr.mxu0 %v6956
  %7101 = vmatpush2.msra.mxu0 %v6955
  %7102 = vmatprep.subr.mxu0 %v6954
  %7103 = vmatpush2.msra.mxu0 %v6953
  %7104 = vmatprep.subr.mxu0 %v6952
  %7105 = vmatpush2.msra.mxu0 %v6951
  %7106 = vmatprep.subr.mxu0 %v6950
  %7107 = vmatpush2.msra.mxu0 %v6949
  %7108 = vmatprep.subr.mxu0 %v6948
  %7109 = vmatpush2.msra.mxu0 %v6947
  %7110 = vmatprep.subr.mxu0 %v6946
  %7111 = vmatpush2.msra.mxu0 %v6945
  %7112 = vmatprep.subr.mxu0 %v6944
  %7113 = vmatpush2.msra.mxu0 %v6943
  %7114 = vmatprep.subr.mxu0 %v6942
  %7115 = vmatpush2.msra.mxu0 %v6941
  %7116 = vmatprep.subr.mxu0 %v6940
  %7117 = vmatpush2.msra.mxu0 %v6939
  %7118 = vmatprep.mubr.f32.mxu0 %v6838
  %7119 = vmatmul.mubr.f32.gmra.mxu0 %v6837
  %v7120 = vpop.f32.mrf.mxu0
  %v7121 = vadd.f32 %v7050, %v7120
  %v7122 = vpop.f32.mrf.mxu0
  %v7123 = vadd.f32 %v7052, %v7122
  %7124 = vdwg.mxu0
  %v7125 = vmul.f32 %v7121, 0.01
  %v7126 = vmul.f32 %v7123, 0.01
  %v7127 = vmax.f32 %v7121, %v7125
  %v7128 = vmax.f32 %v7123, %v7126
  %v7131 = vrot.slane %v7127, 2
  %v7132 = vrot.slane %v7128, 2
  %v7135 = vsub.f32 %v7127, %v7131
  %v7136 = vsub.f32 %v7128, %v7132
  %v7137 = vand.u32 2147483647, %v7135
  %v7138 = vand.u32 2147483647, %v7136
  %v7139 = vsel %vm5225, %v7137, 0.0
  %v7140 = vsel %vm5225, %v7138, 0.0
  %v7141 = vadd.f32 %v7139, %v7140
  %7142 = vadd.xlane.f32.xlu0 %v7141
  %v7143 = vpop.xlane.xlu0 %7142
  %s7144 = sld [smem:[#allocation5]]
  %v7145 = vstv %s7144
  %v7146 = vmul.f32 %v7143, %v7145
  %s7147 = sld [smem:[#allocation6]]
  %v7148 = vstv %s7147
  %v7149 = vadd.f32 %v7146, %v7148
  %v7150 = vsub.f32 0.0, %v7149
  %v7151 = vmul.f32 %v7150, 1.442695
  %v7152 = vpow.pop %v7151
  %v7153 = vadd.f32 %v7152, 1.0
  %v7154 = vrcp.pop %v7153
  %v7155 = vmul.f32 1.0, %v7154
  %vm7156 = vcmask 1024
  %7157 = vst.msk [vmem:[%s15] sm:$0x3] %vm7156, %v7155
  // Predicated region
  $region122: #{siamese_forward.1} parent=0 // pred_check
    _
  $region123: #{siamese_forward.1} parent=0 // pred_check_branch
    %7159 = sbr.rel (0) target = $region125
  $region124: #{siamese_forward.1} parent=0 // pred_region
    _
  $region125: #{siamese_forward.1} parent=0 // pred_fallthru
    _
  // Predicated region
  $region126: #{siamese_forward.1} parent=0 // pred_check
    _
  $region127: #{siamese_forward.1} parent=0 // pred_check_branch
    %7161 = sbr.rel (0) target = $region129
  $region128: #{siamese_forward.1} parent=0 // pred_region
    _
  $region129: #{siamese_forward.1} parent=0 // pred_fallthru
    _
  %7162 = vsyncmov [#allocation4]
  %s7163 = vpop.sfrf %7162
  %p7164 = scmp.eq.s32.totalorder %s7163, 0
  %p7165 = pneg %p7164
  %7167 = shalt.err (%p7165)
  %s7168 = scalar_lea.sflag [#allocation4], 1
  %7169 = vsyncmov %s7168
  %s7170 = vpop.sfrf %7169
  %p7171 = scmp.eq.s32.totalorder %s7170, 0
  %p7172 = pneg %p7171
  %7174 = shalt.err (%p7172)

</llo_original>
